<compile_context>
chip_gen: v5e
topology: v5e:2x2
jax: 0.10.0
libtpu: 0.0.40
codegen_flags: <defaults>
</compile_context>

<pallas_src>
import functools
import numpy as np
import jax
import jax.numpy as jnp
from jax.experimental import pallas as pl
from jax.experimental.pallas import tpu as pltpu

# ----------------------- hyper-parameters (small hp) -------------------------
B             = 2                 # batch
SRC_LEN       = 8                 # phoneme sequence length
MEL_MAX_LEN   = 16                # mel_max_length
VOCAB         = 20                # hp.vocab_size
MAX_SEQ_LEN   = 32
N_POSITION    = MAX_SEQ_LEN + 1
D_MODEL       = 32                # hp.encoder_dim == hp.decoder_dim
N_LAYERS      = 2                 # encoder/decoder n_layer
N_HEAD        = 2
D_K = D_V     = 16
D_INNER       = 64                # hp.encoder_conv1d_filter_size
FFT_KERNEL    = (3, 1)            # hp.fft_conv1d_kernel
FFT_PAD       = (1, 0)            # hp.fft_conv1d_padding
DP_FILTER     = 32                # duration predictor filter size
DP_KERNEL     = 3
NUM_MELS      = 16                # hp.num_mels
CBHG_K        = 8                 # hard-coded K=8 in FastSpeech
CBHG_PROJ_HID = 256               # hard-coded projections=[256, num_mels]
N_HIGHWAYS    = 4

# TODO(synk): dropout layers are stochastic; treated as identity here.
# TODO(synk): eval-mode LengthRegulator produces data-dependent output lengths
#             (dynamic shapes); only the training branch is implemented.
# Note: all math kept in f32 (model is tiny / fully VMEM-resident); flipping the
# matmul operands to bf16 for v6e/v7x MXU rates would be a one-line cast.

# ====================== small helpers usable inside kernels ===================

def _time_shift(x, off):
    """x: (B, T, C) -> y with y[:, t, :] = x[:, t + off, :], zero outside [0, T).

    Static offset; implemented as a zero-pad + slice concat (cheap VPU copies,
    no MXU / shift-matrix work).
    """
    if off == 0:
        return x
    Bx, T, C = x.shape
    zeros = jnp.zeros((Bx, abs(off), C), x.dtype)
    if off > 0:
        return jnp.concatenate([x[:, off:, :], zeros], axis=1)
    return jnp.concatenate([zeros, x[:, :T + off, :]], axis=1)


def _im2col_k3(x3):
    """(B, T, C) -> (B*T, 3C) with columns [x[t-1] | x[t] | x[t+1]] (zero pad)."""
    Bx, T, C = x3.shape
    cat = jnp.concatenate([_time_shift(x3, -1), x3, _time_shift(x3, 1)], axis=-1)
    return cat.reshape(Bx * T, 3 * C)


def _layernorm(x, g, b, eps=1e-5):
    mu = jnp.mean(x, axis=-1, keepdims=True)
    var = jnp.mean(jnp.square(x - mu), axis=-1, keepdims=True)
    return (x - mu) * jax.lax.rsqrt(var + eps) * g + b


def _batchnorm(x2, g, b, eps=1e-5):
    """Training-mode BatchNorm over rows of a 2D (B*T, C) activation."""
    mu = jnp.mean(x2, axis=0, keepdims=True)
    var = jnp.mean(jnp.square(x2 - mu), axis=0, keepdims=True)
    return (x2 - mu) * jax.lax.rsqrt(var + eps) * g + b


# =============================== Pallas kernels ===============================

def _fft_block_kernel(x_ref, padq_ref, padk_ref, wqkv_ref, bqkv_ref,
                      wfc_ref, bfc_ref, ln1g_ref, ln1b_ref,
                      w1_ref, b1_ref, w2_ref, b2_ref, ln2g_ref, ln2b_ref,
                      o_ref, *, n_head, d_k, inv_temperature):
    """One full FFT block (multi-head self-attention + conv FFN), fused."""
    Bx, T, D = x_ref.shape
    BT = Bx * T
    hdk = n_head * d_k

    x3 = x_ref[...]                                      # (B, T, D)
    x2 = x3.reshape(BT, D)
    padq = padq_ref[...]                                 # (B*T, 1), 1.0 = valid
    key_valid = padk_ref[...]                            # (B, 1, T), 1.0 = valid key

    # ---- multi-head self-attention, fused QKV projection ----
    qkv = jnp.dot(x2, wqkv_ref[...], preferred_element_type=jnp.float32) + bqkv_ref[...]
    wfc = wfc_ref[...]
    attn = jnp.zeros((BT, D), jnp.float32)
    for h in range(n_head):
        q = qkv[:, h * d_k:(h + 1) * d_k].reshape(Bx, T, d_k) * inv_temperature
        k = qkv[:, hdk + h * d_k: hdk + (h + 1) * d_k].reshape(Bx, T, d_k)
        v = qkv[:, 2 * hdk + h * d_k: 2 * hdk + (h + 1) * d_k].reshape(Bx, T, d_k)
        s = jnp.einsum('bqd,bkd->bqk', q, k, preferred_element_type=jnp.float32)
        s = jnp.where(key_valid > 0.0, s, -1e9)          # finite fill -> no NaN rows
        m = jnp.max(s, axis=-1, keepdims=True)
        e = jnp.exp(s - m)
        p = e * pl.reciprocal(jnp.sum(e, axis=-1, keepdims=True), approx=True)
        oh = jnp.einsum('bqk,bkd->bqd', p, v, preferred_element_type=jnp.float32)
        # concat-of-heads @ w_fc  ==  sum over heads of (head @ w_fc-slice)
        attn = attn + jnp.dot(oh.reshape(BT, d_k), wfc[h * d_k:(h + 1) * d_k, :],
                              preferred_element_type=jnp.float32)
    attn = attn + bfc_ref[...]

    # residual + LayerNorm, then non-pad mask
    h1 = _layernorm(attn + x2, ln1g_ref[...], ln1b_ref[...]) * padq

    # ---- position-wise FFN: conv1d(k=3,p=1) as one im2col matmul -> ReLU -> conv1d(k=1) ----
    c1 = jnp.dot(_im2col_k3(h1.reshape(Bx, T, D)), w1_ref[...],
                 preferred_element_type=jnp.float32) + b1_ref[...]
    c1 = jnp.maximum(c1, 0.0)
    ffn = jnp.dot(c1, w2_ref[...], preferred_element_type=jnp.float32) + b2_ref[...]

    h2 = _layernorm(ffn + h1, ln2g_ref[...], ln2b_ref[...]) * padq
    o_ref[...] = h2.reshape(Bx, T, D)


def _dur_lr_kernel(x_ref, align_ref, w1_ref, b1_ref, g1_ref, be1_ref,
                   w2_ref, b2_ref, g2_ref, be2_ref, wlin_ref, blin_ref,
                   lr_ref, dur_ref):
    """Duration predictor + length-regulator alignment matmul, fused."""
    Bx, S, D = x_ref.shape
    x3 = x_ref[...]

    # conv1d(k=3,p=1) -> LayerNorm -> ReLU, twice (each conv is one im2col matmul)
    h = jnp.dot(_im2col_k3(x3), w1_ref[...],
                preferred_element_type=jnp.float32) + b1_ref[...]
    h = jnp.maximum(_layernorm(h, g1_ref[...], be1_ref[...]), 0.0)
    F = h.shape[-1]
    h = jnp.dot(_im2col_k3(h.reshape(Bx, S, F)), w2_ref[...],
                preferred_element_type=jnp.float32) + b2_ref[...]
    h = jnp.maximum(_layernorm(h, g2_ref[...], be2_ref[...]), 0.0)

    # Linear(filter, 1) as a VPU reduction (avoids an N=1 lane-sparse matmul)
    dur = jnp.sum(h * wlin_ref[...], axis=-1, keepdims=True) + blin_ref[...]
    dur_ref[...] = jnp.maximum(dur, 0.0).reshape(Bx, S)

    # length regulator (training branch): alignment @ encoder_output
    lr_ref[...] = jnp.einsum('bms,bsd->bmd', align_ref[...], x3,
                             preferred_element_type=jnp.float32)


def _mel_cbhg_front_kernel(dec_ref, wmel_ref, bmel_ref, valid_ref,
                           wb_ref, bg_ref, bb_ref,
                           w1_ref, g1_ref, b1_ref, w2_ref, g2_ref, b2_ref,
                           mel_ref, front_ref):
    """mel_linear + mask, fused with CBHG conv bank + BN/ReLU + maxpool +
    two conv projections + BN + input residual."""
    Bx, T, D = dec_ref.shape
    BT = Bx * T

    # ---- mel_linear + mask_tensor ----
    mel = (jnp.dot(dec_ref[...].reshape(BT, D), wmel_ref[...],
                   preferred_element_type=jnp.float32)
           + bmel_ref[...]).reshape(Bx, T, -1) * valid_ref[...]
    mel_ref[...] = mel

    x3 = mel
    C = x3.shape[-1]

    # ---- conv1d bank (k = 1..K) as ONE im2col matmul: 8 shifted copies of the
    # input concatenated along lanes (BT, 8*C) against the block-packed
    # (8*C, K*C) weight -> lane-dense (BT, K*C) bank concat. ----
    noff = wb_ref.shape[0] // C
    xs = jnp.concatenate([_time_shift(x3, oi - noff // 2) for oi in range(noff)],
                         axis=-1).reshape(BT, noff * C)
    acc = jnp.dot(xs, wb_ref[...], preferred_element_type=jnp.float32)
    acc = jnp.maximum(_batchnorm(acc, bg_ref[...], bb_ref[...]), 0.0)
    KC = acc.shape[-1]

    # ---- max-pool k=2, s=1, pad=1 truncated to T (inputs >= 0 so zero-fill is exact) ----
    h3 = acc.reshape(Bx, T, KC)
    pooled = jnp.maximum(h3, _time_shift(h3, -1))

    # ---- projection 1: conv1d(k=3,p=1) as one im2col matmul -> BN -> ReLU ----
    p1 = jnp.dot(_im2col_k3(pooled), w1_ref[...], preferred_element_type=jnp.float32)
    p1 = jnp.maximum(_batchnorm(p1, g1_ref[...], b1_ref[...]), 0.0)

    # ---- projection 2: conv1d(k=3,p=1) -> BN (no activation), + input residual ----
    # (output channels are small -> shift the outputs, not the 256-wide input)
    e0 = jnp.dot(p1, w2_ref[0], preferred_element_type=jnp.float32).reshape(Bx, T, C)
    e1 = jnp.dot(p1, w2_ref[1], preferred_element_type=jnp.float32).reshape(Bx, T, C)
    e2 = jnp.dot(p1, w2_ref[2], preferred_element_type=jnp.float32).reshape(Bx, T, C)
    p2 = e1 + _time_shift(e0, -1) + _time_shift(e2, 1)
    p2 = _batchnorm(p2.reshape(BT, C), g2_ref[...], b2_ref[...])
    front_ref[...] = p2.reshape(Bx, T, C) + x3


def _cbhg_tail_kernel(x_ref, hww_ref, hwb_ref,
                      wif_ref, whf_ref, bif_ref, bhf_ref,
                      wib_ref, whb_ref, bib_ref, bhb_ref,
                      wl_ref, bl_ref, mel_ref, valid_ref, o_ref,
                      of_sc, ob_sc):
    """Highway stack + bidirectional GRU + last_linear + postnet residual + mask."""
    Bx, T, C = x_ref.shape
    BT = Bx * T
    h2 = x_ref[...].reshape(BT, C)

    # --- 4 highway layers, H|T weights concatenated into one (C, 2C) matmul each ---
    for l in range(hww_ref.shape[0]):
        ht = jnp.dot(h2, hww_ref[l], preferred_element_type=jnp.float32) + hwb_ref[l]
        hpart = jnp.maximum(ht[:, :C], 0.0)
        tgate = jax.nn.sigmoid(ht[:, C:2 * C])
        h2 = hpart * tgate + h2 * (1.0 - tgate)

    # --- bidirectional GRU (hidden=C): fused input projections, unrolled recurrence ---
    gif = (jnp.dot(h2, wif_ref[...], preferred_element_type=jnp.float32)
           + bif_ref[...]).reshape(Bx, T, 3 * C)
    gib = (jnp.dot(h2, wib_ref[...], preferred_element_type=jnp.float32)
           + bib_ref[...]).reshape(Bx, T, 3 * C)
    whf, bhf = whf_ref[...], bhf_ref[...]
    whb, bhb = whb_ref[...], bhb_ref[...]

    def gru_step(h, gi_t, whh, bhh):
        gh = jnp.dot(h, whh, preferred_element_type=jnp.float32) + bhh
        r = jax.nn.sigmoid(gi_t[:, :C] + gh[:, :C])
        z = jax.nn.sigmoid(gi_t[:, C:2 * C] + gh[:, C:2 * C])
        n = jnp.tanh(gi_t[:, 2 * C:] + r * gh[:, 2 * C:])
        return (1.0 - z) * n + z * h

    hf = jnp.zeros((Bx, C), jnp.float32)
    hb = jnp.zeros((Bx, C), jnp.float32)
    # TODO(synk): GRU recurrence is inherently sequential; unrolled over T in-kernel.
    for t in range(T):
        hf = gru_step(hf, gif[:, t, :], whf, bhf)
        of_sc[:, t:t + 1, :] = hf[:, None, :]
        tb = T - 1 - t
        hb = gru_step(hb, gib[:, tb, :], whb, bhb)
        ob_sc[:, tb:tb + 1, :] = hb[:, None, :]

    # last_linear applied to [fwd | bwd] without materializing the concat
    wl = wl_ref[...]
    res = (jnp.dot(of_sc[...].reshape(BT, C), wl[:C, :], preferred_element_type=jnp.float32)
           + jnp.dot(ob_sc[...].reshape(BT, C), wl[C:2 * C, :], preferred_element_type=jnp.float32))
    out = mel_ref[...] + res.reshape(Bx, T, C) + bl_ref[...]
    o_ref[...] = out * valid_ref[...]


# ============================ Pallas-call wrappers ============================

def _fft_block_call(p, x, padq2, padk, inv_temp):
    Bx, T, D = x.shape
    a, f = p['attn'], p['ffn']
    wqkv = jnp.concatenate([a['wq'], a['wk'], a['wv']], axis=1)              # (D, 3*H*DK)
    bqkv = jnp.concatenate([a['bq'], a['bk'], a['bv']], axis=0).reshape(1, -1)
    # conv1 weight packed row-wise for the im2col matmul: (3*D, DI)
    w1cat = jnp.concatenate([f['w1'][:, :, j].T for j in range(FFT_KERNEL[0])], axis=0)
    w2c = f['w2'][:, :, 0].T                                                 # (DI, D)
    kern = functools.partial(_fft_block_kernel, n_head=N_HEAD, d_k=D_K,
                             inv_temperature=inv_temp)
    return pl.pallas_call(
        kern, out_shape=jax.ShapeDtypeStruct((Bx, T, D), jnp.float32),
    )(x, padq2, padk, wqkv, bqkv,
      a['w_fc'], a['b_fc'].reshape(1, -1),
      a['ln_g'].reshape(1, -1), a['ln_b'].reshape(1, -1),
      w1cat, f['b1'].reshape(1, -1), w2c, f['b2'].reshape(1, -1),
      f['ln_g'].reshape(1, -1), f['ln_b'].reshape(1, -1))


def _dur_lr_call(p, enc_out, align):
    Bx, S, D = enc_out.shape
    M = align.shape[1]
    w1cat = jnp.concatenate([p['w1'][:, :, j].T for j in range(DP_KERNEL)], axis=0)  # (3D, F)
    w2cat = jnp.concatenate([p['w2'][:, :, j].T for j in range(DP_KERNEL)], axis=0)  # (3F, F)
    out_shapes = (jax.ShapeDtypeStruct((Bx, M, D), jnp.float32),
                  jax.ShapeDtypeStruct((Bx, S), jnp.float32))
    return pl.pallas_call(_dur_lr_kernel, out_shape=out_shapes)(
        enc_out, align,
        w1cat, p['b1'].reshape(1, -1), p['ln1_g'].reshape(1, -1), p['ln1_b'].reshape(1, -1),
        w2cat, p['b2'].reshape(1, -1), p['ln2_g'].reshape(1, -1), p['ln2_b'].reshape(1, -1),
        p['w_lin'].reshape(1, -1), p['b_lin'].reshape(1, 1))


def _build_bank_weight(bank_ws):
    """Pack the K conv-bank weights into one (K_off*C, K*C) block matrix.

    Row block `oi` holds, for every bank k, the tap w_k[:, :, j].T with
    j = (oi - K//2) + k//2 (zero block if that tap does not exist), so the
    whole bank is a single im2col matmul producing the lane-dense (B*T, K*C)
    branch concat.
    """
    C = NUM_MELS
    noff = CBHG_K
    rows = []
    for oi in range(noff):
        off = oi - noff // 2
        blocks = []
        for ki, w in enumerate(bank_ws):
            k = ki + 1
            j = off + k // 2
            if 0 <= j < k:
                blocks.append(w[:, :, j].T)
            else:
                blocks.append(jnp.zeros((C, C), jnp.float32))
        rows.append(jnp.concatenate(blocks, axis=1))
    return jnp.concatenate(rows, axis=0)                 # (noff*C, K*C)


def _mel_cbhg_front_call(pm, p, dec_out, valid3):
    Bx, T, D = dec_out.shape
    C = pm['w'].shape[1]
    wbank = _build_bank_weight(p['bank_w'])                                   # (8*C, K*C)
    bank_g = jnp.concatenate(p['bank_bn_g'], axis=0).reshape(1, -1)
    bank_b = jnp.concatenate(p['bank_bn_b'], axis=0).reshape(1, -1)
    w1cat = jnp.concatenate([p['proj1_w'][:, :, j].T for j in range(3)], axis=0)  # (3*K*C, 256)
    w2s = jnp.stack([p['proj2_w'][:, :, j].T for j in range(3)], axis=0)          # (3, 256, C)
    out_shapes = (jax.ShapeDtypeStruct((Bx, T, C), jnp.float32),
                  jax.ShapeDtypeStruct((Bx, T, C), jnp.float32))
    return pl.pallas_call(_mel_cbhg_front_kernel, out_shape=out_shapes)(
        dec_out, pm['w'], pm['b'].reshape(1, -1), valid3,
        wbank, bank_g, bank_b,
        w1cat, p['proj1_bn_g'].reshape(1, -1), p['proj1_bn_b'].reshape(1, -1),
        w2s, p['proj2_bn_g'].reshape(1, -1), p['proj2_bn_b'].reshape(1, -1))


def _cbhg_tail_call(p, ll, front_out, mel, valid3):
    Bx, T, C = front_out.shape
    hw_w = jnp.stack([jnp.concatenate([hw['H_w'], hw['T_w']], axis=1)
                      for hw in p['highways']], axis=0)                   # (4, C, 2C)
    hw_b = jnp.stack([jnp.concatenate([hw['H_b'], hw['T_b']], axis=0).reshape(1, -1)
                      for hw in p['highways']], axis=0)                   # (4, 1, 2C)
    g = p['gru']
    return pl.pallas_call(
        _cbhg_tail_kernel,
        out_shape=jax.ShapeDtypeStruct((Bx, T, C), jnp.float32),
        scratch_shapes=[pltpu.VMEM((Bx, T, C), jnp.float32),
                        pltpu.VMEM((Bx, T, C), jnp.float32)],
    )(front_out, hw_w, hw_b,
      g['wih_f'].T, g['whh_f'].T, g['bih_f'].reshape(1, -1), g['bhh_f'].reshape(1, -1),
      g['wih_b'].T, g['whh_b'].T, g['bih_b'].reshape(1, -1), g['bhh_b'].reshape(1, -1),
      ll['w'], ll['b'].reshape(1, 1, -1), mel, valid3)


# ================================ model blocks ================================

def encoder_forward(params, src_seq, src_pos):
    Bx, S = src_seq.shape
    valid = (src_seq != 0).astype(jnp.float32)           # 1.0 = non-pad
    padq2 = valid.reshape(Bx * S, 1)
    padk = valid.reshape(Bx, 1, S)
    x = params['word_emb'][src_seq] + params['pos_table'][src_pos]
    inv_temp = 1.0 / float(np.power(D_K, 0.5))
    for layer in params['enc_layers']:
        x = _fft_block_call(layer, x, padq2, padk, inv_temp)
    return x


def decoder_forward(params, x, mel_pos):
    Bx, T = mel_pos.shape
    valid = (mel_pos != 0).astype(jnp.float32)
    padq2 = valid.reshape(Bx * T, 1)
    padk = valid.reshape(Bx, 1, T)
    h = x + params['pos_table'][mel_pos]
    inv_temp = 1.0 / float(np.power(D_K, 0.5))
    for layer in params['dec_layers']:
        h = _fft_block_call(layer, h, padq2, padk, inv_temp)
    return h


@jax.jit
def fastspeech_forward(params, src_seq, src_pos, mel_pos, length_target):
    enc_out = encoder_forward(params, src_seq, src_pos)

    # alignment matrix from target durations (training branch of LengthRegulator)
    cum = jnp.cumsum(length_target, axis=-1)
    starts = cum - length_target
    t_idx = jnp.arange(MEL_MAX_LEN)[None, :, None]
    align = ((t_idx >= starts[:, None, :]) & (t_idx < cum[:, None, :])).astype(jnp.float32)

    lr_out, dur_pred = _dur_lr_call(params['dur'], enc_out, align)
    dec_out = decoder_forward(params, lr_out, mel_pos)

    # mask_tensor: valid positions derived from max(mel_pos)
    lengths = jnp.max(mel_pos, axis=-1)
    valid_mel = (jnp.arange(MEL_MAX_LEN)[None, :] < lengths[:, None]
                 ).astype(jnp.float32)[..., None]                        # (B, T, 1)

    mel_output, front = _mel_cbhg_front_call(params['mel_linear'], params['cbhg'],
                                             dec_out, valid_mel)
    mel_postnet = _cbhg_tail_call(params['cbhg'], params['last_linear'],
                                  front, mel_output, valid_mel)
    return mel_output, mel_postnet, dur_pred


# ================================ parameters ==================================

def get_sinusoid_encoding_table(n_position, d_hid, padding_idx=0):
    position = np.arange(n_position)[:, None].astype(np.float64)
    div = np.power(10000.0, 2 * (np.arange(d_hid) // 2) / d_hid)
    table = position / div
    table[:, 0::2] = np.sin(table[:, 0::2])
    table[:, 1::2] = np.cos(table[:, 1::2])
    table[padding_idx] = 0.0
    return jnp.asarray(table, dtype=jnp.float32)


def make_params(key):
    keys = iter(jax.random.split(key, 256))

    def nrm(*shape, scale=0.1):
        return (scale * jax.random.normal(next(keys), shape)).astype(jnp.float32)

    def zeros(*shape):
        return jnp.zeros(shape, jnp.float32)

    def ones(*shape):
        return jnp.ones(shape, jnp.float32)

    def fft_layer():
        return {
            'attn': {
                'wq': nrm(D_MODEL, N_HEAD * D_K), 'bq': zeros(N_HEAD * D_K),
                'wk': nrm(D_MODEL, N_HEAD * D_K), 'bk': zeros(N_HEAD * D_K),
                'wv': nrm(D_MODEL, N_HEAD * D_V), 'bv': zeros(N_HEAD * D_V),
                'w_fc': nrm(N_HEAD * D_V, D_MODEL), 'b_fc': zeros(D_MODEL),
                'ln_g': ones(D_MODEL), 'ln_b': zeros(D_MODEL),
            },
            'ffn': {
                'w1': nrm(D_INNER, D_MODEL, FFT_KERNEL[0]), 'b1': zeros(D_INNER),
                'w2': nrm(D_MODEL, D_INNER, FFT_KERNEL[1]), 'b2': zeros(D_MODEL),
                'ln_g': ones(D_MODEL), 'ln_b': zeros(D_MODEL),
            },
        }

    params = {
        'word_emb': nrm(VOCAB, D_MODEL).at[0].set(0.0),     # padding_idx=0
        'pos_table': get_sinusoid_encoding_table(N_POSITION, D_MODEL),
        'enc_layers': [fft_layer() for _ in range(N_LAYERS)],
        'dec_layers': [fft_layer() for _ in range(N_LAYERS)],
        'dur': {
            'w1': nrm(DP_FILTER, D_MODEL, DP_KERNEL), 'b1': zeros(DP_FILTER),
            'ln1_g': ones(DP_FILTER), 'ln1_b': zeros(DP_FILTER),
            'w2': nrm(DP_FILTER, DP_FILTER, DP_KERNEL), 'b2': zeros(DP_FILTER),
            'ln2_g': ones(DP_FILTER), 'ln2_b': zeros(DP_FILTER),
            'w_lin': nrm(DP_FILTER, 1), 'b_lin': zeros(1),
        },
        'mel_linear': {'w': nrm(D_MODEL, NUM_MELS), 'b': zeros(NUM_MELS)},
        'cbhg': {
            'bank_w': [nrm(NUM_MELS, NUM_MELS, k) for k in range(1, CBHG_K + 1)],
            'bank_bn_g': [ones(NUM_MELS) for _ in range(CBHG_K)],
            'bank_bn_b': [zeros(NUM_MELS) for _ in range(CBHG_K)],
            'proj1_w': nrm(CBHG_PROJ_HID, CBHG_K * NUM_MELS, 3),
            'proj1_bn_g': ones(CBHG_PROJ_HID), 'proj1_bn_b': zeros(CBHG_PROJ_HID),
            'proj2_w': nrm(NUM_MELS, CBHG_PROJ_HID, 3),
            'proj2_bn_g': ones(NUM_MELS), 'proj2_bn_b': zeros(NUM_MELS),
            'highways': [{'H_w': nrm(NUM_MELS, NUM_MELS), 'H_b': zeros(NUM_MELS),
                          'T_w': nrm(NUM_MELS, NUM_MELS),
                          'T_b': jnp.full((NUM_MELS,), -1.0, jnp.float32)}
                         for _ in range(N_HIGHWAYS)],
            'gru': {
                'wih_f': nrm(3 * NUM_MELS, NUM_MELS), 'whh_f': nrm(3 * NUM_MELS, NUM_MELS),
                'bih_f': zeros(3 * NUM_MELS), 'bhh_f': zeros(3 * NUM_MELS),
                'wih_b': nrm(3 * NUM_MELS, NUM_MELS), 'whh_b': nrm(3 * NUM_MELS, NUM_MELS),
                'bih_b': zeros(3 * NUM_MELS), 'bhh_b': zeros(3 * NUM_MELS),
            },
        },
        'last_linear': {'w': nrm(2 * NUM_MELS, NUM_MELS), 'b': zeros(NUM_MELS)},
    }
    return params


# =================================== main =====================================

if __name__ == "__main__":
    key = jax.random.PRNGKey(0)
    pkey, skey = jax.random.split(key)
    params = make_params(pkey)

    # deterministic small inputs
    src_lens = np.array([8, 6])
    src_seq = np.array(jax.random.randint(skey, (B, SRC_LEN), 1, VOCAB))
    for b in range(B):
        src_seq[b, src_lens[b]:] = 0                            # PAD = 0
    src_pos = np.zeros((B, SRC_LEN), np.int32)
    for b in range(B):
        src_pos[b, :src_lens[b]] = np.arange(1, src_lens[b] + 1)

    length_target = np.array([[2, 2, 2, 2, 2, 2, 1, 1],
                              [2, 2, 2, 2, 2, 2, 0, 0]], np.int32)
    mel_lens = length_target.sum(axis=-1)                       # [14, 12]
    mel_pos = np.zeros((B, MEL_MAX_LEN), np.int32)
    for b in range(B):
        mel_pos[b, :mel_lens[b]] = np.arange(1, mel_lens[b] + 1)

    # mirror the module's asserts
    assert src_seq.max() < VOCAB, 'src_seq contains invalid indices.'
    assert src_pos.max() < N_POSITION, 'src_pos contains invalid indices.'

    mel_output, mel_postnet, dur_pred = fastspeech_forward(
        params,
        jnp.asarray(src_seq, jnp.int32),
        jnp.asarray(src_pos, jnp.int32),
        jnp.asarray(mel_pos, jnp.int32),
        jnp.asarray(length_target, jnp.int32),
    )
    jax.block_until_ready((mel_output, mel_postnet, dur_pred))

    assert mel_output.shape == (B, MEL_MAX_LEN, NUM_MELS)
    assert mel_postnet.shape == (B, MEL_MAX_LEN, NUM_MELS)
    assert dur_pred.shape == (B, SRC_LEN)
    assert bool(jnp.all(jnp.isfinite(mel_output)))
    assert bool(jnp.all(jnp.isfinite(mel_postnet)))
    assert bool(jnp.all(jnp.isfinite(dur_pred)))
    print("KERNEL_OK")
</pallas_src>

<mosaic_0001>
module attributes {stable_mosaic.version = 11 : i64} {
  func.func @_fft_block_kernel(%arg0: memref<2x8x32xf32, #tpu.memory_space<vmem>>, %arg1: memref<16x1xf32, #tpu.memory_space<vmem>>, %arg2: memref<2x1x8xf32, #tpu.memory_space<vmem>>, %arg3: memref<32x96xf32, #tpu.memory_space<vmem>>, %arg4: memref<1x96xf32, #tpu.memory_space<vmem>>, %arg5: memref<32x32xf32, #tpu.memory_space<vmem>>, %arg6: memref<1x32xf32, #tpu.memory_space<vmem>>, %arg7: memref<1x32xf32, #tpu.memory_space<vmem>>, %arg8: memref<1x32xf32, #tpu.memory_space<vmem>>, %arg9: memref<96x64xf32, #tpu.memory_space<vmem>>, %arg10: memref<1x64xf32, #tpu.memory_space<vmem>>, %arg11: memref<64x32xf32, #tpu.memory_space<vmem>>, %arg12: memref<1x32xf32, #tpu.memory_space<vmem>>, %arg13: memref<1x32xf32, #tpu.memory_space<vmem>>, %arg14: memref<1x32xf32, #tpu.memory_space<vmem>>, %arg15: memref<2x8x32xf32, #tpu.memory_space<vmem>>) attributes {dimension_semantics = [], scalar_prefetch = 0 : i64, scratch_operands = 0 : i64, tpu.core_type = #tpu.core_type<tc>} {
    %c0 = arith.constant 0 : index
    %c0_0 = arith.constant 0 : index
    %c0_1 = arith.constant 0 : index
    %0 = vector.load %arg0[%c0, %c0_0, %c0_1] : memref<2x8x32xf32, #tpu.memory_space<vmem>>, vector<2x8x32xf32>
    %1 = vector.shape_cast %0 : vector<2x8x32xf32> to vector<16x32xf32>
    %c0_2 = arith.constant 0 : index
    %c0_3 = arith.constant 0 : index
    %2 = vector.load %arg1[%c0_2, %c0_3] : memref<16x1xf32, #tpu.memory_space<vmem>>, vector<16x1xf32>
    %c0_4 = arith.constant 0 : index
    %c0_5 = arith.constant 0 : index
    %c0_6 = arith.constant 0 : index
    %3 = vector.load %arg2[%c0_4, %c0_5, %c0_6] : memref<2x1x8xf32, #tpu.memory_space<vmem>>, vector<2x1x8xf32>
    %c0_7 = arith.constant 0 : index
    %c0_8 = arith.constant 0 : index
    %4 = vector.load %arg3[%c0_7, %c0_8] : memref<32x96xf32, #tpu.memory_space<vmem>>, vector<32x96xf32>
    %cst = arith.constant dense<0.000000e+00> : vector<16x96xf32>
    %5 = tpu.matmul %1, %4, %cst {dimension_numbers = #tpu.dot_dimension_numbers<[1], [0], [0], [1], [0, 0, 1, 1], [], []>} : vector<16x32xf32>, vector<32x96xf32>, vector<16x96xf32> -> vector<16x96xf32>
    %c0_9 = arith.constant 0 : index
    %c0_10 = arith.constant 0 : index
    %6 = vector.load %arg4[%c0_9, %c0_10] : memref<1x96xf32, #tpu.memory_space<vmem>>, vector<1x96xf32>
    %7 = vector.broadcast %6 : vector<1x96xf32> to vector<16x96xf32>
    %8 = arith.addf %5, %7 : vector<16x96xf32>
    %c0_11 = arith.constant 0 : index
    %c0_12 = arith.constant 0 : index
    %9 = vector.load %arg5[%c0_11, %c0_12] : memref<32x32xf32, #tpu.memory_space<vmem>>, vector<32x32xf32>
    %cst_13 = arith.constant 0.000000e+00 : f32
    %10 = vector.broadcast %cst_13 : f32 to vector<16x32xf32>
    %11 = vector.extract_strided_slice %8 {offsets = [0, 0], sizes = [16, 16], strides = [1, 1]} : vector<16x96xf32> to vector<16x16xf32>
    %12 = vector.shape_cast %11 : vector<16x16xf32> to vector<2x8x16xf32>
    %cst_14 = arith.constant 2.500000e-01 : f32
    %13 = vector.broadcast %cst_14 : f32 to vector<2x8x16xf32>
    %14 = arith.mulf %12, %13 : vector<2x8x16xf32>
    %15 = vector.extract_strided_slice %8 {offsets = [0, 32], sizes = [16, 16], strides = [1, 1]} : vector<16x96xf32> to vector<16x16xf32>
    %16 = vector.shape_cast %15 : vector<16x16xf32> to vector<2x8x16xf32>
    %17 = vector.extract_strided_slice %8 {offsets = [0, 64], sizes = [16, 16], strides = [1, 1]} : vector<16x96xf32> to vector<16x16xf32>
    %18 = vector.shape_cast %17 : vector<16x16xf32> to vector<2x8x16xf32>
    "tpu.trace_start"() <{level = 10 : i32, message = "bqd,bkd->bqk"}> : () -> ()
    %cst_15 = arith.constant dense<0.000000e+00> : vector<2x8x8xf32>
    %19 = tpu.matmul %14, %16, %cst_15 {dimension_numbers = #tpu.dot_dimension_numbers<[2], [2], [1], [1], [0, 0, 0, 1, 1, 1], [0], [0]>} : vector<2x8x16xf32>, vector<2x8x16xf32>, vector<2x8x8xf32> -> vector<2x8x8xf32>
    %cst_16 = arith.constant 0.000000e+00 : f32
    "tpu.trace_stop"() : () -> ()
    %20 = vector.broadcast %cst_16 : f32 to vector<2x1x8xf32>
    %21 = arith.cmpf ogt, %3, %20 : vector<2x1x8xf32>
    %cst_17 = arith.constant -1.000000e+09 : f32
    %22 = vector.shape_cast %21 : vector<2x1x8xi1> to vector<2x1x8xi1>
    %23 = vector.broadcast %22 : vector<2x1x8xi1> to vector<2x8x8xi1>
    %24 = vector.broadcast %cst_17 : f32 to vector<2x8x8xf32>
    %25 = arith.select %23, %19, %24 : vector<2x8x8xi1>, vector<2x8x8xf32>
    %cst_18 = arith.constant dense<0xFF800000> : vector<2x8xf32>
    %26 = vector.multi_reduction <maximumf>, %25, %cst_18 [2] : vector<2x8x8xf32> to vector<2x8xf32>
    %27 = vector.shape_cast %26 : vector<2x8xf32> to vector<2x8x1xf32>
    %28 = vector.broadcast %27 : vector<2x8x1xf32> to vector<2x8x8xf32>
    %29 = arith.subf %25, %28 : vector<2x8x8xf32>
    %30 = math.exp %29 : vector<2x8x8xf32>
    %cst_19 = arith.constant dense<0.000000e+00> : vector<2x8xf32>
    %31 = vector.multi_reduction <add>, %30, %cst_19 [2] : vector<2x8x8xf32> to vector<2x8xf32>
    %32 = vector.shape_cast %31 : vector<2x8xf32> to vector<2x8x1xf32>
    %33 = tpu.reciprocal %32 {approx = true} : vector<2x8x1xf32> -> vector<2x8x1xf32>
    %34 = vector.broadcast %33 : vector<2x8x1xf32> to vector<2x8x8xf32>
    %35 = arith.mulf %30, %34 : vector<2x8x8xf32>
    "tpu.trace_start"() <{level = 10 : i32, message = "bqk,bkd->bqd"}> : () -> ()
    %cst_20 = arith.constant dense<0.000000e+00> : vector<2x8x16xf32>
    %36 = tpu.matmul %35, %18, %cst_20 {dimension_numbers = #tpu.dot_dimension_numbers<[2], [1], [1], [2], [0, 0, 0, 1, 1, 2], [0], [0]>} : vector<2x8x8xf32>, vector<2x8x16xf32>, vector<2x8x16xf32> -> vector<2x8x16xf32>
    "tpu.trace_stop"() : () -> ()
    %37 = vector.shape_cast %36 : vector<2x8x16xf32> to vector<16x16xf32>
    %38 = vector.extract_strided_slice %9 {offsets = [0, 0], sizes = [16, 32], strides = [1, 1]} : vector<32x32xf32> to vector<16x32xf32>
    %cst_21 = arith.constant dense<0.000000e+00> : vector<16x32xf32>
    %39 = tpu.matmul %37, %38, %cst_21 {dimension_numbers = #tpu.dot_dimension_numbers<[1], [0], [0], [1], [0, 0, 1, 1], [], []>} : vector<16x16xf32>, vector<16x32xf32>, vector<16x32xf32> -> vector<16x32xf32>
    %40 = arith.addf %10, %39 : vector<16x32xf32>
    %41 = vector.extract_strided_slice %8 {offsets = [0, 16], sizes = [16, 16], strides = [1, 1]} : vector<16x96xf32> to vector<16x16xf32>
    %42 = vector.shape_cast %41 : vector<16x16xf32> to vector<2x8x16xf32>
    %cst_22 = arith.constant 2.500000e-01 : f32
    %43 = vector.broadcast %cst_22 : f32 to vector<2x8x16xf32>
    %44 = arith.mulf %42, %43 : vector<2x8x16xf32>
    %45 = vector.extract_strided_slice %8 {offsets = [0, 48], sizes = [16, 16], strides = [1, 1]} : vector<16x96xf32> to vector<16x16xf32>
    %46 = vector.shape_cast %45 : vector<16x16xf32> to vector<2x8x16xf32>
    %47 = vector.extract_strided_slice %8 {offsets = [0, 80], sizes = [16, 16], strides = [1, 1]} : vector<16x96xf32> to vector<16x16xf32>
    %48 = vector.shape_cast %47 : vector<16x16xf32> to vector<2x8x16xf32>
    "tpu.trace_start"() <{level = 10 : i32, message = "bqd,bkd->bqk"}> : () -> ()
    %cst_23 = arith.constant dense<0.000000e+00> : vector<2x8x8xf32>
    %49 = tpu.matmul %44, %46, %cst_23 {dimension_numbers = #tpu.dot_dimension_numbers<[2], [2], [1], [1], [0, 0, 0, 1, 1, 1], [0], [0]>} : vector<2x8x16xf32>, vector<2x8x16xf32>, vector<2x8x8xf32> -> vector<2x8x8xf32>
    %cst_24 = arith.constant 0.000000e+00 : f32
    "tpu.trace_stop"() : () -> ()
    %50 = vector.broadcast %cst_24 : f32 to vector<2x1x8xf32>
    %51 = arith.cmpf ogt, %3, %50 : vector<2x1x8xf32>
    %cst_25 = arith.constant -1.000000e+09 : f32
    %52 = vector.shape_cast %51 : vector<2x1x8xi1> to vector<2x1x8xi1>
    %53 = vector.broadcast %52 : vector<2x1x8xi1> to vector<2x8x8xi1>
    %54 = vector.broadcast %cst_25 : f32 to vector<2x8x8xf32>
    %55 = arith.select %53, %49, %54 : vector<2x8x8xi1>, vector<2x8x8xf32>
    %cst_26 = arith.constant dense<0xFF800000> : vector<2x8xf32>
    %56 = vector.multi_reduction <maximumf>, %55, %cst_26 [2] : vector<2x8x8xf32> to vector<2x8xf32>
    %57 = vector.shape_cast %56 : vector<2x8xf32> to vector<2x8x1xf32>
    %58 = vector.broadcast %57 : vector<2x8x1xf32> to vector<2x8x8xf32>
    %59 = arith.subf %55, %58 : vector<2x8x8xf32>
    %60 = math.exp %59 : vector<2x8x8xf32>
    %cst_27 = arith.constant dense<0.000000e+00> : vector<2x8xf32>
    %61 = vector.multi_reduction <add>, %60, %cst_27 [2] : vector<2x8x8xf32> to vector<2x8xf32>
    %62 = vector.shape_cast %61 : vector<2x8xf32> to vector<2x8x1xf32>
    %63 = tpu.reciprocal %62 {approx = true} : vector<2x8x1xf32> -> vector<2x8x1xf32>
    %64 = vector.broadcast %63 : vector<2x8x1xf32> to vector<2x8x8xf32>
    %65 = arith.mulf %60, %64 : vector<2x8x8xf32>
    "tpu.trace_start"() <{level = 10 : i32, message = "bqk,bkd->bqd"}> : () -> ()
    %cst_28 = arith.constant dense<0.000000e+00> : vector<2x8x16xf32>
    %66 = tpu.matmul %65, %48, %cst_28 {dimension_numbers = #tpu.dot_dimension_numbers<[2], [1], [1], [2], [0, 0, 0, 1, 1, 2], [0], [0]>} : vector<2x8x8xf32>, vector<2x8x16xf32>, vector<2x8x16xf32> -> vector<2x8x16xf32>
    "tpu.trace_stop"() : () -> ()
    %67 = vector.shape_cast %66 : vector<2x8x16xf32> to vector<16x16xf32>
    %68 = vector.extract_strided_slice %9 {offsets = [16, 0], sizes = [16, 32], strides = [1, 1]} : vector<32x32xf32> to vector<16x32xf32>
    %cst_29 = arith.constant dense<0.000000e+00> : vector<16x32xf32>
    %69 = tpu.matmul %67, %68, %cst_29 {dimension_numbers = #tpu.dot_dimension_numbers<[1], [0], [0], [1], [0, 0, 1, 1], [], []>} : vector<16x16xf32>, vector<16x32xf32>, vector<16x32xf32> -> vector<16x32xf32>
    %70 = arith.addf %40, %69 : vector<16x32xf32>
    %c0_30 = arith.constant 0 : index
    %c0_31 = arith.constant 0 : index
    %71 = vector.load %arg6[%c0_30, %c0_31] : memref<1x32xf32, #tpu.memory_space<vmem>>, vector<1x32xf32>
    %72 = vector.broadcast %71 : vector<1x32xf32> to vector<16x32xf32>
    %73 = arith.addf %70, %72 : vector<16x32xf32>
    %74 = arith.addf %73, %1 : vector<16x32xf32>
    %c0_32 = arith.constant 0 : index
    %c0_33 = arith.constant 0 : index
    %75 = vector.load %arg7[%c0_32, %c0_33] : memref<1x32xf32, #tpu.memory_space<vmem>>, vector<1x32xf32>
    %c0_34 = arith.constant 0 : index
    %c0_35 = arith.constant 0 : index
    %76 = vector.load %arg8[%c0_34, %c0_35] : memref<1x32xf32, #tpu.memory_space<vmem>>, vector<1x32xf32>
    %cst_36 = arith.constant dense<0.000000e+00> : vector<16xf32>
    %77 = vector.multi_reduction <add>, %74, %cst_36 [1] : vector<16x32xf32> to vector<16xf32>
    %78 = vector.shape_cast %77 : vector<16xf32> to vector<16x1xf32>
    %cst_37 = arith.constant 3.200000e+01 : f32
    %79 = vector.broadcast %cst_37 : f32 to vector<16x1xf32>
    %80 = arith.divf %78, %79 : vector<16x1xf32>
    %81 = vector.broadcast %80 : vector<16x1xf32> to vector<16x32xf32>
    %82 = arith.subf %74, %81 : vector<16x32xf32>
    %83 = arith.mulf %82, %82 : vector<16x32xf32>
    %cst_38 = arith.constant dense<0.000000e+00> : vector<16xf32>
    %84 = vector.multi_reduction <add>, %83, %cst_38 [1] : vector<16x32xf32> to vector<16xf32>
    %85 = vector.shape_cast %84 : vector<16xf32> to vector<16x1xf32>
    %cst_39 = arith.constant 3.200000e+01 : f32
    %86 = vector.broadcast %cst_39 : f32 to vector<16x1xf32>
    %87 = arith.divf %85, %86 : vector<16x1xf32>
    %88 = vector.broadcast %80 : vector<16x1xf32> to vector<16x32xf32>
    %89 = arith.subf %74, %88 : vector<16x32xf32>
    %cst_40 = arith.constant 9.99999974E-6 : f32
    %90 = vector.broadcast %cst_40 : f32 to vector<16x1xf32>
    %91 = arith.addf %87, %90 : vector<16x1xf32>
    %92 = math.rsqrt %91 : vector<16x1xf32>
    %93 = vector.broadcast %92 : vector<16x1xf32> to vector<16x32xf32>
    %94 = arith.mulf %89, %93 : vector<16x32xf32>
    %95 = vector.broadcast %75 : vector<1x32xf32> to vector<16x32xf32>
    %96 = arith.mulf %94, %95 : vector<16x32xf32>
    %97 = vector.broadcast %76 : vector<1x32xf32> to vector<16x32xf32>
    %98 = arith.addf %96, %97 : vector<16x32xf32>
    %99 = vector.broadcast %2 : vector<16x1xf32> to vector<16x32xf32>
    %100 = arith.mulf %98, %99 : vector<16x32xf32>
    %101 = vector.shape_cast %100 : vector<16x32xf32> to vector<2x8x32xf32>
    %cst_41 = arith.constant 0.000000e+00 : f32
    %102 = vector.broadcast %cst_41 : f32 to vector<2x1x32xf32>
    %103 = vector.extract_strided_slice %101 {offsets = [0, 0, 0], sizes = [2, 7, 32], strides = [1, 1, 1]} : vector<2x8x32xf32> to vector<2x7x32xf32>
    %104 = tpu.concatenate %102, %103 in 1 : vector<2x1x32xf32>, vector<2x7x32xf32> -> vector<2x8x32xf32>
    %cst_42 = arith.constant 0.000000e+00 : f32
    %105 = vector.broadcast %cst_42 : f32 to vector<2x1x32xf32>
    %106 = vector.extract_strided_slice %101 {offsets = [0, 1, 0], sizes = [2, 7, 32], strides = [1, 1, 1]} : vector<2x8x32xf32> to vector<2x7x32xf32>
    %107 = tpu.concatenate %106, %105 in 1 : vector<2x7x32xf32>, vector<2x1x32xf32> -> vector<2x8x32xf32>
    %108 = tpu.concatenate %104, %101, %107 in 2 : vector<2x8x32xf32>, vector<2x8x32xf32>, vector<2x8x32xf32> -> vector<2x8x96xf32>
    %109 = vector.shape_cast %108 : vector<2x8x96xf32> to vector<16x96xf32>
    %c0_43 = arith.constant 0 : index
    %c0_44 = arith.constant 0 : index
    %110 = vector.load %arg9[%c0_43, %c0_44] : memref<96x64xf32, #tpu.memory_space<vmem>>, vector<96x64xf32>
    %cst_45 = arith.constant dense<0.000000e+00> : vector<16x64xf32>
    %111 = tpu.matmul %109, %110, %cst_45 {dimension_numbers = #tpu.dot_dimension_numbers<[1], [0], [0], [1], [0, 0, 1, 1], [], []>} : vector<16x96xf32>, vector<96x64xf32>, vector<16x64xf32> -> vector<16x64xf32>
    %c0_46 = arith.constant 0 : index
    %c0_47 = arith.constant 0 : index
    %112 = vector.load %arg10[%c0_46, %c0_47] : memref<1x64xf32, #tpu.memory_space<vmem>>, vector<1x64xf32>
    %113 = vector.broadcast %112 : vector<1x64xf32> to vector<16x64xf32>
    %114 = arith.addf %111, %113 : vector<16x64xf32>
    %cst_48 = arith.constant 0.000000e+00 : f32
    %115 = vector.broadcast %cst_48 : f32 to vector<16x64xf32>
    %116 = arith.maximumf %114, %115 : vector<16x64xf32>
    %c0_49 = arith.constant 0 : index
    %c0_50 = arith.constant 0 : index
    %117 = vector.load %arg11[%c0_49, %c0_50] : memref<64x32xf32, #tpu.memory_space<vmem>>, vector<64x32xf32>
    %cst_51 = arith.constant dense<0.000000e+00> : vector<16x32xf32>
    %118 = tpu.matmul %116, %117, %cst_51 {dimension_numbers = #tpu.dot_dimension_numbers<[1], [0], [0], [1], [0, 0, 1, 1], [], []>} : vector<16x64xf32>, vector<64x32xf32>, vector<16x32xf32> -> vector<16x32xf32>
    %c0_52 = arith.constant 0 : index
    %c0_53 = arith.constant 0 : index
    %119 = vector.load %arg12[%c0_52, %c0_53] : memref<1x32xf32, #tpu.memory_space<vmem>>, vector<1x32xf32>
    %120 = vector.broadcast %119 : vector<1x32xf32> to vector<16x32xf32>
    %121 = arith.addf %118, %120 : vector<16x32xf32>
    %122 = arith.addf %121, %100 : vector<16x32xf32>
    %c0_54 = arith.constant 0 : index
    %c0_55 = arith.constant 0 : index
    %123 = vector.load %arg13[%c0_54, %c0_55] : memref<1x32xf32, #tpu.memory_space<vmem>>, vector<1x32xf32>
    %c0_56 = arith.constant 0 : index
    %c0_57 = arith.constant 0 : index
    %124 = vector.load %arg14[%c0_56, %c0_57] : memref<1x32xf32, #tpu.memory_space<vmem>>, vector<1x32xf32>
    %cst_58 = arith.constant dense<0.000000e+00> : vector<16xf32>
    %125 = vector.multi_reduction <add>, %122, %cst_58 [1] : vector<16x32xf32> to vector<16xf32>
    %126 = vector.shape_cast %125 : vector<16xf32> to vector<16x1xf32>
    %cst_59 = arith.constant 3.200000e+01 : f32
    %127 = vector.broadcast %cst_59 : f32 to vector<16x1xf32>
    %128 = arith.divf %126, %127 : vector<16x1xf32>
    %129 = vector.broadcast %128 : vector<16x1xf32> to vector<16x32xf32>
    %130 = arith.subf %122, %129 : vector<16x32xf32>
    %131 = arith.mulf %130, %130 : vector<16x32xf32>
    %cst_60 = arith.constant dense<0.000000e+00> : vector<16xf32>
    %132 = vector.multi_reduction <add>, %131, %cst_60 [1] : vector<16x32xf32> to vector<16xf32>
    %133 = vector.shape_cast %132 : vector<16xf32> to vector<16x1xf32>
    %cst_61 = arith.constant 3.200000e+01 : f32
    %134 = vector.broadcast %cst_61 : f32 to vector<16x1xf32>
    %135 = arith.divf %133, %134 : vector<16x1xf32>
    %136 = vector.broadcast %128 : vector<16x1xf32> to vector<16x32xf32>
    %137 = arith.subf %122, %136 : vector<16x32xf32>
    %cst_62 = arith.constant 9.99999974E-6 : f32
    %138 = vector.broadcast %cst_62 : f32 to vector<16x1xf32>
    %139 = arith.addf %135, %138 : vector<16x1xf32>
    %140 = math.rsqrt %139 : vector<16x1xf32>
    %141 = vector.broadcast %140 : vector<16x1xf32> to vector<16x32xf32>
    %142 = arith.mulf %137, %141 : vector<16x32xf32>
    %143 = vector.broadcast %123 : vector<1x32xf32> to vector<16x32xf32>
    %144 = arith.mulf %142, %143 : vector<16x32xf32>
    %145 = vector.broadcast %124 : vector<1x32xf32> to vector<16x32xf32>
    %146 = arith.addf %144, %145 : vector<16x32xf32>
    %147 = vector.broadcast %2 : vector<16x1xf32> to vector<16x32xf32>
    %148 = arith.mulf %146, %147 : vector<16x32xf32>
    %149 = vector.shape_cast %148 : vector<16x32xf32> to vector<2x8x32xf32>
    %c0_63 = arith.constant 0 : index
    %c0_64 = arith.constant 0 : index
    %c0_65 = arith.constant 0 : index
    %150 = vector.load %arg15[%c0_63, %c0_64, %c0_65] : memref<2x8x32xf32, #tpu.memory_space<vmem>>, vector<2x8x32xf32>
    tpu.vector_store %arg15[%c0_63, %c0_64, %c0_65], %149 {strides = array<i32>} : memref<2x8x32xf32, #tpu.memory_space<vmem>>, vector<2x8x32xf32>,
    return
  }
}

module attributes {stable_mosaic.version = 11 : i64} {
  func.func @_dur_lr_kernel(%arg0: memref<2x8x32xf32, #tpu.memory_space<vmem>>, %arg1: memref<2x16x8xf32, #tpu.memory_space<vmem>>, %arg2: memref<96x32xf32, #tpu.memory_space<vmem>>, %arg3: memref<1x32xf32, #tpu.memory_space<vmem>>, %arg4: memref<1x32xf32, #tpu.memory_space<vmem>>, %arg5: memref<1x32xf32, #tpu.memory_space<vmem>>, %arg6: memref<96x32xf32, #tpu.memory_space<vmem>>, %arg7: memref<1x32xf32, #tpu.memory_space<vmem>>, %arg8: memref<1x32xf32, #tpu.memory_space<vmem>>, %arg9: memref<1x32xf32, #tpu.memory_space<vmem>>, %arg10: memref<1x32xf32, #tpu.memory_space<vmem>>, %arg11: memref<1x1xf32, #tpu.memory_space<vmem>>, %arg12: memref<2x16x32xf32, #tpu.memory_space<vmem>>, %arg13: memref<2x8xf32, #tpu.memory_space<vmem>>) attributes {dimension_semantics = [], scalar_prefetch = 0 : i64, scratch_operands = 0 : i64, tpu.core_type = #tpu.core_type<tc>} {
    %c0 = arith.constant 0 : index
    %c0_0 = arith.constant 0 : index
    %c0_1 = arith.constant 0 : index
    %0 = vector.load %arg0[%c0, %c0_0, %c0_1] : memref<2x8x32xf32, #tpu.memory_space<vmem>>, vector<2x8x32xf32>
    %cst = arith.constant 0.000000e+00 : f32
    %1 = vector.broadcast %cst : f32 to vector<2x1x32xf32>
    %2 = vector.extract_strided_slice %0 {offsets = [0, 0, 0], sizes = [2, 7, 32], strides = [1, 1, 1]} : vector<2x8x32xf32> to vector<2x7x32xf32>
    %3 = tpu.concatenate %1, %2 in 1 : vector<2x1x32xf32>, vector<2x7x32xf32> -> vector<2x8x32xf32>
    %cst_2 = arith.constant 0.000000e+00 : f32
    %4 = vector.broadcast %cst_2 : f32 to vector<2x1x32xf32>
    %5 = vector.extract_strided_slice %0 {offsets = [0, 1, 0], sizes = [2, 7, 32], strides = [1, 1, 1]} : vector<2x8x32xf32> to vector<2x7x32xf32>
    %6 = tpu.concatenate %5, %4 in 1 : vector<2x7x32xf32>, vector<2x1x32xf32> -> vector<2x8x32xf32>
    %7 = tpu.concatenate %3, %0, %6 in 2 : vector<2x8x32xf32>, vector<2x8x32xf32>, vector<2x8x32xf32> -> vector<2x8x96xf32>
    %8 = vector.shape_cast %7 : vector<2x8x96xf32> to vector<16x96xf32>
    %c0_3 = arith.constant 0 : index
    %c0_4 = arith.constant 0 : index
    %9 = vector.load %arg2[%c0_3, %c0_4] : memref<96x32xf32, #tpu.memory_space<vmem>>, vector<96x32xf32>
    %cst_5 = arith.constant dense<0.000000e+00> : vector<16x32xf32>
    %10 = tpu.matmul %8, %9, %cst_5 {dimension_numbers = #tpu.dot_dimension_numbers<[1], [0], [0], [1], [0, 0, 1, 1], [], []>} : vector<16x96xf32>, vector<96x32xf32>, vector<16x32xf32> -> vector<16x32xf32>
    %c0_6 = arith.constant 0 : index
    %c0_7 = arith.constant 0 : index
    %11 = vector.load %arg3[%c0_6, %c0_7] : memref<1x32xf32, #tpu.memory_space<vmem>>, vector<1x32xf32>
    %12 = vector.broadcast %11 : vector<1x32xf32> to vector<16x32xf32>
    %13 = arith.addf %10, %12 : vector<16x32xf32>
    %c0_8 = arith.constant 0 : index
    %c0_9 = arith.constant 0 : index
    %14 = vector.load %arg4[%c0_8, %c0_9] : memref<1x32xf32, #tpu.memory_space<vmem>>, vector<1x32xf32>
    %c0_10 = arith.constant 0 : index
    %c0_11 = arith.constant 0 : index
    %15 = vector.load %arg5[%c0_10, %c0_11] : memref<1x32xf32, #tpu.memory_space<vmem>>, vector<1x32xf32>
    %cst_12 = arith.constant dense<0.000000e+00> : vector<16xf32>
    %16 = vector.multi_reduction <add>, %13, %cst_12 [1] : vector<16x32xf32> to vector<16xf32>
    %17 = vector.shape_cast %16 : vector<16xf32> to vector<16x1xf32>
    %cst_13 = arith.constant 3.200000e+01 : f32
    %18 = vector.broadcast %cst_13 : f32 to vector<16x1xf32>
    %19 = arith.divf %17, %18 : vector<16x1xf32>
    %20 = vector.broadcast %19 : vector<16x1xf32> to vector<16x32xf32>
    %21 = arith.subf %13, %20 : vector<16x32xf32>
    %22 = arith.mulf %21, %21 : vector<16x32xf32>
    %cst_14 = arith.constant dense<0.000000e+00> : vector<16xf32>
    %23 = vector.multi_reduction <add>, %22, %cst_14 [1] : vector<16x32xf32> to vector<16xf32>
    %24 = vector.shape_cast %23 : vector<16xf32> to vector<16x1xf32>
    %cst_15 = arith.constant 3.200000e+01 : f32
    %25 = vector.broadcast %cst_15 : f32 to vector<16x1xf32>
    %26 = arith.divf %24, %25 : vector<16x1xf32>
    %27 = vector.broadcast %19 : vector<16x1xf32> to vector<16x32xf32>
    %28 = arith.subf %13, %27 : vector<16x32xf32>
    %cst_16 = arith.constant 9.99999974E-6 : f32
    %29 = vector.broadcast %cst_16 : f32 to vector<16x1xf32>
    %30 = arith.addf %26, %29 : vector<16x1xf32>
    %31 = math.rsqrt %30 : vector<16x1xf32>
    %32 = vector.broadcast %31 : vector<16x1xf32> to vector<16x32xf32>
    %33 = arith.mulf %28, %32 : vector<16x32xf32>
    %34 = vector.broadcast %14 : vector<1x32xf32> to vector<16x32xf32>
    %35 = arith.mulf %33, %34 : vector<16x32xf32>
    %36 = vector.broadcast %15 : vector<1x32xf32> to vector<16x32xf32>
    %37 = arith.addf %35, %36 : vector<16x32xf32>
    %cst_17 = arith.constant 0.000000e+00 : f32
    %38 = vector.broadcast %cst_17 : f32 to vector<16x32xf32>
    %39 = arith.maximumf %37, %38 : vector<16x32xf32>
    %40 = vector.shape_cast %39 : vector<16x32xf32> to vector<2x8x32xf32>
    %cst_18 = arith.constant 0.000000e+00 : f32
    %41 = vector.broadcast %cst_18 : f32 to vector<2x1x32xf32>
    %42 = vector.extract_strided_slice %40 {offsets = [0, 0, 0], sizes = [2, 7, 32], strides = [1, 1, 1]} : vector<2x8x32xf32> to vector<2x7x32xf32>
    %43 = tpu.concatenate %41, %42 in 1 : vector<2x1x32xf32>, vector<2x7x32xf32> -> vector<2x8x32xf32>
    %cst_19 = arith.constant 0.000000e+00 : f32
    %44 = vector.broadcast %cst_19 : f32 to vector<2x1x32xf32>
    %45 = vector.extract_strided_slice %40 {offsets = [0, 1, 0], sizes = [2, 7, 32], strides = [1, 1, 1]} : vector<2x8x32xf32> to vector<2x7x32xf32>
    %46 = tpu.concatenate %45, %44 in 1 : vector<2x7x32xf32>, vector<2x1x32xf32> -> vector<2x8x32xf32>
    %47 = tpu.concatenate %43, %40, %46 in 2 : vector<2x8x32xf32>, vector<2x8x32xf32>, vector<2x8x32xf32> -> vector<2x8x96xf32>
    %48 = vector.shape_cast %47 : vector<2x8x96xf32> to vector<16x96xf32>
    %c0_20 = arith.constant 0 : index
    %c0_21 = arith.constant 0 : index
    %49 = vector.load %arg6[%c0_20, %c0_21] : memref<96x32xf32, #tpu.memory_space<vmem>>, vector<96x32xf32>
    %cst_22 = arith.constant dense<0.000000e+00> : vector<16x32xf32>
    %50 = tpu.matmul %48, %49, %cst_22 {dimension_numbers = #tpu.dot_dimension_numbers<[1], [0], [0], [1], [0, 0, 1, 1], [], []>} : vector<16x96xf32>, vector<96x32xf32>, vector<16x32xf32> -> vector<16x32xf32>
    %c0_23 = arith.constant 0 : index
    %c0_24 = arith.constant 0 : index
    %51 = vector.load %arg7[%c0_23, %c0_24] : memref<1x32xf32, #tpu.memory_space<vmem>>, vector<1x32xf32>
    %52 = vector.broadcast %51 : vector<1x32xf32> to vector<16x32xf32>
    %53 = arith.addf %50, %52 : vector<16x32xf32>
    %c0_25 = arith.constant 0 : index
    %c0_26 = arith.constant 0 : index
    %54 = vector.load %arg8[%c0_25, %c0_26] : memref<1x32xf32, #tpu.memory_space<vmem>>, vector<1x32xf32>
    %c0_27 = arith.constant 0 : index
    %c0_28 = arith.constant 0 : index
    %55 = vector.load %arg9[%c0_27, %c0_28] : memref<1x32xf32, #tpu.memory_space<vmem>>, vector<1x32xf32>
    %cst_29 = arith.constant dense<0.000000e+00> : vector<16xf32>
    %56 = vector.multi_reduction <add>, %53, %cst_29 [1] : vector<16x32xf32> to vector<16xf32>
    %57 = vector.shape_cast %56 : vector<16xf32> to vector<16x1xf32>
    %cst_30 = arith.constant 3.200000e+01 : f32
    %58 = vector.broadcast %cst_30 : f32 to vector<16x1xf32>
    %59 = arith.divf %57, %58 : vector<16x1xf32>
    %60 = vector.broadcast %59 : vector<16x1xf32> to vector<16x32xf32>
    %61 = arith.subf %53, %60 : vector<16x32xf32>
    %62 = arith.mulf %61, %61 : vector<16x32xf32>
    %cst_31 = arith.constant dense<0.000000e+00> : vector<16xf32>
    %63 = vector.multi_reduction <add>, %62, %cst_31 [1] : vector<16x32xf32> to vector<16xf32>
    %64 = vector.shape_cast %63 : vector<16xf32> to vector<16x1xf32>
    %cst_32 = arith.constant 3.200000e+01 : f32
    %65 = vector.broadcast %cst_32 : f32 to vector<16x1xf32>
    %66 = arith.divf %64, %65 : vector<16x1xf32>
    %67 = vector.broadcast %59 : vector<16x1xf32> to vector<16x32xf32>
    %68 = arith.subf %53, %67 : vector<16x32xf32>
    %cst_33 = arith.constant 9.99999974E-6 : f32
    %69 = vector.broadcast %cst_33 : f32 to vector<16x1xf32>
    %70 = arith.addf %66, %69 : vector<16x1xf32>
    %71 = math.rsqrt %70 : vector<16x1xf32>
    %72 = vector.broadcast %71 : vector<16x1xf32> to vector<16x32xf32>
    %73 = arith.mulf %68, %72 : vector<16x32xf32>
    %74 = vector.broadcast %54 : vector<1x32xf32> to vector<16x32xf32>
    %75 = arith.mulf %73, %74 : vector<16x32xf32>
    %76 = vector.broadcast %55 : vector<1x32xf32> to vector<16x32xf32>
    %77 = arith.addf %75, %76 : vector<16x32xf32>
    %cst_34 = arith.constant 0.000000e+00 : f32
    %78 = vector.broadcast %cst_34 : f32 to vector<16x32xf32>
    %79 = arith.maximumf %77, %78 : vector<16x32xf32>
    %c0_35 = arith.constant 0 : index
    %c0_36 = arith.constant 0 : index
    %80 = vector.load %arg10[%c0_35, %c0_36] : memref<1x32xf32, #tpu.memory_space<vmem>>, vector<1x32xf32>
    %81 = vector.broadcast %80 : vector<1x32xf32> to vector<16x32xf32>
    %82 = arith.mulf %79, %81 : vector<16x32xf32>
    %cst_37 = arith.constant dense<0.000000e+00> : vector<16xf32>
    %83 = vector.multi_reduction <add>, %82, %cst_37 [1] : vector<16x32xf32> to vector<16xf32>
    %84 = vector.shape_cast %83 : vector<16xf32> to vector<16x1xf32>
    %c0_38 = arith.constant 0 : index
    %c0_39 = arith.constant 0 : index
    %85 = vector.load %arg11[%c0_38, %c0_39] : memref<1x1xf32, #tpu.memory_space<vmem>>, vector<1x1xf32>
    %86 = vector.broadcast %85 : vector<1x1xf32> to vector<16x1xf32>
    %87 = arith.addf %84, %86 : vector<16x1xf32>
    %cst_40 = arith.constant 0.000000e+00 : f32
    %88 = vector.broadcast %cst_40 : f32 to vector<16x1xf32>
    %89 = arith.maximumf %87, %88 : vector<16x1xf32>
    %90 = vector.shape_cast %89 : vector<16x1xf32> to vector<2x8xf32>
    %c0_41 = arith.constant 0 : index
    %c0_42 = arith.constant 0 : index
    %91 = vector.load %arg13[%c0_41, %c0_42] : memref<2x8xf32, #tpu.memory_space<vmem>>, vector<2x8xf32>
    tpu.vector_store %arg13[%c0_41, %c0_42], %90 {strides = array<i32>} : memref<2x8xf32, #tpu.memory_space<vmem>>, vector<2x8xf32>,
    %c0_43 = arith.constant 0 : index
    %c0_44 = arith.constant 0 : index
    %c0_45 = arith.constant 0 : index
    %92 = vector.load %arg1[%c0_43, %c0_44, %c0_45] : memref<2x16x8xf32, #tpu.memory_space<vmem>>, vector<2x16x8xf32>
    "tpu.trace_start"() <{level = 10 : i32, message = "bms,bsd->bmd"}> : () -> ()
    %cst_46 = arith.constant dense<0.000000e+00> : vector<2x16x32xf32>
    %93 = tpu.matmul %92, %0, %cst_46 {dimension_numbers = #tpu.dot_dimension_numbers<[2], [1], [1], [2], [0, 0, 0, 1, 1, 2], [0], [0]>} : vector<2x16x8xf32>, vector<2x8x32xf32>, vector<2x16x32xf32> -> vector<2x16x32xf32>
    "tpu.trace_stop"() : () -> ()
    %c0_47 = arith.constant 0 : index
    %c0_48 = arith.constant 0 : index
    %c0_49 = arith.constant 0 : index
    %94 = vector.load %arg12[%c0_47, %c0_48, %c0_49] : memref<2x16x32xf32, #tpu.memory_space<vmem>>, vector<2x16x32xf32>
    tpu.vector_store %arg12[%c0_47, %c0_48, %c0_49], %93 {strides = array<i32>} : memref<2x16x32xf32, #tpu.memory_space<vmem>>, vector<2x16x32xf32>,
    return
  }
}

module attributes {stable_mosaic.version = 11 : i64} {
  func.func @_fft_block_kernel(%arg0: memref<2x16x32xf32, #tpu.memory_space<vmem>>, %arg1: memref<32x1xf32, #tpu.memory_space<vmem>>, %arg2: memref<2x1x16xf32, #tpu.memory_space<vmem>>, %arg3: memref<32x96xf32, #tpu.memory_space<vmem>>, %arg4: memref<1x96xf32, #tpu.memory_space<vmem>>, %arg5: memref<32x32xf32, #tpu.memory_space<vmem>>, %arg6: memref<1x32xf32, #tpu.memory_space<vmem>>, %arg7: memref<1x32xf32, #tpu.memory_space<vmem>>, %arg8: memref<1x32xf32, #tpu.memory_space<vmem>>, %arg9: memref<96x64xf32, #tpu.memory_space<vmem>>, %arg10: memref<1x64xf32, #tpu.memory_space<vmem>>, %arg11: memref<64x32xf32, #tpu.memory_space<vmem>>, %arg12: memref<1x32xf32, #tpu.memory_space<vmem>>, %arg13: memref<1x32xf32, #tpu.memory_space<vmem>>, %arg14: memref<1x32xf32, #tpu.memory_space<vmem>>, %arg15: memref<2x16x32xf32, #tpu.memory_space<vmem>>) attributes {dimension_semantics = [], scalar_prefetch = 0 : i64, scratch_operands = 0 : i64, tpu.core_type = #tpu.core_type<tc>} {
    %c0 = arith.constant 0 : index
    %c0_0 = arith.constant 0 : index
    %c0_1 = arith.constant 0 : index
    %0 = vector.load %arg0[%c0, %c0_0, %c0_1] : memref<2x16x32xf32, #tpu.memory_space<vmem>>, vector<2x16x32xf32>
    %1 = vector.shape_cast %0 : vector<2x16x32xf32> to vector<32x32xf32>
    %c0_2 = arith.constant 0 : index
    %c0_3 = arith.constant 0 : index
    %2 = vector.load %arg1[%c0_2, %c0_3] : memref<32x1xf32, #tpu.memory_space<vmem>>, vector<32x1xf32>
    %c0_4 = arith.constant 0 : index
    %c0_5 = arith.constant 0 : index
    %c0_6 = arith.constant 0 : index
    %3 = vector.load %arg2[%c0_4, %c0_5, %c0_6] : memref<2x1x16xf32, #tpu.memory_space<vmem>>, vector<2x1x16xf32>
    %c0_7 = arith.constant 0 : index
    %c0_8 = arith.constant 0 : index
    %4 = vector.load %arg3[%c0_7, %c0_8] : memref<32x96xf32, #tpu.memory_space<vmem>>, vector<32x96xf32>
    %cst = arith.constant dense<0.000000e+00> : vector<32x96xf32>
    %5 = tpu.matmul %1, %4, %cst {dimension_numbers = #tpu.dot_dimension_numbers<[1], [0], [0], [1], [0, 0, 1, 1], [], []>} : vector<32x32xf32>, vector<32x96xf32>, vector<32x96xf32> -> vector<32x96xf32>
    %c0_9 = arith.constant 0 : index
    %c0_10 = arith.constant 0 : index
    %6 = vector.load %arg4[%c0_9, %c0_10] : memref<1x96xf32, #tpu.memory_space<vmem>>, vector<1x96xf32>
    %7 = vector.broadcast %6 : vector<1x96xf32> to vector<32x96xf32>
    %8 = arith.addf %5, %7 : vector<32x96xf32>
    %c0_11 = arith.constant 0 : index
    %c0_12 = arith.constant 0 : index
    %9 = vector.load %arg5[%c0_11, %c0_12] : memref<32x32xf32, #tpu.memory_space<vmem>>, vector<32x32xf32>
    %cst_13 = arith.constant 0.000000e+00 : f32
    %10 = vector.broadcast %cst_13 : f32 to vector<32x32xf32>
    %11 = vector.extract_strided_slice %8 {offsets = [0, 0], sizes = [32, 16], strides = [1, 1]} : vector<32x96xf32> to vector<32x16xf32>
    %12 = vector.shape_cast %11 : vector<32x16xf32> to vector<2x16x16xf32>
    %cst_14 = arith.constant 2.500000e-01 : f32
    %13 = vector.broadcast %cst_14 : f32 to vector<2x16x16xf32>
    %14 = arith.mulf %12, %13 : vector<2x16x16xf32>
    %15 = vector.extract_strided_slice %8 {offsets = [0, 32], sizes = [32, 16], strides = [1, 1]} : vector<32x96xf32> to vector<32x16xf32>
    %16 = vector.shape_cast %15 : vector<32x16xf32> to vector<2x16x16xf32>
    %17 = vector.extract_strided_slice %8 {offsets = [0, 64], sizes = [32, 16], strides = [1, 1]} : vector<32x96xf32> to vector<32x16xf32>
    %18 = vector.shape_cast %17 : vector<32x16xf32> to vector<2x16x16xf32>
    "tpu.trace_start"() <{level = 10 : i32, message = "bqd,bkd->bqk"}> : () -> ()
    %cst_15 = arith.constant dense<0.000000e+00> : vector<2x16x16xf32>
    %19 = tpu.matmul %14, %16, %cst_15 {dimension_numbers = #tpu.dot_dimension_numbers<[2], [2], [1], [1], [0, 0, 0, 1, 1, 1], [0], [0]>} : vector<2x16x16xf32>, vector<2x16x16xf32>, vector<2x16x16xf32> -> vector<2x16x16xf32>
    %cst_16 = arith.constant 0.000000e+00 : f32
    "tpu.trace_stop"() : () -> ()
    %20 = vector.broadcast %cst_16 : f32 to vector<2x1x16xf32>
    %21 = arith.cmpf ogt, %3, %20 : vector<2x1x16xf32>
    %cst_17 = arith.constant -1.000000e+09 : f32
    %22 = vector.shape_cast %21 : vector<2x1x16xi1> to vector<2x1x16xi1>
    %23 = vector.broadcast %22 : vector<2x1x16xi1> to vector<2x16x16xi1>
    %24 = vector.broadcast %cst_17 : f32 to vector<2x16x16xf32>
    %25 = arith.select %23, %19, %24 : vector<2x16x16xi1>, vector<2x16x16xf32>
    %cst_18 = arith.constant dense<0xFF800000> : vector<2x16xf32>
    %26 = vector.multi_reduction <maximumf>, %25, %cst_18 [2] : vector<2x16x16xf32> to vector<2x16xf32>
    %27 = vector.shape_cast %26 : vector<2x16xf32> to vector<2x16x1xf32>
    %28 = vector.broadcast %27 : vector<2x16x1xf32> to vector<2x16x16xf32>
    %29 = arith.subf %25, %28 : vector<2x16x16xf32>
    %30 = math.exp %29 : vector<2x16x16xf32>
    %cst_19 = arith.constant dense<0.000000e+00> : vector<2x16xf32>
    %31 = vector.multi_reduction <add>, %30, %cst_19 [2] : vector<2x16x16xf32> to vector<2x16xf32>
    %32 = vector.shape_cast %31 : vector<2x16xf32> to vector<2x16x1xf32>
    %33 = tpu.reciprocal %32 {approx = true} : vector<2x16x1xf32> -> vector<2x16x1xf32>
    %34 = vector.broadcast %33 : vector<2x16x1xf32> to vector<2x16x16xf32>
    %35 = arith.mulf %30, %34 : vector<2x16x16xf32>
    "tpu.trace_start"() <{level = 10 : i32, message = "bqk,bkd->bqd"}> : () -> ()
    %cst_20 = arith.constant dense<0.000000e+00> : vector<2x16x16xf32>
    %36 = tpu.matmul %35, %18, %cst_20 {dimension_numbers = #tpu.dot_dimension_numbers<[2], [1], [1], [2], [0, 0, 0, 1, 1, 2], [0], [0]>} : vector<2x16x16xf32>, vector<2x16x16xf32>, vector<2x16x16xf32> -> vector<2x16x16xf32>
    "tpu.trace_stop"() : () -> ()
    %37 = vector.shape_cast %36 : vector<2x16x16xf32> to vector<32x16xf32>
    %38 = vector.extract_strided_slice %9 {offsets = [0, 0], sizes = [16, 32], strides = [1, 1]} : vector<32x32xf32> to vector<16x32xf32>
    %cst_21 = arith.constant dense<0.000000e+00> : vector<32x32xf32>
    %39 = tpu.matmul %37, %38, %cst_21 {dimension_numbers = #tpu.dot_dimension_numbers<[1], [0], [0], [1], [0, 0, 1, 1], [], []>} : vector<32x16xf32>, vector<16x32xf32>, vector<32x32xf32> -> vector<32x32xf32>
    %40 = arith.addf %10, %39 : vector<32x32xf32>
    %41 = vector.extract_strided_slice %8 {offsets = [0, 16], sizes = [32, 16], strides = [1, 1]} : vector<32x96xf32> to vector<32x16xf32>
    %42 = vector.shape_cast %41 : vector<32x16xf32> to vector<2x16x16xf32>
    %cst_22 = arith.constant 2.500000e-01 : f32
    %43 = vector.broadcast %cst_22 : f32 to vector<2x16x16xf32>
    %44 = arith.mulf %42, %43 : vector<2x16x16xf32>
    %45 = vector.extract_strided_slice %8 {offsets = [0, 48], sizes = [32, 16], strides = [1, 1]} : vector<32x96xf32> to vector<32x16xf32>
    %46 = vector.shape_cast %45 : vector<32x16xf32> to vector<2x16x16xf32>
    %47 = vector.extract_strided_slice %8 {offsets = [0, 80], sizes = [32, 16], strides = [1, 1]} : vector<32x96xf32> to vector<32x16xf32>
    %48 = vector.shape_cast %47 : vector<32x16xf32> to vector<2x16x16xf32>
    "tpu.trace_start"() <{level = 10 : i32, message = "bqd,bkd->bqk"}> : () -> ()
    %cst_23 = arith.constant dense<0.000000e+00> : vector<2x16x16xf32>
    %49 = tpu.matmul %44, %46, %cst_23 {dimension_numbers = #tpu.dot_dimension_numbers<[2], [2], [1], [1], [0, 0, 0, 1, 1, 1], [0], [0]>} : vector<2x16x16xf32>, vector<2x16x16xf32>, vector<2x16x16xf32> -> vector<2x16x16xf32>
    %cst_24 = arith.constant 0.000000e+00 : f32
    "tpu.trace_stop"() : () -> ()
    %50 = vector.broadcast %cst_24 : f32 to vector<2x1x16xf32>
    %51 = arith.cmpf ogt, %3, %50 : vector<2x1x16xf32>
    %cst_25 = arith.constant -1.000000e+09 : f32
    %52 = vector.shape_cast %51 : vector<2x1x16xi1> to vector<2x1x16xi1>
    %53 = vector.broadcast %52 : vector<2x1x16xi1> to vector<2x16x16xi1>
    %54 = vector.broadcast %cst_25 : f32 to vector<2x16x16xf32>
    %55 = arith.select %53, %49, %54 : vector<2x16x16xi1>, vector<2x16x16xf32>
    %cst_26 = arith.constant dense<0xFF800000> : vector<2x16xf32>
    %56 = vector.multi_reduction <maximumf>, %55, %cst_26 [2] : vector<2x16x16xf32> to vector<2x16xf32>
    %57 = vector.shape_cast %56 : vector<2x16xf32> to vector<2x16x1xf32>
    %58 = vector.broadcast %57 : vector<2x16x1xf32> to vector<2x16x16xf32>
    %59 = arith.subf %55, %58 : vector<2x16x16xf32>
    %60 = math.exp %59 : vector<2x16x16xf32>
    %cst_27 = arith.constant dense<0.000000e+00> : vector<2x16xf32>
    %61 = vector.multi_reduction <add>, %60, %cst_27 [2] : vector<2x16x16xf32> to vector<2x16xf32>
    %62 = vector.shape_cast %61 : vector<2x16xf32> to vector<2x16x1xf32>
    %63 = tpu.reciprocal %62 {approx = true} : vector<2x16x1xf32> -> vector<2x16x1xf32>
    %64 = vector.broadcast %63 : vector<2x16x1xf32> to vector<2x16x16xf32>
    %65 = arith.mulf %60, %64 : vector<2x16x16xf32>
    "tpu.trace_start"() <{level = 10 : i32, message = "bqk,bkd->bqd"}> : () -> ()
    %cst_28 = arith.constant dense<0.000000e+00> : vector<2x16x16xf32>
    %66 = tpu.matmul %65, %48, %cst_28 {dimension_numbers = #tpu.dot_dimension_numbers<[2], [1], [1], [2], [0, 0, 0, 1, 1, 2], [0], [0]>} : vector<2x16x16xf32>, vector<2x16x16xf32>, vector<2x16x16xf32> -> vector<2x16x16xf32>
    "tpu.trace_stop"() : () -> ()
    %67 = vector.shape_cast %66 : vector<2x16x16xf32> to vector<32x16xf32>
    %68 = vector.extract_strided_slice %9 {offsets = [16, 0], sizes = [16, 32], strides = [1, 1]} : vector<32x32xf32> to vector<16x32xf32>
    %cst_29 = arith.constant dense<0.000000e+00> : vector<32x32xf32>
    %69 = tpu.matmul %67, %68, %cst_29 {dimension_numbers = #tpu.dot_dimension_numbers<[1], [0], [0], [1], [0, 0, 1, 1], [], []>} : vector<32x16xf32>, vector<16x32xf32>, vector<32x32xf32> -> vector<32x32xf32>
    %70 = arith.addf %40, %69 : vector<32x32xf32>
    %c0_30 = arith.constant 0 : index
    %c0_31 = arith.constant 0 : index
    %71 = vector.load %arg6[%c0_30, %c0_31] : memref<1x32xf32, #tpu.memory_space<vmem>>, vector<1x32xf32>
    %72 = vector.broadcast %71 : vector<1x32xf32> to vector<32x32xf32>
    %73 = arith.addf %70, %72 : vector<32x32xf32>
    %74 = arith.addf %73, %1 : vector<32x32xf32>
    %c0_32 = arith.constant 0 : index
    %c0_33 = arith.constant 0 : index
    %75 = vector.load %arg7[%c0_32, %c0_33] : memref<1x32xf32, #tpu.memory_space<vmem>>, vector<1x32xf32>
    %c0_34 = arith.constant 0 : index
    %c0_35 = arith.constant 0 : index
    %76 = vector.load %arg8[%c0_34, %c0_35] : memref<1x32xf32, #tpu.memory_space<vmem>>, vector<1x32xf32>
    %cst_36 = arith.constant dense<0.000000e+00> : vector<32xf32>
    %77 = vector.multi_reduction <add>, %74, %cst_36 [1] : vector<32x32xf32> to vector<32xf32>
    %78 = vector.shape_cast %77 : vector<32xf32> to vector<32x1xf32>
    %cst_37 = arith.constant 3.200000e+01 : f32
    %79 = vector.broadcast %cst_37 : f32 to vector<32x1xf32>
    %80 = arith.divf %78, %79 : vector<32x1xf32>
    %81 = vector.broadcast %80 : vector<32x1xf32> to vector<32x32xf32>
    %82 = arith.subf %74, %81 : vector<32x32xf32>
    %83 = arith.mulf %82, %82 : vector<32x32xf32>
    %cst_38 = arith.constant dense<0.000000e+00> : vector<32xf32>
    %84 = vector.multi_reduction <add>, %83, %cst_38 [1] : vector<32x32xf32> to vector<32xf32>
    %85 = vector.shape_cast %84 : vector<32xf32> to vector<32x1xf32>
    %cst_39 = arith.constant 3.200000e+01 : f32
    %86 = vector.broadcast %cst_39 : f32 to vector<32x1xf32>
    %87 = arith.divf %85, %86 : vector<32x1xf32>
    %88 = vector.broadcast %80 : vector<32x1xf32> to vector<32x32xf32>
    %89 = arith.subf %74, %88 : vector<32x32xf32>
    %cst_40 = arith.constant 9.99999974E-6 : f32
    %90 = vector.broadcast %cst_40 : f32 to vector<32x1xf32>
    %91 = arith.addf %87, %90 : vector<32x1xf32>
    %92 = math.rsqrt %91 : vector<32x1xf32>
    %93 = vector.broadcast %92 : vector<32x1xf32> to vector<32x32xf32>
    %94 = arith.mulf %89, %93 : vector<32x32xf32>
    %95 = vector.broadcast %75 : vector<1x32xf32> to vector<32x32xf32>
    %96 = arith.mulf %94, %95 : vector<32x32xf32>
    %97 = vector.broadcast %76 : vector<1x32xf32> to vector<32x32xf32>
    %98 = arith.addf %96, %97 : vector<32x32xf32>
    %99 = vector.broadcast %2 : vector<32x1xf32> to vector<32x32xf32>
    %100 = arith.mulf %98, %99 : vector<32x32xf32>
    %101 = vector.shape_cast %100 : vector<32x32xf32> to vector<2x16x32xf32>
    %cst_41 = arith.constant 0.000000e+00 : f32
    %102 = vector.broadcast %cst_41 : f32 to vector<2x1x32xf32>
    %103 = vector.extract_strided_slice %101 {offsets = [0, 0, 0], sizes = [2, 15, 32], strides = [1, 1, 1]} : vector<2x16x32xf32> to vector<2x15x32xf32>
    %104 = tpu.concatenate %102, %103 in 1 : vector<2x1x32xf32>, vector<2x15x32xf32> -> vector<2x16x32xf32>
    %cst_42 = arith.constant 0.000000e+00 : f32
    %105 = vector.broadcast %cst_42 : f32 to vector<2x1x32xf32>
    %106 = vector.extract_strided_slice %101 {offsets = [0, 1, 0], sizes = [2, 15, 32], strides = [1, 1, 1]} : vector<2x16x32xf32> to vector<2x15x32xf32>
    %107 = tpu.concatenate %106, %105 in 1 : vector<2x15x32xf32>, vector<2x1x32xf32> -> vector<2x16x32xf32>
    %108 = tpu.concatenate %104, %101, %107 in 2 : vector<2x16x32xf32>, vector<2x16x32xf32>, vector<2x16x32xf32> -> vector<2x16x96xf32>
    %109 = vector.shape_cast %108 : vector<2x16x96xf32> to vector<32x96xf32>
    %c0_43 = arith.constant 0 : index
    %c0_44 = arith.constant 0 : index
    %110 = vector.load %arg9[%c0_43, %c0_44] : memref<96x64xf32, #tpu.memory_space<vmem>>, vector<96x64xf32>
    %cst_45 = arith.constant dense<0.000000e+00> : vector<32x64xf32>
    %111 = tpu.matmul %109, %110, %cst_45 {dimension_numbers = #tpu.dot_dimension_numbers<[1], [0], [0], [1], [0, 0, 1, 1], [], []>} : vector<32x96xf32>, vector<96x64xf32>, vector<32x64xf32> -> vector<32x64xf32>
    %c0_46 = arith.constant 0 : index
    %c0_47 = arith.constant 0 : index
    %112 = vector.load %arg10[%c0_46, %c0_47] : memref<1x64xf32, #tpu.memory_space<vmem>>, vector<1x64xf32>
    %113 = vector.broadcast %112 : vector<1x64xf32> to vector<32x64xf32>
    %114 = arith.addf %111, %113 : vector<32x64xf32>
    %cst_48 = arith.constant 0.000000e+00 : f32
    %115 = vector.broadcast %cst_48 : f32 to vector<32x64xf32>
    %116 = arith.maximumf %114, %115 : vector<32x64xf32>
    %c0_49 = arith.constant 0 : index
    %c0_50 = arith.constant 0 : index
    %117 = vector.load %arg11[%c0_49, %c0_50] : memref<64x32xf32, #tpu.memory_space<vmem>>, vector<64x32xf32>
    %cst_51 = arith.constant dense<0.000000e+00> : vector<32x32xf32>
    %118 = tpu.matmul %116, %117, %cst_51 {dimension_numbers = #tpu.dot_dimension_numbers<[1], [0], [0], [1], [0, 0, 1, 1], [], []>} : vector<32x64xf32>, vector<64x32xf32>, vector<32x32xf32> -> vector<32x32xf32>
    %c0_52 = arith.constant 0 : index
    %c0_53 = arith.constant 0 : index
    %119 = vector.load %arg12[%c0_52, %c0_53] : memref<1x32xf32, #tpu.memory_space<vmem>>, vector<1x32xf32>
    %120 = vector.broadcast %119 : vector<1x32xf32> to vector<32x32xf32>
    %121 = arith.addf %118, %120 : vector<32x32xf32>
    %122 = arith.addf %121, %100 : vector<32x32xf32>
    %c0_54 = arith.constant 0 : index
    %c0_55 = arith.constant 0 : index
    %123 = vector.load %arg13[%c0_54, %c0_55] : memref<1x32xf32, #tpu.memory_space<vmem>>, vector<1x32xf32>
    %c0_56 = arith.constant 0 : index
    %c0_57 = arith.constant 0 : index
    %124 = vector.load %arg14[%c0_56, %c0_57] : memref<1x32xf32, #tpu.memory_space<vmem>>, vector<1x32xf32>
    %cst_58 = arith.constant dense<0.000000e+00> : vector<32xf32>
    %125 = vector.multi_reduction <add>, %122, %cst_58 [1] : vector<32x32xf32> to vector<32xf32>
    %126 = vector.shape_cast %125 : vector<32xf32> to vector<32x1xf32>
    %cst_59 = arith.constant 3.200000e+01 : f32
    %127 = vector.broadcast %cst_59 : f32 to vector<32x1xf32>
    %128 = arith.divf %126, %127 : vector<32x1xf32>
    %129 = vector.broadcast %128 : vector<32x1xf32> to vector<32x32xf32>
    %130 = arith.subf %122, %129 : vector<32x32xf32>
    %131 = arith.mulf %130, %130 : vector<32x32xf32>
    %cst_60 = arith.constant dense<0.000000e+00> : vector<32xf32>
    %132 = vector.multi_reduction <add>, %131, %cst_60 [1] : vector<32x32xf32> to vector<32xf32>
    %133 = vector.shape_cast %132 : vector<32xf32> to vector<32x1xf32>
    %cst_61 = arith.constant 3.200000e+01 : f32
    %134 = vector.broadcast %cst_61 : f32 to vector<32x1xf32>
    %135 = arith.divf %133, %134 : vector<32x1xf32>
    %136 = vector.broadcast %128 : vector<32x1xf32> to vector<32x32xf32>
    %137 = arith.subf %122, %136 : vector<32x32xf32>
    %cst_62 = arith.constant 9.99999974E-6 : f32
    %138 = vector.broadcast %cst_62 : f32 to vector<32x1xf32>
    %139 = arith.addf %135, %138 : vector<32x1xf32>
    %140 = math.rsqrt %139 : vector<32x1xf32>
    %141 = vector.broadcast %140 : vector<32x1xf32> to vector<32x32xf32>
    %142 = arith.mulf %137, %141 : vector<32x32xf32>
    %143 = vector.broadcast %123 : vector<1x32xf32> to vector<32x32xf32>
    %144 = arith.mulf %142, %143 : vector<32x32xf32>
    %145 = vector.broadcast %124 : vector<1x32xf32> to vector<32x32xf32>
    %146 = arith.addf %144, %145 : vector<32x32xf32>
    %147 = vector.broadcast %2 : vector<32x1xf32> to vector<32x32xf32>
    %148 = arith.mulf %146, %147 : vector<32x32xf32>
    %149 = vector.shape_cast %148 : vector<32x32xf32> to vector<2x16x32xf32>
    %c0_63 = arith.constant 0 : index
    %c0_64 = arith.constant 0 : index
    %c0_65 = arith.constant 0 : index
    %150 = vector.load %arg15[%c0_63, %c0_64, %c0_65] : memref<2x16x32xf32, #tpu.memory_space<vmem>>, vector<2x16x32xf32>
    tpu.vector_store %arg15[%c0_63, %c0_64, %c0_65], %149 {strides = array<i32>} : memref<2x16x32xf32, #tpu.memory_space<vmem>>, vector<2x16x32xf32>,
    return
  }
}

module attributes {stable_mosaic.version = 11 : i64} {
  func.func @_mel_cbhg_front_kernel(%arg0: memref<2x16x32xf32, #tpu.memory_space<vmem>>, %arg1: memref<32x16xf32, #tpu.memory_space<vmem>>, %arg2: memref<1x16xf32, #tpu.memory_space<vmem>>, %arg3: memref<2x16x1xf32, #tpu.memory_space<vmem>>, %arg4: memref<128x128xf32, #tpu.memory_space<vmem>>, %arg5: memref<1x128xf32, #tpu.memory_space<vmem>>, %arg6: memref<1x128xf32, #tpu.memory_space<vmem>>, %arg7: memref<384x256xf32, #tpu.memory_space<vmem>>, %arg8: memref<1x256xf32, #tpu.memory_space<vmem>>, %arg9: memref<1x256xf32, #tpu.memory_space<vmem>>, %arg10: memref<3x256x16xf32, #tpu.memory_space<vmem>>, %arg11: memref<1x16xf32, #tpu.memory_space<vmem>>, %arg12: memref<1x16xf32, #tpu.memory_space<vmem>>, %arg13: memref<2x16x16xf32, #tpu.memory_space<vmem>>, %arg14: memref<2x16x16xf32, #tpu.memory_space<vmem>>) attributes {dimension_semantics = [], scalar_prefetch = 0 : i64, scratch_operands = 0 : i64, tpu.core_type = #tpu.core_type<tc>} {
    %c0 = arith.constant 0 : index
    %c0_0 = arith.constant 0 : index
    %c0_1 = arith.constant 0 : index
    %0 = vector.load %arg0[%c0, %c0_0, %c0_1] : memref<2x16x32xf32, #tpu.memory_space<vmem>>, vector<2x16x32xf32>
    %1 = vector.shape_cast %0 : vector<2x16x32xf32> to vector<32x32xf32>
    %c0_2 = arith.constant 0 : index
    %c0_3 = arith.constant 0 : index
    %2 = vector.load %arg1[%c0_2, %c0_3] : memref<32x16xf32, #tpu.memory_space<vmem>>, vector<32x16xf32>
    %cst = arith.constant dense<0.000000e+00> : vector<32x16xf32>
    %3 = tpu.matmul %1, %2, %cst {dimension_numbers = #tpu.dot_dimension_numbers<[1], [0], [0], [1], [0, 0, 1, 1], [], []>} : vector<32x32xf32>, vector<32x16xf32>, vector<32x16xf32> -> vector<32x16xf32>
    %c0_4 = arith.constant 0 : index
    %c0_5 = arith.constant 0 : index
    %4 = vector.load %arg2[%c0_4, %c0_5] : memref<1x16xf32, #tpu.memory_space<vmem>>, vector<1x16xf32>
    %5 = vector.broadcast %4 : vector<1x16xf32> to vector<32x16xf32>
    %6 = arith.addf %3, %5 : vector<32x16xf32>
    %7 = vector.shape_cast %6 : vector<32x16xf32> to vector<2x16x16xf32>
    %c0_6 = arith.constant 0 : index
    %c0_7 = arith.constant 0 : index
    %c0_8 = arith.constant 0 : index
    %8 = vector.load %arg3[%c0_6, %c0_7, %c0_8] : memref<2x16x1xf32, #tpu.memory_space<vmem>>, vector<2x16x1xf32>
    %9 = vector.broadcast %8 : vector<2x16x1xf32> to vector<2x16x16xf32>
    %10 = arith.mulf %7, %9 : vector<2x16x16xf32>
    %c0_9 = arith.constant 0 : index
    %c0_10 = arith.constant 0 : index
    %c0_11 = arith.constant 0 : index
    %11 = vector.load %arg13[%c0_9, %c0_10, %c0_11] : memref<2x16x16xf32, #tpu.memory_space<vmem>>, vector<2x16x16xf32>
    tpu.vector_store %arg13[%c0_9, %c0_10, %c0_11], %10 {strides = array<i32>} : memref<2x16x16xf32, #tpu.memory_space<vmem>>, vector<2x16x16xf32>,
    %cst_12 = arith.constant 0.000000e+00 : f32
    %12 = vector.broadcast %cst_12 : f32 to vector<2x4x16xf32>
    %13 = vector.extract_strided_slice %10 {offsets = [0, 0, 0], sizes = [2, 12, 16], strides = [1, 1, 1]} : vector<2x16x16xf32> to vector<2x12x16xf32>
    %14 = tpu.concatenate %12, %13 in 1 : vector<2x4x16xf32>, vector<2x12x16xf32> -> vector<2x16x16xf32>
    %cst_13 = arith.constant 0.000000e+00 : f32
    %15 = vector.broadcast %cst_13 : f32 to vector<2x3x16xf32>
    %16 = vector.extract_strided_slice %10 {offsets = [0, 0, 0], sizes = [2, 13, 16], strides = [1, 1, 1]} : vector<2x16x16xf32> to vector<2x13x16xf32>
    %17 = tpu.concatenate %15, %16 in 1 : vector<2x3x16xf32>, vector<2x13x16xf32> -> vector<2x16x16xf32>
    %cst_14 = arith.constant 0.000000e+00 : f32
    %18 = vector.broadcast %cst_14 : f32 to vector<2x2x16xf32>
    %19 = vector.extract_strided_slice %10 {offsets = [0, 0, 0], sizes = [2, 14, 16], strides = [1, 1, 1]} : vector<2x16x16xf32> to vector<2x14x16xf32>
    %20 = tpu.concatenate %18, %19 in 1 : vector<2x2x16xf32>, vector<2x14x16xf32> -> vector<2x16x16xf32>
    %cst_15 = arith.constant 0.000000e+00 : f32
    %21 = vector.broadcast %cst_15 : f32 to vector<2x1x16xf32>
    %22 = vector.extract_strided_slice %10 {offsets = [0, 0, 0], sizes = [2, 15, 16], strides = [1, 1, 1]} : vector<2x16x16xf32> to vector<2x15x16xf32>
    %23 = tpu.concatenate %21, %22 in 1 : vector<2x1x16xf32>, vector<2x15x16xf32> -> vector<2x16x16xf32>
    %cst_16 = arith.constant 0.000000e+00 : f32
    %24 = vector.broadcast %cst_16 : f32 to vector<2x1x16xf32>
    %25 = vector.extract_strided_slice %10 {offsets = [0, 1, 0], sizes = [2, 15, 16], strides = [1, 1, 1]} : vector<2x16x16xf32> to vector<2x15x16xf32>
    %26 = tpu.concatenate %25, %24 in 1 : vector<2x15x16xf32>, vector<2x1x16xf32> -> vector<2x16x16xf32>
    %cst_17 = arith.constant 0.000000e+00 : f32
    %27 = vector.broadcast %cst_17 : f32 to vector<2x2x16xf32>
    %28 = vector.extract_strided_slice %10 {offsets = [0, 2, 0], sizes = [2, 14, 16], strides = [1, 1, 1]} : vector<2x16x16xf32> to vector<2x14x16xf32>
    %29 = tpu.concatenate %28, %27 in 1 : vector<2x14x16xf32>, vector<2x2x16xf32> -> vector<2x16x16xf32>
    %cst_18 = arith.constant 0.000000e+00 : f32
    %30 = vector.broadcast %cst_18 : f32 to vector<2x3x16xf32>
    %31 = vector.extract_strided_slice %10 {offsets = [0, 3, 0], sizes = [2, 13, 16], strides = [1, 1, 1]} : vector<2x16x16xf32> to vector<2x13x16xf32>
    %32 = tpu.concatenate %31, %30 in 1 : vector<2x13x16xf32>, vector<2x3x16xf32> -> vector<2x16x16xf32>
    %33 = tpu.concatenate %14, %17, %20, %23, %10, %26, %29, %32 in 2 : vector<2x16x16xf32>, vector<2x16x16xf32>, vector<2x16x16xf32>, vector<2x16x16xf32>, vector<2x16x16xf32>, vector<2x16x16xf32>, vector<2x16x16xf32>, vector<2x16x16xf32> -> vector<2x16x128xf32>
    %34 = vector.shape_cast %33 : vector<2x16x128xf32> to vector<32x128xf32>
    %c0_19 = arith.constant 0 : index
    %c0_20 = arith.constant 0 : index
    %35 = vector.load %arg4[%c0_19, %c0_20] : memref<128x128xf32, #tpu.memory_space<vmem>>, vector<128x128xf32>
    %cst_21 = arith.constant dense<0.000000e+00> : vector<32x128xf32>
    %36 = tpu.matmul %34, %35, %cst_21 {dimension_numbers = #tpu.dot_dimension_numbers<[1], [0], [0], [1], [0, 0, 1, 1], [], []>} : vector<32x128xf32>, vector<128x128xf32>, vector<32x128xf32> -> vector<32x128xf32>
    %c0_22 = arith.constant 0 : index
    %c0_23 = arith.constant 0 : index
    %37 = vector.load %arg5[%c0_22, %c0_23] : memref<1x128xf32, #tpu.memory_space<vmem>>, vector<1x128xf32>
    %c0_24 = arith.constant 0 : index
    %c0_25 = arith.constant 0 : index
    %38 = vector.load %arg6[%c0_24, %c0_25] : memref<1x128xf32, #tpu.memory_space<vmem>>, vector<1x128xf32>
    %cst_26 = arith.constant dense<0.000000e+00> : vector<128xf32>
    %39 = vector.multi_reduction <add>, %36, %cst_26 [0] : vector<32x128xf32> to vector<128xf32>
    %40 = vector.shape_cast %39 : vector<128xf32> to vector<1x128xf32>
    %cst_27 = arith.constant 3.200000e+01 : f32
    %41 = vector.broadcast %cst_27 : f32 to vector<1x128xf32>
    %42 = arith.divf %40, %41 : vector<1x128xf32>
    %43 = vector.broadcast %42 : vector<1x128xf32> to vector<32x128xf32>
    %44 = arith.subf %36, %43 : vector<32x128xf32>
    %45 = arith.mulf %44, %44 : vector<32x128xf32>
    %cst_28 = arith.constant dense<0.000000e+00> : vector<128xf32>
    %46 = vector.multi_reduction <add>, %45, %cst_28 [0] : vector<32x128xf32> to vector<128xf32>
    %47 = vector.shape_cast %46 : vector<128xf32> to vector<1x128xf32>
    %cst_29 = arith.constant 3.200000e+01 : f32
    %48 = vector.broadcast %cst_29 : f32 to vector<1x128xf32>
    %49 = arith.divf %47, %48 : vector<1x128xf32>
    %50 = vector.broadcast %42 : vector<1x128xf32> to vector<32x128xf32>
    %51 = arith.subf %36, %50 : vector<32x128xf32>
    %cst_30 = arith.constant 9.99999974E-6 : f32
    %52 = vector.broadcast %cst_30 : f32 to vector<1x128xf32>
    %53 = arith.addf %49, %52 : vector<1x128xf32>
    %54 = math.rsqrt %53 : vector<1x128xf32>
    %55 = vector.broadcast %54 : vector<1x128xf32> to vector<32x128xf32>
    %56 = arith.mulf %51, %55 : vector<32x128xf32>
    %57 = vector.broadcast %37 : vector<1x128xf32> to vector<32x128xf32>
    %58 = arith.mulf %56, %57 : vector<32x128xf32>
    %59 = vector.broadcast %38 : vector<1x128xf32> to vector<32x128xf32>
    %60 = arith.addf %58, %59 : vector<32x128xf32>
    %cst_31 = arith.constant 0.000000e+00 : f32
    %61 = vector.broadcast %cst_31 : f32 to vector<32x128xf32>
    %62 = arith.maximumf %60, %61 : vector<32x128xf32>
    %63 = vector.shape_cast %62 : vector<32x128xf32> to vector<2x16x128xf32>
    %cst_32 = arith.constant 0.000000e+00 : f32
    %64 = vector.broadcast %cst_32 : f32 to vector<2x1x128xf32>
    %65 = vector.extract_strided_slice %63 {offsets = [0, 0, 0], sizes = [2, 15, 128], strides = [1, 1, 1]} : vector<2x16x128xf32> to vector<2x15x128xf32>
    %66 = tpu.concatenate %64, %65 in 1 : vector<2x1x128xf32>, vector<2x15x128xf32> -> vector<2x16x128xf32>
    %67 = arith.maximumf %63, %66 : vector<2x16x128xf32>
    %cst_33 = arith.constant 0.000000e+00 : f32
    %68 = vector.broadcast %cst_33 : f32 to vector<2x1x128xf32>
    %69 = vector.extract_strided_slice %67 {offsets = [0, 0, 0], sizes = [2, 15, 128], strides = [1, 1, 1]} : vector<2x16x128xf32> to vector<2x15x128xf32>
    %70 = tpu.concatenate %68, %69 in 1 : vector<2x1x128xf32>, vector<2x15x128xf32> -> vector<2x16x128xf32>
    %cst_34 = arith.constant 0.000000e+00 : f32
    %71 = vector.broadcast %cst_34 : f32 to vector<2x1x128xf32>
    %72 = vector.extract_strided_slice %67 {offsets = [0, 1, 0], sizes = [2, 15, 128], strides = [1, 1, 1]} : vector<2x16x128xf32> to vector<2x15x128xf32>
    %73 = tpu.concatenate %72, %71 in 1 : vector<2x15x128xf32>, vector<2x1x128xf32> -> vector<2x16x128xf32>
    %74 = tpu.concatenate %70, %67, %73 in 2 : vector<2x16x128xf32>, vector<2x16x128xf32>, vector<2x16x128xf32> -> vector<2x16x384xf32>
    %75 = vector.shape_cast %74 : vector<2x16x384xf32> to vector<32x384xf32>
    %c0_35 = arith.constant 0 : index
    %c0_36 = arith.constant 0 : index
    %76 = vector.load %arg7[%c0_35, %c0_36] : memref<384x256xf32, #tpu.memory_space<vmem>>, vector<384x256xf32>
    %cst_37 = arith.constant dense<0.000000e+00> : vector<32x256xf32>
    %77 = tpu.matmul %75, %76, %cst_37 {dimension_numbers = #tpu.dot_dimension_numbers<[1], [0], [0], [1], [0, 0, 1, 1], [], []>} : vector<32x384xf32>, vector<384x256xf32>, vector<32x256xf32> -> vector<32x256xf32>
    %c0_38 = arith.constant 0 : index
    %c0_39 = arith.constant 0 : index
    %78 = vector.load %arg8[%c0_38, %c0_39] : memref<1x256xf32, #tpu.memory_space<vmem>>, vector<1x256xf32>
    %c0_40 = arith.constant 0 : index
    %c0_41 = arith.constant 0 : index
    %79 = vector.load %arg9[%c0_40, %c0_41] : memref<1x256xf32, #tpu.memory_space<vmem>>, vector<1x256xf32>
    %cst_42 = arith.constant dense<0.000000e+00> : vector<256xf32>
    %80 = vector.multi_reduction <add>, %77, %cst_42 [0] : vector<32x256xf32> to vector<256xf32>
    %81 = vector.shape_cast %80 : vector<256xf32> to vector<1x256xf32>
    %cst_43 = arith.constant 3.200000e+01 : f32
    %82 = vector.broadcast %cst_43 : f32 to vector<1x256xf32>
    %83 = arith.divf %81, %82 : vector<1x256xf32>
    %84 = vector.broadcast %83 : vector<1x256xf32> to vector<32x256xf32>
    %85 = arith.subf %77, %84 : vector<32x256xf32>
    %86 = arith.mulf %85, %85 : vector<32x256xf32>
    %cst_44 = arith.constant dense<0.000000e+00> : vector<256xf32>
    %87 = vector.multi_reduction <add>, %86, %cst_44 [0] : vector<32x256xf32> to vector<256xf32>
    %88 = vector.shape_cast %87 : vector<256xf32> to vector<1x256xf32>
    %cst_45 = arith.constant 3.200000e+01 : f32
    %89 = vector.broadcast %cst_45 : f32 to vector<1x256xf32>
    %90 = arith.divf %88, %89 : vector<1x256xf32>
    %91 = vector.broadcast %83 : vector<1x256xf32> to vector<32x256xf32>
    %92 = arith.subf %77, %91 : vector<32x256xf32>
    %cst_46 = arith.constant 9.99999974E-6 : f32
    %93 = vector.broadcast %cst_46 : f32 to vector<1x256xf32>
    %94 = arith.addf %90, %93 : vector<1x256xf32>
    %95 = math.rsqrt %94 : vector<1x256xf32>
    %96 = vector.broadcast %95 : vector<1x256xf32> to vector<32x256xf32>
    %97 = arith.mulf %92, %96 : vector<32x256xf32>
    %98 = vector.broadcast %78 : vector<1x256xf32> to vector<32x256xf32>
    %99 = arith.mulf %97, %98 : vector<32x256xf32>
    %100 = vector.broadcast %79 : vector<1x256xf32> to vector<32x256xf32>
    %101 = arith.addf %99, %100 : vector<32x256xf32>
    %cst_47 = arith.constant 0.000000e+00 : f32
    %102 = vector.broadcast %cst_47 : f32 to vector<32x256xf32>
    %103 = arith.maximumf %101, %102 : vector<32x256xf32>
    %c0_48 = arith.constant 0 : index
    %c0_49 = arith.constant 0 : index
    %c0_50 = arith.constant 0 : index
    %104 = vector.load %arg10[%c0_48, %c0_49, %c0_50] : memref<3x256x16xf32, #tpu.memory_space<vmem>>, vector<1x256x16xf32>
    %105 = vector.shape_cast %104 : vector<1x256x16xf32> to vector<256x16xf32>
    %cst_51 = arith.constant dense<0.000000e+00> : vector<32x16xf32>
    %106 = tpu.matmul %103, %105, %cst_51 {dimension_numbers = #tpu.dot_dimension_numbers<[1], [0], [0], [1], [0, 0, 1, 1], [], []>} : vector<32x256xf32>, vector<256x16xf32>, vector<32x16xf32> -> vector<32x16xf32>
    %107 = vector.shape_cast %106 : vector<32x16xf32> to vector<2x16x16xf32>
    %c1 = arith.constant 1 : index
    %c0_52 = arith.constant 0 : index
    %c0_53 = arith.constant 0 : index
    %108 = vector.load %arg10[%c1, %c0_52, %c0_53] : memref<3x256x16xf32, #tpu.memory_space<vmem>>, vector<1x256x16xf32>
    %109 = vector.shape_cast %108 : vector<1x256x16xf32> to vector<256x16xf32>
    %cst_54 = arith.constant dense<0.000000e+00> : vector<32x16xf32>
    %110 = tpu.matmul %103, %109, %cst_54 {dimension_numbers = #tpu.dot_dimension_numbers<[1], [0], [0], [1], [0, 0, 1, 1], [], []>} : vector<32x256xf32>, vector<256x16xf32>, vector<32x16xf32> -> vector<32x16xf32>
    %111 = vector.shape_cast %110 : vector<32x16xf32> to vector<2x16x16xf32>
    %c2 = arith.constant 2 : index
    %c0_55 = arith.constant 0 : index
    %c0_56 = arith.constant 0 : index
    %112 = vector.load %arg10[%c2, %c0_55, %c0_56] : memref<3x256x16xf32, #tpu.memory_space<vmem>>, vector<1x256x16xf32>
    %113 = vector.shape_cast %112 : vector<1x256x16xf32> to vector<256x16xf32>
    %cst_57 = arith.constant dense<0.000000e+00> : vector<32x16xf32>
    %114 = tpu.matmul %103, %113, %cst_57 {dimension_numbers = #tpu.dot_dimension_numbers<[1], [0], [0], [1], [0, 0, 1, 1], [], []>} : vector<32x256xf32>, vector<256x16xf32>, vector<32x16xf32> -> vector<32x16xf32>
    %115 = vector.shape_cast %114 : vector<32x16xf32> to vector<2x16x16xf32>
    %cst_58 = arith.constant 0.000000e+00 : f32
    %116 = vector.broadcast %cst_58 : f32 to vector<2x1x16xf32>
    %117 = vector.extract_strided_slice %107 {offsets = [0, 0, 0], sizes = [2, 15, 16], strides = [1, 1, 1]} : vector<2x16x16xf32> to vector<2x15x16xf32>
    %118 = tpu.concatenate %116, %117 in 1 : vector<2x1x16xf32>, vector<2x15x16xf32> -> vector<2x16x16xf32>
    %119 = arith.addf %111, %118 : vector<2x16x16xf32>
    %cst_59 = arith.constant 0.000000e+00 : f32
    %120 = vector.broadcast %cst_59 : f32 to vector<2x1x16xf32>
    %121 = vector.extract_strided_slice %115 {offsets = [0, 1, 0], sizes = [2, 15, 16], strides = [1, 1, 1]} : vector<2x16x16xf32> to vector<2x15x16xf32>
    %122 = tpu.concatenate %121, %120 in 1 : vector<2x15x16xf32>, vector<2x1x16xf32> -> vector<2x16x16xf32>
    %123 = arith.addf %119, %122 : vector<2x16x16xf32>
    %124 = vector.shape_cast %123 : vector<2x16x16xf32> to vector<32x16xf32>
    %c0_60 = arith.constant 0 : index
    %c0_61 = arith.constant 0 : index
    %125 = vector.load %arg11[%c0_60, %c0_61] : memref<1x16xf32, #tpu.memory_space<vmem>>, vector<1x16xf32>
    %c0_62 = arith.constant 0 : index
    %c0_63 = arith.constant 0 : index
    %126 = vector.load %arg12[%c0_62, %c0_63] : memref<1x16xf32, #tpu.memory_space<vmem>>, vector<1x16xf32>
    %cst_64 = arith.constant dense<0.000000e+00> : vector<16xf32>
    %127 = vector.multi_reduction <add>, %124, %cst_64 [0] : vector<32x16xf32> to vector<16xf32>
    %128 = vector.shape_cast %127 : vector<16xf32> to vector<1x16xf32>
    %cst_65 = arith.constant 3.200000e+01 : f32
    %129 = vector.broadcast %cst_65 : f32 to vector<1x16xf32>
    %130 = arith.divf %128, %129 : vector<1x16xf32>
    %131 = vector.broadcast %130 : vector<1x16xf32> to vector<32x16xf32>
    %132 = arith.subf %124, %131 : vector<32x16xf32>
    %133 = arith.mulf %132, %132 : vector<32x16xf32>
    %cst_66 = arith.constant dense<0.000000e+00> : vector<16xf32>
    %134 = vector.multi_reduction <add>, %133, %cst_66 [0] : vector<32x16xf32> to vector<16xf32>
    %135 = vector.shape_cast %134 : vector<16xf32> to vector<1x16xf32>
    %cst_67 = arith.constant 3.200000e+01 : f32
    %136 = vector.broadcast %cst_67 : f32 to vector<1x16xf32>
    %137 = arith.divf %135, %136 : vector<1x16xf32>
    %138 = vector.broadcast %130 : vector<1x16xf32> to vector<32x16xf32>
    %139 = arith.subf %124, %138 : vector<32x16xf32>
    %cst_68 = arith.constant 9.99999974E-6 : f32
    %140 = vector.broadcast %cst_68 : f32 to vector<1x16xf32>
    %141 = arith.addf %137, %140 : vector<1x16xf32>
    %142 = math.rsqrt %141 : vector<1x16xf32>
    %143 = vector.broadcast %142 : vector<1x16xf32> to vector<32x16xf32>
    %144 = arith.mulf %139, %143 : vector<32x16xf32>
    %145 = vector.broadcast %125 : vector<1x16xf32> to vector<32x16xf32>
    %146 = arith.mulf %144, %145 : vector<32x16xf32>
    %147 = vector.broadcast %126 : vector<1x16xf32> to vector<32x16xf32>
    %148 = arith.addf %146, %147 : vector<32x16xf32>
    %149 = vector.shape_cast %148 : vector<32x16xf32> to vector<2x16x16xf32>
    %150 = arith.addf %149, %10 : vector<2x16x16xf32>
    %c0_69 = arith.constant 0 : index
    %c0_70 = arith.constant 0 : index
    %c0_71 = arith.constant 0 : index
    %151 = vector.load %arg14[%c0_69, %c0_70, %c0_71] : memref<2x16x16xf32, #tpu.memory_space<vmem>>, vector<2x16x16xf32>
    tpu.vector_store %arg14[%c0_69, %c0_70, %c0_71], %150 {strides = array<i32>} : memref<2x16x16xf32, #tpu.memory_space<vmem>>, vector<2x16x16xf32>,
    return
  }
}

module attributes {stable_mosaic.version = 11 : i64} {
  func.func @_cbhg_tail_kernel(%arg0: memref<2x16x16xf32, #tpu.memory_space<vmem>>, %arg1: memref<4x16x32xf32, #tpu.memory_space<vmem>>, %arg2: memref<4x1x32xf32, #tpu.memory_space<vmem>>, %arg3: memref<16x48xf32, #tpu.memory_space<vmem>>, %arg4: memref<16x48xf32, #tpu.memory_space<vmem>>, %arg5: memref<1x48xf32, #tpu.memory_space<vmem>>, %arg6: memref<1x48xf32, #tpu.memory_space<vmem>>, %arg7: memref<16x48xf32, #tpu.memory_space<vmem>>, %arg8: memref<16x48xf32, #tpu.memory_space<vmem>>, %arg9: memref<1x48xf32, #tpu.memory_space<vmem>>, %arg10: memref<1x48xf32, #tpu.memory_space<vmem>>, %arg11: memref<32x16xf32, #tpu.memory_space<vmem>>, %arg12: memref<1x1x16xf32, #tpu.memory_space<vmem>>, %arg13: memref<2x16x16xf32, #tpu.memory_space<vmem>>, %arg14: memref<2x16x1xf32, #tpu.memory_space<vmem>>, %arg15: memref<2x16x16xf32, #tpu.memory_space<vmem>>, %arg16: memref<2x16x16xf32, #tpu.memory_space<vmem>>, %arg17: memref<2x16x16xf32, #tpu.memory_space<vmem>>) attributes {dimension_semantics = [], scalar_prefetch = 0 : i64, scratch_operands = 2 : i64, tpu.core_type = #tpu.core_type<tc>} {
    %c0 = arith.constant 0 : index
    %c0_0 = arith.constant 0 : index
    %c0_1 = arith.constant 0 : index
    %0 = vector.load %arg0[%c0, %c0_0, %c0_1] : memref<2x16x16xf32, #tpu.memory_space<vmem>>, vector<2x16x16xf32>
    %1 = vector.shape_cast %0 : vector<2x16x16xf32> to vector<32x16xf32>
    %c0_2 = arith.constant 0 : index
    %c0_3 = arith.constant 0 : index
    %c0_4 = arith.constant 0 : index
    %2 = vector.load %arg1[%c0_2, %c0_3, %c0_4] : memref<4x16x32xf32, #tpu.memory_space<vmem>>, vector<1x16x32xf32>
    %3 = vector.shape_cast %2 : vector<1x16x32xf32> to vector<16x32xf32>
    %cst = arith.constant dense<0.000000e+00> : vector<32x32xf32>
    %4 = tpu.matmul %1, %3, %cst {dimension_numbers = #tpu.dot_dimension_numbers<[1], [0], [0], [1], [0, 0, 1, 1], [], []>} : vector<32x16xf32>, vector<16x32xf32>, vector<32x32xf32> -> vector<32x32xf32>
    %c0_5 = arith.constant 0 : index
    %c0_6 = arith.constant 0 : index
    %c0_7 = arith.constant 0 : index
    %5 = vector.load %arg2[%c0_5, %c0_6, %c0_7] : memref<4x1x32xf32, #tpu.memory_space<vmem>>, vector<1x1x32xf32>
    %6 = vector.shape_cast %5 : vector<1x1x32xf32> to vector<1x32xf32>
    %7 = vector.broadcast %6 : vector<1x32xf32> to vector<32x32xf32>
    %8 = arith.addf %4, %7 : vector<32x32xf32>
    %9 = vector.extract_strided_slice %8 {offsets = [0, 0], sizes = [32, 16], strides = [1, 1]} : vector<32x32xf32> to vector<32x16xf32>
    %cst_8 = arith.constant 0.000000e+00 : f32
    %10 = vector.broadcast %cst_8 : f32 to vector<32x16xf32>
    %11 = arith.maximumf %9, %10 : vector<32x16xf32>
    %12 = vector.extract_strided_slice %8 {offsets = [0, 16], sizes = [32, 16], strides = [1, 1]} : vector<32x32xf32> to vector<32x16xf32>
    %13 = arith.negf %12 : vector<32x16xf32>
    %14 = math.exp %13 : vector<32x16xf32>
    %cst_9 = arith.constant 1.000000e+00 : f32
    %15 = vector.broadcast %cst_9 : f32 to vector<32x16xf32>
    %16 = arith.addf %15, %14 : vector<32x16xf32>
    %17 = arith.divf %15, %16 : vector<32x16xf32>
    %18 = arith.mulf %11, %17 : vector<32x16xf32>
    %cst_10 = arith.constant 1.000000e+00 : f32
    %19 = vector.broadcast %cst_10 : f32 to vector<32x16xf32>
    %20 = arith.subf %19, %17 : vector<32x16xf32>
    %21 = arith.mulf %1, %20 : vector<32x16xf32>
    %22 = arith.addf %18, %21 : vector<32x16xf32>
    %c1 = arith.constant 1 : index
    %c0_11 = arith.constant 0 : index
    %c0_12 = arith.constant 0 : index
    %23 = vector.load %arg1[%c1, %c0_11, %c0_12] : memref<4x16x32xf32, #tpu.memory_space<vmem>>, vector<1x16x32xf32>
    %24 = vector.shape_cast %23 : vector<1x16x32xf32> to vector<16x32xf32>
    %cst_13 = arith.constant dense<0.000000e+00> : vector<32x32xf32>
    %25 = tpu.matmul %22, %24, %cst_13 {dimension_numbers = #tpu.dot_dimension_numbers<[1], [0], [0], [1], [0, 0, 1, 1], [], []>} : vector<32x16xf32>, vector<16x32xf32>, vector<32x32xf32> -> vector<32x32xf32>
    %c1_14 = arith.constant 1 : index
    %c0_15 = arith.constant 0 : index
    %c0_16 = arith.constant 0 : index
    %26 = vector.load %arg2[%c1_14, %c0_15, %c0_16] : memref<4x1x32xf32, #tpu.memory_space<vmem>>, vector<1x1x32xf32>
    %27 = vector.shape_cast %26 : vector<1x1x32xf32> to vector<1x32xf32>
    %28 = vector.broadcast %27 : vector<1x32xf32> to vector<32x32xf32>
    %29 = arith.addf %25, %28 : vector<32x32xf32>
    %30 = vector.extract_strided_slice %29 {offsets = [0, 0], sizes = [32, 16], strides = [1, 1]} : vector<32x32xf32> to vector<32x16xf32>
    %cst_17 = arith.constant 0.000000e+00 : f32
    %31 = vector.broadcast %cst_17 : f32 to vector<32x16xf32>
    %32 = arith.maximumf %30, %31 : vector<32x16xf32>
    %33 = vector.extract_strided_slice %29 {offsets = [0, 16], sizes = [32, 16], strides = [1, 1]} : vector<32x32xf32> to vector<32x16xf32>
    %34 = arith.negf %33 : vector<32x16xf32>
    %35 = math.exp %34 : vector<32x16xf32>
    %cst_18 = arith.constant 1.000000e+00 : f32
    %36 = vector.broadcast %cst_18 : f32 to vector<32x16xf32>
    %37 = arith.addf %36, %35 : vector<32x16xf32>
    %38 = arith.divf %36, %37 : vector<32x16xf32>
    %39 = arith.mulf %32, %38 : vector<32x16xf32>
    %cst_19 = arith.constant 1.000000e+00 : f32
    %40 = vector.broadcast %cst_19 : f32 to vector<32x16xf32>
    %41 = arith.subf %40, %38 : vector<32x16xf32>
    %42 = arith.mulf %22, %41 : vector<32x16xf32>
    %43 = arith.addf %39, %42 : vector<32x16xf32>
    %c2 = arith.constant 2 : index
    %c0_20 = arith.constant 0 : index
    %c0_21 = arith.constant 0 : index
    %44 = vector.load %arg1[%c2, %c0_20, %c0_21] : memref<4x16x32xf32, #tpu.memory_space<vmem>>, vector<1x16x32xf32>
    %45 = vector.shape_cast %44 : vector<1x16x32xf32> to vector<16x32xf32>
    %cst_22 = arith.constant dense<0.000000e+00> : vector<32x32xf32>
    %46 = tpu.matmul %43, %45, %cst_22 {dimension_numbers = #tpu.dot_dimension_numbers<[1], [0], [0], [1], [0, 0, 1, 1], [], []>} : vector<32x16xf32>, vector<16x32xf32>, vector<32x32xf32> -> vector<32x32xf32>
    %c2_23 = arith.constant 2 : index
    %c0_24 = arith.constant 0 : index
    %c0_25 = arith.constant 0 : index
    %47 = vector.load %arg2[%c2_23, %c0_24, %c0_25] : memref<4x1x32xf32, #tpu.memory_space<vmem>>, vector<1x1x32xf32>
    %48 = vector.shape_cast %47 : vector<1x1x32xf32> to vector<1x32xf32>
    %49 = vector.broadcast %48 : vector<1x32xf32> to vector<32x32xf32>
    %50 = arith.addf %46, %49 : vector<32x32xf32>
    %51 = vector.extract_strided_slice %50 {offsets = [0, 0], sizes = [32, 16], strides = [1, 1]} : vector<32x32xf32> to vector<32x16xf32>
    %cst_26 = arith.constant 0.000000e+00 : f32
    %52 = vector.broadcast %cst_26 : f32 to vector<32x16xf32>
    %53 = arith.maximumf %51, %52 : vector<32x16xf32>
    %54 = vector.extract_strided_slice %50 {offsets = [0, 16], sizes = [32, 16], strides = [1, 1]} : vector<32x32xf32> to vector<32x16xf32>
    %55 = arith.negf %54 : vector<32x16xf32>
    %56 = math.exp %55 : vector<32x16xf32>
    %cst_27 = arith.constant 1.000000e+00 : f32
    %57 = vector.broadcast %cst_27 : f32 to vector<32x16xf32>
    %58 = arith.addf %57, %56 : vector<32x16xf32>
    %59 = arith.divf %57, %58 : vector<32x16xf32>
    %60 = arith.mulf %53, %59 : vector<32x16xf32>
    %cst_28 = arith.constant 1.000000e+00 : f32
    %61 = vector.broadcast %cst_28 : f32 to vector<32x16xf32>
    %62 = arith.subf %61, %59 : vector<32x16xf32>
    %63 = arith.mulf %43, %62 : vector<32x16xf32>
    %64 = arith.addf %60, %63 : vector<32x16xf32>
    %c3 = arith.constant 3 : index
    %c0_29 = arith.constant 0 : index
    %c0_30 = arith.constant 0 : index
    %65 = vector.load %arg1[%c3, %c0_29, %c0_30] : memref<4x16x32xf32, #tpu.memory_space<vmem>>, vector<1x16x32xf32>
    %66 = vector.shape_cast %65 : vector<1x16x32xf32> to vector<16x32xf32>
    %cst_31 = arith.constant dense<0.000000e+00> : vector<32x32xf32>
    %67 = tpu.matmul %64, %66, %cst_31 {dimension_numbers = #tpu.dot_dimension_numbers<[1], [0], [0], [1], [0, 0, 1, 1], [], []>} : vector<32x16xf32>, vector<16x32xf32>, vector<32x32xf32> -> vector<32x32xf32>
    %c3_32 = arith.constant 3 : index
    %c0_33 = arith.constant 0 : index
    %c0_34 = arith.constant 0 : index
    %68 = vector.load %arg2[%c3_32, %c0_33, %c0_34] : memref<4x1x32xf32, #tpu.memory_space<vmem>>, vector<1x1x32xf32>
    %69 = vector.shape_cast %68 : vector<1x1x32xf32> to vector<1x32xf32>
    %70 = vector.broadcast %69 : vector<1x32xf32> to vector<32x32xf32>
    %71 = arith.addf %67, %70 : vector<32x32xf32>
    %72 = vector.extract_strided_slice %71 {offsets = [0, 0], sizes = [32, 16], strides = [1, 1]} : vector<32x32xf32> to vector<32x16xf32>
    %cst_35 = arith.constant 0.000000e+00 : f32
    %73 = vector.broadcast %cst_35 : f32 to vector<32x16xf32>
    %74 = arith.maximumf %72, %73 : vector<32x16xf32>
    %75 = vector.extract_strided_slice %71 {offsets = [0, 16], sizes = [32, 16], strides = [1, 1]} : vector<32x32xf32> to vector<32x16xf32>
    %76 = arith.negf %75 : vector<32x16xf32>
    %77 = math.exp %76 : vector<32x16xf32>
    %cst_36 = arith.constant 1.000000e+00 : f32
    %78 = vector.broadcast %cst_36 : f32 to vector<32x16xf32>
    %79 = arith.addf %78, %77 : vector<32x16xf32>
    %80 = arith.divf %78, %79 : vector<32x16xf32>
    %81 = arith.mulf %74, %80 : vector<32x16xf32>
    %cst_37 = arith.constant 1.000000e+00 : f32
    %82 = vector.broadcast %cst_37 : f32 to vector<32x16xf32>
    %83 = arith.subf %82, %80 : vector<32x16xf32>
    %84 = arith.mulf %64, %83 : vector<32x16xf32>
    %85 = arith.addf %81, %84 : vector<32x16xf32>
    %c0_38 = arith.constant 0 : index
    %c0_39 = arith.constant 0 : index
    %86 = vector.load %arg3[%c0_38, %c0_39] : memref<16x48xf32, #tpu.memory_space<vmem>>, vector<16x48xf32>
    %cst_40 = arith.constant dense<0.000000e+00> : vector<32x48xf32>
    %87 = tpu.matmul %85, %86, %cst_40 {dimension_numbers = #tpu.dot_dimension_numbers<[1], [0], [0], [1], [0, 0, 1, 1], [], []>} : vector<32x16xf32>, vector<16x48xf32>, vector<32x48xf32> -> vector<32x48xf32>
    %c0_41 = arith.constant 0 : index
    %c0_42 = arith.constant 0 : index
    %88 = vector.load %arg5[%c0_41, %c0_42] : memref<1x48xf32, #tpu.memory_space<vmem>>, vector<1x48xf32>
    %89 = vector.broadcast %88 : vector<1x48xf32> to vector<32x48xf32>
    %90 = arith.addf %87, %89 : vector<32x48xf32>
    %91 = vector.shape_cast %90 : vector<32x48xf32> to vector<2x16x48xf32>
    %c0_43 = arith.constant 0 : index
    %c0_44 = arith.constant 0 : index
    %92 = vector.load %arg7[%c0_43, %c0_44] : memref<16x48xf32, #tpu.memory_space<vmem>>, vector<16x48xf32>
    %cst_45 = arith.constant dense<0.000000e+00> : vector<32x48xf32>
    %93 = tpu.matmul %85, %92, %cst_45 {dimension_numbers = #tpu.dot_dimension_numbers<[1], [0], [0], [1], [0, 0, 1, 1], [], []>} : vector<32x16xf32>, vector<16x48xf32>, vector<32x48xf32> -> vector<32x48xf32>
    %c0_46 = arith.constant 0 : index
    %c0_47 = arith.constant 0 : index
    %94 = vector.load %arg9[%c0_46, %c0_47] : memref<1x48xf32, #tpu.memory_space<vmem>>, vector<1x48xf32>
    %95 = vector.broadcast %94 : vector<1x48xf32> to vector<32x48xf32>
    %96 = arith.addf %93, %95 : vector<32x48xf32>
    %97 = vector.shape_cast %96 : vector<32x48xf32> to vector<2x16x48xf32>
    %c0_48 = arith.constant 0 : index
    %c0_49 = arith.constant 0 : index
    %98 = vector.load %arg4[%c0_48, %c0_49] : memref<16x48xf32, #tpu.memory_space<vmem>>, vector<16x48xf32>
    %c0_50 = arith.constant 0 : index
    %c0_51 = arith.constant 0 : index
    %99 = vector.load %arg6[%c0_50, %c0_51] : memref<1x48xf32, #tpu.memory_space<vmem>>, vector<1x48xf32>
    %c0_52 = arith.constant 0 : index
    %c0_53 = arith.constant 0 : index
    %100 = vector.load %arg8[%c0_52, %c0_53] : memref<16x48xf32, #tpu.memory_space<vmem>>, vector<16x48xf32>
    %c0_54 = arith.constant 0 : index
    %c0_55 = arith.constant 0 : index
    %101 = vector.load %arg10[%c0_54, %c0_55] : memref<1x48xf32, #tpu.memory_space<vmem>>, vector<1x48xf32>
    %cst_56 = arith.constant 0.000000e+00 : f32
    %102 = vector.broadcast %cst_56 : f32 to vector<2x16xf32>
    %cst_57 = arith.constant 0.000000e+00 : f32
    %103 = vector.broadcast %cst_57 : f32 to vector<2x16xf32>
    %104 = vector.extract_strided_slice %91 {offsets = [0, 0, 0], sizes = [2, 1, 48], strides = [1, 1, 1]} : vector<2x16x48xf32> to vector<2x1x48xf32>
    %105 = vector.shape_cast %104 : vector<2x1x48xf32> to vector<2x48xf32>
    %cst_58 = arith.constant dense<0.000000e+00> : vector<2x48xf32>
    %106 = tpu.matmul %102, %98, %cst_58 {dimension_numbers = #tpu.dot_dimension_numbers<[1], [0], [0], [1], [0, 0, 1, 1], [], []>} : vector<2x16xf32>, vector<16x48xf32>, vector<2x48xf32> -> vector<2x48xf32>
    %107 = vector.broadcast %99 : vector<1x48xf32> to vector<2x48xf32>
    %108 = arith.addf %106, %107 : vector<2x48xf32>
    %109 = vector.extract_strided_slice %105 {offsets = [0, 0], sizes = [2, 16], strides = [1, 1]} : vector<2x48xf32> to vector<2x16xf32>
    %110 = vector.extract_strided_slice %108 {offsets = [0, 0], sizes = [2, 16], strides = [1, 1]} : vector<2x48xf32> to vector<2x16xf32>
    %111 = arith.addf %109, %110 : vector<2x16xf32>
    %112 = arith.negf %111 : vector<2x16xf32>
    %113 = math.exp %112 : vector<2x16xf32>
    %cst_59 = arith.constant 1.000000e+00 : f32
    %114 = vector.broadcast %cst_59 : f32 to vector<2x16xf32>
    %115 = arith.addf %114, %113 : vector<2x16xf32>
    %116 = arith.divf %114, %115 : vector<2x16xf32>
    %117 = vector.extract_strided_slice %105 {offsets = [0, 16], sizes = [2, 16], strides = [1, 1]} : vector<2x48xf32> to vector<2x16xf32>
    %118 = vector.extract_strided_slice %108 {offsets = [0, 16], sizes = [2, 16], strides = [1, 1]} : vector<2x48xf32> to vector<2x16xf32>
    %119 = arith.addf %117, %118 : vector<2x16xf32>
    %120 = arith.negf %119 : vector<2x16xf32>
    %121 = math.exp %120 : vector<2x16xf32>
    %cst_60 = arith.constant 1.000000e+00 : f32
    %122 = vector.broadcast %cst_60 : f32 to vector<2x16xf32>
    %123 = arith.addf %122, %121 : vector<2x16xf32>
    %124 = arith.divf %122, %123 : vector<2x16xf32>
    %125 = vector.extract_strided_slice %105 {offsets = [0, 32], sizes = [2, 16], strides = [1, 1]} : vector<2x48xf32> to vector<2x16xf32>
    %126 = vector.extract_strided_slice %108 {offsets = [0, 32], sizes = [2, 16], strides = [1, 1]} : vector<2x48xf32> to vector<2x16xf32>
    %127 = arith.mulf %116, %126 : vector<2x16xf32>
    %128 = arith.addf %125, %127 : vector<2x16xf32>
    %129 = math.tanh %128 : vector<2x16xf32>
    %cst_61 = arith.constant 1.000000e+00 : f32
    %130 = vector.broadcast %cst_61 : f32 to vector<2x16xf32>
    %131 = arith.subf %130, %124 : vector<2x16xf32>
    %132 = arith.mulf %131, %129 : vector<2x16xf32>
    %133 = arith.mulf %124, %102 : vector<2x16xf32>
    %134 = arith.addf %132, %133 : vector<2x16xf32>
    %135 = vector.shape_cast %134 : vector<2x16xf32> to vector<2x1x16xf32>
    %c0_62 = arith.constant 0 : index
    %c0_63 = arith.constant 0 : index
    %c0_64 = arith.constant 0 : index
    %136 = vector.load %arg16[%c0_62, %c0_63, %c0_64] : memref<2x16x16xf32, #tpu.memory_space<vmem>>, vector<2x1x16xf32>
    tpu.vector_store %arg16[%c0_62, %c0_63, %c0_64], %135 {strides = array<i32>} : memref<2x16x16xf32, #tpu.memory_space<vmem>>, vector<2x1x16xf32>,
    %137 = vector.extract_strided_slice %97 {offsets = [0, 15, 0], sizes = [2, 1, 48], strides = [1, 1, 1]} : vector<2x16x48xf32> to vector<2x1x48xf32>
    %138 = vector.shape_cast %137 : vector<2x1x48xf32> to vector<2x48xf32>
    %cst_65 = arith.constant dense<0.000000e+00> : vector<2x48xf32>
    %139 = tpu.matmul %103, %100, %cst_65 {dimension_numbers = #tpu.dot_dimension_numbers<[1], [0], [0], [1], [0, 0, 1, 1], [], []>} : vector<2x16xf32>, vector<16x48xf32>, vector<2x48xf32> -> vector<2x48xf32>
    %140 = vector.broadcast %101 : vector<1x48xf32> to vector<2x48xf32>
    %141 = arith.addf %139, %140 : vector<2x48xf32>
    %142 = vector.extract_strided_slice %138 {offsets = [0, 0], sizes = [2, 16], strides = [1, 1]} : vector<2x48xf32> to vector<2x16xf32>
    %143 = vector.extract_strided_slice %141 {offsets = [0, 0], sizes = [2, 16], strides = [1, 1]} : vector<2x48xf32> to vector<2x16xf32>
    %144 = arith.addf %142, %143 : vector<2x16xf32>
    %145 = arith.negf %144 : vector<2x16xf32>
    %146 = math.exp %145 : vector<2x16xf32>
    %cst_66 = arith.constant 1.000000e+00 : f32
    %147 = vector.broadcast %cst_66 : f32 to vector<2x16xf32>
    %148 = arith.addf %147, %146 : vector<2x16xf32>
    %149 = arith.divf %147, %148 : vector<2x16xf32>
    %150 = vector.extract_strided_slice %138 {offsets = [0, 16], sizes = [2, 16], strides = [1, 1]} : vector<2x48xf32> to vector<2x16xf32>
    %151 = vector.extract_strided_slice %141 {offsets = [0, 16], sizes = [2, 16], strides = [1, 1]} : vector<2x48xf32> to vector<2x16xf32>
    %152 = arith.addf %150, %151 : vector<2x16xf32>
    %153 = arith.negf %152 : vector<2x16xf32>
    %154 = math.exp %153 : vector<2x16xf32>
    %cst_67 = arith.constant 1.000000e+00 : f32
    %155 = vector.broadcast %cst_67 : f32 to vector<2x16xf32>
    %156 = arith.addf %155, %154 : vector<2x16xf32>
    %157 = arith.divf %155, %156 : vector<2x16xf32>
    %158 = vector.extract_strided_slice %138 {offsets = [0, 32], sizes = [2, 16], strides = [1, 1]} : vector<2x48xf32> to vector<2x16xf32>
    %159 = vector.extract_strided_slice %141 {offsets = [0, 32], sizes = [2, 16], strides = [1, 1]} : vector<2x48xf32> to vector<2x16xf32>
    %160 = arith.mulf %149, %159 : vector<2x16xf32>
    %161 = arith.addf %158, %160 : vector<2x16xf32>
    %162 = math.tanh %161 : vector<2x16xf32>
    %cst_68 = arith.constant 1.000000e+00 : f32
    %163 = vector.broadcast %cst_68 : f32 to vector<2x16xf32>
    %164 = arith.subf %163, %157 : vector<2x16xf32>
    %165 = arith.mulf %164, %162 : vector<2x16xf32>
    %166 = arith.mulf %157, %103 : vector<2x16xf32>
    %167 = arith.addf %165, %166 : vector<2x16xf32>
    %168 = vector.shape_cast %167 : vector<2x16xf32> to vector<2x1x16xf32>
    %c0_69 = arith.constant 0 : index
    %c15 = arith.constant 15 : index
    %c0_70 = arith.constant 0 : index
    %169 = vector.load %arg17[%c0_69, %c15, %c0_70] : memref<2x16x16xf32, #tpu.memory_space<vmem>>, vector<2x1x16xf32>
    tpu.vector_store %arg17[%c0_69, %c15, %c0_70], %168 {strides = array<i32>} : memref<2x16x16xf32, #tpu.memory_space<vmem>>, vector<2x1x16xf32>,
    %170 = vector.extract_strided_slice %91 {offsets = [0, 1, 0], sizes = [2, 1, 48], strides = [1, 1, 1]} : vector<2x16x48xf32> to vector<2x1x48xf32>
    %171 = vector.shape_cast %170 : vector<2x1x48xf32> to vector<2x48xf32>
    %cst_71 = arith.constant dense<0.000000e+00> : vector<2x48xf32>
    %172 = tpu.matmul %134, %98, %cst_71 {dimension_numbers = #tpu.dot_dimension_numbers<[1], [0], [0], [1], [0, 0, 1, 1], [], []>} : vector<2x16xf32>, vector<16x48xf32>, vector<2x48xf32> -> vector<2x48xf32>
    %173 = vector.broadcast %99 : vector<1x48xf32> to vector<2x48xf32>
    %174 = arith.addf %172, %173 : vector<2x48xf32>
    %175 = vector.extract_strided_slice %171 {offsets = [0, 0], sizes = [2, 16], strides = [1, 1]} : vector<2x48xf32> to vector<2x16xf32>
    %176 = vector.extract_strided_slice %174 {offsets = [0, 0], sizes = [2, 16], strides = [1, 1]} : vector<2x48xf32> to vector<2x16xf32>
    %177 = arith.addf %175, %176 : vector<2x16xf32>
    %178 = arith.negf %177 : vector<2x16xf32>
    %179 = math.exp %178 : vector<2x16xf32>
    %cst_72 = arith.constant 1.000000e+00 : f32
    %180 = vector.broadcast %cst_72 : f32 to vector<2x16xf32>
    %181 = arith.addf %180, %179 : vector<2x16xf32>
    %182 = arith.divf %180, %181 : vector<2x16xf32>
    %183 = vector.extract_strided_slice %171 {offsets = [0, 16], sizes = [2, 16], strides = [1, 1]} : vector<2x48xf32> to vector<2x16xf32>
    %184 = vector.extract_strided_slice %174 {offsets = [0, 16], sizes = [2, 16], strides = [1, 1]} : vector<2x48xf32> to vector<2x16xf32>
    %185 = arith.addf %183, %184 : vector<2x16xf32>
    %186 = arith.negf %185 : vector<2x16xf32>
    %187 = math.exp %186 : vector<2x16xf32>
    %cst_73 = arith.constant 1.000000e+00 : f32
    %188 = vector.broadcast %cst_73 : f32 to vector<2x16xf32>
    %189 = arith.addf %188, %187 : vector<2x16xf32>
    %190 = arith.divf %188, %189 : vector<2x16xf32>
    %191 = vector.extract_strided_slice %171 {offsets = [0, 32], sizes = [2, 16], strides = [1, 1]} : vector<2x48xf32> to vector<2x16xf32>
    %192 = vector.extract_strided_slice %174 {offsets = [0, 32], sizes = [2, 16], strides = [1, 1]} : vector<2x48xf32> to vector<2x16xf32>
    %193 = arith.mulf %182, %192 : vector<2x16xf32>
    %194 = arith.addf %191, %193 : vector<2x16xf32>
    %195 = math.tanh %194 : vector<2x16xf32>
    %cst_74 = arith.constant 1.000000e+00 : f32
    %196 = vector.broadcast %cst_74 : f32 to vector<2x16xf32>
    %197 = arith.subf %196, %190 : vector<2x16xf32>
    %198 = arith.mulf %197, %195 : vector<2x16xf32>
    %199 = arith.mulf %190, %134 : vector<2x16xf32>
    %200 = arith.addf %198, %199 : vector<2x16xf32>
    %201 = vector.shape_cast %200 : vector<2x16xf32> to vector<2x1x16xf32>
    %c0_75 = arith.constant 0 : index
    %c1_76 = arith.constant 1 : index
    %c0_77 = arith.constant 0 : index
    %202 = vector.load %arg16[%c0_75, %c1_76, %c0_77] : memref<2x16x16xf32, #tpu.memory_space<vmem>>, vector<2x1x16xf32>
    tpu.vector_store %arg16[%c0_75, %c1_76, %c0_77], %201 {strides = array<i32>} : memref<2x16x16xf32, #tpu.memory_space<vmem>>, vector<2x1x16xf32>,
    %203 = vector.extract_strided_slice %97 {offsets = [0, 14, 0], sizes = [2, 1, 48], strides = [1, 1, 1]} : vector<2x16x48xf32> to vector<2x1x48xf32>
    %204 = vector.shape_cast %203 : vector<2x1x48xf32> to vector<2x48xf32>
    %cst_78 = arith.constant dense<0.000000e+00> : vector<2x48xf32>
    %205 = tpu.matmul %167, %100, %cst_78 {dimension_numbers = #tpu.dot_dimension_numbers<[1], [0], [0], [1], [0, 0, 1, 1], [], []>} : vector<2x16xf32>, vector<16x48xf32>, vector<2x48xf32> -> vector<2x48xf32>
    %206 = vector.broadcast %101 : vector<1x48xf32> to vector<2x48xf32>
    %207 = arith.addf %205, %206 : vector<2x48xf32>
    %208 = vector.extract_strided_slice %204 {offsets = [0, 0], sizes = [2, 16], strides = [1, 1]} : vector<2x48xf32> to vector<2x16xf32>
    %209 = vector.extract_strided_slice %207 {offsets = [0, 0], sizes = [2, 16], strides = [1, 1]} : vector<2x48xf32> to vector<2x16xf32>
    %210 = arith.addf %208, %209 : vector<2x16xf32>
    %211 = arith.negf %210 : vector<2x16xf32>
    %212 = math.exp %211 : vector<2x16xf32>
    %cst_79 = arith.constant 1.000000e+00 : f32
    %213 = vector.broadcast %cst_79 : f32 to vector<2x16xf32>
    %214 = arith.addf %213, %212 : vector<2x16xf32>
    %215 = arith.divf %213, %214 : vector<2x16xf32>
    %216 = vector.extract_strided_slice %204 {offsets = [0, 16], sizes = [2, 16], strides = [1, 1]} : vector<2x48xf32> to vector<2x16xf32>
    %217 = vector.extract_strided_slice %207 {offsets = [0, 16], sizes = [2, 16], strides = [1, 1]} : vector<2x48xf32> to vector<2x16xf32>
    %218 = arith.addf %216, %217 : vector<2x16xf32>
    %219 = arith.negf %218 : vector<2x16xf32>
    %220 = math.exp %219 : vector<2x16xf32>
    %cst_80 = arith.constant 1.000000e+00 : f32
    %221 = vector.broadcast %cst_80 : f32 to vector<2x16xf32>
    %222 = arith.addf %221, %220 : vector<2x16xf32>
    %223 = arith.divf %221, %222 : vector<2x16xf32>
    %224 = vector.extract_strided_slice %204 {offsets = [0, 32], sizes = [2, 16], strides = [1, 1]} : vector<2x48xf32> to vector<2x16xf32>
    %225 = vector.extract_strided_slice %207 {offsets = [0, 32], sizes = [2, 16], strides = [1, 1]} : vector<2x48xf32> to vector<2x16xf32>
    %226 = arith.mulf %215, %225 : vector<2x16xf32>
    %227 = arith.addf %224, %226 : vector<2x16xf32>
    %228 = math.tanh %227 : vector<2x16xf32>
    %cst_81 = arith.constant 1.000000e+00 : f32
    %229 = vector.broadcast %cst_81 : f32 to vector<2x16xf32>
    %230 = arith.subf %229, %223 : vector<2x16xf32>
    %231 = arith.mulf %230, %228 : vector<2x16xf32>
    %232 = arith.mulf %223, %167 : vector<2x16xf32>
    %233 = arith.addf %231, %232 : vector<2x16xf32>
    %234 = vector.shape_cast %233 : vector<2x16xf32> to vector<2x1x16xf32>
    %c0_82 = arith.constant 0 : index
    %c14 = arith.constant 14 : index
    %c0_83 = arith.constant 0 : index
    %235 = vector.load %arg17[%c0_82, %c14, %c0_83] : memref<2x16x16xf32, #tpu.memory_space<vmem>>, vector<2x1x16xf32>
    tpu.vector_store %arg17[%c0_82, %c14, %c0_83], %234 {strides = array<i32>} : memref<2x16x16xf32, #tpu.memory_space<vmem>>, vector<2x1x16xf32>,
    %236 = vector.extract_strided_slice %91 {offsets = [0, 2, 0], sizes = [2, 1, 48], strides = [1, 1, 1]} : vector<2x16x48xf32> to vector<2x1x48xf32>
    %237 = vector.shape_cast %236 : vector<2x1x48xf32> to vector<2x48xf32>
    %cst_84 = arith.constant dense<0.000000e+00> : vector<2x48xf32>
    %238 = tpu.matmul %200, %98, %cst_84 {dimension_numbers = #tpu.dot_dimension_numbers<[1], [0], [0], [1], [0, 0, 1, 1], [], []>} : vector<2x16xf32>, vector<16x48xf32>, vector<2x48xf32> -> vector<2x48xf32>
    %239 = vector.broadcast %99 : vector<1x48xf32> to vector<2x48xf32>
    %240 = arith.addf %238, %239 : vector<2x48xf32>
    %241 = vector.extract_strided_slice %237 {offsets = [0, 0], sizes = [2, 16], strides = [1, 1]} : vector<2x48xf32> to vector<2x16xf32>
    %242 = vector.extract_strided_slice %240 {offsets = [0, 0], sizes = [2, 16], strides = [1, 1]} : vector<2x48xf32> to vector<2x16xf32>
    %243 = arith.addf %241, %242 : vector<2x16xf32>
    %244 = arith.negf %243 : vector<2x16xf32>
    %245 = math.exp %244 : vector<2x16xf32>
    %cst_85 = arith.constant 1.000000e+00 : f32
    %246 = vector.broadcast %cst_85 : f32 to vector<2x16xf32>
    %247 = arith.addf %246, %245 : vector<2x16xf32>
    %248 = arith.divf %246, %247 : vector<2x16xf32>
    %249 = vector.extract_strided_slice %237 {offsets = [0, 16], sizes = [2, 16], strides = [1, 1]} : vector<2x48xf32> to vector<2x16xf32>
    %250 = vector.extract_strided_slice %240 {offsets = [0, 16], sizes = [2, 16], strides = [1, 1]} : vector<2x48xf32> to vector<2x16xf32>
    %251 = arith.addf %249, %250 : vector<2x16xf32>
    %252 = arith.negf %251 : vector<2x16xf32>
    %253 = math.exp %252 : vector<2x16xf32>
    %cst_86 = arith.constant 1.000000e+00 : f32
    %254 = vector.broadcast %cst_86 : f32 to vector<2x16xf32>
    %255 = arith.addf %254, %253 : vector<2x16xf32>
    %256 = arith.divf %254, %255 : vector<2x16xf32>
    %257 = vector.extract_strided_slice %237 {offsets = [0, 32], sizes = [2, 16], strides = [1, 1]} : vector<2x48xf32> to vector<2x16xf32>
    %258 = vector.extract_strided_slice %240 {offsets = [0, 32], sizes = [2, 16], strides = [1, 1]} : vector<2x48xf32> to vector<2x16xf32>
    %259 = arith.mulf %248, %258 : vector<2x16xf32>
    %260 = arith.addf %257, %259 : vector<2x16xf32>
    %261 = math.tanh %260 : vector<2x16xf32>
    %cst_87 = arith.constant 1.000000e+00 : f32
    %262 = vector.broadcast %cst_87 : f32 to vector<2x16xf32>
    %263 = arith.subf %262, %256 : vector<2x16xf32>
    %264 = arith.mulf %263, %261 : vector<2x16xf32>
    %265 = arith.mulf %256, %200 : vector<2x16xf32>
    %266 = arith.addf %264, %265 : vector<2x16xf32>
    %267 = vector.shape_cast %266 : vector<2x16xf32> to vector<2x1x16xf32>
    %c0_88 = arith.constant 0 : index
    %c2_89 = arith.constant 2 : index
    %c0_90 = arith.constant 0 : index
    %268 = vector.load %arg16[%c0_88, %c2_89, %c0_90] : memref<2x16x16xf32, #tpu.memory_space<vmem>>, vector<2x1x16xf32>
    tpu.vector_store %arg16[%c0_88, %c2_89, %c0_90], %267 {strides = array<i32>} : memref<2x16x16xf32, #tpu.memory_space<vmem>>, vector<2x1x16xf32>,
    %269 = vector.extract_strided_slice %97 {offsets = [0, 13, 0], sizes = [2, 1, 48], strides = [1, 1, 1]} : vector<2x16x48xf32> to vector<2x1x48xf32>
    %270 = vector.shape_cast %269 : vector<2x1x48xf32> to vector<2x48xf32>
    %cst_91 = arith.constant dense<0.000000e+00> : vector<2x48xf32>
    %271 = tpu.matmul %233, %100, %cst_91 {dimension_numbers = #tpu.dot_dimension_numbers<[1], [0], [0], [1], [0, 0, 1, 1], [], []>} : vector<2x16xf32>, vector<16x48xf32>, vector<2x48xf32> -> vector<2x48xf32>
    %272 = vector.broadcast %101 : vector<1x48xf32> to vector<2x48xf32>
    %273 = arith.addf %271, %272 : vector<2x48xf32>
    %274 = vector.extract_strided_slice %270 {offsets = [0, 0], sizes = [2, 16], strides = [1, 1]} : vector<2x48xf32> to vector<2x16xf32>
    %275 = vector.extract_strided_slice %273 {offsets = [0, 0], sizes = [2, 16], strides = [1, 1]} : vector<2x48xf32> to vector<2x16xf32>
    %276 = arith.addf %274, %275 : vector<2x16xf32>
    %277 = arith.negf %276 : vector<2x16xf32>
    %278 = math.exp %277 : vector<2x16xf32>
    %cst_92 = arith.constant 1.000000e+00 : f32
    %279 = vector.broadcast %cst_92 : f32 to vector<2x16xf32>
    %280 = arith.addf %279, %278 : vector<2x16xf32>
    %281 = arith.divf %279, %280 : vector<2x16xf32>
    %282 = vector.extract_strided_slice %270 {offsets = [0, 16], sizes = [2, 16], strides = [1, 1]} : vector<2x48xf32> to vector<2x16xf32>
    %283 = vector.extract_strided_slice %273 {offsets = [0, 16], sizes = [2, 16], strides = [1, 1]} : vector<2x48xf32> to vector<2x16xf32>
    %284 = arith.addf %282, %283 : vector<2x16xf32>
    %285 = arith.negf %284 : vector<2x16xf32>
    %286 = math.exp %285 : vector<2x16xf32>
    %cst_93 = arith.constant 1.000000e+00 : f32
    %287 = vector.broadcast %cst_93 : f32 to vector<2x16xf32>
    %288 = arith.addf %287, %286 : vector<2x16xf32>
    %289 = arith.divf %287, %288 : vector<2x16xf32>
    %290 = vector.extract_strided_slice %270 {offsets = [0, 32], sizes = [2, 16], strides = [1, 1]} : vector<2x48xf32> to vector<2x16xf32>
    %291 = vector.extract_strided_slice %273 {offsets = [0, 32], sizes = [2, 16], strides = [1, 1]} : vector<2x48xf32> to vector<2x16xf32>
    %292 = arith.mulf %281, %291 : vector<2x16xf32>
    %293 = arith.addf %290, %292 : vector<2x16xf32>
    %294 = math.tanh %293 : vector<2x16xf32>
    %cst_94 = arith.constant 1.000000e+00 : f32
    %295 = vector.broadcast %cst_94 : f32 to vector<2x16xf32>
    %296 = arith.subf %295, %289 : vector<2x16xf32>
    %297 = arith.mulf %296, %294 : vector<2x16xf32>
    %298 = arith.mulf %289, %233 : vector<2x16xf32>
    %299 = arith.addf %297, %298 : vector<2x16xf32>
    %300 = vector.shape_cast %299 : vector<2x16xf32> to vector<2x1x16xf32>
    %c0_95 = arith.constant 0 : index
    %c13 = arith.constant 13 : index
    %c0_96 = arith.constant 0 : index
    %301 = vector.load %arg17[%c0_95, %c13, %c0_96] : memref<2x16x16xf32, #tpu.memory_space<vmem>>, vector<2x1x16xf32>
    tpu.vector_store %arg17[%c0_95, %c13, %c0_96], %300 {strides = array<i32>} : memref<2x16x16xf32, #tpu.memory_space<vmem>>, vector<2x1x16xf32>,
    %302 = vector.extract_strided_slice %91 {offsets = [0, 3, 0], sizes = [2, 1, 48], strides = [1, 1, 1]} : vector<2x16x48xf32> to vector<2x1x48xf32>
    %303 = vector.shape_cast %302 : vector<2x1x48xf32> to vector<2x48xf32>
    %cst_97 = arith.constant dense<0.000000e+00> : vector<2x48xf32>
    %304 = tpu.matmul %266, %98, %cst_97 {dimension_numbers = #tpu.dot_dimension_numbers<[1], [0], [0], [1], [0, 0, 1, 1], [], []>} : vector<2x16xf32>, vector<16x48xf32>, vector<2x48xf32> -> vector<2x48xf32>
    %305 = vector.broadcast %99 : vector<1x48xf32> to vector<2x48xf32>
    %306 = arith.addf %304, %305 : vector<2x48xf32>
    %307 = vector.extract_strided_slice %303 {offsets = [0, 0], sizes = [2, 16], strides = [1, 1]} : vector<2x48xf32> to vector<2x16xf32>
    %308 = vector.extract_strided_slice %306 {offsets = [0, 0], sizes = [2, 16], strides = [1, 1]} : vector<2x48xf32> to vector<2x16xf32>
    %309 = arith.addf %307, %308 : vector<2x16xf32>
    %310 = arith.negf %309 : vector<2x16xf32>
    %311 = math.exp %310 : vector<2x16xf32>
    %cst_98 = arith.constant 1.000000e+00 : f32
    %312 = vector.broadcast %cst_98 : f32 to vector<2x16xf32>
    %313 = arith.addf %312, %311 : vector<2x16xf32>
    %314 = arith.divf %312, %313 : vector<2x16xf32>
    %315 = vector.extract_strided_slice %303 {offsets = [0, 16], sizes = [2, 16], strides = [1, 1]} : vector<2x48xf32> to vector<2x16xf32>
    %316 = vector.extract_strided_slice %306 {offsets = [0, 16], sizes = [2, 16], strides = [1, 1]} : vector<2x48xf32> to vector<2x16xf32>
    %317 = arith.addf %315, %316 : vector<2x16xf32>
    %318 = arith.negf %317 : vector<2x16xf32>
    %319 = math.exp %318 : vector<2x16xf32>
    %cst_99 = arith.constant 1.000000e+00 : f32
    %320 = vector.broadcast %cst_99 : f32 to vector<2x16xf32>
    %321 = arith.addf %320, %319 : vector<2x16xf32>
    %322 = arith.divf %320, %321 : vector<2x16xf32>
    %323 = vector.extract_strided_slice %303 {offsets = [0, 32], sizes = [2, 16], strides = [1, 1]} : vector<2x48xf32> to vector<2x16xf32>
    %324 = vector.extract_strided_slice %306 {offsets = [0, 32], sizes = [2, 16], strides = [1, 1]} : vector<2x48xf32> to vector<2x16xf32>
    %325 = arith.mulf %314, %324 : vector<2x16xf32>
    %326 = arith.addf %323, %325 : vector<2x16xf32>
    %327 = math.tanh %326 : vector<2x16xf32>
    %cst_100 = arith.constant 1.000000e+00 : f32
    %328 = vector.broadcast %cst_100 : f32 to vector<2x16xf32>
    %329 = arith.subf %328, %322 : vector<2x16xf32>
    %330 = arith.mulf %329, %327 : vector<2x16xf32>
    %331 = arith.mulf %322, %266 : vector<2x16xf32>
    %332 = arith.addf %330, %331 : vector<2x16xf32>
    %333 = vector.shape_cast %332 : vector<2x16xf32> to vector<2x1x16xf32>
    %c0_101 = arith.constant 0 : index
    %c3_102 = arith.constant 3 : index
    %c0_103 = arith.constant 0 : index
    %334 = vector.load %arg16[%c0_101, %c3_102, %c0_103] : memref<2x16x16xf32, #tpu.memory_space<vmem>>, vector<2x1x16xf32>
    tpu.vector_store %arg16[%c0_101, %c3_102, %c0_103], %333 {strides = array<i32>} : memref<2x16x16xf32, #tpu.memory_space<vmem>>, vector<2x1x16xf32>,
    %335 = vector.extract_strided_slice %97 {offsets = [0, 12, 0], sizes = [2, 1, 48], strides = [1, 1, 1]} : vector<2x16x48xf32> to vector<2x1x48xf32>
    %336 = vector.shape_cast %335 : vector<2x1x48xf32> to vector<2x48xf32>
    %cst_104 = arith.constant dense<0.000000e+00> : vector<2x48xf32>
    %337 = tpu.matmul %299, %100, %cst_104 {dimension_numbers = #tpu.dot_dimension_numbers<[1], [0], [0], [1], [0, 0, 1, 1], [], []>} : vector<2x16xf32>, vector<16x48xf32>, vector<2x48xf32> -> vector<2x48xf32>
    %338 = vector.broadcast %101 : vector<1x48xf32> to vector<2x48xf32>
    %339 = arith.addf %337, %338 : vector<2x48xf32>
    %340 = vector.extract_strided_slice %336 {offsets = [0, 0], sizes = [2, 16], strides = [1, 1]} : vector<2x48xf32> to vector<2x16xf32>
    %341 = vector.extract_strided_slice %339 {offsets = [0, 0], sizes = [2, 16], strides = [1, 1]} : vector<2x48xf32> to vector<2x16xf32>
    %342 = arith.addf %340, %341 : vector<2x16xf32>
    %343 = arith.negf %342 : vector<2x16xf32>
    %344 = math.exp %343 : vector<2x16xf32>
    %cst_105 = arith.constant 1.000000e+00 : f32
    %345 = vector.broadcast %cst_105 : f32 to vector<2x16xf32>
    %346 = arith.addf %345, %344 : vector<2x16xf32>
    %347 = arith.divf %345, %346 : vector<2x16xf32>
    %348 = vector.extract_strided_slice %336 {offsets = [0, 16], sizes = [2, 16], strides = [1, 1]} : vector<2x48xf32> to vector<2x16xf32>
    %349 = vector.extract_strided_slice %339 {offsets = [0, 16], sizes = [2, 16], strides = [1, 1]} : vector<2x48xf32> to vector<2x16xf32>
    %350 = arith.addf %348, %349 : vector<2x16xf32>
    %351 = arith.negf %350 : vector<2x16xf32>
    %352 = math.exp %351 : vector<2x16xf32>
    %cst_106 = arith.constant 1.000000e+00 : f32
    %353 = vector.broadcast %cst_106 : f32 to vector<2x16xf32>
    %354 = arith.addf %353, %352 : vector<2x16xf32>
    %355 = arith.divf %353, %354 : vector<2x16xf32>
    %356 = vector.extract_strided_slice %336 {offsets = [0, 32], sizes = [2, 16], strides = [1, 1]} : vector<2x48xf32> to vector<2x16xf32>
    %357 = vector.extract_strided_slice %339 {offsets = [0, 32], sizes = [2, 16], strides = [1, 1]} : vector<2x48xf32> to vector<2x16xf32>
    %358 = arith.mulf %347, %357 : vector<2x16xf32>
    %359 = arith.addf %356, %358 : vector<2x16xf32>
    %360 = math.tanh %359 : vector<2x16xf32>
    %cst_107 = arith.constant 1.000000e+00 : f32
    %361 = vector.broadcast %cst_107 : f32 to vector<2x16xf32>
    %362 = arith.subf %361, %355 : vector<2x16xf32>
    %363 = arith.mulf %362, %360 : vector<2x16xf32>
    %364 = arith.mulf %355, %299 : vector<2x16xf32>
    %365 = arith.addf %363, %364 : vector<2x16xf32>
    %366 = vector.shape_cast %365 : vector<2x16xf32> to vector<2x1x16xf32>
    %c0_108 = arith.constant 0 : index
    %c12 = arith.constant 12 : index
    %c0_109 = arith.constant 0 : index
    %367 = vector.load %arg17[%c0_108, %c12, %c0_109] : memref<2x16x16xf32, #tpu.memory_space<vmem>>, vector<2x1x16xf32>
    tpu.vector_store %arg17[%c0_108, %c12, %c0_109], %366 {strides = array<i32>} : memref<2x16x16xf32, #tpu.memory_space<vmem>>, vector<2x1x16xf32>,
    %368 = vector.extract_strided_slice %91 {offsets = [0, 4, 0], sizes = [2, 1, 48], strides = [1, 1, 1]} : vector<2x16x48xf32> to vector<2x1x48xf32>
    %369 = vector.shape_cast %368 : vector<2x1x48xf32> to vector<2x48xf32>
    %cst_110 = arith.constant dense<0.000000e+00> : vector<2x48xf32>
    %370 = tpu.matmul %332, %98, %cst_110 {dimension_numbers = #tpu.dot_dimension_numbers<[1], [0], [0], [1], [0, 0, 1, 1], [], []>} : vector<2x16xf32>, vector<16x48xf32>, vector<2x48xf32> -> vector<2x48xf32>
    %371 = vector.broadcast %99 : vector<1x48xf32> to vector<2x48xf32>
    %372 = arith.addf %370, %371 : vector<2x48xf32>
    %373 = vector.extract_strided_slice %369 {offsets = [0, 0], sizes = [2, 16], strides = [1, 1]} : vector<2x48xf32> to vector<2x16xf32>
    %374 = vector.extract_strided_slice %372 {offsets = [0, 0], sizes = [2, 16], strides = [1, 1]} : vector<2x48xf32> to vector<2x16xf32>
    %375 = arith.addf %373, %374 : vector<2x16xf32>
    %376 = arith.negf %375 : vector<2x16xf32>
    %377 = math.exp %376 : vector<2x16xf32>
    %cst_111 = arith.constant 1.000000e+00 : f32
    %378 = vector.broadcast %cst_111 : f32 to vector<2x16xf32>
    %379 = arith.addf %378, %377 : vector<2x16xf32>
    %380 = arith.divf %378, %379 : vector<2x16xf32>
    %381 = vector.extract_strided_slice %369 {offsets = [0, 16], sizes = [2, 16], strides = [1, 1]} : vector<2x48xf32> to vector<2x16xf32>
    %382 = vector.extract_strided_slice %372 {offsets = [0, 16], sizes = [2, 16], strides = [1, 1]} : vector<2x48xf32> to vector<2x16xf32>
    %383 = arith.addf %381, %382 : vector<2x16xf32>
    %384 = arith.negf %383 : vector<2x16xf32>
    %385 = math.exp %384 : vector<2x16xf32>
    %cst_112 = arith.constant 1.000000e+00 : f32
    %386 = vector.broadcast %cst_112 : f32 to vector<2x16xf32>
    %387 = arith.addf %386, %385 : vector<2x16xf32>
    %388 = arith.divf %386, %387 : vector<2x16xf32>
    %389 = vector.extract_strided_slice %369 {offsets = [0, 32], sizes = [2, 16], strides = [1, 1]} : vector<2x48xf32> to vector<2x16xf32>
    %390 = vector.extract_strided_slice %372 {offsets = [0, 32], sizes = [2, 16], strides = [1, 1]} : vector<2x48xf32> to vector<2x16xf32>
    %391 = arith.mulf %380, %390 : vector<2x16xf32>
    %392 = arith.addf %389, %391 : vector<2x16xf32>
    %393 = math.tanh %392 : vector<2x16xf32>
    %cst_113 = arith.constant 1.000000e+00 : f32
    %394 = vector.broadcast %cst_113 : f32 to vector<2x16xf32>
    %395 = arith.subf %394, %388 : vector<2x16xf32>
    %396 = arith.mulf %395, %393 : vector<2x16xf32>
    %397 = arith.mulf %388, %332 : vector<2x16xf32>
    %398 = arith.addf %396, %397 : vector<2x16xf32>
    %399 = vector.shape_cast %398 : vector<2x16xf32> to vector<2x1x16xf32>
    %c0_114 = arith.constant 0 : index
    %c4 = arith.constant 4 : index
    %c0_115 = arith.constant 0 : index
    %400 = vector.load %arg16[%c0_114, %c4, %c0_115] : memref<2x16x16xf32, #tpu.memory_space<vmem>>, vector<2x1x16xf32>
    tpu.vector_store %arg16[%c0_114, %c4, %c0_115], %399 {strides = array<i32>} : memref<2x16x16xf32, #tpu.memory_space<vmem>>, vector<2x1x16xf32>,
    %401 = vector.extract_strided_slice %97 {offsets = [0, 11, 0], sizes = [2, 1, 48], strides = [1, 1, 1]} : vector<2x16x48xf32> to vector<2x1x48xf32>
    %402 = vector.shape_cast %401 : vector<2x1x48xf32> to vector<2x48xf32>
    %cst_116 = arith.constant dense<0.000000e+00> : vector<2x48xf32>
    %403 = tpu.matmul %365, %100, %cst_116 {dimension_numbers = #tpu.dot_dimension_numbers<[1], [0], [0], [1], [0, 0, 1, 1], [], []>} : vector<2x16xf32>, vector<16x48xf32>, vector<2x48xf32> -> vector<2x48xf32>
    %404 = vector.broadcast %101 : vector<1x48xf32> to vector<2x48xf32>
    %405 = arith.addf %403, %404 : vector<2x48xf32>
    %406 = vector.extract_strided_slice %402 {offsets = [0, 0], sizes = [2, 16], strides = [1, 1]} : vector<2x48xf32> to vector<2x16xf32>
    %407 = vector.extract_strided_slice %405 {offsets = [0, 0], sizes = [2, 16], strides = [1, 1]} : vector<2x48xf32> to vector<2x16xf32>
    %408 = arith.addf %406, %407 : vector<2x16xf32>
    %409 = arith.negf %408 : vector<2x16xf32>
    %410 = math.exp %409 : vector<2x16xf32>
    %cst_117 = arith.constant 1.000000e+00 : f32
    %411 = vector.broadcast %cst_117 : f32 to vector<2x16xf32>
    %412 = arith.addf %411, %410 : vector<2x16xf32>
    %413 = arith.divf %411, %412 : vector<2x16xf32>
    %414 = vector.extract_strided_slice %402 {offsets = [0, 16], sizes = [2, 16], strides = [1, 1]} : vector<2x48xf32> to vector<2x16xf32>
    %415 = vector.extract_strided_slice %405 {offsets = [0, 16], sizes = [2, 16], strides = [1, 1]} : vector<2x48xf32> to vector<2x16xf32>
    %416 = arith.addf %414, %415 : vector<2x16xf32>
    %417 = arith.negf %416 : vector<2x16xf32>
    %418 = math.exp %417 : vector<2x16xf32>
    %cst_118 = arith.constant 1.000000e+00 : f32
    %419 = vector.broadcast %cst_118 : f32 to vector<2x16xf32>
    %420 = arith.addf %419, %418 : vector<2x16xf32>
    %421 = arith.divf %419, %420 : vector<2x16xf32>
    %422 = vector.extract_strided_slice %402 {offsets = [0, 32], sizes = [2, 16], strides = [1, 1]} : vector<2x48xf32> to vector<2x16xf32>
    %423 = vector.extract_strided_slice %405 {offsets = [0, 32], sizes = [2, 16], strides = [1, 1]} : vector<2x48xf32> to vector<2x16xf32>
    %424 = arith.mulf %413, %423 : vector<2x16xf32>
    %425 = arith.addf %422, %424 : vector<2x16xf32>
    %426 = math.tanh %425 : vector<2x16xf32>
    %cst_119 = arith.constant 1.000000e+00 : f32
    %427 = vector.broadcast %cst_119 : f32 to vector<2x16xf32>
    %428 = arith.subf %427, %421 : vector<2x16xf32>
    %429 = arith.mulf %428, %426 : vector<2x16xf32>
    %430 = arith.mulf %421, %365 : vector<2x16xf32>
    %431 = arith.addf %429, %430 : vector<2x16xf32>
    %432 = vector.shape_cast %431 : vector<2x16xf32> to vector<2x1x16xf32>
    %c0_120 = arith.constant 0 : index
    %c11 = arith.constant 11 : index
    %c0_121 = arith.constant 0 : index
    %433 = vector.load %arg17[%c0_120, %c11, %c0_121] : memref<2x16x16xf32, #tpu.memory_space<vmem>>, vector<2x1x16xf32>
    tpu.vector_store %arg17[%c0_120, %c11, %c0_121], %432 {strides = array<i32>} : memref<2x16x16xf32, #tpu.memory_space<vmem>>, vector<2x1x16xf32>,
    %434 = vector.extract_strided_slice %91 {offsets = [0, 5, 0], sizes = [2, 1, 48], strides = [1, 1, 1]} : vector<2x16x48xf32> to vector<2x1x48xf32>
    %435 = vector.shape_cast %434 : vector<2x1x48xf32> to vector<2x48xf32>
    %cst_122 = arith.constant dense<0.000000e+00> : vector<2x48xf32>
    %436 = tpu.matmul %398, %98, %cst_122 {dimension_numbers = #tpu.dot_dimension_numbers<[1], [0], [0], [1], [0, 0, 1, 1], [], []>} : vector<2x16xf32>, vector<16x48xf32>, vector<2x48xf32> -> vector<2x48xf32>
    %437 = vector.broadcast %99 : vector<1x48xf32> to vector<2x48xf32>
    %438 = arith.addf %436, %437 : vector<2x48xf32>
    %439 = vector.extract_strided_slice %435 {offsets = [0, 0], sizes = [2, 16], strides = [1, 1]} : vector<2x48xf32> to vector<2x16xf32>
    %440 = vector.extract_strided_slice %438 {offsets = [0, 0], sizes = [2, 16], strides = [1, 1]} : vector<2x48xf32> to vector<2x16xf32>
    %441 = arith.addf %439, %440 : vector<2x16xf32>
    %442 = arith.negf %441 : vector<2x16xf32>
    %443 = math.exp %442 : vector<2x16xf32>
    %cst_123 = arith.constant 1.000000e+00 : f32
    %444 = vector.broadcast %cst_123 : f32 to vector<2x16xf32>
    %445 = arith.addf %444, %443 : vector<2x16xf32>
    %446 = arith.divf %444, %445 : vector<2x16xf32>
    %447 = vector.extract_strided_slice %435 {offsets = [0, 16], sizes = [2, 16], strides = [1, 1]} : vector<2x48xf32> to vector<2x16xf32>
    %448 = vector.extract_strided_slice %438 {offsets = [0, 16], sizes = [2, 16], strides = [1, 1]} : vector<2x48xf32> to vector<2x16xf32>
    %449 = arith.addf %447, %448 : vector<2x16xf32>
    %450 = arith.negf %449 : vector<2x16xf32>
    %451 = math.exp %450 : vector<2x16xf32>
    %cst_124 = arith.constant 1.000000e+00 : f32
    %452 = vector.broadcast %cst_124 : f32 to vector<2x16xf32>
    %453 = arith.addf %452, %451 : vector<2x16xf32>
    %454 = arith.divf %452, %453 : vector<2x16xf32>
    %455 = vector.extract_strided_slice %435 {offsets = [0, 32], sizes = [2, 16], strides = [1, 1]} : vector<2x48xf32> to vector<2x16xf32>
    %456 = vector.extract_strided_slice %438 {offsets = [0, 32], sizes = [2, 16], strides = [1, 1]} : vector<2x48xf32> to vector<2x16xf32>
    %457 = arith.mulf %446, %456 : vector<2x16xf32>
    %458 = arith.addf %455, %457 : vector<2x16xf32>
    %459 = math.tanh %458 : vector<2x16xf32>
    %cst_125 = arith.constant 1.000000e+00 : f32
    %460 = vector.broadcast %cst_125 : f32 to vector<2x16xf32>
    %461 = arith.subf %460, %454 : vector<2x16xf32>
    %462 = arith.mulf %461, %459 : vector<2x16xf32>
    %463 = arith.mulf %454, %398 : vector<2x16xf32>
    %464 = arith.addf %462, %463 : vector<2x16xf32>
    %465 = vector.shape_cast %464 : vector<2x16xf32> to vector<2x1x16xf32>
    %c0_126 = arith.constant 0 : index
    %c5 = arith.constant 5 : index
    %c0_127 = arith.constant 0 : index
    %466 = vector.load %arg16[%c0_126, %c5, %c0_127] : memref<2x16x16xf32, #tpu.memory_space<vmem>>, vector<2x1x16xf32>
    tpu.vector_store %arg16[%c0_126, %c5, %c0_127], %465 {strides = array<i32>} : memref<2x16x16xf32, #tpu.memory_space<vmem>>, vector<2x1x16xf32>,
    %467 = vector.extract_strided_slice %97 {offsets = [0, 10, 0], sizes = [2, 1, 48], strides = [1, 1, 1]} : vector<2x16x48xf32> to vector<2x1x48xf32>
    %468 = vector.shape_cast %467 : vector<2x1x48xf32> to vector<2x48xf32>
    %cst_128 = arith.constant dense<0.000000e+00> : vector<2x48xf32>
    %469 = tpu.matmul %431, %100, %cst_128 {dimension_numbers = #tpu.dot_dimension_numbers<[1], [0], [0], [1], [0, 0, 1, 1], [], []>} : vector<2x16xf32>, vector<16x48xf32>, vector<2x48xf32> -> vector<2x48xf32>
    %470 = vector.broadcast %101 : vector<1x48xf32> to vector<2x48xf32>
    %471 = arith.addf %469, %470 : vector<2x48xf32>
    %472 = vector.extract_strided_slice %468 {offsets = [0, 0], sizes = [2, 16], strides = [1, 1]} : vector<2x48xf32> to vector<2x16xf32>
    %473 = vector.extract_strided_slice %471 {offsets = [0, 0], sizes = [2, 16], strides = [1, 1]} : vector<2x48xf32> to vector<2x16xf32>
    %474 = arith.addf %472, %473 : vector<2x16xf32>
    %475 = arith.negf %474 : vector<2x16xf32>
    %476 = math.exp %475 : vector<2x16xf32>
    %cst_129 = arith.constant 1.000000e+00 : f32
    %477 = vector.broadcast %cst_129 : f32 to vector<2x16xf32>
    %478 = arith.addf %477, %476 : vector<2x16xf32>
    %479 = arith.divf %477, %478 : vector<2x16xf32>
    %480 = vector.extract_strided_slice %468 {offsets = [0, 16], sizes = [2, 16], strides = [1, 1]} : vector<2x48xf32> to vector<2x16xf32>
    %481 = vector.extract_strided_slice %471 {offsets = [0, 16], sizes = [2, 16], strides = [1, 1]} : vector<2x48xf32> to vector<2x16xf32>
    %482 = arith.addf %480, %481 : vector<2x16xf32>
    %483 = arith.negf %482 : vector<2x16xf32>
    %484 = math.exp %483 : vector<2x16xf32>
    %cst_130 = arith.constant 1.000000e+00 : f32
    %485 = vector.broadcast %cst_130 : f32 to vector<2x16xf32>
    %486 = arith.addf %485, %484 : vector<2x16xf32>
    %487 = arith.divf %485, %486 : vector<2x16xf32>
    %488 = vector.extract_strided_slice %468 {offsets = [0, 32], sizes = [2, 16], strides = [1, 1]} : vector<2x48xf32> to vector<2x16xf32>
    %489 = vector.extract_strided_slice %471 {offsets = [0, 32], sizes = [2, 16], strides = [1, 1]} : vector<2x48xf32> to vector<2x16xf32>
    %490 = arith.mulf %479, %489 : vector<2x16xf32>
    %491 = arith.addf %488, %490 : vector<2x16xf32>
    %492 = math.tanh %491 : vector<2x16xf32>
    %cst_131 = arith.constant 1.000000e+00 : f32
    %493 = vector.broadcast %cst_131 : f32 to vector<2x16xf32>
    %494 = arith.subf %493, %487 : vector<2x16xf32>
    %495 = arith.mulf %494, %492 : vector<2x16xf32>
    %496 = arith.mulf %487, %431 : vector<2x16xf32>
    %497 = arith.addf %495, %496 : vector<2x16xf32>
    %498 = vector.shape_cast %497 : vector<2x16xf32> to vector<2x1x16xf32>
    %c0_132 = arith.constant 0 : index
    %c10 = arith.constant 10 : index
    %c0_133 = arith.constant 0 : index
    %499 = vector.load %arg17[%c0_132, %c10, %c0_133] : memref<2x16x16xf32, #tpu.memory_space<vmem>>, vector<2x1x16xf32>
    tpu.vector_store %arg17[%c0_132, %c10, %c0_133], %498 {strides = array<i32>} : memref<2x16x16xf32, #tpu.memory_space<vmem>>, vector<2x1x16xf32>,
    %500 = vector.extract_strided_slice %91 {offsets = [0, 6, 0], sizes = [2, 1, 48], strides = [1, 1, 1]} : vector<2x16x48xf32> to vector<2x1x48xf32>
    %501 = vector.shape_cast %500 : vector<2x1x48xf32> to vector<2x48xf32>
    %cst_134 = arith.constant dense<0.000000e+00> : vector<2x48xf32>
    %502 = tpu.matmul %464, %98, %cst_134 {dimension_numbers = #tpu.dot_dimension_numbers<[1], [0], [0], [1], [0, 0, 1, 1], [], []>} : vector<2x16xf32>, vector<16x48xf32>, vector<2x48xf32> -> vector<2x48xf32>
    %503 = vector.broadcast %99 : vector<1x48xf32> to vector<2x48xf32>
    %504 = arith.addf %502, %503 : vector<2x48xf32>
    %505 = vector.extract_strided_slice %501 {offsets = [0, 0], sizes = [2, 16], strides = [1, 1]} : vector<2x48xf32> to vector<2x16xf32>
    %506 = vector.extract_strided_slice %504 {offsets = [0, 0], sizes = [2, 16], strides = [1, 1]} : vector<2x48xf32> to vector<2x16xf32>
    %507 = arith.addf %505, %506 : vector<2x16xf32>
    %508 = arith.negf %507 : vector<2x16xf32>
    %509 = math.exp %508 : vector<2x16xf32>
    %cst_135 = arith.constant 1.000000e+00 : f32
    %510 = vector.broadcast %cst_135 : f32 to vector<2x16xf32>
    %511 = arith.addf %510, %509 : vector<2x16xf32>
    %512 = arith.divf %510, %511 : vector<2x16xf32>
    %513 = vector.extract_strided_slice %501 {offsets = [0, 16], sizes = [2, 16], strides = [1, 1]} : vector<2x48xf32> to vector<2x16xf32>
    %514 = vector.extract_strided_slice %504 {offsets = [0, 16], sizes = [2, 16], strides = [1, 1]} : vector<2x48xf32> to vector<2x16xf32>
    %515 = arith.addf %513, %514 : vector<2x16xf32>
    %516 = arith.negf %515 : vector<2x16xf32>
    %517 = math.exp %516 : vector<2x16xf32>
    %cst_136 = arith.constant 1.000000e+00 : f32
    %518 = vector.broadcast %cst_136 : f32 to vector<2x16xf32>
    %519 = arith.addf %518, %517 : vector<2x16xf32>
    %520 = arith.divf %518, %519 : vector<2x16xf32>
    %521 = vector.extract_strided_slice %501 {offsets = [0, 32], sizes = [2, 16], strides = [1, 1]} : vector<2x48xf32> to vector<2x16xf32>
    %522 = vector.extract_strided_slice %504 {offsets = [0, 32], sizes = [2, 16], strides = [1, 1]} : vector<2x48xf32> to vector<2x16xf32>
    %523 = arith.mulf %512, %522 : vector<2x16xf32>
    %524 = arith.addf %521, %523 : vector<2x16xf32>
    %525 = math.tanh %524 : vector<2x16xf32>
    %cst_137 = arith.constant 1.000000e+00 : f32
    %526 = vector.broadcast %cst_137 : f32 to vector<2x16xf32>
    %527 = arith.subf %526, %520 : vector<2x16xf32>
    %528 = arith.mulf %527, %525 : vector<2x16xf32>
    %529 = arith.mulf %520, %464 : vector<2x16xf32>
    %530 = arith.addf %528, %529 : vector<2x16xf32>
    %531 = vector.shape_cast %530 : vector<2x16xf32> to vector<2x1x16xf32>
    %c0_138 = arith.constant 0 : index
    %c6 = arith.constant 6 : index
    %c0_139 = arith.constant 0 : index
    %532 = vector.load %arg16[%c0_138, %c6, %c0_139] : memref<2x16x16xf32, #tpu.memory_space<vmem>>, vector<2x1x16xf32>
    tpu.vector_store %arg16[%c0_138, %c6, %c0_139], %531 {strides = array<i32>} : memref<2x16x16xf32, #tpu.memory_space<vmem>>, vector<2x1x16xf32>,
    %533 = vector.extract_strided_slice %97 {offsets = [0, 9, 0], sizes = [2, 1, 48], strides = [1, 1, 1]} : vector<2x16x48xf32> to vector<2x1x48xf32>
    %534 = vector.shape_cast %533 : vector<2x1x48xf32> to vector<2x48xf32>
    %cst_140 = arith.constant dense<0.000000e+00> : vector<2x48xf32>
    %535 = tpu.matmul %497, %100, %cst_140 {dimension_numbers = #tpu.dot_dimension_numbers<[1], [0], [0], [1], [0, 0, 1, 1], [], []>} : vector<2x16xf32>, vector<16x48xf32>, vector<2x48xf32> -> vector<2x48xf32>
    %536 = vector.broadcast %101 : vector<1x48xf32> to vector<2x48xf32>
    %537 = arith.addf %535, %536 : vector<2x48xf32>
    %538 = vector.extract_strided_slice %534 {offsets = [0, 0], sizes = [2, 16], strides = [1, 1]} : vector<2x48xf32> to vector<2x16xf32>
    %539 = vector.extract_strided_slice %537 {offsets = [0, 0], sizes = [2, 16], strides = [1, 1]} : vector<2x48xf32> to vector<2x16xf32>
    %540 = arith.addf %538, %539 : vector<2x16xf32>
    %541 = arith.negf %540 : vector<2x16xf32>
    %542 = math.exp %541 : vector<2x16xf32>
    %cst_141 = arith.constant 1.000000e+00 : f32
    %543 = vector.broadcast %cst_141 : f32 to vector<2x16xf32>
    %544 = arith.addf %543, %542 : vector<2x16xf32>
    %545 = arith.divf %543, %544 : vector<2x16xf32>
    %546 = vector.extract_strided_slice %534 {offsets = [0, 16], sizes = [2, 16], strides = [1, 1]} : vector<2x48xf32> to vector<2x16xf32>
    %547 = vector.extract_strided_slice %537 {offsets = [0, 16], sizes = [2, 16], strides = [1, 1]} : vector<2x48xf32> to vector<2x16xf32>
    %548 = arith.addf %546, %547 : vector<2x16xf32>
    %549 = arith.negf %548 : vector<2x16xf32>
    %550 = math.exp %549 : vector<2x16xf32>
    %cst_142 = arith.constant 1.000000e+00 : f32
    %551 = vector.broadcast %cst_142 : f32 to vector<2x16xf32>
    %552 = arith.addf %551, %550 : vector<2x16xf32>
    %553 = arith.divf %551, %552 : vector<2x16xf32>
    %554 = vector.extract_strided_slice %534 {offsets = [0, 32], sizes = [2, 16], strides = [1, 1]} : vector<2x48xf32> to vector<2x16xf32>
    %555 = vector.extract_strided_slice %537 {offsets = [0, 32], sizes = [2, 16], strides = [1, 1]} : vector<2x48xf32> to vector<2x16xf32>
    %556 = arith.mulf %545, %555 : vector<2x16xf32>
    %557 = arith.addf %554, %556 : vector<2x16xf32>
    %558 = math.tanh %557 : vector<2x16xf32>
    %cst_143 = arith.constant 1.000000e+00 : f32
    %559 = vector.broadcast %cst_143 : f32 to vector<2x16xf32>
    %560 = arith.subf %559, %553 : vector<2x16xf32>
    %561 = arith.mulf %560, %558 : vector<2x16xf32>
    %562 = arith.mulf %553, %497 : vector<2x16xf32>
    %563 = arith.addf %561, %562 : vector<2x16xf32>
    %564 = vector.shape_cast %563 : vector<2x16xf32> to vector<2x1x16xf32>
    %c0_144 = arith.constant 0 : index
    %c9 = arith.constant 9 : index
    %c0_145 = arith.constant 0 : index
    %565 = vector.load %arg17[%c0_144, %c9, %c0_145] : memref<2x16x16xf32, #tpu.memory_space<vmem>>, vector<2x1x16xf32>
    tpu.vector_store %arg17[%c0_144, %c9, %c0_145], %564 {strides = array<i32>} : memref<2x16x16xf32, #tpu.memory_space<vmem>>, vector<2x1x16xf32>,
    %566 = vector.extract_strided_slice %91 {offsets = [0, 7, 0], sizes = [2, 1, 48], strides = [1, 1, 1]} : vector<2x16x48xf32> to vector<2x1x48xf32>
    %567 = vector.shape_cast %566 : vector<2x1x48xf32> to vector<2x48xf32>
    %cst_146 = arith.constant dense<0.000000e+00> : vector<2x48xf32>
    %568 = tpu.matmul %530, %98, %cst_146 {dimension_numbers = #tpu.dot_dimension_numbers<[1], [0], [0], [1], [0, 0, 1, 1], [], []>} : vector<2x16xf32>, vector<16x48xf32>, vector<2x48xf32> -> vector<2x48xf32>
    %569 = vector.broadcast %99 : vector<1x48xf32> to vector<2x48xf32>
    %570 = arith.addf %568, %569 : vector<2x48xf32>
    %571 = vector.extract_strided_slice %567 {offsets = [0, 0], sizes = [2, 16], strides = [1, 1]} : vector<2x48xf32> to vector<2x16xf32>
    %572 = vector.extract_strided_slice %570 {offsets = [0, 0], sizes = [2, 16], strides = [1, 1]} : vector<2x48xf32> to vector<2x16xf32>
    %573 = arith.addf %571, %572 : vector<2x16xf32>
    %574 = arith.negf %573 : vector<2x16xf32>
    %575 = math.exp %574 : vector<2x16xf32>
    %cst_147 = arith.constant 1.000000e+00 : f32
    %576 = vector.broadcast %cst_147 : f32 to vector<2x16xf32>
    %577 = arith.addf %576, %575 : vector<2x16xf32>
    %578 = arith.divf %576, %577 : vector<2x16xf32>
    %579 = vector.extract_strided_slice %567 {offsets = [0, 16], sizes = [2, 16], strides = [1, 1]} : vector<2x48xf32> to vector<2x16xf32>
    %580 = vector.extract_strided_slice %570 {offsets = [0, 16], sizes = [2, 16], strides = [1, 1]} : vector<2x48xf32> to vector<2x16xf32>
    %581 = arith.addf %579, %580 : vector<2x16xf32>
    %582 = arith.negf %581 : vector<2x16xf32>
    %583 = math.exp %582 : vector<2x16xf32>
    %cst_148 = arith.constant 1.000000e+00 : f32
    %584 = vector.broadcast %cst_148 : f32 to vector<2x16xf32>
    %585 = arith.addf %584, %583 : vector<2x16xf32>
    %586 = arith.divf %584, %585 : vector<2x16xf32>
    %587 = vector.extract_strided_slice %567 {offsets = [0, 32], sizes = [2, 16], strides = [1, 1]} : vector<2x48xf32> to vector<2x16xf32>
    %588 = vector.extract_strided_slice %570 {offsets = [0, 32], sizes = [2, 16], strides = [1, 1]} : vector<2x48xf32> to vector<2x16xf32>
    %589 = arith.mulf %578, %588 : vector<2x16xf32>
    %590 = arith.addf %587, %589 : vector<2x16xf32>
    %591 = math.tanh %590 : vector<2x16xf32>
    %cst_149 = arith.constant 1.000000e+00 : f32
    %592 = vector.broadcast %cst_149 : f32 to vector<2x16xf32>
    %593 = arith.subf %592, %586 : vector<2x16xf32>
    %594 = arith.mulf %593, %591 : vector<2x16xf32>
    %595 = arith.mulf %586, %530 : vector<2x16xf32>
    %596 = arith.addf %594, %595 : vector<2x16xf32>
    %597 = vector.shape_cast %596 : vector<2x16xf32> to vector<2x1x16xf32>
    %c0_150 = arith.constant 0 : index
    %c7 = arith.constant 7 : index
    %c0_151 = arith.constant 0 : index
    %598 = vector.load %arg16[%c0_150, %c7, %c0_151] : memref<2x16x16xf32, #tpu.memory_space<vmem>>, vector<2x1x16xf32>
    tpu.vector_store %arg16[%c0_150, %c7, %c0_151], %597 {strides = array<i32>} : memref<2x16x16xf32, #tpu.memory_space<vmem>>, vector<2x1x16xf32>,
    %599 = vector.extract_strided_slice %97 {offsets = [0, 8, 0], sizes = [2, 1, 48], strides = [1, 1, 1]} : vector<2x16x48xf32> to vector<2x1x48xf32>
    %600 = vector.shape_cast %599 : vector<2x1x48xf32> to vector<2x48xf32>
    %cst_152 = arith.constant dense<0.000000e+00> : vector<2x48xf32>
    %601 = tpu.matmul %563, %100, %cst_152 {dimension_numbers = #tpu.dot_dimension_numbers<[1], [0], [0], [1], [0, 0, 1, 1], [], []>} : vector<2x16xf32>, vector<16x48xf32>, vector<2x48xf32> -> vector<2x48xf32>
    %602 = vector.broadcast %101 : vector<1x48xf32> to vector<2x48xf32>
    %603 = arith.addf %601, %602 : vector<2x48xf32>
    %604 = vector.extract_strided_slice %600 {offsets = [0, 0], sizes = [2, 16], strides = [1, 1]} : vector<2x48xf32> to vector<2x16xf32>
    %605 = vector.extract_strided_slice %603 {offsets = [0, 0], sizes = [2, 16], strides = [1, 1]} : vector<2x48xf32> to vector<2x16xf32>
    %606 = arith.addf %604, %605 : vector<2x16xf32>
    %607 = arith.negf %606 : vector<2x16xf32>
    %608 = math.exp %607 : vector<2x16xf32>
    %cst_153 = arith.constant 1.000000e+00 : f32
    %609 = vector.broadcast %cst_153 : f32 to vector<2x16xf32>
    %610 = arith.addf %609, %608 : vector<2x16xf32>
    %611 = arith.divf %609, %610 : vector<2x16xf32>
    %612 = vector.extract_strided_slice %600 {offsets = [0, 16], sizes = [2, 16], strides = [1, 1]} : vector<2x48xf32> to vector<2x16xf32>
    %613 = vector.extract_strided_slice %603 {offsets = [0, 16], sizes = [2, 16], strides = [1, 1]} : vector<2x48xf32> to vector<2x16xf32>
    %614 = arith.addf %612, %613 : vector<2x16xf32>
    %615 = arith.negf %614 : vector<2x16xf32>
    %616 = math.exp %615 : vector<2x16xf32>
    %cst_154 = arith.constant 1.000000e+00 : f32
    %617 = vector.broadcast %cst_154 : f32 to vector<2x16xf32>
    %618 = arith.addf %617, %616 : vector<2x16xf32>
    %619 = arith.divf %617, %618 : vector<2x16xf32>
    %620 = vector.extract_strided_slice %600 {offsets = [0, 32], sizes = [2, 16], strides = [1, 1]} : vector<2x48xf32> to vector<2x16xf32>
    %621 = vector.extract_strided_slice %603 {offsets = [0, 32], sizes = [2, 16], strides = [1, 1]} : vector<2x48xf32> to vector<2x16xf32>
    %622 = arith.mulf %611, %621 : vector<2x16xf32>
    %623 = arith.addf %620, %622 : vector<2x16xf32>
    %624 = math.tanh %623 : vector<2x16xf32>
    %cst_155 = arith.constant 1.000000e+00 : f32
    %625 = vector.broadcast %cst_155 : f32 to vector<2x16xf32>
    %626 = arith.subf %625, %619 : vector<2x16xf32>
    %627 = arith.mulf %626, %624 : vector<2x16xf32>
    %628 = arith.mulf %619, %563 : vector<2x16xf32>
    %629 = arith.addf %627, %628 : vector<2x16xf32>
    %630 = vector.shape_cast %629 : vector<2x16xf32> to vector<2x1x16xf32>
    %c0_156 = arith.constant 0 : index
    %c8 = arith.constant 8 : index
    %c0_157 = arith.constant 0 : index
    %631 = vector.load %arg17[%c0_156, %c8, %c0_157] : memref<2x16x16xf32, #tpu.memory_space<vmem>>, vector<2x1x16xf32>
    tpu.vector_store %arg17[%c0_156, %c8, %c0_157], %630 {strides = array<i32>} : memref<2x16x16xf32, #tpu.memory_space<vmem>>, vector<2x1x16xf32>,
    %632 = vector.extract_strided_slice %91 {offsets = [0, 8, 0], sizes = [2, 1, 48], strides = [1, 1, 1]} : vector<2x16x48xf32> to vector<2x1x48xf32>
    %633 = vector.shape_cast %632 : vector<2x1x48xf32> to vector<2x48xf32>
    %cst_158 = arith.constant dense<0.000000e+00> : vector<2x48xf32>
    %634 = tpu.matmul %596, %98, %cst_158 {dimension_numbers = #tpu.dot_dimension_numbers<[1], [0], [0], [1], [0, 0, 1, 1], [], []>} : vector<2x16xf32>, vector<16x48xf32>, vector<2x48xf32> -> vector<2x48xf32>
    %635 = vector.broadcast %99 : vector<1x48xf32> to vector<2x48xf32>
    %636 = arith.addf %634, %635 : vector<2x48xf32>
    %637 = vector.extract_strided_slice %633 {offsets = [0, 0], sizes = [2, 16], strides = [1, 1]} : vector<2x48xf32> to vector<2x16xf32>
    %638 = vector.extract_strided_slice %636 {offsets = [0, 0], sizes = [2, 16], strides = [1, 1]} : vector<2x48xf32> to vector<2x16xf32>
    %639 = arith.addf %637, %638 : vector<2x16xf32>
    %640 = arith.negf %639 : vector<2x16xf32>
    %641 = math.exp %640 : vector<2x16xf32>
    %cst_159 = arith.constant 1.000000e+00 : f32
    %642 = vector.broadcast %cst_159 : f32 to vector<2x16xf32>
    %643 = arith.addf %642, %641 : vector<2x16xf32>
    %644 = arith.divf %642, %643 : vector<2x16xf32>
    %645 = vector.extract_strided_slice %633 {offsets = [0, 16], sizes = [2, 16], strides = [1, 1]} : vector<2x48xf32> to vector<2x16xf32>
    %646 = vector.extract_strided_slice %636 {offsets = [0, 16], sizes = [2, 16], strides = [1, 1]} : vector<2x48xf32> to vector<2x16xf32>
    %647 = arith.addf %645, %646 : vector<2x16xf32>
    %648 = arith.negf %647 : vector<2x16xf32>
    %649 = math.exp %648 : vector<2x16xf32>
    %cst_160 = arith.constant 1.000000e+00 : f32
    %650 = vector.broadcast %cst_160 : f32 to vector<2x16xf32>
    %651 = arith.addf %650, %649 : vector<2x16xf32>
    %652 = arith.divf %650, %651 : vector<2x16xf32>
    %653 = vector.extract_strided_slice %633 {offsets = [0, 32], sizes = [2, 16], strides = [1, 1]} : vector<2x48xf32> to vector<2x16xf32>
    %654 = vector.extract_strided_slice %636 {offsets = [0, 32], sizes = [2, 16], strides = [1, 1]} : vector<2x48xf32> to vector<2x16xf32>
    %655 = arith.mulf %644, %654 : vector<2x16xf32>
    %656 = arith.addf %653, %655 : vector<2x16xf32>
    %657 = math.tanh %656 : vector<2x16xf32>
    %cst_161 = arith.constant 1.000000e+00 : f32
    %658 = vector.broadcast %cst_161 : f32 to vector<2x16xf32>
    %659 = arith.subf %658, %652 : vector<2x16xf32>
    %660 = arith.mulf %659, %657 : vector<2x16xf32>
    %661 = arith.mulf %652, %596 : vector<2x16xf32>
    %662 = arith.addf %660, %661 : vector<2x16xf32>
    %663 = vector.shape_cast %662 : vector<2x16xf32> to vector<2x1x16xf32>
    %c0_162 = arith.constant 0 : index
    %c8_163 = arith.constant 8 : index
    %c0_164 = arith.constant 0 : index
    %664 = vector.load %arg16[%c0_162, %c8_163, %c0_164] : memref<2x16x16xf32, #tpu.memory_space<vmem>>, vector<2x1x16xf32>
    tpu.vector_store %arg16[%c0_162, %c8_163, %c0_164], %663 {strides = array<i32>} : memref<2x16x16xf32, #tpu.memory_space<vmem>>, vector<2x1x16xf32>,
    %665 = vector.extract_strided_slice %97 {offsets = [0, 7, 0], sizes = [2, 1, 48], strides = [1, 1, 1]} : vector<2x16x48xf32> to vector<2x1x48xf32>
    %666 = vector.shape_cast %665 : vector<2x1x48xf32> to vector<2x48xf32>
    %cst_165 = arith.constant dense<0.000000e+00> : vector<2x48xf32>
    %667 = tpu.matmul %629, %100, %cst_165 {dimension_numbers = #tpu.dot_dimension_numbers<[1], [0], [0], [1], [0, 0, 1, 1], [], []>} : vector<2x16xf32>, vector<16x48xf32>, vector<2x48xf32> -> vector<2x48xf32>
    %668 = vector.broadcast %101 : vector<1x48xf32> to vector<2x48xf32>
    %669 = arith.addf %667, %668 : vector<2x48xf32>
    %670 = vector.extract_strided_slice %666 {offsets = [0, 0], sizes = [2, 16], strides = [1, 1]} : vector<2x48xf32> to vector<2x16xf32>
    %671 = vector.extract_strided_slice %669 {offsets = [0, 0], sizes = [2, 16], strides = [1, 1]} : vector<2x48xf32> to vector<2x16xf32>
    %672 = arith.addf %670, %671 : vector<2x16xf32>
    %673 = arith.negf %672 : vector<2x16xf32>
    %674 = math.exp %673 : vector<2x16xf32>
    %cst_166 = arith.constant 1.000000e+00 : f32
    %675 = vector.broadcast %cst_166 : f32 to vector<2x16xf32>
    %676 = arith.addf %675, %674 : vector<2x16xf32>
    %677 = arith.divf %675, %676 : vector<2x16xf32>
    %678 = vector.extract_strided_slice %666 {offsets = [0, 16], sizes = [2, 16], strides = [1, 1]} : vector<2x48xf32> to vector<2x16xf32>
    %679 = vector.extract_strided_slice %669 {offsets = [0, 16], sizes = [2, 16], strides = [1, 1]} : vector<2x48xf32> to vector<2x16xf32>
    %680 = arith.addf %678, %679 : vector<2x16xf32>
    %681 = arith.negf %680 : vector<2x16xf32>
    %682 = math.exp %681 : vector<2x16xf32>
    %cst_167 = arith.constant 1.000000e+00 : f32
    %683 = vector.broadcast %cst_167 : f32 to vector<2x16xf32>
    %684 = arith.addf %683, %682 : vector<2x16xf32>
    %685 = arith.divf %683, %684 : vector<2x16xf32>
    %686 = vector.extract_strided_slice %666 {offsets = [0, 32], sizes = [2, 16], strides = [1, 1]} : vector<2x48xf32> to vector<2x16xf32>
    %687 = vector.extract_strided_slice %669 {offsets = [0, 32], sizes = [2, 16], strides = [1, 1]} : vector<2x48xf32> to vector<2x16xf32>
    %688 = arith.mulf %677, %687 : vector<2x16xf32>
    %689 = arith.addf %686, %688 : vector<2x16xf32>
    %690 = math.tanh %689 : vector<2x16xf32>
    %cst_168 = arith.constant 1.000000e+00 : f32
    %691 = vector.broadcast %cst_168 : f32 to vector<2x16xf32>
    %692 = arith.subf %691, %685 : vector<2x16xf32>
    %693 = arith.mulf %692, %690 : vector<2x16xf32>
    %694 = arith.mulf %685, %629 : vector<2x16xf32>
    %695 = arith.addf %693, %694 : vector<2x16xf32>
    %696 = vector.shape_cast %695 : vector<2x16xf32> to vector<2x1x16xf32>
    %c0_169 = arith.constant 0 : index
    %c7_170 = arith.constant 7 : index
    %c0_171 = arith.constant 0 : index
    %697 = vector.load %arg17[%c0_169, %c7_170, %c0_171] : memref<2x16x16xf32, #tpu.memory_space<vmem>>, vector<2x1x16xf32>
    tpu.vector_store %arg17[%c0_169, %c7_170, %c0_171], %696 {strides = array<i32>} : memref<2x16x16xf32, #tpu.memory_space<vmem>>, vector<2x1x16xf32>,
    %698 = vector.extract_strided_slice %91 {offsets = [0, 9, 0], sizes = [2, 1, 48], strides = [1, 1, 1]} : vector<2x16x48xf32> to vector<2x1x48xf32>
    %699 = vector.shape_cast %698 : vector<2x1x48xf32> to vector<2x48xf32>
    %cst_172 = arith.constant dense<0.000000e+00> : vector<2x48xf32>
    %700 = tpu.matmul %662, %98, %cst_172 {dimension_numbers = #tpu.dot_dimension_numbers<[1], [0], [0], [1], [0, 0, 1, 1], [], []>} : vector<2x16xf32>, vector<16x48xf32>, vector<2x48xf32> -> vector<2x48xf32>
    %701 = vector.broadcast %99 : vector<1x48xf32> to vector<2x48xf32>
    %702 = arith.addf %700, %701 : vector<2x48xf32>
    %703 = vector.extract_strided_slice %699 {offsets = [0, 0], sizes = [2, 16], strides = [1, 1]} : vector<2x48xf32> to vector<2x16xf32>
    %704 = vector.extract_strided_slice %702 {offsets = [0, 0], sizes = [2, 16], strides = [1, 1]} : vector<2x48xf32> to vector<2x16xf32>
    %705 = arith.addf %703, %704 : vector<2x16xf32>
    %706 = arith.negf %705 : vector<2x16xf32>
    %707 = math.exp %706 : vector<2x16xf32>
    %cst_173 = arith.constant 1.000000e+00 : f32
    %708 = vector.broadcast %cst_173 : f32 to vector<2x16xf32>
    %709 = arith.addf %708, %707 : vector<2x16xf32>
    %710 = arith.divf %708, %709 : vector<2x16xf32>
    %711 = vector.extract_strided_slice %699 {offsets = [0, 16], sizes = [2, 16], strides = [1, 1]} : vector<2x48xf32> to vector<2x16xf32>
    %712 = vector.extract_strided_slice %702 {offsets = [0, 16], sizes = [2, 16], strides = [1, 1]} : vector<2x48xf32> to vector<2x16xf32>
    %713 = arith.addf %711, %712 : vector<2x16xf32>
    %714 = arith.negf %713 : vector<2x16xf32>
    %715 = math.exp %714 : vector<2x16xf32>
    %cst_174 = arith.constant 1.000000e+00 : f32
    %716 = vector.broadcast %cst_174 : f32 to vector<2x16xf32>
    %717 = arith.addf %716, %715 : vector<2x16xf32>
    %718 = arith.divf %716, %717 : vector<2x16xf32>
    %719 = vector.extract_strided_slice %699 {offsets = [0, 32], sizes = [2, 16], strides = [1, 1]} : vector<2x48xf32> to vector<2x16xf32>
    %720 = vector.extract_strided_slice %702 {offsets = [0, 32], sizes = [2, 16], strides = [1, 1]} : vector<2x48xf32> to vector<2x16xf32>
    %721 = arith.mulf %710, %720 : vector<2x16xf32>
    %722 = arith.addf %719, %721 : vector<2x16xf32>
    %723 = math.tanh %722 : vector<2x16xf32>
    %cst_175 = arith.constant 1.000000e+00 : f32
    %724 = vector.broadcast %cst_175 : f32 to vector<2x16xf32>
    %725 = arith.subf %724, %718 : vector<2x16xf32>
    %726 = arith.mulf %725, %723 : vector<2x16xf32>
    %727 = arith.mulf %718, %662 : vector<2x16xf32>
    %728 = arith.addf %726, %727 : vector<2x16xf32>
    %729 = vector.shape_cast %728 : vector<2x16xf32> to vector<2x1x16xf32>
    %c0_176 = arith.constant 0 : index
    %c9_177 = arith.constant 9 : index
    %c0_178 = arith.constant 0 : index
    %730 = vector.load %arg16[%c0_176, %c9_177, %c0_178] : memref<2x16x16xf32, #tpu.memory_space<vmem>>, vector<2x1x16xf32>
    tpu.vector_store %arg16[%c0_176, %c9_177, %c0_178], %729 {strides = array<i32>} : memref<2x16x16xf32, #tpu.memory_space<vmem>>, vector<2x1x16xf32>,
    %731 = vector.extract_strided_slice %97 {offsets = [0, 6, 0], sizes = [2, 1, 48], strides = [1, 1, 1]} : vector<2x16x48xf32> to vector<2x1x48xf32>
    %732 = vector.shape_cast %731 : vector<2x1x48xf32> to vector<2x48xf32>
    %cst_179 = arith.constant dense<0.000000e+00> : vector<2x48xf32>
    %733 = tpu.matmul %695, %100, %cst_179 {dimension_numbers = #tpu.dot_dimension_numbers<[1], [0], [0], [1], [0, 0, 1, 1], [], []>} : vector<2x16xf32>, vector<16x48xf32>, vector<2x48xf32> -> vector<2x48xf32>
    %734 = vector.broadcast %101 : vector<1x48xf32> to vector<2x48xf32>
    %735 = arith.addf %733, %734 : vector<2x48xf32>
    %736 = vector.extract_strided_slice %732 {offsets = [0, 0], sizes = [2, 16], strides = [1, 1]} : vector<2x48xf32> to vector<2x16xf32>
    %737 = vector.extract_strided_slice %735 {offsets = [0, 0], sizes = [2, 16], strides = [1, 1]} : vector<2x48xf32> to vector<2x16xf32>
    %738 = arith.addf %736, %737 : vector<2x16xf32>
    %739 = arith.negf %738 : vector<2x16xf32>
    %740 = math.exp %739 : vector<2x16xf32>
    %cst_180 = arith.constant 1.000000e+00 : f32
    %741 = vector.broadcast %cst_180 : f32 to vector<2x16xf32>
    %742 = arith.addf %741, %740 : vector<2x16xf32>
    %743 = arith.divf %741, %742 : vector<2x16xf32>
    %744 = vector.extract_strided_slice %732 {offsets = [0, 16], sizes = [2, 16], strides = [1, 1]} : vector<2x48xf32> to vector<2x16xf32>
    %745 = vector.extract_strided_slice %735 {offsets = [0, 16], sizes = [2, 16], strides = [1, 1]} : vector<2x48xf32> to vector<2x16xf32>
    %746 = arith.addf %744, %745 : vector<2x16xf32>
    %747 = arith.negf %746 : vector<2x16xf32>
    %748 = math.exp %747 : vector<2x16xf32>
    %cst_181 = arith.constant 1.000000e+00 : f32
    %749 = vector.broadcast %cst_181 : f32 to vector<2x16xf32>
    %750 = arith.addf %749, %748 : vector<2x16xf32>
    %751 = arith.divf %749, %750 : vector<2x16xf32>
    %752 = vector.extract_strided_slice %732 {offsets = [0, 32], sizes = [2, 16], strides = [1, 1]} : vector<2x48xf32> to vector<2x16xf32>
    %753 = vector.extract_strided_slice %735 {offsets = [0, 32], sizes = [2, 16], strides = [1, 1]} : vector<2x48xf32> to vector<2x16xf32>
    %754 = arith.mulf %743, %753 : vector<2x16xf32>
    %755 = arith.addf %752, %754 : vector<2x16xf32>
    %756 = math.tanh %755 : vector<2x16xf32>
    %cst_182 = arith.constant 1.000000e+00 : f32
    %757 = vector.broadcast %cst_182 : f32 to vector<2x16xf32>
    %758 = arith.subf %757, %751 : vector<2x16xf32>
    %759 = arith.mulf %758, %756 : vector<2x16xf32>
    %760 = arith.mulf %751, %695 : vector<2x16xf32>
    %761 = arith.addf %759, %760 : vector<2x16xf32>
    %762 = vector.shape_cast %761 : vector<2x16xf32> to vector<2x1x16xf32>
    %c0_183 = arith.constant 0 : index
    %c6_184 = arith.constant 6 : index
    %c0_185 = arith.constant 0 : index
    %763 = vector.load %arg17[%c0_183, %c6_184, %c0_185] : memref<2x16x16xf32, #tpu.memory_space<vmem>>, vector<2x1x16xf32>
    tpu.vector_store %arg17[%c0_183, %c6_184, %c0_185], %762 {strides = array<i32>} : memref<2x16x16xf32, #tpu.memory_space<vmem>>, vector<2x1x16xf32>,
    %764 = vector.extract_strided_slice %91 {offsets = [0, 10, 0], sizes = [2, 1, 48], strides = [1, 1, 1]} : vector<2x16x48xf32> to vector<2x1x48xf32>
    %765 = vector.shape_cast %764 : vector<2x1x48xf32> to vector<2x48xf32>
    %cst_186 = arith.constant dense<0.000000e+00> : vector<2x48xf32>
    %766 = tpu.matmul %728, %98, %cst_186 {dimension_numbers = #tpu.dot_dimension_numbers<[1], [0], [0], [1], [0, 0, 1, 1], [], []>} : vector<2x16xf32>, vector<16x48xf32>, vector<2x48xf32> -> vector<2x48xf32>
    %767 = vector.broadcast %99 : vector<1x48xf32> to vector<2x48xf32>
    %768 = arith.addf %766, %767 : vector<2x48xf32>
    %769 = vector.extract_strided_slice %765 {offsets = [0, 0], sizes = [2, 16], strides = [1, 1]} : vector<2x48xf32> to vector<2x16xf32>
    %770 = vector.extract_strided_slice %768 {offsets = [0, 0], sizes = [2, 16], strides = [1, 1]} : vector<2x48xf32> to vector<2x16xf32>
    %771 = arith.addf %769, %770 : vector<2x16xf32>
    %772 = arith.negf %771 : vector<2x16xf32>
    %773 = math.exp %772 : vector<2x16xf32>
    %cst_187 = arith.constant 1.000000e+00 : f32
    %774 = vector.broadcast %cst_187 : f32 to vector<2x16xf32>
    %775 = arith.addf %774, %773 : vector<2x16xf32>
    %776 = arith.divf %774, %775 : vector<2x16xf32>
    %777 = vector.extract_strided_slice %765 {offsets = [0, 16], sizes = [2, 16], strides = [1, 1]} : vector<2x48xf32> to vector<2x16xf32>
    %778 = vector.extract_strided_slice %768 {offsets = [0, 16], sizes = [2, 16], strides = [1, 1]} : vector<2x48xf32> to vector<2x16xf32>
    %779 = arith.addf %777, %778 : vector<2x16xf32>
    %780 = arith.negf %779 : vector<2x16xf32>
    %781 = math.exp %780 : vector<2x16xf32>
    %cst_188 = arith.constant 1.000000e+00 : f32
    %782 = vector.broadcast %cst_188 : f32 to vector<2x16xf32>
    %783 = arith.addf %782, %781 : vector<2x16xf32>
    %784 = arith.divf %782, %783 : vector<2x16xf32>
    %785 = vector.extract_strided_slice %765 {offsets = [0, 32], sizes = [2, 16], strides = [1, 1]} : vector<2x48xf32> to vector<2x16xf32>
    %786 = vector.extract_strided_slice %768 {offsets = [0, 32], sizes = [2, 16], strides = [1, 1]} : vector<2x48xf32> to vector<2x16xf32>
    %787 = arith.mulf %776, %786 : vector<2x16xf32>
    %788 = arith.addf %785, %787 : vector<2x16xf32>
    %789 = math.tanh %788 : vector<2x16xf32>
    %cst_189 = arith.constant 1.000000e+00 : f32
    %790 = vector.broadcast %cst_189 : f32 to vector<2x16xf32>
    %791 = arith.subf %790, %784 : vector<2x16xf32>
    %792 = arith.mulf %791, %789 : vector<2x16xf32>
    %793 = arith.mulf %784, %728 : vector<2x16xf32>
    %794 = arith.addf %792, %793 : vector<2x16xf32>
    %795 = vector.shape_cast %794 : vector<2x16xf32> to vector<2x1x16xf32>
    %c0_190 = arith.constant 0 : index
    %c10_191 = arith.constant 10 : index
    %c0_192 = arith.constant 0 : index
    %796 = vector.load %arg16[%c0_190, %c10_191, %c0_192] : memref<2x16x16xf32, #tpu.memory_space<vmem>>, vector<2x1x16xf32>
    tpu.vector_store %arg16[%c0_190, %c10_191, %c0_192], %795 {strides = array<i32>} : memref<2x16x16xf32, #tpu.memory_space<vmem>>, vector<2x1x16xf32>,
    %797 = vector.extract_strided_slice %97 {offsets = [0, 5, 0], sizes = [2, 1, 48], strides = [1, 1, 1]} : vector<2x16x48xf32> to vector<2x1x48xf32>
    %798 = vector.shape_cast %797 : vector<2x1x48xf32> to vector<2x48xf32>
    %cst_193 = arith.constant dense<0.000000e+00> : vector<2x48xf32>
    %799 = tpu.matmul %761, %100, %cst_193 {dimension_numbers = #tpu.dot_dimension_numbers<[1], [0], [0], [1], [0, 0, 1, 1], [], []>} : vector<2x16xf32>, vector<16x48xf32>, vector<2x48xf32> -> vector<2x48xf32>
    %800 = vector.broadcast %101 : vector<1x48xf32> to vector<2x48xf32>
    %801 = arith.addf %799, %800 : vector<2x48xf32>
    %802 = vector.extract_strided_slice %798 {offsets = [0, 0], sizes = [2, 16], strides = [1, 1]} : vector<2x48xf32> to vector<2x16xf32>
    %803 = vector.extract_strided_slice %801 {offsets = [0, 0], sizes = [2, 16], strides = [1, 1]} : vector<2x48xf32> to vector<2x16xf32>
    %804 = arith.addf %802, %803 : vector<2x16xf32>
    %805 = arith.negf %804 : vector<2x16xf32>
    %806 = math.exp %805 : vector<2x16xf32>
    %cst_194 = arith.constant 1.000000e+00 : f32
    %807 = vector.broadcast %cst_194 : f32 to vector<2x16xf32>
    %808 = arith.addf %807, %806 : vector<2x16xf32>
    %809 = arith.divf %807, %808 : vector<2x16xf32>
    %810 = vector.extract_strided_slice %798 {offsets = [0, 16], sizes = [2, 16], strides = [1, 1]} : vector<2x48xf32> to vector<2x16xf32>
    %811 = vector.extract_strided_slice %801 {offsets = [0, 16], sizes = [2, 16], strides = [1, 1]} : vector<2x48xf32> to vector<2x16xf32>
    %812 = arith.addf %810, %811 : vector<2x16xf32>
    %813 = arith.negf %812 : vector<2x16xf32>
    %814 = math.exp %813 : vector<2x16xf32>
    %cst_195 = arith.constant 1.000000e+00 : f32
    %815 = vector.broadcast %cst_195 : f32 to vector<2x16xf32>
    %816 = arith.addf %815, %814 : vector<2x16xf32>
    %817 = arith.divf %815, %816 : vector<2x16xf32>
    %818 = vector.extract_strided_slice %798 {offsets = [0, 32], sizes = [2, 16], strides = [1, 1]} : vector<2x48xf32> to vector<2x16xf32>
    %819 = vector.extract_strided_slice %801 {offsets = [0, 32], sizes = [2, 16], strides = [1, 1]} : vector<2x48xf32> to vector<2x16xf32>
    %820 = arith.mulf %809, %819 : vector<2x16xf32>
    %821 = arith.addf %818, %820 : vector<2x16xf32>
    %822 = math.tanh %821 : vector<2x16xf32>
    %cst_196 = arith.constant 1.000000e+00 : f32
    %823 = vector.broadcast %cst_196 : f32 to vector<2x16xf32>
    %824 = arith.subf %823, %817 : vector<2x16xf32>
    %825 = arith.mulf %824, %822 : vector<2x16xf32>
    %826 = arith.mulf %817, %761 : vector<2x16xf32>
    %827 = arith.addf %825, %826 : vector<2x16xf32>
    %828 = vector.shape_cast %827 : vector<2x16xf32> to vector<2x1x16xf32>
    %c0_197 = arith.constant 0 : index
    %c5_198 = arith.constant 5 : index
    %c0_199 = arith.constant 0 : index
    %829 = vector.load %arg17[%c0_197, %c5_198, %c0_199] : memref<2x16x16xf32, #tpu.memory_space<vmem>>, vector<2x1x16xf32>
    tpu.vector_store %arg17[%c0_197, %c5_198, %c0_199], %828 {strides = array<i32>} : memref<2x16x16xf32, #tpu.memory_space<vmem>>, vector<2x1x16xf32>,
    %830 = vector.extract_strided_slice %91 {offsets = [0, 11, 0], sizes = [2, 1, 48], strides = [1, 1, 1]} : vector<2x16x48xf32> to vector<2x1x48xf32>
    %831 = vector.shape_cast %830 : vector<2x1x48xf32> to vector<2x48xf32>
    %cst_200 = arith.constant dense<0.000000e+00> : vector<2x48xf32>
    %832 = tpu.matmul %794, %98, %cst_200 {dimension_numbers = #tpu.dot_dimension_numbers<[1], [0], [0], [1], [0, 0, 1, 1], [], []>} : vector<2x16xf32>, vector<16x48xf32>, vector<2x48xf32> -> vector<2x48xf32>
    %833 = vector.broadcast %99 : vector<1x48xf32> to vector<2x48xf32>
    %834 = arith.addf %832, %833 : vector<2x48xf32>
    %835 = vector.extract_strided_slice %831 {offsets = [0, 0], sizes = [2, 16], strides = [1, 1]} : vector<2x48xf32> to vector<2x16xf32>
    %836 = vector.extract_strided_slice %834 {offsets = [0, 0], sizes = [2, 16], strides = [1, 1]} : vector<2x48xf32> to vector<2x16xf32>
    %837 = arith.addf %835, %836 : vector<2x16xf32>
    %838 = arith.negf %837 : vector<2x16xf32>
    %839 = math.exp %838 : vector<2x16xf32>
    %cst_201 = arith.constant 1.000000e+00 : f32
    %840 = vector.broadcast %cst_201 : f32 to vector<2x16xf32>
    %841 = arith.addf %840, %839 : vector<2x16xf32>
    %842 = arith.divf %840, %841 : vector<2x16xf32>
    %843 = vector.extract_strided_slice %831 {offsets = [0, 16], sizes = [2, 16], strides = [1, 1]} : vector<2x48xf32> to vector<2x16xf32>
    %844 = vector.extract_strided_slice %834 {offsets = [0, 16], sizes = [2, 16], strides = [1, 1]} : vector<2x48xf32> to vector<2x16xf32>
    %845 = arith.addf %843, %844 : vector<2x16xf32>
    %846 = arith.negf %845 : vector<2x16xf32>
    %847 = math.exp %846 : vector<2x16xf32>
    %cst_202 = arith.constant 1.000000e+00 : f32
    %848 = vector.broadcast %cst_202 : f32 to vector<2x16xf32>
    %849 = arith.addf %848, %847 : vector<2x16xf32>
    %850 = arith.divf %848, %849 : vector<2x16xf32>
    %851 = vector.extract_strided_slice %831 {offsets = [0, 32], sizes = [2, 16], strides = [1, 1]} : vector<2x48xf32> to vector<2x16xf32>
    %852 = vector.extract_strided_slice %834 {offsets = [0, 32], sizes = [2, 16], strides = [1, 1]} : vector<2x48xf32> to vector<2x16xf32>
    %853 = arith.mulf %842, %852 : vector<2x16xf32>
    %854 = arith.addf %851, %853 : vector<2x16xf32>
    %855 = math.tanh %854 : vector<2x16xf32>
    %cst_203 = arith.constant 1.000000e+00 : f32
    %856 = vector.broadcast %cst_203 : f32 to vector<2x16xf32>
    %857 = arith.subf %856, %850 : vector<2x16xf32>
    %858 = arith.mulf %857, %855 : vector<2x16xf32>
    %859 = arith.mulf %850, %794 : vector<2x16xf32>
    %860 = arith.addf %858, %859 : vector<2x16xf32>
    %861 = vector.shape_cast %860 : vector<2x16xf32> to vector<2x1x16xf32>
    %c0_204 = arith.constant 0 : index
    %c11_205 = arith.constant 11 : index
    %c0_206 = arith.constant 0 : index
    %862 = vector.load %arg16[%c0_204, %c11_205, %c0_206] : memref<2x16x16xf32, #tpu.memory_space<vmem>>, vector<2x1x16xf32>
    tpu.vector_store %arg16[%c0_204, %c11_205, %c0_206], %861 {strides = array<i32>} : memref<2x16x16xf32, #tpu.memory_space<vmem>>, vector<2x1x16xf32>,
    %863 = vector.extract_strided_slice %97 {offsets = [0, 4, 0], sizes = [2, 1, 48], strides = [1, 1, 1]} : vector<2x16x48xf32> to vector<2x1x48xf32>
    %864 = vector.shape_cast %863 : vector<2x1x48xf32> to vector<2x48xf32>
    %cst_207 = arith.constant dense<0.000000e+00> : vector<2x48xf32>
    %865 = tpu.matmul %827, %100, %cst_207 {dimension_numbers = #tpu.dot_dimension_numbers<[1], [0], [0], [1], [0, 0, 1, 1], [], []>} : vector<2x16xf32>, vector<16x48xf32>, vector<2x48xf32> -> vector<2x48xf32>
    %866 = vector.broadcast %101 : vector<1x48xf32> to vector<2x48xf32>
    %867 = arith.addf %865, %866 : vector<2x48xf32>
    %868 = vector.extract_strided_slice %864 {offsets = [0, 0], sizes = [2, 16], strides = [1, 1]} : vector<2x48xf32> to vector<2x16xf32>
    %869 = vector.extract_strided_slice %867 {offsets = [0, 0], sizes = [2, 16], strides = [1, 1]} : vector<2x48xf32> to vector<2x16xf32>
    %870 = arith.addf %868, %869 : vector<2x16xf32>
    %871 = arith.negf %870 : vector<2x16xf32>
    %872 = math.exp %871 : vector<2x16xf32>
    %cst_208 = arith.constant 1.000000e+00 : f32
    %873 = vector.broadcast %cst_208 : f32 to vector<2x16xf32>
    %874 = arith.addf %873, %872 : vector<2x16xf32>
    %875 = arith.divf %873, %874 : vector<2x16xf32>
    %876 = vector.extract_strided_slice %864 {offsets = [0, 16], sizes = [2, 16], strides = [1, 1]} : vector<2x48xf32> to vector<2x16xf32>
    %877 = vector.extract_strided_slice %867 {offsets = [0, 16], sizes = [2, 16], strides = [1, 1]} : vector<2x48xf32> to vector<2x16xf32>
    %878 = arith.addf %876, %877 : vector<2x16xf32>
    %879 = arith.negf %878 : vector<2x16xf32>
    %880 = math.exp %879 : vector<2x16xf32>
    %cst_209 = arith.constant 1.000000e+00 : f32
    %881 = vector.broadcast %cst_209 : f32 to vector<2x16xf32>
    %882 = arith.addf %881, %880 : vector<2x16xf32>
    %883 = arith.divf %881, %882 : vector<2x16xf32>
    %884 = vector.extract_strided_slice %864 {offsets = [0, 32], sizes = [2, 16], strides = [1, 1]} : vector<2x48xf32> to vector<2x16xf32>
    %885 = vector.extract_strided_slice %867 {offsets = [0, 32], sizes = [2, 16], strides = [1, 1]} : vector<2x48xf32> to vector<2x16xf32>
    %886 = arith.mulf %875, %885 : vector<2x16xf32>
    %887 = arith.addf %884, %886 : vector<2x16xf32>
    %888 = math.tanh %887 : vector<2x16xf32>
    %cst_210 = arith.constant 1.000000e+00 : f32
    %889 = vector.broadcast %cst_210 : f32 to vector<2x16xf32>
    %890 = arith.subf %889, %883 : vector<2x16xf32>
    %891 = arith.mulf %890, %888 : vector<2x16xf32>
    %892 = arith.mulf %883, %827 : vector<2x16xf32>
    %893 = arith.addf %891, %892 : vector<2x16xf32>
    %894 = vector.shape_cast %893 : vector<2x16xf32> to vector<2x1x16xf32>
    %c0_211 = arith.constant 0 : index
    %c4_212 = arith.constant 4 : index
    %c0_213 = arith.constant 0 : index
    %895 = vector.load %arg17[%c0_211, %c4_212, %c0_213] : memref<2x16x16xf32, #tpu.memory_space<vmem>>, vector<2x1x16xf32>
    tpu.vector_store %arg17[%c0_211, %c4_212, %c0_213], %894 {strides = array<i32>} : memref<2x16x16xf32, #tpu.memory_space<vmem>>, vector<2x1x16xf32>,
    %896 = vector.extract_strided_slice %91 {offsets = [0, 12, 0], sizes = [2, 1, 48], strides = [1, 1, 1]} : vector<2x16x48xf32> to vector<2x1x48xf32>
    %897 = vector.shape_cast %896 : vector<2x1x48xf32> to vector<2x48xf32>
    %cst_214 = arith.constant dense<0.000000e+00> : vector<2x48xf32>
    %898 = tpu.matmul %860, %98, %cst_214 {dimension_numbers = #tpu.dot_dimension_numbers<[1], [0], [0], [1], [0, 0, 1, 1], [], []>} : vector<2x16xf32>, vector<16x48xf32>, vector<2x48xf32> -> vector<2x48xf32>
    %899 = vector.broadcast %99 : vector<1x48xf32> to vector<2x48xf32>
    %900 = arith.addf %898, %899 : vector<2x48xf32>
    %901 = vector.extract_strided_slice %897 {offsets = [0, 0], sizes = [2, 16], strides = [1, 1]} : vector<2x48xf32> to vector<2x16xf32>
    %902 = vector.extract_strided_slice %900 {offsets = [0, 0], sizes = [2, 16], strides = [1, 1]} : vector<2x48xf32> to vector<2x16xf32>
    %903 = arith.addf %901, %902 : vector<2x16xf32>
    %904 = arith.negf %903 : vector<2x16xf32>
    %905 = math.exp %904 : vector<2x16xf32>
    %cst_215 = arith.constant 1.000000e+00 : f32
    %906 = vector.broadcast %cst_215 : f32 to vector<2x16xf32>
    %907 = arith.addf %906, %905 : vector<2x16xf32>
    %908 = arith.divf %906, %907 : vector<2x16xf32>
    %909 = vector.extract_strided_slice %897 {offsets = [0, 16], sizes = [2, 16], strides = [1, 1]} : vector<2x48xf32> to vector<2x16xf32>
    %910 = vector.extract_strided_slice %900 {offsets = [0, 16], sizes = [2, 16], strides = [1, 1]} : vector<2x48xf32> to vector<2x16xf32>
    %911 = arith.addf %909, %910 : vector<2x16xf32>
    %912 = arith.negf %911 : vector<2x16xf32>
    %913 = math.exp %912 : vector<2x16xf32>
    %cst_216 = arith.constant 1.000000e+00 : f32
    %914 = vector.broadcast %cst_216 : f32 to vector<2x16xf32>
    %915 = arith.addf %914, %913 : vector<2x16xf32>
    %916 = arith.divf %914, %915 : vector<2x16xf32>
    %917 = vector.extract_strided_slice %897 {offsets = [0, 32], sizes = [2, 16], strides = [1, 1]} : vector<2x48xf32> to vector<2x16xf32>
    %918 = vector.extract_strided_slice %900 {offsets = [0, 32], sizes = [2, 16], strides = [1, 1]} : vector<2x48xf32> to vector<2x16xf32>
    %919 = arith.mulf %908, %918 : vector<2x16xf32>
    %920 = arith.addf %917, %919 : vector<2x16xf32>
    %921 = math.tanh %920 : vector<2x16xf32>
    %cst_217 = arith.constant 1.000000e+00 : f32
    %922 = vector.broadcast %cst_217 : f32 to vector<2x16xf32>
    %923 = arith.subf %922, %916 : vector<2x16xf32>
    %924 = arith.mulf %923, %921 : vector<2x16xf32>
    %925 = arith.mulf %916, %860 : vector<2x16xf32>
    %926 = arith.addf %924, %925 : vector<2x16xf32>
    %927 = vector.shape_cast %926 : vector<2x16xf32> to vector<2x1x16xf32>
    %c0_218 = arith.constant 0 : index
    %c12_219 = arith.constant 12 : index
    %c0_220 = arith.constant 0 : index
    %928 = vector.load %arg16[%c0_218, %c12_219, %c0_220] : memref<2x16x16xf32, #tpu.memory_space<vmem>>, vector<2x1x16xf32>
    tpu.vector_store %arg16[%c0_218, %c12_219, %c0_220], %927 {strides = array<i32>} : memref<2x16x16xf32, #tpu.memory_space<vmem>>, vector<2x1x16xf32>,
    %929 = vector.extract_strided_slice %97 {offsets = [0, 3, 0], sizes = [2, 1, 48], strides = [1, 1, 1]} : vector<2x16x48xf32> to vector<2x1x48xf32>
    %930 = vector.shape_cast %929 : vector<2x1x48xf32> to vector<2x48xf32>
    %cst_221 = arith.constant dense<0.000000e+00> : vector<2x48xf32>
    %931 = tpu.matmul %893, %100, %cst_221 {dimension_numbers = #tpu.dot_dimension_numbers<[1], [0], [0], [1], [0, 0, 1, 1], [], []>} : vector<2x16xf32>, vector<16x48xf32>, vector<2x48xf32> -> vector<2x48xf32>
    %932 = vector.broadcast %101 : vector<1x48xf32> to vector<2x48xf32>
    %933 = arith.addf %931, %932 : vector<2x48xf32>
    %934 = vector.extract_strided_slice %930 {offsets = [0, 0], sizes = [2, 16], strides = [1, 1]} : vector<2x48xf32> to vector<2x16xf32>
    %935 = vector.extract_strided_slice %933 {offsets = [0, 0], sizes = [2, 16], strides = [1, 1]} : vector<2x48xf32> to vector<2x16xf32>
    %936 = arith.addf %934, %935 : vector<2x16xf32>
    %937 = arith.negf %936 : vector<2x16xf32>
    %938 = math.exp %937 : vector<2x16xf32>
    %cst_222 = arith.constant 1.000000e+00 : f32
    %939 = vector.broadcast %cst_222 : f32 to vector<2x16xf32>
    %940 = arith.addf %939, %938 : vector<2x16xf32>
    %941 = arith.divf %939, %940 : vector<2x16xf32>
    %942 = vector.extract_strided_slice %930 {offsets = [0, 16], sizes = [2, 16], strides = [1, 1]} : vector<2x48xf32> to vector<2x16xf32>
    %943 = vector.extract_strided_slice %933 {offsets = [0, 16], sizes = [2, 16], strides = [1, 1]} : vector<2x48xf32> to vector<2x16xf32>
    %944 = arith.addf %942, %943 : vector<2x16xf32>
    %945 = arith.negf %944 : vector<2x16xf32>
    %946 = math.exp %945 : vector<2x16xf32>
    %cst_223 = arith.constant 1.000000e+00 : f32
    %947 = vector.broadcast %cst_223 : f32 to vector<2x16xf32>
    %948 = arith.addf %947, %946 : vector<2x16xf32>
    %949 = arith.divf %947, %948 : vector<2x16xf32>
    %950 = vector.extract_strided_slice %930 {offsets = [0, 32], sizes = [2, 16], strides = [1, 1]} : vector<2x48xf32> to vector<2x16xf32>
    %951 = vector.extract_strided_slice %933 {offsets = [0, 32], sizes = [2, 16], strides = [1, 1]} : vector<2x48xf32> to vector<2x16xf32>
    %952 = arith.mulf %941, %951 : vector<2x16xf32>
    %953 = arith.addf %950, %952 : vector<2x16xf32>
    %954 = math.tanh %953 : vector<2x16xf32>
    %cst_224 = arith.constant 1.000000e+00 : f32
    %955 = vector.broadcast %cst_224 : f32 to vector<2x16xf32>
    %956 = arith.subf %955, %949 : vector<2x16xf32>
    %957 = arith.mulf %956, %954 : vector<2x16xf32>
    %958 = arith.mulf %949, %893 : vector<2x16xf32>
    %959 = arith.addf %957, %958 : vector<2x16xf32>
    %960 = vector.shape_cast %959 : vector<2x16xf32> to vector<2x1x16xf32>
    %c0_225 = arith.constant 0 : index
    %c3_226 = arith.constant 3 : index
    %c0_227 = arith.constant 0 : index
    %961 = vector.load %arg17[%c0_225, %c3_226, %c0_227] : memref<2x16x16xf32, #tpu.memory_space<vmem>>, vector<2x1x16xf32>
    tpu.vector_store %arg17[%c0_225, %c3_226, %c0_227], %960 {strides = array<i32>} : memref<2x16x16xf32, #tpu.memory_space<vmem>>, vector<2x1x16xf32>,
    %962 = vector.extract_strided_slice %91 {offsets = [0, 13, 0], sizes = [2, 1, 48], strides = [1, 1, 1]} : vector<2x16x48xf32> to vector<2x1x48xf32>
    %963 = vector.shape_cast %962 : vector<2x1x48xf32> to vector<2x48xf32>
    %cst_228 = arith.constant dense<0.000000e+00> : vector<2x48xf32>
    %964 = tpu.matmul %926, %98, %cst_228 {dimension_numbers = #tpu.dot_dimension_numbers<[1], [0], [0], [1], [0, 0, 1, 1], [], []>} : vector<2x16xf32>, vector<16x48xf32>, vector<2x48xf32> -> vector<2x48xf32>
    %965 = vector.broadcast %99 : vector<1x48xf32> to vector<2x48xf32>
    %966 = arith.addf %964, %965 : vector<2x48xf32>
    %967 = vector.extract_strided_slice %963 {offsets = [0, 0], sizes = [2, 16], strides = [1, 1]} : vector<2x48xf32> to vector<2x16xf32>
    %968 = vector.extract_strided_slice %966 {offsets = [0, 0], sizes = [2, 16], strides = [1, 1]} : vector<2x48xf32> to vector<2x16xf32>
    %969 = arith.addf %967, %968 : vector<2x16xf32>
    %970 = arith.negf %969 : vector<2x16xf32>
    %971 = math.exp %970 : vector<2x16xf32>
    %cst_229 = arith.constant 1.000000e+00 : f32
    %972 = vector.broadcast %cst_229 : f32 to vector<2x16xf32>
    %973 = arith.addf %972, %971 : vector<2x16xf32>
    %974 = arith.divf %972, %973 : vector<2x16xf32>
    %975 = vector.extract_strided_slice %963 {offsets = [0, 16], sizes = [2, 16], strides = [1, 1]} : vector<2x48xf32> to vector<2x16xf32>
    %976 = vector.extract_strided_slice %966 {offsets = [0, 16], sizes = [2, 16], strides = [1, 1]} : vector<2x48xf32> to vector<2x16xf32>
    %977 = arith.addf %975, %976 : vector<2x16xf32>
    %978 = arith.negf %977 : vector<2x16xf32>
    %979 = math.exp %978 : vector<2x16xf32>
    %cst_230 = arith.constant 1.000000e+00 : f32
    %980 = vector.broadcast %cst_230 : f32 to vector<2x16xf32>
    %981 = arith.addf %980, %979 : vector<2x16xf32>
    %982 = arith.divf %980, %981 : vector<2x16xf32>
    %983 = vector.extract_strided_slice %963 {offsets = [0, 32], sizes = [2, 16], strides = [1, 1]} : vector<2x48xf32> to vector<2x16xf32>
    %984 = vector.extract_strided_slice %966 {offsets = [0, 32], sizes = [2, 16], strides = [1, 1]} : vector<2x48xf32> to vector<2x16xf32>
    %985 = arith.mulf %974, %984 : vector<2x16xf32>
    %986 = arith.addf %983, %985 : vector<2x16xf32>
    %987 = math.tanh %986 : vector<2x16xf32>
    %cst_231 = arith.constant 1.000000e+00 : f32
    %988 = vector.broadcast %cst_231 : f32 to vector<2x16xf32>
    %989 = arith.subf %988, %982 : vector<2x16xf32>
    %990 = arith.mulf %989, %987 : vector<2x16xf32>
    %991 = arith.mulf %982, %926 : vector<2x16xf32>
    %992 = arith.addf %990, %991 : vector<2x16xf32>
    %993 = vector.shape_cast %992 : vector<2x16xf32> to vector<2x1x16xf32>
    %c0_232 = arith.constant 0 : index
    %c13_233 = arith.constant 13 : index
    %c0_234 = arith.constant 0 : index
    %994 = vector.load %arg16[%c0_232, %c13_233, %c0_234] : memref<2x16x16xf32, #tpu.memory_space<vmem>>, vector<2x1x16xf32>
    tpu.vector_store %arg16[%c0_232, %c13_233, %c0_234], %993 {strides = array<i32>} : memref<2x16x16xf32, #tpu.memory_space<vmem>>, vector<2x1x16xf32>,
    %995 = vector.extract_strided_slice %97 {offsets = [0, 2, 0], sizes = [2, 1, 48], strides = [1, 1, 1]} : vector<2x16x48xf32> to vector<2x1x48xf32>
    %996 = vector.shape_cast %995 : vector<2x1x48xf32> to vector<2x48xf32>
    %cst_235 = arith.constant dense<0.000000e+00> : vector<2x48xf32>
    %997 = tpu.matmul %959, %100, %cst_235 {dimension_numbers = #tpu.dot_dimension_numbers<[1], [0], [0], [1], [0, 0, 1, 1], [], []>} : vector<2x16xf32>, vector<16x48xf32>, vector<2x48xf32> -> vector<2x48xf32>
    %998 = vector.broadcast %101 : vector<1x48xf32> to vector<2x48xf32>
    %999 = arith.addf %997, %998 : vector<2x48xf32>
    %1000 = vector.extract_strided_slice %996 {offsets = [0, 0], sizes = [2, 16], strides = [1, 1]} : vector<2x48xf32> to vector<2x16xf32>
    %1001 = vector.extract_strided_slice %999 {offsets = [0, 0], sizes = [2, 16], strides = [1, 1]} : vector<2x48xf32> to vector<2x16xf32>
    %1002 = arith.addf %1000, %1001 : vector<2x16xf32>
    %1003 = arith.negf %1002 : vector<2x16xf32>
    %1004 = math.exp %1003 : vector<2x16xf32>
    %cst_236 = arith.constant 1.000000e+00 : f32
    %1005 = vector.broadcast %cst_236 : f32 to vector<2x16xf32>
    %1006 = arith.addf %1005, %1004 : vector<2x16xf32>
    %1007 = arith.divf %1005, %1006 : vector<2x16xf32>
    %1008 = vector.extract_strided_slice %996 {offsets = [0, 16], sizes = [2, 16], strides = [1, 1]} : vector<2x48xf32> to vector<2x16xf32>
    %1009 = vector.extract_strided_slice %999 {offsets = [0, 16], sizes = [2, 16], strides = [1, 1]} : vector<2x48xf32> to vector<2x16xf32>
    %1010 = arith.addf %1008, %1009 : vector<2x16xf32>
    %1011 = arith.negf %1010 : vector<2x16xf32>
    %1012 = math.exp %1011 : vector<2x16xf32>
    %cst_237 = arith.constant 1.000000e+00 : f32
    %1013 = vector.broadcast %cst_237 : f32 to vector<2x16xf32>
    %1014 = arith.addf %1013, %1012 : vector<2x16xf32>
    %1015 = arith.divf %1013, %1014 : vector<2x16xf32>
    %1016 = vector.extract_strided_slice %996 {offsets = [0, 32], sizes = [2, 16], strides = [1, 1]} : vector<2x48xf32> to vector<2x16xf32>
    %1017 = vector.extract_strided_slice %999 {offsets = [0, 32], sizes = [2, 16], strides = [1, 1]} : vector<2x48xf32> to vector<2x16xf32>
    %1018 = arith.mulf %1007, %1017 : vector<2x16xf32>
    %1019 = arith.addf %1016, %1018 : vector<2x16xf32>
    %1020 = math.tanh %1019 : vector<2x16xf32>
    %cst_238 = arith.constant 1.000000e+00 : f32
    %1021 = vector.broadcast %cst_238 : f32 to vector<2x16xf32>
    %1022 = arith.subf %1021, %1015 : vector<2x16xf32>
    %1023 = arith.mulf %1022, %1020 : vector<2x16xf32>
    %1024 = arith.mulf %1015, %959 : vector<2x16xf32>
    %1025 = arith.addf %1023, %1024 : vector<2x16xf32>
    %1026 = vector.shape_cast %1025 : vector<2x16xf32> to vector<2x1x16xf32>
    %c0_239 = arith.constant 0 : index
    %c2_240 = arith.constant 2 : index
    %c0_241 = arith.constant 0 : index
    %1027 = vector.load %arg17[%c0_239, %c2_240, %c0_241] : memref<2x16x16xf32, #tpu.memory_space<vmem>>, vector<2x1x16xf32>
    tpu.vector_store %arg17[%c0_239, %c2_240, %c0_241], %1026 {strides = array<i32>} : memref<2x16x16xf32, #tpu.memory_space<vmem>>, vector<2x1x16xf32>,
    %1028 = vector.extract_strided_slice %91 {offsets = [0, 14, 0], sizes = [2, 1, 48], strides = [1, 1, 1]} : vector<2x16x48xf32> to vector<2x1x48xf32>
    %1029 = vector.shape_cast %1028 : vector<2x1x48xf32> to vector<2x48xf32>
    %cst_242 = arith.constant dense<0.000000e+00> : vector<2x48xf32>
    %1030 = tpu.matmul %992, %98, %cst_242 {dimension_numbers = #tpu.dot_dimension_numbers<[1], [0], [0], [1], [0, 0, 1, 1], [], []>} : vector<2x16xf32>, vector<16x48xf32>, vector<2x48xf32> -> vector<2x48xf32>
    %1031 = vector.broadcast %99 : vector<1x48xf32> to vector<2x48xf32>
    %1032 = arith.addf %1030, %1031 : vector<2x48xf32>
    %1033 = vector.extract_strided_slice %1029 {offsets = [0, 0], sizes = [2, 16], strides = [1, 1]} : vector<2x48xf32> to vector<2x16xf32>
    %1034 = vector.extract_strided_slice %1032 {offsets = [0, 0], sizes = [2, 16], strides = [1, 1]} : vector<2x48xf32> to vector<2x16xf32>
    %1035 = arith.addf %1033, %1034 : vector<2x16xf32>
    %1036 = arith.negf %1035 : vector<2x16xf32>
    %1037 = math.exp %1036 : vector<2x16xf32>
    %cst_243 = arith.constant 1.000000e+00 : f32
    %1038 = vector.broadcast %cst_243 : f32 to vector<2x16xf32>
    %1039 = arith.addf %1038, %1037 : vector<2x16xf32>
    %1040 = arith.divf %1038, %1039 : vector<2x16xf32>
    %1041 = vector.extract_strided_slice %1029 {offsets = [0, 16], sizes = [2, 16], strides = [1, 1]} : vector<2x48xf32> to vector<2x16xf32>
    %1042 = vector.extract_strided_slice %1032 {offsets = [0, 16], sizes = [2, 16], strides = [1, 1]} : vector<2x48xf32> to vector<2x16xf32>
    %1043 = arith.addf %1041, %1042 : vector<2x16xf32>
    %1044 = arith.negf %1043 : vector<2x16xf32>
    %1045 = math.exp %1044 : vector<2x16xf32>
    %cst_244 = arith.constant 1.000000e+00 : f32
    %1046 = vector.broadcast %cst_244 : f32 to vector<2x16xf32>
    %1047 = arith.addf %1046, %1045 : vector<2x16xf32>
    %1048 = arith.divf %1046, %1047 : vector<2x16xf32>
    %1049 = vector.extract_strided_slice %1029 {offsets = [0, 32], sizes = [2, 16], strides = [1, 1]} : vector<2x48xf32> to vector<2x16xf32>
    %1050 = vector.extract_strided_slice %1032 {offsets = [0, 32], sizes = [2, 16], strides = [1, 1]} : vector<2x48xf32> to vector<2x16xf32>
    %1051 = arith.mulf %1040, %1050 : vector<2x16xf32>
    %1052 = arith.addf %1049, %1051 : vector<2x16xf32>
    %1053 = math.tanh %1052 : vector<2x16xf32>
    %cst_245 = arith.constant 1.000000e+00 : f32
    %1054 = vector.broadcast %cst_245 : f32 to vector<2x16xf32>
    %1055 = arith.subf %1054, %1048 : vector<2x16xf32>
    %1056 = arith.mulf %1055, %1053 : vector<2x16xf32>
    %1057 = arith.mulf %1048, %992 : vector<2x16xf32>
    %1058 = arith.addf %1056, %1057 : vector<2x16xf32>
    %1059 = vector.shape_cast %1058 : vector<2x16xf32> to vector<2x1x16xf32>
    %c0_246 = arith.constant 0 : index
    %c14_247 = arith.constant 14 : index
    %c0_248 = arith.constant 0 : index
    %1060 = vector.load %arg16[%c0_246, %c14_247, %c0_248] : memref<2x16x16xf32, #tpu.memory_space<vmem>>, vector<2x1x16xf32>
    tpu.vector_store %arg16[%c0_246, %c14_247, %c0_248], %1059 {strides = array<i32>} : memref<2x16x16xf32, #tpu.memory_space<vmem>>, vector<2x1x16xf32>,
    %1061 = vector.extract_strided_slice %97 {offsets = [0, 1, 0], sizes = [2, 1, 48], strides = [1, 1, 1]} : vector<2x16x48xf32> to vector<2x1x48xf32>
    %1062 = vector.shape_cast %1061 : vector<2x1x48xf32> to vector<2x48xf32>
    %cst_249 = arith.constant dense<0.000000e+00> : vector<2x48xf32>
    %1063 = tpu.matmul %1025, %100, %cst_249 {dimension_numbers = #tpu.dot_dimension_numbers<[1], [0], [0], [1], [0, 0, 1, 1], [], []>} : vector<2x16xf32>, vector<16x48xf32>, vector<2x48xf32> -> vector<2x48xf32>
    %1064 = vector.broadcast %101 : vector<1x48xf32> to vector<2x48xf32>
    %1065 = arith.addf %1063, %1064 : vector<2x48xf32>
    %1066 = vector.extract_strided_slice %1062 {offsets = [0, 0], sizes = [2, 16], strides = [1, 1]} : vector<2x48xf32> to vector<2x16xf32>
    %1067 = vector.extract_strided_slice %1065 {offsets = [0, 0], sizes = [2, 16], strides = [1, 1]} : vector<2x48xf32> to vector<2x16xf32>
    %1068 = arith.addf %1066, %1067 : vector<2x16xf32>
    %1069 = arith.negf %1068 : vector<2x16xf32>
    %1070 = math.exp %1069 : vector<2x16xf32>
    %cst_250 = arith.constant 1.000000e+00 : f32
    %1071 = vector.broadcast %cst_250 : f32 to vector<2x16xf32>
    %1072 = arith.addf %1071, %1070 : vector<2x16xf32>
    %1073 = arith.divf %1071, %1072 : vector<2x16xf32>
    %1074 = vector.extract_strided_slice %1062 {offsets = [0, 16], sizes = [2, 16], strides = [1, 1]} : vector<2x48xf32> to vector<2x16xf32>
    %1075 = vector.extract_strided_slice %1065 {offsets = [0, 16], sizes = [2, 16], strides = [1, 1]} : vector<2x48xf32> to vector<2x16xf32>
    %1076 = arith.addf %1074, %1075 : vector<2x16xf32>
    %1077 = arith.negf %1076 : vector<2x16xf32>
    %1078 = math.exp %1077 : vector<2x16xf32>
    %cst_251 = arith.constant 1.000000e+00 : f32
    %1079 = vector.broadcast %cst_251 : f32 to vector<2x16xf32>
    %1080 = arith.addf %1079, %1078 : vector<2x16xf32>
    %1081 = arith.divf %1079, %1080 : vector<2x16xf32>
    %1082 = vector.extract_strided_slice %1062 {offsets = [0, 32], sizes = [2, 16], strides = [1, 1]} : vector<2x48xf32> to vector<2x16xf32>
    %1083 = vector.extract_strided_slice %1065 {offsets = [0, 32], sizes = [2, 16], strides = [1, 1]} : vector<2x48xf32> to vector<2x16xf32>
    %1084 = arith.mulf %1073, %1083 : vector<2x16xf32>
    %1085 = arith.addf %1082, %1084 : vector<2x16xf32>
    %1086 = math.tanh %1085 : vector<2x16xf32>
    %cst_252 = arith.constant 1.000000e+00 : f32
    %1087 = vector.broadcast %cst_252 : f32 to vector<2x16xf32>
    %1088 = arith.subf %1087, %1081 : vector<2x16xf32>
    %1089 = arith.mulf %1088, %1086 : vector<2x16xf32>
    %1090 = arith.mulf %1081, %1025 : vector<2x16xf32>
    %1091 = arith.addf %1089, %1090 : vector<2x16xf32>
    %1092 = vector.shape_cast %1091 : vector<2x16xf32> to vector<2x1x16xf32>
    %c0_253 = arith.constant 0 : index
    %c1_254 = arith.constant 1 : index
    %c0_255 = arith.constant 0 : index
    %1093 = vector.load %arg17[%c0_253, %c1_254, %c0_255] : memref<2x16x16xf32, #tpu.memory_space<vmem>>, vector<2x1x16xf32>
    tpu.vector_store %arg17[%c0_253, %c1_254, %c0_255], %1092 {strides = array<i32>} : memref<2x16x16xf32, #tpu.memory_space<vmem>>, vector<2x1x16xf32>,
    %1094 = vector.extract_strided_slice %91 {offsets = [0, 15, 0], sizes = [2, 1, 48], strides = [1, 1, 1]} : vector<2x16x48xf32> to vector<2x1x48xf32>
    %1095 = vector.shape_cast %1094 : vector<2x1x48xf32> to vector<2x48xf32>
    %cst_256 = arith.constant dense<0.000000e+00> : vector<2x48xf32>
    %1096 = tpu.matmul %1058, %98, %cst_256 {dimension_numbers = #tpu.dot_dimension_numbers<[1], [0], [0], [1], [0, 0, 1, 1], [], []>} : vector<2x16xf32>, vector<16x48xf32>, vector<2x48xf32> -> vector<2x48xf32>
    %1097 = vector.broadcast %99 : vector<1x48xf32> to vector<2x48xf32>
    %1098 = arith.addf %1096, %1097 : vector<2x48xf32>
    %1099 = vector.extract_strided_slice %1095 {offsets = [0, 0], sizes = [2, 16], strides = [1, 1]} : vector<2x48xf32> to vector<2x16xf32>
    %1100 = vector.extract_strided_slice %1098 {offsets = [0, 0], sizes = [2, 16], strides = [1, 1]} : vector<2x48xf32> to vector<2x16xf32>
    %1101 = arith.addf %1099, %1100 : vector<2x16xf32>
    %1102 = arith.negf %1101 : vector<2x16xf32>
    %1103 = math.exp %1102 : vector<2x16xf32>
    %cst_257 = arith.constant 1.000000e+00 : f32
    %1104 = vector.broadcast %cst_257 : f32 to vector<2x16xf32>
    %1105 = arith.addf %1104, %1103 : vector<2x16xf32>
    %1106 = arith.divf %1104, %1105 : vector<2x16xf32>
    %1107 = vector.extract_strided_slice %1095 {offsets = [0, 16], sizes = [2, 16], strides = [1, 1]} : vector<2x48xf32> to vector<2x16xf32>
    %1108 = vector.extract_strided_slice %1098 {offsets = [0, 16], sizes = [2, 16], strides = [1, 1]} : vector<2x48xf32> to vector<2x16xf32>
    %1109 = arith.addf %1107, %1108 : vector<2x16xf32>
    %1110 = arith.negf %1109 : vector<2x16xf32>
    %1111 = math.exp %1110 : vector<2x16xf32>
    %cst_258 = arith.constant 1.000000e+00 : f32
    %1112 = vector.broadcast %cst_258 : f32 to vector<2x16xf32>
    %1113 = arith.addf %1112, %1111 : vector<2x16xf32>
    %1114 = arith.divf %1112, %1113 : vector<2x16xf32>
    %1115 = vector.extract_strided_slice %1095 {offsets = [0, 32], sizes = [2, 16], strides = [1, 1]} : vector<2x48xf32> to vector<2x16xf32>
    %1116 = vector.extract_strided_slice %1098 {offsets = [0, 32], sizes = [2, 16], strides = [1, 1]} : vector<2x48xf32> to vector<2x16xf32>
    %1117 = arith.mulf %1106, %1116 : vector<2x16xf32>
    %1118 = arith.addf %1115, %1117 : vector<2x16xf32>
    %1119 = math.tanh %1118 : vector<2x16xf32>
    %cst_259 = arith.constant 1.000000e+00 : f32
    %1120 = vector.broadcast %cst_259 : f32 to vector<2x16xf32>
    %1121 = arith.subf %1120, %1114 : vector<2x16xf32>
    %1122 = arith.mulf %1121, %1119 : vector<2x16xf32>
    %1123 = arith.mulf %1114, %1058 : vector<2x16xf32>
    %1124 = arith.addf %1122, %1123 : vector<2x16xf32>
    %1125 = vector.shape_cast %1124 : vector<2x16xf32> to vector<2x1x16xf32>
    %c0_260 = arith.constant 0 : index
    %c15_261 = arith.constant 15 : index
    %c0_262 = arith.constant 0 : index
    %1126 = vector.load %arg16[%c0_260, %c15_261, %c0_262] : memref<2x16x16xf32, #tpu.memory_space<vmem>>, vector<2x1x16xf32>
    tpu.vector_store %arg16[%c0_260, %c15_261, %c0_262], %1125 {strides = array<i32>} : memref<2x16x16xf32, #tpu.memory_space<vmem>>, vector<2x1x16xf32>,
    %1127 = vector.extract_strided_slice %97 {offsets = [0, 0, 0], sizes = [2, 1, 48], strides = [1, 1, 1]} : vector<2x16x48xf32> to vector<2x1x48xf32>
    %1128 = vector.shape_cast %1127 : vector<2x1x48xf32> to vector<2x48xf32>
    %cst_263 = arith.constant dense<0.000000e+00> : vector<2x48xf32>
    %1129 = tpu.matmul %1091, %100, %cst_263 {dimension_numbers = #tpu.dot_dimension_numbers<[1], [0], [0], [1], [0, 0, 1, 1], [], []>} : vector<2x16xf32>, vector<16x48xf32>, vector<2x48xf32> -> vector<2x48xf32>
    %1130 = vector.broadcast %101 : vector<1x48xf32> to vector<2x48xf32>
    %1131 = arith.addf %1129, %1130 : vector<2x48xf32>
    %1132 = vector.extract_strided_slice %1128 {offsets = [0, 0], sizes = [2, 16], strides = [1, 1]} : vector<2x48xf32> to vector<2x16xf32>
    %1133 = vector.extract_strided_slice %1131 {offsets = [0, 0], sizes = [2, 16], strides = [1, 1]} : vector<2x48xf32> to vector<2x16xf32>
    %1134 = arith.addf %1132, %1133 : vector<2x16xf32>
    %1135 = arith.negf %1134 : vector<2x16xf32>
    %1136 = math.exp %1135 : vector<2x16xf32>
    %cst_264 = arith.constant 1.000000e+00 : f32
    %1137 = vector.broadcast %cst_264 : f32 to vector<2x16xf32>
    %1138 = arith.addf %1137, %1136 : vector<2x16xf32>
    %1139 = arith.divf %1137, %1138 : vector<2x16xf32>
    %1140 = vector.extract_strided_slice %1128 {offsets = [0, 16], sizes = [2, 16], strides = [1, 1]} : vector<2x48xf32> to vector<2x16xf32>
    %1141 = vector.extract_strided_slice %1131 {offsets = [0, 16], sizes = [2, 16], strides = [1, 1]} : vector<2x48xf32> to vector<2x16xf32>
    %1142 = arith.addf %1140, %1141 : vector<2x16xf32>
    %1143 = arith.negf %1142 : vector<2x16xf32>
    %1144 = math.exp %1143 : vector<2x16xf32>
    %cst_265 = arith.constant 1.000000e+00 : f32
    %1145 = vector.broadcast %cst_265 : f32 to vector<2x16xf32>
    %1146 = arith.addf %1145, %1144 : vector<2x16xf32>
    %1147 = arith.divf %1145, %1146 : vector<2x16xf32>
    %1148 = vector.extract_strided_slice %1128 {offsets = [0, 32], sizes = [2, 16], strides = [1, 1]} : vector<2x48xf32> to vector<2x16xf32>
    %1149 = vector.extract_strided_slice %1131 {offsets = [0, 32], sizes = [2, 16], strides = [1, 1]} : vector<2x48xf32> to vector<2x16xf32>
    %1150 = arith.mulf %1139, %1149 : vector<2x16xf32>
    %1151 = arith.addf %1148, %1150 : vector<2x16xf32>
    %1152 = math.tanh %1151 : vector<2x16xf32>
    %cst_266 = arith.constant 1.000000e+00 : f32
    %1153 = vector.broadcast %cst_266 : f32 to vector<2x16xf32>
    %1154 = arith.subf %1153, %1147 : vector<2x16xf32>
    %1155 = arith.mulf %1154, %1152 : vector<2x16xf32>
    %1156 = arith.mulf %1147, %1091 : vector<2x16xf32>
    %1157 = arith.addf %1155, %1156 : vector<2x16xf32>
    %1158 = vector.shape_cast %1157 : vector<2x16xf32> to vector<2x1x16xf32>
    %c0_267 = arith.constant 0 : index
    %c0_268 = arith.constant 0 : index
    %c0_269 = arith.constant 0 : index
    %1159 = vector.load %arg17[%c0_267, %c0_268, %c0_269] : memref<2x16x16xf32, #tpu.memory_space<vmem>>, vector<2x1x16xf32>
    tpu.vector_store %arg17[%c0_267, %c0_268, %c0_269], %1158 {strides = array<i32>} : memref<2x16x16xf32, #tpu.memory_space<vmem>>, vector<2x1x16xf32>,
    %c0_270 = arith.constant 0 : index
    %c0_271 = arith.constant 0 : index
    %1160 = vector.load %arg11[%c0_270, %c0_271] : memref<32x16xf32, #tpu.memory_space<vmem>>, vector<32x16xf32>
    %c0_272 = arith.constant 0 : index
    %c0_273 = arith.constant 0 : index
    %c0_274 = arith.constant 0 : index
    %1161 = vector.load %arg16[%c0_272, %c0_273, %c0_274] : memref<2x16x16xf32, #tpu.memory_space<vmem>>, vector<2x16x16xf32>
    %1162 = vector.shape_cast %1161 : vector<2x16x16xf32> to vector<32x16xf32>
    %1163 = vector.extract_strided_slice %1160 {offsets = [0, 0], sizes = [16, 16], strides = [1, 1]} : vector<32x16xf32> to vector<16x16xf32>
    %cst_275 = arith.constant dense<0.000000e+00> : vector<32x16xf32>
    %1164 = tpu.matmul %1162, %1163, %cst_275 {dimension_numbers = #tpu.dot_dimension_numbers<[1], [0], [0], [1], [0, 0, 1, 1], [], []>} : vector<32x16xf32>, vector<16x16xf32>, vector<32x16xf32> -> vector<32x16xf32>
    %c0_276 = arith.constant 0 : index
    %c0_277 = arith.constant 0 : index
    %c0_278 = arith.constant 0 : index
    %1165 = vector.load %arg17[%c0_276, %c0_277, %c0_278] : memref<2x16x16xf32, #tpu.memory_space<vmem>>, vector<2x16x16xf32>
    %1166 = vector.shape_cast %1165 : vector<2x16x16xf32> to vector<32x16xf32>
    %1167 = vector.extract_strided_slice %1160 {offsets = [16, 0], sizes = [16, 16], strides = [1, 1]} : vector<32x16xf32> to vector<16x16xf32>
    %cst_279 = arith.constant dense<0.000000e+00> : vector<32x16xf32>
    %1168 = tpu.matmul %1166, %1167, %cst_279 {dimension_numbers = #tpu.dot_dimension_numbers<[1], [0], [0], [1], [0, 0, 1, 1], [], []>} : vector<32x16xf32>, vector<16x16xf32>, vector<32x16xf32> -> vector<32x16xf32>
    %1169 = arith.addf %1164, %1168 : vector<32x16xf32>
    %c0_280 = arith.constant 0 : index
    %c0_281 = arith.constant 0 : index
    %c0_282 = arith.constant 0 : index
    %1170 = vector.load %arg13[%c0_280, %c0_281, %c0_282] : memref<2x16x16xf32, #tpu.memory_space<vmem>>, vector<2x16x16xf32>
    %1171 = vector.shape_cast %1169 : vector<32x16xf32> to vector<2x16x16xf32>
    %1172 = arith.addf %1170, %1171 : vector<2x16x16xf32>
    %c0_283 = arith.constant 0 : index
    %c0_284 = arith.constant 0 : index
    %c0_285 = arith.constant 0 : index
    %1173 = vector.load %arg12[%c0_283, %c0_284, %c0_285] : memref<1x1x16xf32, #tpu.memory_space<vmem>>, vector<1x1x16xf32>
    %1174 = vector.broadcast %1173 : vector<1x1x16xf32> to vector<2x16x16xf32>
    %1175 = arith.addf %1172, %1174 : vector<2x16x16xf32>
    %c0_286 = arith.constant 0 : index
    %c0_287 = arith.constant 0 : index
    %c0_288 = arith.constant 0 : index
    %1176 = vector.load %arg14[%c0_286, %c0_287, %c0_288] : memref<2x16x1xf32, #tpu.memory_space<vmem>>, vector<2x16x1xf32>
    %1177 = vector.broadcast %1176 : vector<2x16x1xf32> to vector<2x16x16xf32>
    %1178 = arith.mulf %1175, %1177 : vector<2x16x16xf32>
    %c0_289 = arith.constant 0 : index
    %c0_290 = arith.constant 0 : index
    %c0_291 = arith.constant 0 : index
    %1179 = vector.load %arg15[%c0_289, %c0_290, %c0_291] : memref<2x16x16xf32, #tpu.memory_space<vmem>>, vector<2x16x16xf32>
    tpu.vector_store %arg15[%c0_289, %c0_290, %c0_291], %1178 {strides = array<i32>} : memref<2x16x16xf32, #tpu.memory_space<vmem>>, vector<2x16x16xf32>,
    return
  }
}

</mosaic_0001>

<llo_original>
// kernel: sub.1
$region0: #{sub.1}
  #allocation0 [shape = 's32[1]{0}', space=sflag, size = 0x4, scoped, tag = 'scoped memory for sub.1']
  %s0 = inlined_call_operand.vmem [shape: s32[2,8], index: 0, kind: input, shape index: {}]
  %s1 = inlined_call_operand.vmem [shape: s32[2,8], index: 1, kind: input, shape index: {}]
  %s2 = inlined_call_operand.vmem [shape: s32[2,8], index: 2, kind: output, shape index: {}]
  %v3 = vld [vmem:[%s0] sm:$0x3]
  %v4 = vld [vmem:[%s1] sm:$0x3]
  %5 = xla_tuple %v3, %v4
  %6 = xla_tuple %5
  %v7 = vsub.s32 %v3, %v4
  %8 = xla_tuple %v7
  %9 = vst [vmem:[%s2] sm:$0x3] %v7

// kernel: fastspeech_forward.7
$region0: #{fastspeech_forward.7}
  #allocation0 [shape = 'u32[]', space=smem, size = 0x4, offset = 0x4, fixed_abs, tag = 'smem constant byte address 0x4 - core index']
  #allocation1 [shape = 'u32[72,128]{1,0:T(1,128)}', space=vmem, size = 0x9000, scoped, tag = 'internal scratch']
  %s0 = inlined_call_operand.vmem [shape: f32[2,8,32], index: 0, kind: input, shape index: {}]
  %s1 = inlined_call_operand.vmem [shape: f32[16,1], index: 1, kind: input, shape index: {}]
  %s2 = inlined_call_operand.vmem [shape: f32[2,1,8], index: 2, kind: input, shape index: {}]
  %s3 = inlined_call_operand.vmem [shape: f32[32,96], index: 3, kind: input, shape index: {}]
  %s4 = inlined_call_operand.vmem [shape: f32[1,96], index: 4, kind: input, shape index: {}]
  %s5 = inlined_call_operand.vmem [shape: f32[32,32], index: 5, kind: input, shape index: {}]
  %s6 = inlined_call_operand.vmem [shape: f32[1,32], index: 6, kind: input, shape index: {}]
  %s7 = inlined_call_operand.vmem [shape: f32[1,32], index: 7, kind: input, shape index: {}]
  %s8 = inlined_call_operand.vmem [shape: f32[1,32], index: 8, kind: input, shape index: {}]
  %s9 = inlined_call_operand.vmem [shape: f32[96,64], index: 9, kind: input, shape index: {}]
  %s10 = inlined_call_operand.vmem [shape: f32[1,64], index: 10, kind: input, shape index: {}]
  %s11 = inlined_call_operand.vmem [shape: f32[64,32], index: 11, kind: input, shape index: {}]
  %s12 = inlined_call_operand.vmem [shape: f32[1,32], index: 12, kind: input, shape index: {}]
  %s13 = inlined_call_operand.vmem [shape: f32[1,32], index: 13, kind: input, shape index: {}]
  %s14 = inlined_call_operand.vmem [shape: f32[1,32], index: 14, kind: input, shape index: {}]
  %s15 = inlined_call_operand.vmem [shape: f32[2,8,32], index: 15, kind: output, shape index: {}]
  %s16 = sld [smem:[#allocation0]]
  $region70: #{fastspeech_forward.7} parent=0
    _
  %s18 = ssub.s32 1, %s16
  %s19 = scalar_select 0, %s18, %s16
  // Predicated region
  $region2: #{fastspeech_forward.7} parent=0 // pred_check
    _
  $region3: #{fastspeech_forward.7} parent=0 // pred_check_branch
    %21 = sbr.rel (0) target = $region5
  $region4: #{fastspeech_forward.7} parent=0 // pred_region
    _
  $region5: #{fastspeech_forward.7} parent=0 // pred_fallthru
    _
  // Predicated region
  $region6: #{fastspeech_forward.7} parent=0 // pred_check
    _
  $region7: #{fastspeech_forward.7} parent=0 // pred_check_branch
    %23 = sbr.rel (0) target = $region9
  $region8: #{fastspeech_forward.7} parent=0 // pred_region
    _
  $region9: #{fastspeech_forward.7} parent=0 // pred_fallthru
    _
  // Predicated region
  $region10: #{fastspeech_forward.7} parent=0 // pred_check
    _
  $region11: #{fastspeech_forward.7} parent=0 // pred_check_branch
    %25 = sbr.rel (0) target = $region13
  $region12: #{fastspeech_forward.7} parent=0 // pred_region
    _
  $region13: #{fastspeech_forward.7} parent=0 // pred_fallthru
    _
  // Predicated region
  $region14: #{fastspeech_forward.7} parent=0 // pred_check
    _
  $region15: #{fastspeech_forward.7} parent=0 // pred_check_branch
    %27 = sbr.rel (0) target = $region17
  $region16: #{fastspeech_forward.7} parent=0 // pred_region
    _
  $region17: #{fastspeech_forward.7} parent=0 // pred_fallthru
    _
  // Predicated region
  $region18: #{fastspeech_forward.7} parent=0 // pred_check
    _
  $region19: #{fastspeech_forward.7} parent=0 // pred_check_branch
    %29 = sbr.rel (0) target = $region21
  $region20: #{fastspeech_forward.7} parent=0 // pred_region
    _
  $region21: #{fastspeech_forward.7} parent=0 // pred_fallthru
    _
  // Predicated region
  $region22: #{fastspeech_forward.7} parent=0 // pred_check
    _
  $region23: #{fastspeech_forward.7} parent=0 // pred_check_branch
    %31 = sbr.rel (0) target = $region25
  $region24: #{fastspeech_forward.7} parent=0 // pred_region
    _
  $region25: #{fastspeech_forward.7} parent=0 // pred_fallthru
    _
  // Predicated region
  $region26: #{fastspeech_forward.7} parent=0 // pred_check
    _
  $region27: #{fastspeech_forward.7} parent=0 // pred_check_branch
    %33 = sbr.rel (0) target = $region29
  $region28: #{fastspeech_forward.7} parent=0 // pred_region
    _
  $region29: #{fastspeech_forward.7} parent=0 // pred_fallthru
    _
  // Predicated region
  $region30: #{fastspeech_forward.7} parent=0 // pred_check
    _
  $region31: #{fastspeech_forward.7} parent=0 // pred_check_branch
    %35 = sbr.rel (0) target = $region33
  $region32: #{fastspeech_forward.7} parent=0 // pred_region
    _
  $region33: #{fastspeech_forward.7} parent=0 // pred_fallthru
    _
  // Predicated region
  $region34: #{fastspeech_forward.7} parent=0 // pred_check
    _
  $region35: #{fastspeech_forward.7} parent=0 // pred_check_branch
    %37 = sbr.rel (0) target = $region37
  $region36: #{fastspeech_forward.7} parent=0 // pred_region
    _
  $region37: #{fastspeech_forward.7} parent=0 // pred_fallthru
    _
  // Predicated region
  $region38: #{fastspeech_forward.7} parent=0 // pred_check
    _
  $region39: #{fastspeech_forward.7} parent=0 // pred_check_branch
    %39 = sbr.rel (0) target = $region41
  $region40: #{fastspeech_forward.7} parent=0 // pred_region
    _
  $region41: #{fastspeech_forward.7} parent=0 // pred_fallthru
    _
  // Predicated region
  $region42: #{fastspeech_forward.7} parent=0 // pred_check
    _
  $region43: #{fastspeech_forward.7} parent=0 // pred_check_branch
    %41 = sbr.rel (0) target = $region45
  $region44: #{fastspeech_forward.7} parent=0 // pred_region
    _
  $region45: #{fastspeech_forward.7} parent=0 // pred_fallthru
    _
  // Predicated region
  $region46: #{fastspeech_forward.7} parent=0 // pred_check
    _
  $region47: #{fastspeech_forward.7} parent=0 // pred_check_branch
    %43 = sbr.rel (0) target = $region49
  $region48: #{fastspeech_forward.7} parent=0 // pred_region
    _
  $region49: #{fastspeech_forward.7} parent=0 // pred_fallthru
    _
  // Predicated region
  $region50: #{fastspeech_forward.7} parent=0 // pred_check
    _
  $region51: #{fastspeech_forward.7} parent=0 // pred_check_branch
    %45 = sbr.rel (0) target = $region53
  $region52: #{fastspeech_forward.7} parent=0 // pred_region
    _
  $region53: #{fastspeech_forward.7} parent=0 // pred_fallthru
    _
  // Predicated region
  $region54: #{fastspeech_forward.7} parent=0 // pred_check
    _
  $region55: #{fastspeech_forward.7} parent=0 // pred_check_branch
    %47 = sbr.rel (0) target = $region57
  $region56: #{fastspeech_forward.7} parent=0 // pred_region
    _
  $region57: #{fastspeech_forward.7} parent=0 // pred_fallthru
    _
  // Predicated region
  $region58: #{fastspeech_forward.7} parent=0 // pred_check
    _
  $region59: #{fastspeech_forward.7} parent=0 // pred_check_branch
    %49 = sbr.rel (0) target = $region61
  $region60: #{fastspeech_forward.7} parent=0 // pred_region
    _
  $region61: #{fastspeech_forward.7} parent=0 // pred_fallthru
    _
  %v50 = vld [vmem:[%s0] sm:$0xff]
  %v51 = vld [vmem:[%s0 + $0x8] sm:$0xff]
  %v52 = vld [vmem:[%s1] sm:$0xff]
  %v53 = vld [vmem:[%s1 + $0x8] sm:$0xff]
  %v54 = vld [vmem:[%s2] sm:$0x1]
  %v55 = vld [vmem:[%s2 + $0x1] sm:$0x1]
  %v56 = vld [vmem:[%s3] sm:$0xff]
  %v57 = vld [vmem:[%s3 + $0x8] sm:$0xff]
  %v58 = vld [vmem:[%s3 + $0x10] sm:$0xff]
  %v59 = vld [vmem:[%s3 + $0x18] sm:$0xff]
  %v60 = vld [vmem:[%s4] sm:$0x1]
  %v62 = vperm.slane %v60, 0
  %vm64 = vcmask 261120
  %v66 = vsel %vm64, %v50, 0
  %v69 = vsel %vm64, %v51, 0
  %71 = vmatpush.msra.mxu0 0.0
  %72 = vmatpush.msra.mxu0 0.0
  %73 = vmatpush.msra.mxu0 0.0
  %74 = vmatpush.msra.mxu0 0.0
  %75 = vmatpush.msra.mxu0 0.0
  %76 = vmatpush.msra.mxu0 0.0
  %77 = vmatpush.msra.mxu0 0.0
  %78 = vmatpush.msra.mxu0 0.0
  %79 = vmatpush.msra.mxu0 0.0
  %80 = vmatpush.msra.mxu0 0.0
  %81 = vmatpush.msra.mxu0 0.0
  %82 = vmatpush.msra.mxu0 0.0
  %83 = vmatpush.msra.mxu0 %v59
  %84 = vmatpush.msra.mxu0 %v58
  %85 = vmatpush.msra.mxu0 %v57
  %86 = vmatpush.msra.mxu0 %v56
  %87 = vmatmul.f32.gmra.mxu0 %v66
  %v88 = vpop.f32.mrf.mxu0
  %v89 = vadd.f32 %v62, %v88
  %90 = vmatmul.f32.gmra.mxu0 %v69
  %v91 = vpop.f32.mrf.mxu0
  %v92 = vadd.f32 %v62, %v91
  %93 = vdwg.mxu0
  %v94 = vld [vmem:[%s5] sm:$0xff]
  %v95 = vld [vmem:[%s5 + $0x8] sm:$0xff]
  %v96 = vld [vmem:[%s5 + $0x10] sm:$0xff]
  %v97 = vld [vmem:[%s5 + $0x18] sm:$0xff]
  %v98 = vmul.f32 %v89, 0.25
  %v99 = vmul.f32 %v92, 0.25
  %101 = vrot.lane.b32.xlu0 %v89, 96
  %v102 = vpop.permute.xlu0 %101
  %vm103 = vcmask 130048
  %v105 = vsel %vm103, %v98, 0
  %v107 = vsel %vm103, %v102, 0
  %109 = vmatpush.xpose.msra.mxu0 0.0
  %110 = vmatpush.xpose.msra.mxu0 0.0
  %111 = vmatpush.xpose.msra.mxu0 0.0
  %112 = vmatpush.xpose.msra.mxu0 0.0
  %113 = vmatpush.xpose.msra.mxu0 0.0
  %114 = vmatpush.xpose.msra.mxu0 0.0
  %115 = vmatpush.xpose.msra.mxu0 0.0
  %116 = vmatpush.xpose.msra.mxu0 0.0
  %117 = vmatpush.xpose.msra.mxu0 0.0
  %118 = vmatpush.xpose.msra.mxu0 0.0
  %119 = vmatpush.xpose.msra.mxu0 0.0
  %120 = vmatpush.xpose.msra.mxu0 0.0
  %121 = vmatpush.xpose.msra.mxu0 0.0
  %122 = vmatpush.xpose.msra.mxu0 0.0
  %123 = vmatpush.xpose.msra.mxu0 0.0
  %124 = vmatpush.xpose.msra.mxu0 %v107
  %125 = vmatmul.f32.gmra.mxu0 %v105
  %v126 = vpop.f32.mrf.mxu0
  %v127 = vadd.f32 0.0, %v126
  %128 = vdwg.mxu0
  %130 = vrot.lane.b32.xlu0 %v92, 96
  %v131 = vpop.permute.xlu0 %130
  %v133 = vsel %vm103, %v99, 0
  %v135 = vsel %vm103, %v131, 0
  %137 = vmatpush.xpose.msra.mxu0 0.0
  %138 = vmatpush.xpose.msra.mxu0 0.0
  %139 = vmatpush.xpose.msra.mxu0 0.0
  %140 = vmatpush.xpose.msra.mxu0 0.0
  %141 = vmatpush.xpose.msra.mxu0 0.0
  %142 = vmatpush.xpose.msra.mxu0 0.0
  %143 = vmatpush.xpose.msra.mxu0 0.0
  %144 = vmatpush.xpose.msra.mxu0 0.0
  %145 = vmatpush.xpose.msra.mxu0 0.0
  %146 = vmatpush.xpose.msra.mxu0 0.0
  %147 = vmatpush.xpose.msra.mxu0 0.0
  %148 = vmatpush.xpose.msra.mxu0 0.0
  %149 = vmatpush.xpose.msra.mxu0 0.0
  %150 = vmatpush.xpose.msra.mxu0 0.0
  %151 = vmatpush.xpose.msra.mxu0 0.0
  %152 = vmatpush.xpose.msra.mxu0 %v135
  %153 = vmatmul.f32.gmra.mxu0 %v133
  %v154 = vpop.f32.mrf.mxu0
  %v155 = vadd.f32 0.0, %v154
  %156 = vdwg.mxu0
  %vm157 = vcmp.gt.f32.partialorder %v54, 0.0
  %vm158 = vcmp.gt.f32.partialorder %v55, 0.0
  %v159 = vsel %vm157, 1, 0
  %v160 = vsel %vm158, 1, 0
  %v161 = vperm.slane %v159, 0
  %v162 = vperm.slane %v160, 0
  %vm163 = vcmp.eq.s32.totalorder %v161, 1
  %vm164 = vcmp.eq.s32.totalorder %v162, 1
  %v165 = vsel %vm163, %v127, -1e+09
  %v166 = vsel %vm164, %v155, -1e+09
  %vm167 = vcmask 64512
  %v168 = vsel %vm167, %v165, -inf
  %169 = vmax.xlane.f32.xlu0 %v168
  %v170 = vpop.xlane.xlu0 %169
  %v171 = vsel %vm167, %v166, -inf
  %172 = vmax.xlane.f32.xlu0 %v171
  %v173 = vpop.xlane.xlu0 %172
  %v174 = vsub.f32 %v165, %v170
  %v175 = vsub.f32 %v166, %v173
  %v176 = vmul.f32 %v174, 1.442695
  %v177 = vpow.pop %v176
  %v178 = vmul.f32 %v175, 1.442695
  %v179 = vpow.pop %v178
  %v180 = vsel %vm167, %v177, 0.0
  %181 = vadd.xlane.f32.xlu0 %v180
  %v182 = vpop.xlane.xlu0 %181
  %v183 = vsel %vm167, %v179, 0.0
  %184 = vadd.xlane.f32.xlu0 %v183
  %v185 = vpop.xlane.xlu0 %184
  %v186 = vrcp.pop %v182
  %v187 = vrcp.pop %v185
  %v188 = vmul.f32 %v177, %v186
  %v189 = vmul.f32 %v179, %v187
  %190 = vrot.lane.b32.xlu0 %v89, 64
  %v191 = vpop.permute.xlu0 %190
  %v194 = vsel %vm167, %v188, 0
  %196 = vmatpush.msra.mxu0 0.0
  %197 = vmatpush.msra.mxu0 0.0
  %198 = vmatpush.msra.mxu0 0.0
  %199 = vmatpush.msra.mxu0 0.0
  %200 = vmatpush.msra.mxu0 0.0
  %201 = vmatpush.msra.mxu0 0.0
  %202 = vmatpush.msra.mxu0 0.0
  %203 = vmatpush.msra.mxu0 0.0
  %204 = vmatpush.msra.mxu0 0.0
  %205 = vmatpush.msra.mxu0 0.0
  %206 = vmatpush.msra.mxu0 0.0
  %207 = vmatpush.msra.mxu0 0.0
  %208 = vmatpush.msra.mxu0 0.0
  %209 = vmatpush.msra.mxu0 0.0
  %210 = vmatpush.msra.mxu0 0.0
  %211 = vmatpush.msra.mxu0 %v191
  %212 = vmatmul.f32.gmra.mxu0 %v194
  %v213 = vpop.f32.mrf.mxu0
  %v214 = vadd.f32 0.0, %v213
  %215 = vdwg.mxu0
  %216 = vrot.lane.b32.xlu0 %v92, 64
  %v217 = vpop.permute.xlu0 %216
  %v220 = vsel %vm167, %v189, 0
  %222 = vmatpush.msra.mxu0 0.0
  %223 = vmatpush.msra.mxu0 0.0
  %224 = vmatpush.msra.mxu0 0.0
  %225 = vmatpush.msra.mxu0 0.0
  %226 = vmatpush.msra.mxu0 0.0
  %227 = vmatpush.msra.mxu0 0.0
  %228 = vmatpush.msra.mxu0 0.0
  %229 = vmatpush.msra.mxu0 0.0
  %230 = vmatpush.msra.mxu0 0.0
  %231 = vmatpush.msra.mxu0 0.0
  %232 = vmatpush.msra.mxu0 0.0
  %233 = vmatpush.msra.mxu0 0.0
  %234 = vmatpush.msra.mxu0 0.0
  %235 = vmatpush.msra.mxu0 0.0
  %236 = vmatpush.msra.mxu0 0.0
  %237 = vmatpush.msra.mxu0 %v217
  %238 = vmatmul.f32.gmra.mxu0 %v220
  %v239 = vpop.f32.mrf.mxu0
  %v240 = vadd.f32 0.0, %v239
  %241 = vdwg.mxu0
  %242 = vrot.lane.b32.xlu0 %v98, 112
  %v243 = vpop.permute.xlu0 %242
  %244 = vrot.lane.b32.xlu0 %v89, 80
  %v245 = vpop.permute.xlu0 %244
  %v246 = vsel %vm103, %v243, 0
  %v248 = vsel %vm103, %v245, 0
  %250 = vmatpush.xpose.msra.mxu0 0.0
  %251 = vmatpush.xpose.msra.mxu0 0.0
  %252 = vmatpush.xpose.msra.mxu0 0.0
  %253 = vmatpush.xpose.msra.mxu0 0.0
  %254 = vmatpush.xpose.msra.mxu0 0.0
  %255 = vmatpush.xpose.msra.mxu0 0.0
  %256 = vmatpush.xpose.msra.mxu0 0.0
  %257 = vmatpush.xpose.msra.mxu0 0.0
  %258 = vmatpush.xpose.msra.mxu0 0.0
  %259 = vmatpush.xpose.msra.mxu0 0.0
  %260 = vmatpush.xpose.msra.mxu0 0.0
  %261 = vmatpush.xpose.msra.mxu0 0.0
  %262 = vmatpush.xpose.msra.mxu0 0.0
  %263 = vmatpush.xpose.msra.mxu0 0.0
  %264 = vmatpush.xpose.msra.mxu0 0.0
  %265 = vmatpush.xpose.msra.mxu0 %v248
  %266 = vmatmul.f32.gmra.mxu0 %v246
  %v267 = vpop.f32.mrf.mxu0
  %v268 = vadd.f32 0.0, %v267
  %269 = vdwg.mxu0
  %270 = vrot.lane.b32.xlu0 %v99, 112
  %v271 = vpop.permute.xlu0 %270
  %272 = vrot.lane.b32.xlu0 %v92, 80
  %v273 = vpop.permute.xlu0 %272
  %v274 = vsel %vm103, %v271, 0
  %v276 = vsel %vm103, %v273, 0
  %278 = vmatpush.xpose.msra.mxu0 0.0
  %279 = vmatpush.xpose.msra.mxu0 0.0
  %280 = vmatpush.xpose.msra.mxu0 0.0
  %281 = vmatpush.xpose.msra.mxu0 0.0
  %282 = vmatpush.xpose.msra.mxu0 0.0
  %283 = vmatpush.xpose.msra.mxu0 0.0
  %284 = vmatpush.xpose.msra.mxu0 0.0
  %285 = vmatpush.xpose.msra.mxu0 0.0
  %286 = vmatpush.xpose.msra.mxu0 0.0
  %287 = vmatpush.xpose.msra.mxu0 0.0
  %288 = vmatpush.xpose.msra.mxu0 0.0
  %289 = vmatpush.xpose.msra.mxu0 0.0
  %290 = vmatpush.xpose.msra.mxu0 0.0
  %291 = vmatpush.xpose.msra.mxu0 0.0
  %292 = vmatpush.xpose.msra.mxu0 0.0
  %293 = vmatpush.xpose.msra.mxu0 %v276
  %294 = vmatmul.f32.gmra.mxu0 %v274
  %v295 = vpop.f32.mrf.mxu0
  %v296 = vadd.f32 0.0, %v295
  %297 = vdwg.mxu0
  %v298 = vsel %vm163, %v268, -1e+09
  %v299 = vsel %vm164, %v296, -1e+09
  %v300 = vsel %vm167, %v298, -inf
  %301 = vmax.xlane.f32.xlu0 %v300
  %v302 = vpop.xlane.xlu0 %301
  %v303 = vsel %vm167, %v299, -inf
  %304 = vmax.xlane.f32.xlu0 %v303
  %v305 = vpop.xlane.xlu0 %304
  %v306 = vsub.f32 %v298, %v302
  %v307 = vsub.f32 %v299, %v305
  %v308 = vmul.f32 %v306, 1.442695
  %v309 = vpow.pop %v308
  %v310 = vmul.f32 %v307, 1.442695
  %v311 = vpow.pop %v310
  %v312 = vsel %vm167, %v309, 0.0
  %313 = vadd.xlane.f32.xlu0 %v312
  %v314 = vpop.xlane.xlu0 %313
  %v315 = vsel %vm167, %v311, 0.0
  %316 = vadd.xlane.f32.xlu0 %v315
  %v317 = vpop.xlane.xlu0 %316
  %v318 = vrcp.pop %v314
  %v319 = vrcp.pop %v317
  %v320 = vmul.f32 %v309, %v318
  %v321 = vmul.f32 %v311, %v319
  %322 = vrot.lane.b32.xlu0 %v89, 48
  %v323 = vpop.permute.xlu0 %322
  %v326 = vsel %vm167, %v320, 0
  %328 = vmatpush.msra.mxu0 0.0
  %329 = vmatpush.msra.mxu0 0.0
  %330 = vmatpush.msra.mxu0 0.0
  %331 = vmatpush.msra.mxu0 0.0
  %332 = vmatpush.msra.mxu0 0.0
  %333 = vmatpush.msra.mxu0 0.0
  %334 = vmatpush.msra.mxu0 0.0
  %335 = vmatpush.msra.mxu0 0.0
  %336 = vmatpush.msra.mxu0 0.0
  %337 = vmatpush.msra.mxu0 0.0
  %338 = vmatpush.msra.mxu0 0.0
  %339 = vmatpush.msra.mxu0 0.0
  %340 = vmatpush.msra.mxu0 0.0
  %341 = vmatpush.msra.mxu0 0.0
  %342 = vmatpush.msra.mxu0 0.0
  %343 = vmatpush.msra.mxu0 %v323
  %344 = vmatmul.f32.gmra.mxu0 %v326
  %v345 = vpop.f32.mrf.mxu0
  %v346 = vadd.f32 0.0, %v345
  %347 = vdwg.mxu0
  %348 = vrot.lane.b32.xlu0 %v92, 48
  %v349 = vpop.permute.xlu0 %348
  %v352 = vsel %vm167, %v321, 0
  %354 = vmatpush.msra.mxu0 0.0
  %355 = vmatpush.msra.mxu0 0.0
  %356 = vmatpush.msra.mxu0 0.0
  %357 = vmatpush.msra.mxu0 0.0
  %358 = vmatpush.msra.mxu0 0.0
  %359 = vmatpush.msra.mxu0 0.0
  %360 = vmatpush.msra.mxu0 0.0
  %361 = vmatpush.msra.mxu0 0.0
  %362 = vmatpush.msra.mxu0 0.0
  %363 = vmatpush.msra.mxu0 0.0
  %364 = vmatpush.msra.mxu0 0.0
  %365 = vmatpush.msra.mxu0 0.0
  %366 = vmatpush.msra.mxu0 0.0
  %367 = vmatpush.msra.mxu0 0.0
  %368 = vmatpush.msra.mxu0 0.0
  %369 = vmatpush.msra.mxu0 %v349
  %370 = vmatmul.f32.gmra.mxu0 %v352
  %v371 = vpop.f32.mrf.mxu0
  %v372 = vadd.f32 0.0, %v371
  %373 = vdwg.mxu0
  %v375 = vsel %vm103, %v346, 0
  %v378 = vsel %vm103, %v372, 0
  %380 = vmatpush.msra.mxu0 0.0
  %381 = vmatpush.msra.mxu0 0.0
  %382 = vmatpush.msra.mxu0 0.0
  %383 = vmatpush.msra.mxu0 0.0
  %384 = vmatpush.msra.mxu0 0.0
  %385 = vmatpush.msra.mxu0 0.0
  %386 = vmatpush.msra.mxu0 0.0
  %387 = vmatpush.msra.mxu0 0.0
  %388 = vmatpush.msra.mxu0 0.0
  %389 = vmatpush.msra.mxu0 0.0
  %390 = vmatpush.msra.mxu0 0.0
  %391 = vmatpush.msra.mxu0 0.0
  %392 = vmatpush.msra.mxu0 0.0
  %393 = vmatpush.msra.mxu0 0.0
  %394 = vmatpush.msra.mxu0 %v97
  %395 = vmatpush.msra.mxu0 %v96
  %396 = vmatmul.f32.gmra.mxu0 %v375
  %v397 = vpop.f32.mrf.mxu0
  %v398 = vadd.f32 0.0, %v397
  %399 = vmatmul.f32.gmra.mxu0 %v378
  %v400 = vpop.f32.mrf.mxu0
  %v401 = vadd.f32 0.0, %v400
  %402 = vdwg.mxu0
  %v404 = vsel %vm103, %v214, 0
  %v407 = vsel %vm103, %v240, 0
  %409 = vmatpush.msra.mxu0 0.0
  %410 = vmatpush.msra.mxu0 0.0
  %411 = vmatpush.msra.mxu0 0.0
  %412 = vmatpush.msra.mxu0 0.0
  %413 = vmatpush.msra.mxu0 0.0
  %414 = vmatpush.msra.mxu0 0.0
  %415 = vmatpush.msra.mxu0 0.0
  %416 = vmatpush.msra.mxu0 0.0
  %417 = vmatpush.msra.mxu0 0.0
  %418 = vmatpush.msra.mxu0 0.0
  %419 = vmatpush.msra.mxu0 0.0
  %420 = vmatpush.msra.mxu0 0.0
  %421 = vmatpush.msra.mxu0 0.0
  %422 = vmatpush.msra.mxu0 0.0
  %423 = vmatpush.msra.mxu0 %v95
  %424 = vmatpush.msra.mxu0 %v94
  %425 = vmatmul.f32.gmra.mxu0 %v404
  %v426 = vpop.f32.mrf.mxu0
  %v427 = vadd.f32 %v398, %v426
  %428 = vmatmul.f32.gmra.mxu0 %v407
  %v429 = vpop.f32.mrf.mxu0
  %v430 = vadd.f32 %v401, %v429
  %431 = vdwg.mxu0
  %v432 = vld [vmem:[%s6] sm:$0x1]
  %v434 = vperm.slane %v432, 0
  %v436 = vadd.f32 %v427, %v434
  %v437 = vadd.f32 %v430, %v434
  %v438 = vadd.f32 %v436, %v50
  %v439 = vadd.f32 %v437, %v51
  %v440 = vld [vmem:[%s7] sm:$0x1]
  %v441 = vld [vmem:[%s8] sm:$0x1]
  %v442 = vsel %vm64, %v438, 0.0
  %443 = vadd.xlane.f32.xlu0 %v442
  %v444 = vpop.xlane.xlu0 %443
  %v445 = vsel %vm64, %v439, 0.0
  %446 = vadd.xlane.f32.xlu0 %v445
  %v447 = vpop.xlane.xlu0 %446
  %v448 = vrcp.pop 32.0
  %v449 = vmul.f32 32.0, %v448
  %v450 = vsub.f32 1.0, %v449
  %v451 = vmul.f32 %v448, %v450
  %v452 = vadd.f32 %v448, %v451
  %vm453 = vweird.f32 %v448
  %v454 = vsel %vm453, %v448, %v452
  %v455 = vmul.f32 %v444, %v454
  %v456 = vmul.f32 %v447, %v454
  %v457 = vsub.f32 %v438, %v455
  %v458 = vsub.f32 %v439, %v456
  %v459 = vmul.f32 %v457, %v457
  %v460 = vmul.f32 %v458, %v458
  %v461 = vsel %vm64, %v459, 0.0
  %462 = vadd.xlane.f32.xlu0 %v461
  %v463 = vpop.xlane.xlu0 %462
  %v464 = vsel %vm64, %v460, 0.0
  %465 = vadd.xlane.f32.xlu0 %v464
  %v466 = vpop.xlane.xlu0 %465
  %v467 = vmul.f32 %v463, %v454
  %v468 = vmul.f32 %v466, %v454
  %v469 = vadd.f32 %v467, 1e-05
  %v470 = vadd.f32 %v468, 1e-05
  %v471 = vrsqrt.pop %v469
  %v472 = vmul.f32 %v471, %v469
  %v473 = vmul.f32 %v472, %v471
  %v474 = vmul.f32 0.5, %v473
  %v475 = vsub.f32 1.5, %v474
  %v476 = vmul.f32 %v471, %v475
  %vm477 = vweird.f32 %v469
  %vm478 = vweird.f32 %v471
  %vm479 = vmor %vm477, %vm478
  %v480 = vsel %vm479, %v471, %v476
  %v481 = vrsqrt.pop %v470
  %v482 = vmul.f32 %v481, %v470
  %v483 = vmul.f32 %v482, %v481
  %v484 = vmul.f32 0.5, %v483
  %v485 = vsub.f32 1.5, %v484
  %v486 = vmul.f32 %v481, %v485
  %vm487 = vweird.f32 %v470
  %vm488 = vweird.f32 %v481
  %vm489 = vmor %vm487, %vm488
  %v490 = vsel %vm489, %v481, %v486
  %v491 = vmul.f32 %v457, %v480
  %v492 = vmul.f32 %v458, %v490
  %v494 = vperm.slane %v440, 0
  %v496 = vmul.f32 %v491, %v494
  %v497 = vmul.f32 %v492, %v494
  %v499 = vperm.slane %v441, 0
  %v501 = vadd.f32 %v496, %v499
  %v502 = vadd.f32 %v497, %v499
  %504 = vset.pattern.permute.xlu0 0
  %505 = vperm.xlu0 %504, %v52
  %v506 = vpop.permute.xlu0 %505
  %509 = vset.pattern.permute.xlu0 0
  %510 = vperm.xlu0 %509, %v53
  %v511 = vpop.permute.xlu0 %510
  %v513 = vmul.f32 %v501, %v506
  %v514 = vmul.f32 %v502, %v511
  %v517 = vrot.slane %v513, 7
  %v518 = vrot.slane %v514, 7
  %vm521 = vcmask 1040384
  %v522 = vsel %vm521, 0.0, %v517
  %v523 = vsel %vm521, 0.0, %v518
  %v524 = vrot.slane %v513, 1
  %v525 = vrot.slane %v514, 1
  %vm528 = vcmask 1046528
  %v529 = vsel %vm528, %v524, 0.0
  %v530 = vsel %vm528, %v525, 0.0
  %531 = vrot.lane.b32.xlu0 %v513, 32
  %v532 = vpop.permute.xlu0 %531
  %533 = vrot.lane.b32.xlu0 %v514, 32
  %v534 = vpop.permute.xlu0 %533
  %539 = vrot.lane.b32.xlu0 %v529, 64
  %v540 = vpop.permute.xlu0 %539
  %541 = vrot.lane.b32.xlu0 %v530, 64
  %v542 = vpop.permute.xlu0 %541
  %v545 = vsel %vm64, %v522, %v532
  %v546 = vsel %vm64, %v523, %v534
  %vm547 = vcmask 523264
  %v548 = vsel %vm547, %v545, %v540
  %v549 = vsel %vm547, %v546, %v542
  %v550 = vld [vmem:[%s9] sm:$0xff]
  %v551 = vld [vmem:[%s9 + $0x8] sm:$0xff]
  %v552 = vld [vmem:[%s9 + $0x10] sm:$0xff]
  %v553 = vld [vmem:[%s9 + $0x18] sm:$0xff]
  %v554 = vld [vmem:[%s9 + $0x20] sm:$0xff]
  %v555 = vld [vmem:[%s9 + $0x28] sm:$0xff]
  %v556 = vld [vmem:[%s9 + $0x30] sm:$0xff]
  %v557 = vld [vmem:[%s9 + $0x38] sm:$0xff]
  %v558 = vld [vmem:[%s9 + $0x40] sm:$0xff]
  %v559 = vld [vmem:[%s9 + $0x48] sm:$0xff]
  %v560 = vld [vmem:[%s9 + $0x50] sm:$0xff]
  %v561 = vld [vmem:[%s9 + $0x58] sm:$0xff]
  %v562 = vld [vmem:[%s10] sm:$0x1]
  %v564 = vperm.slane %v562, 0
  %vm566 = vcmask 785408
  %v568 = vsel %vm566, %v548, 0
  %v571 = vsel %vm566, %v549, 0
  %573 = vmatpush.msra.mxu0 0.0
  %574 = vmatpush.msra.mxu0 0.0
  %575 = vmatpush.msra.mxu0 0.0
  %576 = vmatpush.msra.mxu0 0.0
  %577 = vmatpush.msra.mxu0 %v561
  %578 = vmatpush.msra.mxu0 %v560
  %579 = vmatpush.msra.mxu0 %v559
  %580 = vmatpush.msra.mxu0 %v558
  %581 = vmatpush.msra.mxu0 %v557
  %582 = vmatpush.msra.mxu0 %v556
  %583 = vmatpush.msra.mxu0 %v555
  %584 = vmatpush.msra.mxu0 %v554
  %585 = vmatpush.msra.mxu0 %v553
  %586 = vmatpush.msra.mxu0 %v552
  %587 = vmatpush.msra.mxu0 %v551
  %588 = vmatpush.msra.mxu0 %v550
  %589 = vmatmul.f32.gmra.mxu0 %v568
  %v590 = vpop.f32.mrf.mxu0
  %v591 = vadd.f32 %v564, %v590
  %592 = vmatmul.f32.gmra.mxu0 %v571
  %v593 = vpop.f32.mrf.mxu0
  %v594 = vadd.f32 %v564, %v593
  %595 = vdwg.mxu0
  %v596 = vmax.f32 %v591, 0.0
  %v597 = vmax.f32 %v594, 0.0
  %v598 = vld [vmem:[%s11] sm:$0xff]
  %v599 = vld [vmem:[%s11 + $0x8] sm:$0xff]
  %v600 = vld [vmem:[%s11 + $0x10] sm:$0xff]
  %v601 = vld [vmem:[%s11 + $0x18] sm:$0xff]
  %v602 = vld [vmem:[%s11 + $0x20] sm:$0xff]
  %v603 = vld [vmem:[%s11 + $0x28] sm:$0xff]
  %v604 = vld [vmem:[%s11 + $0x30] sm:$0xff]
  %v605 = vld [vmem:[%s11 + $0x38] sm:$0xff]
  %v606 = vld [vmem:[%s12] sm:$0x1]
  %v608 = vperm.slane %v606, 0
  %v611 = vsel %vm547, %v596, 0
  %v614 = vsel %vm547, %v597, 0
  %616 = vmatpush.msra.mxu0 0.0
  %617 = vmatpush.msra.mxu0 0.0
  %618 = vmatpush.msra.mxu0 0.0
  %619 = vmatpush.msra.mxu0 0.0
  %620 = vmatpush.msra.mxu0 0.0
  %621 = vmatpush.msra.mxu0 0.0
  %622 = vmatpush.msra.mxu0 0.0
  %623 = vmatpush.msra.mxu0 0.0
  %624 = vmatpush.msra.mxu0 %v605
  %625 = vmatpush.msra.mxu0 %v604
  %626 = vmatpush.msra.mxu0 %v603
  %627 = vmatpush.msra.mxu0 %v602
  %628 = vmatpush.msra.mxu0 %v601
  %629 = vmatpush.msra.mxu0 %v600
  %630 = vmatpush.msra.mxu0 %v599
  %631 = vmatpush.msra.mxu0 %v598
  %632 = vmatmul.f32.gmra.mxu0 %v611
  %v633 = vpop.f32.mrf.mxu0
  %v634 = vadd.f32 %v608, %v633
  %635 = vmatmul.f32.gmra.mxu0 %v614
  %v636 = vpop.f32.mrf.mxu0
  %v637 = vadd.f32 %v608, %v636
  %638 = vdwg.mxu0
  %v639 = vadd.f32 %v634, %v513
  %v640 = vadd.f32 %v637, %v514
  %v641 = vld [vmem:[%s13] sm:$0x1]
  %v642 = vld [vmem:[%s14] sm:$0x1]
  %v643 = vsel %vm64, %v639, 0.0
  %644 = vadd.xlane.f32.xlu0 %v643
  %v645 = vpop.xlane.xlu0 %644
  %v646 = vsel %vm64, %v640, 0.0
  %647 = vadd.xlane.f32.xlu0 %v646
  %v648 = vpop.xlane.xlu0 %647
  %v649 = vmul.f32 %v645, %v454
  %v650 = vmul.f32 %v648, %v454
  %v651 = vsub.f32 %v639, %v649
  %v652 = vsub.f32 %v640, %v650
  %v653 = vmul.f32 %v651, %v651
  %v654 = vmul.f32 %v652, %v652
  %v655 = vsel %vm64, %v653, 0.0
  %656 = vadd.xlane.f32.xlu0 %v655
  %v657 = vpop.xlane.xlu0 %656
  %v658 = vsel %vm64, %v654, 0.0
  %659 = vadd.xlane.f32.xlu0 %v658
  %v660 = vpop.xlane.xlu0 %659
  %v661 = vmul.f32 %v657, %v454
  %v662 = vmul.f32 %v660, %v454
  %v663 = vadd.f32 %v661, 1e-05
  %v664 = vadd.f32 %v662, 1e-05
  %v665 = vrsqrt.pop %v663
  %v666 = vmul.f32 %v665, %v663
  %v667 = vmul.f32 %v666, %v665
  %v668 = vmul.f32 0.5, %v667
  %v669 = vsub.f32 1.5, %v668
  %v670 = vmul.f32 %v665, %v669
  %vm671 = vweird.f32 %v663
  %vm672 = vweird.f32 %v665
  %vm673 = vmor %vm671, %vm672
  %v674 = vsel %vm673, %v665, %v670
  %v675 = vrsqrt.pop %v664
  %v676 = vmul.f32 %v675, %v664
  %v677 = vmul.f32 %v676, %v675
  %v678 = vmul.f32 0.5, %v677
  %v679 = vsub.f32 1.5, %v678
  %v680 = vmul.f32 %v675, %v679
  %vm681 = vweird.f32 %v664
  %vm682 = vweird.f32 %v675
  %vm683 = vmor %vm681, %vm682
  %v684 = vsel %vm683, %v675, %v680
  %v685 = vmul.f32 %v651, %v674
  %v686 = vmul.f32 %v652, %v684
  %v688 = vperm.slane %v641, 0
  %v690 = vmul.f32 %v685, %v688
  %v691 = vmul.f32 %v686, %v688
  %v693 = vperm.slane %v642, 0
  %v695 = vadd.f32 %v690, %v693
  %v696 = vadd.f32 %v691, %v693
  %v697 = vmul.f32 %v695, %v506
  %v698 = vmul.f32 %v696, %v511
  %699 = vst.msk [vmem:[%s15] sm:$0xff] %vm64, %v697
  %700 = vst.msk [vmem:[%s15 + $0x8] sm:$0xff] %vm64, %v698
  // Predicated region
  $region62: #{fastspeech_forward.7} parent=0 // pred_check
    _
  $region63: #{fastspeech_forward.7} parent=0 // pred_check_branch
    %702 = sbr.rel (0) target = $region65
  $region64: #{fastspeech_forward.7} parent=0 // pred_region
    _
  $region65: #{fastspeech_forward.7} parent=0 // pred_fallthru
    _
  // Predicated region
  $region66: #{fastspeech_forward.7} parent=0 // pred_check
    _
  $region67: #{fastspeech_forward.7} parent=0 // pred_check_branch
    %704 = sbr.rel (0) target = $region69
  $region68: #{fastspeech_forward.7} parent=0 // pred_region
    _
  $region69: #{fastspeech_forward.7} parent=0 // pred_fallthru
    _

// kernel: fastspeech_forward.9
$region0: #{fastspeech_forward.9}
  #allocation0 [shape = 'u32[]', space=smem, size = 0x4, offset = 0x4, fixed_abs, tag = 'smem constant byte address 0x4 - core index']
  #allocation1 [shape = 'u32[72,128]{1,0:T(1,128)}', space=vmem, size = 0x9000, scoped, tag = 'internal scratch']
  #allocation2 [shape = 'f32[1,1]{1,0:T(1,128)S(1)}', space=vmem, size = 0x200, scoped, tag = 'scoped memory for fastspeech_forward.9']
  %s0 = inlined_call_operand.vmem [shape: f32[2,8,32], index: 0, kind: input, shape index: {}]
  %s1 = inlined_call_operand.vmem [shape: f32[2,16,8], index: 1, kind: input, shape index: {}]
  %s2 = inlined_call_operand.vmem [shape: f32[96,32], index: 2, kind: input, shape index: {}]
  %s3 = inlined_call_operand.vmem [shape: f32[1,32], index: 3, kind: input, shape index: {}]
  %s4 = inlined_call_operand.vmem [shape: f32[1,32], index: 4, kind: input, shape index: {}]
  %s5 = inlined_call_operand.vmem [shape: f32[1,32], index: 5, kind: input, shape index: {}]
  %s6 = inlined_call_operand.vmem [shape: f32[96,32], index: 6, kind: input, shape index: {}]
  %s7 = inlined_call_operand.vmem [shape: f32[1,32], index: 7, kind: input, shape index: {}]
  %s8 = inlined_call_operand.vmem [shape: f32[1,32], index: 8, kind: input, shape index: {}]
  %s9 = inlined_call_operand.vmem [shape: f32[1,32], index: 9, kind: input, shape index: {}]
  %s10 = inlined_call_operand.vmem [shape: f32[1,32], index: 10, kind: input, shape index: {}]
  %s11 = inlined_call_operand.<no memory space> [shape: f32[1,1], index: 11, kind: input, shape index: {}]
  %s12 = inlined_call_operand.vmem [shape: f32[2,16,32], index: 12, kind: output, shape index: {0}]
  %s13 = inlined_call_operand.hbm [shape: f32[2,8], index: 13, kind: output, shape index: {1}]
  %14 = xla_tuple %s12, %s13
  %s15 = sld [smem:[#allocation0]]
  $region66: #{fastspeech_forward.9} parent=0
    _
  %s17 = ssub.s32 1, %s15
  %s18 = scalar_select 0, %s17, %s15
  %v19 = vstv %s11
  %20 = vst [vmem:[#allocation2] sm:$0x1] %v19
  $region1: #{fastspeech_forward.9} parent=0
    #allocation3 [shape = 'u8[1024]{0}', space=vmem, size = 0x400, scoped, tag = 'output window, operand 1, single buffered']
    #allocation4 [shape = 's32[1]{0}', space=sflag, size = 0x4, scoped, tag = 'scoped memory for fastspeech_forward.9']
    %21 = vsyncpa [#allocation4], 0
    // Predicated region
    $region2: #{fastspeech_forward.9} parent=1 // pred_check
      _
    $region3: #{fastspeech_forward.9} parent=1 // pred_check_branch
      %23 = sbr.rel (0) target = $region5
    $region4: #{fastspeech_forward.9} parent=1 // pred_region
      _
    $region5: #{fastspeech_forward.9} parent=1 // pred_fallthru
      _
    // Predicated region
    $region6: #{fastspeech_forward.9} parent=1 // pred_check
      _
    $region7: #{fastspeech_forward.9} parent=1 // pred_check_branch
      %25 = sbr.rel (0) target = $region9
    $region8: #{fastspeech_forward.9} parent=1 // pred_region
      _
    $region9: #{fastspeech_forward.9} parent=1 // pred_fallthru
      _
    // Predicated region
    $region10: #{fastspeech_forward.9} parent=1 // pred_check
      _
    $region11: #{fastspeech_forward.9} parent=1 // pred_check_branch
      %27 = sbr.rel (0) target = $region13
    $region12: #{fastspeech_forward.9} parent=1 // pred_region
      _
    $region13: #{fastspeech_forward.9} parent=1 // pred_fallthru
      _
    // Predicated region
    $region14: #{fastspeech_forward.9} parent=1 // pred_check
      _
    $region15: #{fastspeech_forward.9} parent=1 // pred_check_branch
      %29 = sbr.rel (0) target = $region17
    $region16: #{fastspeech_forward.9} parent=1 // pred_region
      _
    $region17: #{fastspeech_forward.9} parent=1 // pred_fallthru
      _
    // Predicated region
    $region18: #{fastspeech_forward.9} parent=1 // pred_check
      _
    $region19: #{fastspeech_forward.9} parent=1 // pred_check_branch
      %31 = sbr.rel (0) target = $region21
    $region20: #{fastspeech_forward.9} parent=1 // pred_region
      _
    $region21: #{fastspeech_forward.9} parent=1 // pred_fallthru
      _
    // Predicated region
    $region22: #{fastspeech_forward.9} parent=1 // pred_check
      _
    $region23: #{fastspeech_forward.9} parent=1 // pred_check_branch
      %33 = sbr.rel (0) target = $region25
    $region24: #{fastspeech_forward.9} parent=1 // pred_region
      _
    $region25: #{fastspeech_forward.9} parent=1 // pred_fallthru
      _
    // Predicated region
    $region26: #{fastspeech_forward.9} parent=1 // pred_check
      _
    $region27: #{fastspeech_forward.9} parent=1 // pred_check_branch
      %35 = sbr.rel (0) target = $region29
    $region28: #{fastspeech_forward.9} parent=1 // pred_region
      _
    $region29: #{fastspeech_forward.9} parent=1 // pred_fallthru
      _
    // Predicated region
    $region30: #{fastspeech_forward.9} parent=1 // pred_check
      _
    $region31: #{fastspeech_forward.9} parent=1 // pred_check_branch
      %37 = sbr.rel (0) target = $region33
    $region32: #{fastspeech_forward.9} parent=1 // pred_region
      _
    $region33: #{fastspeech_forward.9} parent=1 // pred_fallthru
      _
    // Predicated region
    $region34: #{fastspeech_forward.9} parent=1 // pred_check
      _
    $region35: #{fastspeech_forward.9} parent=1 // pred_check_branch
      %39 = sbr.rel (0) target = $region37
    $region36: #{fastspeech_forward.9} parent=1 // pred_region
      _
    $region37: #{fastspeech_forward.9} parent=1 // pred_fallthru
      _
    // Predicated region
    $region38: #{fastspeech_forward.9} parent=1 // pred_check
      _
    $region39: #{fastspeech_forward.9} parent=1 // pred_check_branch
      %41 = sbr.rel (0) target = $region41
    $region40: #{fastspeech_forward.9} parent=1 // pred_region
      _
    $region41: #{fastspeech_forward.9} parent=1 // pred_fallthru
      _
    // Predicated region
    $region42: #{fastspeech_forward.9} parent=1 // pred_check
      _
    $region43: #{fastspeech_forward.9} parent=1 // pred_check_branch
      %43 = sbr.rel (0) target = $region45
    $region44: #{fastspeech_forward.9} parent=1 // pred_region
      _
    $region45: #{fastspeech_forward.9} parent=1 // pred_fallthru
      _
    // Predicated region
    $region46: #{fastspeech_forward.9} parent=1 // pred_check
      _
    $region47: #{fastspeech_forward.9} parent=1 // pred_check_branch
      %45 = sbr.rel (0) target = $region49
    $region48: #{fastspeech_forward.9} parent=1 // pred_region
      _
    $region49: #{fastspeech_forward.9} parent=1 // pred_fallthru
      _
    %v46 = vld [vmem:[%s0] sm:$0xff]
    %v47 = vld [vmem:[%s0 + $0x8] sm:$0xff]
    %v50 = vrot.slane %v46, 7
    %v51 = vrot.slane %v47, 7
    %vm54 = vcmask 1040384
    %v55 = vsel %vm54, 0.0, %v50
    %v56 = vsel %vm54, 0.0, %v51
    %v57 = vrot.slane %v46, 1
    %v58 = vrot.slane %v47, 1
    %vm61 = vcmask 1046528
    %v62 = vsel %vm61, %v57, 0.0
    %v63 = vsel %vm61, %v58, 0.0
    %64 = vrot.lane.b32.xlu0 %v46, 32
    %v65 = vpop.permute.xlu0 %64
    %66 = vrot.lane.b32.xlu0 %v47, 32
    %v67 = vpop.permute.xlu0 %66
    %72 = vrot.lane.b32.xlu0 %v62, 64
    %v73 = vpop.permute.xlu0 %72
    %74 = vrot.lane.b32.xlu0 %v63, 64
    %v75 = vpop.permute.xlu0 %74
    %vm78 = vcmask 261120
    %v79 = vsel %vm78, %v55, %v65
    %v80 = vsel %vm78, %v56, %v67
    %vm81 = vcmask 523264
    %v82 = vsel %vm81, %v79, %v73
    %v83 = vsel %vm81, %v80, %v75
    %v84 = vld [vmem:[%s2] sm:$0xff]
    %v85 = vld [vmem:[%s2 + $0x8] sm:$0xff]
    %v86 = vld [vmem:[%s2 + $0x10] sm:$0xff]
    %v87 = vld [vmem:[%s2 + $0x18] sm:$0xff]
    %v88 = vld [vmem:[%s2 + $0x20] sm:$0xff]
    %v89 = vld [vmem:[%s2 + $0x28] sm:$0xff]
    %v90 = vld [vmem:[%s2 + $0x30] sm:$0xff]
    %v91 = vld [vmem:[%s2 + $0x38] sm:$0xff]
    %v92 = vld [vmem:[%s2 + $0x40] sm:$0xff]
    %v93 = vld [vmem:[%s2 + $0x48] sm:$0xff]
    %v94 = vld [vmem:[%s2 + $0x50] sm:$0xff]
    %v95 = vld [vmem:[%s2 + $0x58] sm:$0xff]
    %v96 = vld [vmem:[%s3] sm:$0x1]
    %v98 = vperm.slane %v96, 0
    %vm100 = vcmask 785408
    %v102 = vsel %vm100, %v82, 0
    %v105 = vsel %vm100, %v83, 0
    %107 = vmatpush.msra.mxu0 0.0
    %108 = vmatpush.msra.mxu0 0.0
    %109 = vmatpush.msra.mxu0 0.0
    %110 = vmatpush.msra.mxu0 0.0
    %111 = vmatpush.msra.mxu0 %v95
    %112 = vmatpush.msra.mxu0 %v94
    %113 = vmatpush.msra.mxu0 %v93
    %114 = vmatpush.msra.mxu0 %v92
    %115 = vmatpush.msra.mxu0 %v91
    %116 = vmatpush.msra.mxu0 %v90
    %117 = vmatpush.msra.mxu0 %v89
    %118 = vmatpush.msra.mxu0 %v88
    %119 = vmatpush.msra.mxu0 %v87
    %120 = vmatpush.msra.mxu0 %v86
    %121 = vmatpush.msra.mxu0 %v85
    %122 = vmatpush.msra.mxu0 %v84
    %123 = vmatmul.f32.gmra.mxu0 %v102
    %v124 = vpop.f32.mrf.mxu0
    %v125 = vadd.f32 %v98, %v124
    %126 = vmatmul.f32.gmra.mxu0 %v105
    %v127 = vpop.f32.mrf.mxu0
    %v128 = vadd.f32 %v98, %v127
    %129 = vdwg.mxu0
    %v130 = vld [vmem:[%s4] sm:$0x1]
    %v131 = vld [vmem:[%s5] sm:$0x1]
    %v132 = vsel %vm78, %v125, 0.0
    %133 = vadd.xlane.f32.xlu0 %v132
    %v134 = vpop.xlane.xlu0 %133
    %v135 = vsel %vm78, %v128, 0.0
    %136 = vadd.xlane.f32.xlu0 %v135
    %v137 = vpop.xlane.xlu0 %136
    %v138 = vrcp.pop 32.0
    %v139 = vmul.f32 32.0, %v138
    %v140 = vsub.f32 1.0, %v139
    %v141 = vmul.f32 %v138, %v140
    %v142 = vadd.f32 %v138, %v141
    %vm143 = vweird.f32 %v138
    %v144 = vsel %vm143, %v138, %v142
    %v145 = vmul.f32 %v134, %v144
    %v146 = vmul.f32 %v137, %v144
    %v147 = vsub.f32 %v125, %v145
    %v148 = vsub.f32 %v128, %v146
    %v149 = vmul.f32 %v147, %v147
    %v150 = vmul.f32 %v148, %v148
    %v151 = vsel %vm78, %v149, 0.0
    %152 = vadd.xlane.f32.xlu0 %v151
    %v153 = vpop.xlane.xlu0 %152
    %v154 = vsel %vm78, %v150, 0.0
    %155 = vadd.xlane.f32.xlu0 %v154
    %v156 = vpop.xlane.xlu0 %155
    %v157 = vmul.f32 %v153, %v144
    %v158 = vmul.f32 %v156, %v144
    %v159 = vadd.f32 %v157, 1e-05
    %v160 = vadd.f32 %v158, 1e-05
    %v161 = vrsqrt.pop %v159
    %v162 = vmul.f32 %v161, %v159
    %v163 = vmul.f32 %v162, %v161
    %v164 = vmul.f32 0.5, %v163
    %v165 = vsub.f32 1.5, %v164
    %v166 = vmul.f32 %v161, %v165
    %vm167 = vweird.f32 %v159
    %vm168 = vweird.f32 %v161
    %vm169 = vmor %vm167, %vm168
    %v170 = vsel %vm169, %v161, %v166
    %v171 = vrsqrt.pop %v160
    %v172 = vmul.f32 %v171, %v160
    %v173 = vmul.f32 %v172, %v171
    %v174 = vmul.f32 0.5, %v173
    %v175 = vsub.f32 1.5, %v174
    %v176 = vmul.f32 %v171, %v175
    %vm177 = vweird.f32 %v160
    %vm178 = vweird.f32 %v171
    %vm179 = vmor %vm177, %vm178
    %v180 = vsel %vm179, %v171, %v176
    %v181 = vmul.f32 %v147, %v170
    %v182 = vmul.f32 %v148, %v180
    %v184 = vperm.slane %v130, 0
    %v186 = vmul.f32 %v181, %v184
    %v187 = vmul.f32 %v182, %v184
    %v189 = vperm.slane %v131, 0
    %v191 = vadd.f32 %v186, %v189
    %v192 = vadd.f32 %v187, %v189
    %v193 = vmax.f32 %v191, 0.0
    %v194 = vmax.f32 %v192, 0.0
    %v197 = vrot.slane %v193, 7
    %v198 = vrot.slane %v194, 7
    %v201 = vsel %vm54, 0.0, %v197
    %v202 = vsel %vm54, 0.0, %v198
    %v203 = vrot.slane %v193, 1
    %v204 = vrot.slane %v194, 1
    %v207 = vsel %vm61, %v203, 0.0
    %v208 = vsel %vm61, %v204, 0.0
    %209 = vrot.lane.b32.xlu0 %v193, 32
    %v210 = vpop.permute.xlu0 %209
    %211 = vrot.lane.b32.xlu0 %v194, 32
    %v212 = vpop.permute.xlu0 %211
    %217 = vrot.lane.b32.xlu0 %v207, 64
    %v218 = vpop.permute.xlu0 %217
    %219 = vrot.lane.b32.xlu0 %v208, 64
    %v220 = vpop.permute.xlu0 %219
    %v223 = vsel %vm78, %v201, %v210
    %v224 = vsel %vm78, %v202, %v212
    %v225 = vsel %vm81, %v223, %v218
    %v226 = vsel %vm81, %v224, %v220
    %v227 = vld [vmem:[%s6] sm:$0xff]
    %v228 = vld [vmem:[%s6 + $0x8] sm:$0xff]
    %v229 = vld [vmem:[%s6 + $0x10] sm:$0xff]
    %v230 = vld [vmem:[%s6 + $0x18] sm:$0xff]
    %v231 = vld [vmem:[%s6 + $0x20] sm:$0xff]
    %v232 = vld [vmem:[%s6 + $0x28] sm:$0xff]
    %v233 = vld [vmem:[%s6 + $0x30] sm:$0xff]
    %v234 = vld [vmem:[%s6 + $0x38] sm:$0xff]
    %v235 = vld [vmem:[%s6 + $0x40] sm:$0xff]
    %v236 = vld [vmem:[%s6 + $0x48] sm:$0xff]
    %v237 = vld [vmem:[%s6 + $0x50] sm:$0xff]
    %v238 = vld [vmem:[%s6 + $0x58] sm:$0xff]
    %v239 = vld [vmem:[%s7] sm:$0x1]
    %v241 = vperm.slane %v239, 0
    %v244 = vsel %vm100, %v225, 0
    %v247 = vsel %vm100, %v226, 0
    %249 = vmatpush.msra.mxu0 0.0
    %250 = vmatpush.msra.mxu0 0.0
    %251 = vmatpush.msra.mxu0 0.0
    %252 = vmatpush.msra.mxu0 0.0
    %253 = vmatpush.msra.mxu0 %v238
    %254 = vmatpush.msra.mxu0 %v237
    %255 = vmatpush.msra.mxu0 %v236
    %256 = vmatpush.msra.mxu0 %v235
    %257 = vmatpush.msra.mxu0 %v234
    %258 = vmatpush.msra.mxu0 %v233
    %259 = vmatpush.msra.mxu0 %v232
    %260 = vmatpush.msra.mxu0 %v231
    %261 = vmatpush.msra.mxu0 %v230
    %262 = vmatpush.msra.mxu0 %v229
    %263 = vmatpush.msra.mxu0 %v228
    %264 = vmatpush.msra.mxu0 %v227
    %265 = vmatmul.f32.gmra.mxu0 %v244
    %v266 = vpop.f32.mrf.mxu0
    %v267 = vadd.f32 %v241, %v266
    %268 = vmatmul.f32.gmra.mxu0 %v247
    %v269 = vpop.f32.mrf.mxu0
    %v270 = vadd.f32 %v241, %v269
    %271 = vdwg.mxu0
    %v272 = vld [vmem:[%s8] sm:$0x1]
    %v273 = vld [vmem:[%s9] sm:$0x1]
    %v274 = vsel %vm78, %v267, 0.0
    %275 = vadd.xlane.f32.xlu0 %v274
    %v276 = vpop.xlane.xlu0 %275
    %v277 = vsel %vm78, %v270, 0.0
    %278 = vadd.xlane.f32.xlu0 %v277
    %v279 = vpop.xlane.xlu0 %278
    %v280 = vmul.f32 %v276, %v144
    %v281 = vmul.f32 %v279, %v144
    %v282 = vsub.f32 %v267, %v280
    %v283 = vsub.f32 %v270, %v281
    %v284 = vmul.f32 %v282, %v282
    %v285 = vmul.f32 %v283, %v283
    %v286 = vsel %vm78, %v284, 0.0
    %287 = vadd.xlane.f32.xlu0 %v286
    %v288 = vpop.xlane.xlu0 %287
    %v289 = vsel %vm78, %v285, 0.0
    %290 = vadd.xlane.f32.xlu0 %v289
    %v291 = vpop.xlane.xlu0 %290
    %v292 = vmul.f32 %v288, %v144
    %v293 = vmul.f32 %v291, %v144
    %v294 = vadd.f32 %v292, 1e-05
    %v295 = vadd.f32 %v293, 1e-05
    %v296 = vrsqrt.pop %v294
    %v297 = vmul.f32 %v296, %v294
    %v298 = vmul.f32 %v297, %v296
    %v299 = vmul.f32 0.5, %v298
    %v300 = vsub.f32 1.5, %v299
    %v301 = vmul.f32 %v296, %v300
    %vm302 = vweird.f32 %v294
    %vm303 = vweird.f32 %v296
    %vm304 = vmor %vm302, %vm303
    %v305 = vsel %vm304, %v296, %v301
    %v306 = vrsqrt.pop %v295
    %v307 = vmul.f32 %v306, %v295
    %v308 = vmul.f32 %v307, %v306
    %v309 = vmul.f32 0.5, %v308
    %v310 = vsub.f32 1.5, %v309
    %v311 = vmul.f32 %v306, %v310
    %vm312 = vweird.f32 %v295
    %vm313 = vweird.f32 %v306
    %vm314 = vmor %vm312, %vm313
    %v315 = vsel %vm314, %v306, %v311
    %v316 = vmul.f32 %v282, %v305
    %v317 = vmul.f32 %v283, %v315
    %v319 = vperm.slane %v272, 0
    %v321 = vmul.f32 %v316, %v319
    %v322 = vmul.f32 %v317, %v319
    %v324 = vperm.slane %v273, 0
    %v326 = vadd.f32 %v321, %v324
    %v327 = vadd.f32 %v322, %v324
    %v328 = vmax.f32 %v326, 0.0
    %v329 = vmax.f32 %v327, 0.0
    %v330 = vld [vmem:[%s10] sm:$0x1]
    %v332 = vperm.slane %v330, 0
    %v334 = vmul.f32 %v328, %v332
    %v335 = vmul.f32 %v329, %v332
    %v336 = vsel %vm78, %v334, 0.0
    %337 = vadd.xlane.f32.xlu0 %v336
    %v338 = vpop.xlane.xlu0 %337
    %v339 = vsel %vm78, %v335, 0.0
    %340 = vadd.xlane.f32.xlu0 %v339
    %v341 = vpop.xlane.xlu0 %340
    %v342 = vld [vmem:[#allocation2] sm:$0x1]
    %v344 = vperm.slane %v342, 0
    %v346 = vadd.f32 %v338, %v344
    %v347 = vadd.f32 %v341, %v344
    %v348 = vmax.f32 %v346, 0.0
    %v349 = vmax.f32 %v347, 0.0
    %352 = vset.pattern.permute.xlu0 0
    %353 = vperm.xlu0 %352, %v348
    %v354 = vpop.permute.xlu0 %353
    %355 = vset.pattern.permute.xlu0 0
    %356 = vperm.xlu0 %355, %v349
    %v357 = vpop.permute.xlu0 %356
    %v358 = vlaneseq
    %v359 = vand.u32 %v358, 127
    %v360 = vperm.slane %v354, %v359
    %v361 = vperm.slane %v357, %v359
    %vm362 = vcmask 1041409
    %v363 = vsel %vm362, %v361, %v360
    %vm365 = vcmask 58368
    %366 = vst.msk [vmem:[#allocation3] sm:$0x3] %vm365, %v363
    %v367 = vld [vmem:[%s1] sm:$0xff]
    %v368 = vld [vmem:[%s1 + $0x8] sm:$0xff]
    %v369 = vld [vmem:[%s1 + $0x10] sm:$0xff]
    %v370 = vld [vmem:[%s1 + $0x18] sm:$0xff]
    %vm371 = vcmask 64512
    %v373 = vsel %vm371, %v367, 0
    %v376 = vsel %vm371, %v368, 0
    %378 = vmatpush.msra.mxu0 0.0
    %379 = vmatpush.msra.mxu0 0.0
    %380 = vmatpush.msra.mxu0 0.0
    %381 = vmatpush.msra.mxu0 0.0
    %382 = vmatpush.msra.mxu0 0.0
    %383 = vmatpush.msra.mxu0 0.0
    %384 = vmatpush.msra.mxu0 0.0
    %385 = vmatpush.msra.mxu0 0.0
    %386 = vmatpush.msra.mxu0 0.0
    %387 = vmatpush.msra.mxu0 0.0
    %388 = vmatpush.msra.mxu0 0.0
    %389 = vmatpush.msra.mxu0 0.0
    %390 = vmatpush.msra.mxu0 0.0
    %391 = vmatpush.msra.mxu0 0.0
    %392 = vmatpush.msra.mxu0 0.0
    %393 = vmatpush.msra.mxu0 %v46
    %394 = vmatmul.f32.gmra.mxu0 %v373
    %v395 = vpop.f32.mrf.mxu0
    %v396 = vadd.f32 0.0, %v395
    %397 = vmatmul.f32.gmra.mxu0 %v376
    %v398 = vpop.f32.mrf.mxu0
    %v399 = vadd.f32 0.0, %v398
    %400 = vdwg.mxu0
    %v402 = vsel %vm371, %v369, 0
    %v405 = vsel %vm371, %v370, 0
    %407 = vmatpush.msra.mxu0 0.0
    %408 = vmatpush.msra.mxu0 0.0
    %409 = vmatpush.msra.mxu0 0.0
    %410 = vmatpush.msra.mxu0 0.0
    %411 = vmatpush.msra.mxu0 0.0
    %412 = vmatpush.msra.mxu0 0.0
    %413 = vmatpush.msra.mxu0 0.0
    %414 = vmatpush.msra.mxu0 0.0
    %415 = vmatpush.msra.mxu0 0.0
    %416 = vmatpush.msra.mxu0 0.0
    %417 = vmatpush.msra.mxu0 0.0
    %418 = vmatpush.msra.mxu0 0.0
    %419 = vmatpush.msra.mxu0 0.0
    %420 = vmatpush.msra.mxu0 0.0
    %421 = vmatpush.msra.mxu0 0.0
    %422 = vmatpush.msra.mxu0 %v47
    %423 = vmatmul.f32.gmra.mxu0 %v402
    %v424 = vpop.f32.mrf.mxu0
    %v425 = vadd.f32 0.0, %v424
    %426 = vmatmul.f32.gmra.mxu0 %v405
    %v427 = vpop.f32.mrf.mxu0
    %v428 = vadd.f32 0.0, %v427
    %429 = vdwg.mxu0
    %430 = vst.msk [vmem:[%s12] sm:$0xff] %vm78, %v396
    %431 = vst.msk [vmem:[%s12 + $0x8] sm:$0xff] %vm78, %v399
    %432 = vst.msk [vmem:[%s12 + $0x10] sm:$0xff] %vm78, %v425
    %433 = vst.msk [vmem:[%s12 + $0x18] sm:$0xff] %vm78, %v428
    // Predicated region
    $region50: #{fastspeech_forward.9} parent=1 // pred_check
      _
    $region51: #{fastspeech_forward.9} parent=1 // pred_check_branch
      %435 = sbr.rel (0) target = $region53
    $region52: #{fastspeech_forward.9} parent=1 // pred_region
      _
    $region53: #{fastspeech_forward.9} parent=1 // pred_fallthru
      _
    // Predicated region
    $region54: #{fastspeech_forward.9} parent=1 // pred_check
      _
    $region55: #{fastspeech_forward.9} parent=1 // pred_check_branch
      %437 = sbr.rel (0) target = $region57
    $region56: #{fastspeech_forward.9} parent=1 // pred_region
      %439 = vsyncadd [#allocation4], 0
      %s441 = sshll.u32 [#allocation3], 4
      %s442 = int_to_ptr.vmem [resolvable:$true] %s441
      %s443 = sshll.u32 %s13, 4
      %s444 = int_to_ptr.hbm [resolvable:$true] %s443
      %446 = dma.vmem_to_hbm [thread:$0]  %s442, 32, %s444, [#allocation4]
    $region57: #{fastspeech_forward.9} parent=1 // pred_fallthru
      _
    // Predicated region
    $region58: #{fastspeech_forward.9} parent=1 // pred_check
      _
    $region59: #{fastspeech_forward.9} parent=1 // pred_check_branch
      %448 = sbr.rel (0) target = $region61
    $region60: #{fastspeech_forward.9} parent=1 // pred_region
      _
    $region61: #{fastspeech_forward.9} parent=1 // pred_fallthru
      _
    // Predicated region
    $region62: #{fastspeech_forward.9} parent=1 // pred_check
      _
    $region63: #{fastspeech_forward.9} parent=1 // pred_check_branch
      %450 = sbr.rel (0) target = $region65
    $region64: #{fastspeech_forward.9} parent=1 // pred_region
      %452 = dma.done [#allocation4], 32
    $region65: #{fastspeech_forward.9} parent=1 // pred_fallthru
      _
    %453 = vsyncpa [#allocation4], 1

// kernel: fastspeech_forward.10
$region0: #{fastspeech_forward.10}
  #allocation0 [shape = 'u32[]', space=smem, size = 0x4, offset = 0x4, fixed_abs, tag = 'smem constant byte address 0x4 - core index']
  #allocation1 [shape = 'u32[72,128]{1,0:T(1,128)}', space=vmem, size = 0x9000, scoped, tag = 'internal scratch']
  %s0 = inlined_call_operand.vmem [shape: f32[2,16,32], index: 0, kind: input, shape index: {}]
  %s1 = inlined_call_operand.vmem [shape: f32[32,1], index: 1, kind: input, shape index: {}]
  %s2 = inlined_call_operand.vmem [shape: f32[2,1,16], index: 2, kind: input, shape index: {}]
  %s3 = inlined_call_operand.vmem [shape: f32[32,96], index: 3, kind: input, shape index: {}]
  %s4 = inlined_call_operand.vmem [shape: f32[1,96], index: 4, kind: input, shape index: {}]
  %s5 = inlined_call_operand.vmem [shape: f32[32,32], index: 5, kind: input, shape index: {}]
  %s6 = inlined_call_operand.vmem [shape: f32[1,32], index: 6, kind: input, shape index: {}]
  %s7 = inlined_call_operand.vmem [shape: f32[1,32], index: 7, kind: input, shape index: {}]
  %s8 = inlined_call_operand.vmem [shape: f32[1,32], index: 8, kind: input, shape index: {}]
  %s9 = inlined_call_operand.vmem [shape: f32[96,64], index: 9, kind: input, shape index: {}]
  %s10 = inlined_call_operand.vmem [shape: f32[1,64], index: 10, kind: input, shape index: {}]
  %s11 = inlined_call_operand.vmem [shape: f32[64,32], index: 11, kind: input, shape index: {}]
  %s12 = inlined_call_operand.vmem [shape: f32[1,32], index: 12, kind: input, shape index: {}]
  %s13 = inlined_call_operand.vmem [shape: f32[1,32], index: 13, kind: input, shape index: {}]
  %s14 = inlined_call_operand.vmem [shape: f32[1,32], index: 14, kind: input, shape index: {}]
  %s15 = inlined_call_operand.vmem [shape: f32[2,16,32], index: 15, kind: output, shape index: {}]
  %s16 = sld [smem:[#allocation0]]
  $region70: #{fastspeech_forward.10} parent=0
    _
  %s18 = ssub.s32 1, %s16
  %s19 = scalar_select 0, %s18, %s16
  // Predicated region
  $region2: #{fastspeech_forward.10} parent=0 // pred_check
    _
  $region3: #{fastspeech_forward.10} parent=0 // pred_check_branch
    %21 = sbr.rel (0) target = $region5
  $region4: #{fastspeech_forward.10} parent=0 // pred_region
    _
  $region5: #{fastspeech_forward.10} parent=0 // pred_fallthru
    _
  // Predicated region
  $region6: #{fastspeech_forward.10} parent=0 // pred_check
    _
  $region7: #{fastspeech_forward.10} parent=0 // pred_check_branch
    %23 = sbr.rel (0) target = $region9
  $region8: #{fastspeech_forward.10} parent=0 // pred_region
    _
  $region9: #{fastspeech_forward.10} parent=0 // pred_fallthru
    _
  // Predicated region
  $region10: #{fastspeech_forward.10} parent=0 // pred_check
    _
  $region11: #{fastspeech_forward.10} parent=0 // pred_check_branch
    %25 = sbr.rel (0) target = $region13
  $region12: #{fastspeech_forward.10} parent=0 // pred_region
    _
  $region13: #{fastspeech_forward.10} parent=0 // pred_fallthru
    _
  // Predicated region
  $region14: #{fastspeech_forward.10} parent=0 // pred_check
    _
  $region15: #{fastspeech_forward.10} parent=0 // pred_check_branch
    %27 = sbr.rel (0) target = $region17
  $region16: #{fastspeech_forward.10} parent=0 // pred_region
    _
  $region17: #{fastspeech_forward.10} parent=0 // pred_fallthru
    _
  // Predicated region
  $region18: #{fastspeech_forward.10} parent=0 // pred_check
    _
  $region19: #{fastspeech_forward.10} parent=0 // pred_check_branch
    %29 = sbr.rel (0) target = $region21
  $region20: #{fastspeech_forward.10} parent=0 // pred_region
    _
  $region21: #{fastspeech_forward.10} parent=0 // pred_fallthru
    _
  // Predicated region
  $region22: #{fastspeech_forward.10} parent=0 // pred_check
    _
  $region23: #{fastspeech_forward.10} parent=0 // pred_check_branch
    %31 = sbr.rel (0) target = $region25
  $region24: #{fastspeech_forward.10} parent=0 // pred_region
    _
  $region25: #{fastspeech_forward.10} parent=0 // pred_fallthru
    _
  // Predicated region
  $region26: #{fastspeech_forward.10} parent=0 // pred_check
    _
  $region27: #{fastspeech_forward.10} parent=0 // pred_check_branch
    %33 = sbr.rel (0) target = $region29
  $region28: #{fastspeech_forward.10} parent=0 // pred_region
    _
  $region29: #{fastspeech_forward.10} parent=0 // pred_fallthru
    _
  // Predicated region
  $region30: #{fastspeech_forward.10} parent=0 // pred_check
    _
  $region31: #{fastspeech_forward.10} parent=0 // pred_check_branch
    %35 = sbr.rel (0) target = $region33
  $region32: #{fastspeech_forward.10} parent=0 // pred_region
    _
  $region33: #{fastspeech_forward.10} parent=0 // pred_fallthru
    _
  // Predicated region
  $region34: #{fastspeech_forward.10} parent=0 // pred_check
    _
  $region35: #{fastspeech_forward.10} parent=0 // pred_check_branch
    %37 = sbr.rel (0) target = $region37
  $region36: #{fastspeech_forward.10} parent=0 // pred_region
    _
  $region37: #{fastspeech_forward.10} parent=0 // pred_fallthru
    _
  // Predicated region
  $region38: #{fastspeech_forward.10} parent=0 // pred_check
    _
  $region39: #{fastspeech_forward.10} parent=0 // pred_check_branch
    %39 = sbr.rel (0) target = $region41
  $region40: #{fastspeech_forward.10} parent=0 // pred_region
    _
  $region41: #{fastspeech_forward.10} parent=0 // pred_fallthru
    _
  // Predicated region
  $region42: #{fastspeech_forward.10} parent=0 // pred_check
    _
  $region43: #{fastspeech_forward.10} parent=0 // pred_check_branch
    %41 = sbr.rel (0) target = $region45
  $region44: #{fastspeech_forward.10} parent=0 // pred_region
    _
  $region45: #{fastspeech_forward.10} parent=0 // pred_fallthru
    _
  // Predicated region
  $region46: #{fastspeech_forward.10} parent=0 // pred_check
    _
  $region47: #{fastspeech_forward.10} parent=0 // pred_check_branch
    %43 = sbr.rel (0) target = $region49
  $region48: #{fastspeech_forward.10} parent=0 // pred_region
    _
  $region49: #{fastspeech_forward.10} parent=0 // pred_fallthru
    _
  // Predicated region
  $region50: #{fastspeech_forward.10} parent=0 // pred_check
    _
  $region51: #{fastspeech_forward.10} parent=0 // pred_check_branch
    %45 = sbr.rel (0) target = $region53
  $region52: #{fastspeech_forward.10} parent=0 // pred_region
    _
  $region53: #{fastspeech_forward.10} parent=0 // pred_fallthru
    _
  // Predicated region
  $region54: #{fastspeech_forward.10} parent=0 // pred_check
    _
  $region55: #{fastspeech_forward.10} parent=0 // pred_check_branch
    %47 = sbr.rel (0) target = $region57
  $region56: #{fastspeech_forward.10} parent=0 // pred_region
    _
  $region57: #{fastspeech_forward.10} parent=0 // pred_fallthru
    _
  // Predicated region
  $region58: #{fastspeech_forward.10} parent=0 // pred_check
    _
  $region59: #{fastspeech_forward.10} parent=0 // pred_check_branch
    %49 = sbr.rel (0) target = $region61
  $region60: #{fastspeech_forward.10} parent=0 // pred_region
    _
  $region61: #{fastspeech_forward.10} parent=0 // pred_fallthru
    _
  %v50 = vld [vmem:[%s0] sm:$0xff]
  %v51 = vld [vmem:[%s0 + $0x8] sm:$0xff]
  %v52 = vld [vmem:[%s0 + $0x10] sm:$0xff]
  %v53 = vld [vmem:[%s0 + $0x18] sm:$0xff]
  %v54 = vld [vmem:[%s1] sm:$0xff]
  %v55 = vld [vmem:[%s1 + $0x8] sm:$0xff]
  %v56 = vld [vmem:[%s1 + $0x10] sm:$0xff]
  %v57 = vld [vmem:[%s1 + $0x18] sm:$0xff]
  %v58 = vld [vmem:[%s2] sm:$0x1]
  %v59 = vld [vmem:[%s2 + $0x1] sm:$0x1]
  %v60 = vld [vmem:[%s3] sm:$0xff]
  %v61 = vld [vmem:[%s3 + $0x8] sm:$0xff]
  %v62 = vld [vmem:[%s3 + $0x10] sm:$0xff]
  %v63 = vld [vmem:[%s3 + $0x18] sm:$0xff]
  %v64 = vld [vmem:[%s4] sm:$0x1]
  %v66 = vperm.slane %v64, 0
  %vm68 = vcmask 261120
  %v70 = vsel %vm68, %v50, 0
  %v73 = vsel %vm68, %v51, 0
  %v76 = vsel %vm68, %v52, 0
  %v79 = vsel %vm68, %v53, 0
  %81 = vmatpush.msra.mxu0 0.0
  %82 = vmatpush.msra.mxu0 0.0
  %83 = vmatpush.msra.mxu0 0.0
  %84 = vmatpush.msra.mxu0 0.0
  %85 = vmatpush.msra.mxu0 0.0
  %86 = vmatpush.msra.mxu0 0.0
  %87 = vmatpush.msra.mxu0 0.0
  %88 = vmatpush.msra.mxu0 0.0
  %89 = vmatpush.msra.mxu0 0.0
  %90 = vmatpush.msra.mxu0 0.0
  %91 = vmatpush.msra.mxu0 0.0
  %92 = vmatpush.msra.mxu0 0.0
  %93 = vmatpush.msra.mxu0 %v63
  %94 = vmatpush.msra.mxu0 %v62
  %95 = vmatpush.msra.mxu0 %v61
  %96 = vmatpush.msra.mxu0 %v60
  %97 = vmatmul.f32.gmra.mxu0 %v70
  %v98 = vpop.f32.mrf.mxu0
  %v99 = vadd.f32 %v66, %v98
  %100 = vmatmul.f32.gmra.mxu0 %v73
  %v101 = vpop.f32.mrf.mxu0
  %v102 = vadd.f32 %v66, %v101
  %103 = vmatmul.f32.gmra.mxu0 %v76
  %v104 = vpop.f32.mrf.mxu0
  %v105 = vadd.f32 %v66, %v104
  %106 = vmatmul.f32.gmra.mxu0 %v79
  %v107 = vpop.f32.mrf.mxu0
  %v108 = vadd.f32 %v66, %v107
  %109 = vdwg.mxu0
  %v110 = vld [vmem:[%s5] sm:$0xff]
  %v111 = vld [vmem:[%s5 + $0x8] sm:$0xff]
  %v112 = vld [vmem:[%s5 + $0x10] sm:$0xff]
  %v113 = vld [vmem:[%s5 + $0x18] sm:$0xff]
  %v114 = vmul.f32 %v99, 0.25
  %v115 = vmul.f32 %v102, 0.25
  %v116 = vmul.f32 %v105, 0.25
  %v117 = vmul.f32 %v108, 0.25
  %120 = vrot.lane.b32.xlu0 %v99, 96
  %v121 = vpop.permute.xlu0 %120
  %122 = vrot.lane.b32.xlu0 %v102, 96
  %v123 = vpop.permute.xlu0 %122
  %vm124 = vcmask 130048
  %v126 = vsel %vm124, %v114, 0
  %v129 = vsel %vm124, %v115, 0
  %v131 = vsel %vm124, %v121, 0
  %v133 = vsel %vm124, %v123, 0
  %135 = vmatpush.xpose.msra.mxu0 0.0
  %136 = vmatpush.xpose.msra.mxu0 0.0
  %137 = vmatpush.xpose.msra.mxu0 0.0
  %138 = vmatpush.xpose.msra.mxu0 0.0
  %139 = vmatpush.xpose.msra.mxu0 0.0
  %140 = vmatpush.xpose.msra.mxu0 0.0
  %141 = vmatpush.xpose.msra.mxu0 0.0
  %142 = vmatpush.xpose.msra.mxu0 0.0
  %143 = vmatpush.xpose.msra.mxu0 0.0
  %144 = vmatpush.xpose.msra.mxu0 0.0
  %145 = vmatpush.xpose.msra.mxu0 0.0
  %146 = vmatpush.xpose.msra.mxu0 0.0
  %147 = vmatpush.xpose.msra.mxu0 0.0
  %148 = vmatpush.xpose.msra.mxu0 0.0
  %149 = vmatpush.xpose.msra.mxu0 %v133
  %150 = vmatpush.xpose.msra.mxu0 %v131
  %151 = vmatmul.f32.gmra.mxu0 %v126
  %v152 = vpop.f32.mrf.mxu0
  %v153 = vadd.f32 0.0, %v152
  %154 = vmatmul.f32.gmra.mxu0 %v129
  %v155 = vpop.f32.mrf.mxu0
  %v156 = vadd.f32 0.0, %v155
  %157 = vdwg.mxu0
  %160 = vrot.lane.b32.xlu0 %v105, 96
  %v161 = vpop.permute.xlu0 %160
  %162 = vrot.lane.b32.xlu0 %v108, 96
  %v163 = vpop.permute.xlu0 %162
  %v165 = vsel %vm124, %v116, 0
  %v168 = vsel %vm124, %v117, 0
  %v170 = vsel %vm124, %v161, 0
  %v172 = vsel %vm124, %v163, 0
  %174 = vmatpush.xpose.msra.mxu0 0.0
  %175 = vmatpush.xpose.msra.mxu0 0.0
  %176 = vmatpush.xpose.msra.mxu0 0.0
  %177 = vmatpush.xpose.msra.mxu0 0.0
  %178 = vmatpush.xpose.msra.mxu0 0.0
  %179 = vmatpush.xpose.msra.mxu0 0.0
  %180 = vmatpush.xpose.msra.mxu0 0.0
  %181 = vmatpush.xpose.msra.mxu0 0.0
  %182 = vmatpush.xpose.msra.mxu0 0.0
  %183 = vmatpush.xpose.msra.mxu0 0.0
  %184 = vmatpush.xpose.msra.mxu0 0.0
  %185 = vmatpush.xpose.msra.mxu0 0.0
  %186 = vmatpush.xpose.msra.mxu0 0.0
  %187 = vmatpush.xpose.msra.mxu0 0.0
  %188 = vmatpush.xpose.msra.mxu0 %v172
  %189 = vmatpush.xpose.msra.mxu0 %v170
  %190 = vmatmul.f32.gmra.mxu0 %v165
  %v191 = vpop.f32.mrf.mxu0
  %v192 = vadd.f32 0.0, %v191
  %193 = vmatmul.f32.gmra.mxu0 %v168
  %v194 = vpop.f32.mrf.mxu0
  %v195 = vadd.f32 0.0, %v194
  %196 = vdwg.mxu0
  %vm197 = vcmp.gt.f32.partialorder %v58, 0.0
  %vm198 = vcmp.gt.f32.partialorder %v59, 0.0
  %v199 = vsel %vm197, 1, 0
  %v200 = vsel %vm198, 1, 0
  %v201 = vperm.slane %v199, 0
  %v202 = vperm.slane %v200, 0
  %vm203 = vcmp.eq.s32.totalorder %v201, 1
  %vm204 = vcmp.eq.s32.totalorder %v202, 1
  %v205 = vsel %vm203, %v153, -1e+09
  %v206 = vsel %vm203, %v156, -1e+09
  %v207 = vsel %vm204, %v192, -1e+09
  %v208 = vsel %vm204, %v195, -1e+09
  %v209 = vsel %vm124, %v205, -inf
  %210 = vmax.xlane.f32.xlu0 %v209
  %v211 = vpop.xlane.xlu0 %210
  %v212 = vsel %vm124, %v206, -inf
  %213 = vmax.xlane.f32.xlu0 %v212
  %v214 = vpop.xlane.xlu0 %213
  %v215 = vsel %vm124, %v207, -inf
  %216 = vmax.xlane.f32.xlu0 %v215
  %v217 = vpop.xlane.xlu0 %216
  %v218 = vsel %vm124, %v208, -inf
  %219 = vmax.xlane.f32.xlu0 %v218
  %v220 = vpop.xlane.xlu0 %219
  %v221 = vsub.f32 %v205, %v211
  %v222 = vsub.f32 %v206, %v214
  %v223 = vsub.f32 %v207, %v217
  %v224 = vsub.f32 %v208, %v220
  %v225 = vmul.f32 %v221, 1.442695
  %v226 = vpow.pop %v225
  %v227 = vmul.f32 %v222, 1.442695
  %v228 = vpow.pop %v227
  %v229 = vmul.f32 %v223, 1.442695
  %v230 = vpow.pop %v229
  %v231 = vmul.f32 %v224, 1.442695
  %v232 = vpow.pop %v231
  %v233 = vsel %vm124, %v226, 0.0
  %234 = vadd.xlane.f32.xlu0 %v233
  %v235 = vpop.xlane.xlu0 %234
  %v236 = vsel %vm124, %v228, 0.0
  %237 = vadd.xlane.f32.xlu0 %v236
  %v238 = vpop.xlane.xlu0 %237
  %v239 = vsel %vm124, %v230, 0.0
  %240 = vadd.xlane.f32.xlu0 %v239
  %v241 = vpop.xlane.xlu0 %240
  %v242 = vsel %vm124, %v232, 0.0
  %243 = vadd.xlane.f32.xlu0 %v242
  %v244 = vpop.xlane.xlu0 %243
  %v245 = vrcp.pop %v235
  %v246 = vrcp.pop %v238
  %v247 = vrcp.pop %v241
  %v248 = vrcp.pop %v244
  %v249 = vmul.f32 %v226, %v245
  %v250 = vmul.f32 %v228, %v246
  %v251 = vmul.f32 %v230, %v247
  %v252 = vmul.f32 %v232, %v248
  %253 = vrot.lane.b32.xlu0 %v99, 64
  %v254 = vpop.permute.xlu0 %253
  %255 = vrot.lane.b32.xlu0 %v102, 64
  %v256 = vpop.permute.xlu0 %255
  %v260 = vsel %vm124, %v249, 0
  %v263 = vsel %vm124, %v250, 0
  %265 = vmatpush.msra.mxu0 0.0
  %266 = vmatpush.msra.mxu0 0.0
  %267 = vmatpush.msra.mxu0 0.0
  %268 = vmatpush.msra.mxu0 0.0
  %269 = vmatpush.msra.mxu0 0.0
  %270 = vmatpush.msra.mxu0 0.0
  %271 = vmatpush.msra.mxu0 0.0
  %272 = vmatpush.msra.mxu0 0.0
  %273 = vmatpush.msra.mxu0 0.0
  %274 = vmatpush.msra.mxu0 0.0
  %275 = vmatpush.msra.mxu0 0.0
  %276 = vmatpush.msra.mxu0 0.0
  %277 = vmatpush.msra.mxu0 0.0
  %278 = vmatpush.msra.mxu0 0.0
  %279 = vmatpush.msra.mxu0 %v256
  %280 = vmatpush.msra.mxu0 %v254
  %281 = vmatmul.f32.gmra.mxu0 %v260
  %v282 = vpop.f32.mrf.mxu0
  %v283 = vadd.f32 0.0, %v282
  %284 = vmatmul.f32.gmra.mxu0 %v263
  %v285 = vpop.f32.mrf.mxu0
  %v286 = vadd.f32 0.0, %v285
  %287 = vdwg.mxu0
  %288 = vrot.lane.b32.xlu0 %v105, 64
  %v289 = vpop.permute.xlu0 %288
  %290 = vrot.lane.b32.xlu0 %v108, 64
  %v291 = vpop.permute.xlu0 %290
  %v295 = vsel %vm124, %v251, 0
  %v298 = vsel %vm124, %v252, 0
  %300 = vmatpush.msra.mxu0 0.0
  %301 = vmatpush.msra.mxu0 0.0
  %302 = vmatpush.msra.mxu0 0.0
  %303 = vmatpush.msra.mxu0 0.0
  %304 = vmatpush.msra.mxu0 0.0
  %305 = vmatpush.msra.mxu0 0.0
  %306 = vmatpush.msra.mxu0 0.0
  %307 = vmatpush.msra.mxu0 0.0
  %308 = vmatpush.msra.mxu0 0.0
  %309 = vmatpush.msra.mxu0 0.0
  %310 = vmatpush.msra.mxu0 0.0
  %311 = vmatpush.msra.mxu0 0.0
  %312 = vmatpush.msra.mxu0 0.0
  %313 = vmatpush.msra.mxu0 0.0
  %314 = vmatpush.msra.mxu0 %v291
  %315 = vmatpush.msra.mxu0 %v289
  %316 = vmatmul.f32.gmra.mxu0 %v295
  %v317 = vpop.f32.mrf.mxu0
  %v318 = vadd.f32 0.0, %v317
  %319 = vmatmul.f32.gmra.mxu0 %v298
  %v320 = vpop.f32.mrf.mxu0
  %v321 = vadd.f32 0.0, %v320
  %322 = vdwg.mxu0
  %323 = vrot.lane.b32.xlu0 %v114, 112
  %v324 = vpop.permute.xlu0 %323
  %325 = vrot.lane.b32.xlu0 %v115, 112
  %v326 = vpop.permute.xlu0 %325
  %327 = vrot.lane.b32.xlu0 %v99, 80
  %v328 = vpop.permute.xlu0 %327
  %329 = vrot.lane.b32.xlu0 %v102, 80
  %v330 = vpop.permute.xlu0 %329
  %v331 = vsel %vm124, %v324, 0
  %v333 = vsel %vm124, %v326, 0
  %v335 = vsel %vm124, %v328, 0
  %v337 = vsel %vm124, %v330, 0
  %339 = vmatpush.xpose.msra.mxu0 0.0
  %340 = vmatpush.xpose.msra.mxu0 0.0
  %341 = vmatpush.xpose.msra.mxu0 0.0
  %342 = vmatpush.xpose.msra.mxu0 0.0
  %343 = vmatpush.xpose.msra.mxu0 0.0
  %344 = vmatpush.xpose.msra.mxu0 0.0
  %345 = vmatpush.xpose.msra.mxu0 0.0
  %346 = vmatpush.xpose.msra.mxu0 0.0
  %347 = vmatpush.xpose.msra.mxu0 0.0
  %348 = vmatpush.xpose.msra.mxu0 0.0
  %349 = vmatpush.xpose.msra.mxu0 0.0
  %350 = vmatpush.xpose.msra.mxu0 0.0
  %351 = vmatpush.xpose.msra.mxu0 0.0
  %352 = vmatpush.xpose.msra.mxu0 0.0
  %353 = vmatpush.xpose.msra.mxu0 %v337
  %354 = vmatpush.xpose.msra.mxu0 %v335
  %355 = vmatmul.f32.gmra.mxu0 %v331
  %v356 = vpop.f32.mrf.mxu0
  %v357 = vadd.f32 0.0, %v356
  %358 = vmatmul.f32.gmra.mxu0 %v333
  %v359 = vpop.f32.mrf.mxu0
  %v360 = vadd.f32 0.0, %v359
  %361 = vdwg.mxu0
  %362 = vrot.lane.b32.xlu0 %v116, 112
  %v363 = vpop.permute.xlu0 %362
  %364 = vrot.lane.b32.xlu0 %v117, 112
  %v365 = vpop.permute.xlu0 %364
  %366 = vrot.lane.b32.xlu0 %v105, 80
  %v367 = vpop.permute.xlu0 %366
  %368 = vrot.lane.b32.xlu0 %v108, 80
  %v369 = vpop.permute.xlu0 %368
  %v370 = vsel %vm124, %v363, 0
  %v372 = vsel %vm124, %v365, 0
  %v374 = vsel %vm124, %v367, 0
  %v376 = vsel %vm124, %v369, 0
  %378 = vmatpush.xpose.msra.mxu0 0.0
  %379 = vmatpush.xpose.msra.mxu0 0.0
  %380 = vmatpush.xpose.msra.mxu0 0.0
  %381 = vmatpush.xpose.msra.mxu0 0.0
  %382 = vmatpush.xpose.msra.mxu0 0.0
  %383 = vmatpush.xpose.msra.mxu0 0.0
  %384 = vmatpush.xpose.msra.mxu0 0.0
  %385 = vmatpush.xpose.msra.mxu0 0.0
  %386 = vmatpush.xpose.msra.mxu0 0.0
  %387 = vmatpush.xpose.msra.mxu0 0.0
  %388 = vmatpush.xpose.msra.mxu0 0.0
  %389 = vmatpush.xpose.msra.mxu0 0.0
  %390 = vmatpush.xpose.msra.mxu0 0.0
  %391 = vmatpush.xpose.msra.mxu0 0.0
  %392 = vmatpush.xpose.msra.mxu0 %v376
  %393 = vmatpush.xpose.msra.mxu0 %v374
  %394 = vmatmul.f32.gmra.mxu0 %v370
  %v395 = vpop.f32.mrf.mxu0
  %v396 = vadd.f32 0.0, %v395
  %397 = vmatmul.f32.gmra.mxu0 %v372
  %v398 = vpop.f32.mrf.mxu0
  %v399 = vadd.f32 0.0, %v398
  %400 = vdwg.mxu0
  %v401 = vsel %vm203, %v357, -1e+09
  %v402 = vsel %vm203, %v360, -1e+09
  %v403 = vsel %vm204, %v396, -1e+09
  %v404 = vsel %vm204, %v399, -1e+09
  %v405 = vsel %vm124, %v401, -inf
  %406 = vmax.xlane.f32.xlu0 %v405
  %v407 = vpop.xlane.xlu0 %406
  %v408 = vsel %vm124, %v402, -inf
  %409 = vmax.xlane.f32.xlu0 %v408
  %v410 = vpop.xlane.xlu0 %409
  %v411 = vsel %vm124, %v403, -inf
  %412 = vmax.xlane.f32.xlu0 %v411
  %v413 = vpop.xlane.xlu0 %412
  %v414 = vsel %vm124, %v404, -inf
  %415 = vmax.xlane.f32.xlu0 %v414
  %v416 = vpop.xlane.xlu0 %415
  %v417 = vsub.f32 %v401, %v407
  %v418 = vsub.f32 %v402, %v410
  %v419 = vsub.f32 %v403, %v413
  %v420 = vsub.f32 %v404, %v416
  %v421 = vmul.f32 %v417, 1.442695
  %v422 = vpow.pop %v421
  %v423 = vmul.f32 %v418, 1.442695
  %v424 = vpow.pop %v423
  %v425 = vmul.f32 %v419, 1.442695
  %v426 = vpow.pop %v425
  %v427 = vmul.f32 %v420, 1.442695
  %v428 = vpow.pop %v427
  %v429 = vsel %vm124, %v422, 0.0
  %430 = vadd.xlane.f32.xlu0 %v429
  %v431 = vpop.xlane.xlu0 %430
  %v432 = vsel %vm124, %v424, 0.0
  %433 = vadd.xlane.f32.xlu0 %v432
  %v434 = vpop.xlane.xlu0 %433
  %v435 = vsel %vm124, %v426, 0.0
  %436 = vadd.xlane.f32.xlu0 %v435
  %v437 = vpop.xlane.xlu0 %436
  %v438 = vsel %vm124, %v428, 0.0
  %439 = vadd.xlane.f32.xlu0 %v438
  %v440 = vpop.xlane.xlu0 %439
  %v441 = vrcp.pop %v431
  %v442 = vrcp.pop %v434
  %v443 = vrcp.pop %v437
  %v444 = vrcp.pop %v440
  %v445 = vmul.f32 %v422, %v441
  %v446 = vmul.f32 %v424, %v442
  %v447 = vmul.f32 %v426, %v443
  %v448 = vmul.f32 %v428, %v444
  %449 = vrot.lane.b32.xlu0 %v99, 48
  %v450 = vpop.permute.xlu0 %449
  %451 = vrot.lane.b32.xlu0 %v102, 48
  %v452 = vpop.permute.xlu0 %451
  %v456 = vsel %vm124, %v445, 0
  %v459 = vsel %vm124, %v446, 0
  %461 = vmatpush.msra.mxu0 0.0
  %462 = vmatpush.msra.mxu0 0.0
  %463 = vmatpush.msra.mxu0 0.0
  %464 = vmatpush.msra.mxu0 0.0
  %465 = vmatpush.msra.mxu0 0.0
  %466 = vmatpush.msra.mxu0 0.0
  %467 = vmatpush.msra.mxu0 0.0
  %468 = vmatpush.msra.mxu0 0.0
  %469 = vmatpush.msra.mxu0 0.0
  %470 = vmatpush.msra.mxu0 0.0
  %471 = vmatpush.msra.mxu0 0.0
  %472 = vmatpush.msra.mxu0 0.0
  %473 = vmatpush.msra.mxu0 0.0
  %474 = vmatpush.msra.mxu0 0.0
  %475 = vmatpush.msra.mxu0 %v452
  %476 = vmatpush.msra.mxu0 %v450
  %477 = vmatmul.f32.gmra.mxu0 %v456
  %v478 = vpop.f32.mrf.mxu0
  %v479 = vadd.f32 0.0, %v478
  %480 = vmatmul.f32.gmra.mxu0 %v459
  %v481 = vpop.f32.mrf.mxu0
  %v482 = vadd.f32 0.0, %v481
  %483 = vdwg.mxu0
  %484 = vrot.lane.b32.xlu0 %v105, 48
  %v485 = vpop.permute.xlu0 %484
  %486 = vrot.lane.b32.xlu0 %v108, 48
  %v487 = vpop.permute.xlu0 %486
  %v491 = vsel %vm124, %v447, 0
  %v494 = vsel %vm124, %v448, 0
  %496 = vmatpush.msra.mxu0 0.0
  %497 = vmatpush.msra.mxu0 0.0
  %498 = vmatpush.msra.mxu0 0.0
  %499 = vmatpush.msra.mxu0 0.0
  %500 = vmatpush.msra.mxu0 0.0
  %501 = vmatpush.msra.mxu0 0.0
  %502 = vmatpush.msra.mxu0 0.0
  %503 = vmatpush.msra.mxu0 0.0
  %504 = vmatpush.msra.mxu0 0.0
  %505 = vmatpush.msra.mxu0 0.0
  %506 = vmatpush.msra.mxu0 0.0
  %507 = vmatpush.msra.mxu0 0.0
  %508 = vmatpush.msra.mxu0 0.0
  %509 = vmatpush.msra.mxu0 0.0
  %510 = vmatpush.msra.mxu0 %v487
  %511 = vmatpush.msra.mxu0 %v485
  %512 = vmatmul.f32.gmra.mxu0 %v491
  %v513 = vpop.f32.mrf.mxu0
  %v514 = vadd.f32 0.0, %v513
  %515 = vmatmul.f32.gmra.mxu0 %v494
  %v516 = vpop.f32.mrf.mxu0
  %v517 = vadd.f32 0.0, %v516
  %518 = vdwg.mxu0
  %v520 = vsel %vm124, %v479, 0
  %v523 = vsel %vm124, %v482, 0
  %v526 = vsel %vm124, %v514, 0
  %v529 = vsel %vm124, %v517, 0
  %531 = vmatpush.msra.mxu0 0.0
  %532 = vmatpush.msra.mxu0 0.0
  %533 = vmatpush.msra.mxu0 0.0
  %534 = vmatpush.msra.mxu0 0.0
  %535 = vmatpush.msra.mxu0 0.0
  %536 = vmatpush.msra.mxu0 0.0
  %537 = vmatpush.msra.mxu0 0.0
  %538 = vmatpush.msra.mxu0 0.0
  %539 = vmatpush.msra.mxu0 0.0
  %540 = vmatpush.msra.mxu0 0.0
  %541 = vmatpush.msra.mxu0 0.0
  %542 = vmatpush.msra.mxu0 0.0
  %543 = vmatpush.msra.mxu0 0.0
  %544 = vmatpush.msra.mxu0 0.0
  %545 = vmatpush.msra.mxu0 %v113
  %546 = vmatpush.msra.mxu0 %v112
  %547 = vmatmul.f32.gmra.mxu0 %v520
  %v548 = vpop.f32.mrf.mxu0
  %v549 = vadd.f32 0.0, %v548
  %550 = vmatmul.f32.gmra.mxu0 %v523
  %v551 = vpop.f32.mrf.mxu0
  %v552 = vadd.f32 0.0, %v551
  %553 = vmatmul.f32.gmra.mxu0 %v526
  %v554 = vpop.f32.mrf.mxu0
  %v555 = vadd.f32 0.0, %v554
  %556 = vmatmul.f32.gmra.mxu0 %v529
  %v557 = vpop.f32.mrf.mxu0
  %v558 = vadd.f32 0.0, %v557
  %559 = vdwg.mxu0
  %v561 = vsel %vm124, %v283, 0
  %v564 = vsel %vm124, %v286, 0
  %v567 = vsel %vm124, %v318, 0
  %v570 = vsel %vm124, %v321, 0
  %572 = vmatpush.msra.mxu0 0.0
  %573 = vmatpush.msra.mxu0 0.0
  %574 = vmatpush.msra.mxu0 0.0
  %575 = vmatpush.msra.mxu0 0.0
  %576 = vmatpush.msra.mxu0 0.0
  %577 = vmatpush.msra.mxu0 0.0
  %578 = vmatpush.msra.mxu0 0.0
  %579 = vmatpush.msra.mxu0 0.0
  %580 = vmatpush.msra.mxu0 0.0
  %581 = vmatpush.msra.mxu0 0.0
  %582 = vmatpush.msra.mxu0 0.0
  %583 = vmatpush.msra.mxu0 0.0
  %584 = vmatpush.msra.mxu0 0.0
  %585 = vmatpush.msra.mxu0 0.0
  %586 = vmatpush.msra.mxu0 %v111
  %587 = vmatpush.msra.mxu0 %v110
  %588 = vmatmul.f32.gmra.mxu0 %v561
  %v589 = vpop.f32.mrf.mxu0
  %v590 = vadd.f32 %v549, %v589
  %591 = vmatmul.f32.gmra.mxu0 %v564
  %v592 = vpop.f32.mrf.mxu0
  %v593 = vadd.f32 %v552, %v592
  %594 = vmatmul.f32.gmra.mxu0 %v567
  %v595 = vpop.f32.mrf.mxu0
  %v596 = vadd.f32 %v555, %v595
  %597 = vmatmul.f32.gmra.mxu0 %v570
  %v598 = vpop.f32.mrf.mxu0
  %v599 = vadd.f32 %v558, %v598
  %600 = vdwg.mxu0
  %v601 = vld [vmem:[%s6] sm:$0x1]
  %v603 = vperm.slane %v601, 0
  %v605 = vadd.f32 %v590, %v603
  %v606 = vadd.f32 %v593, %v603
  %v607 = vadd.f32 %v596, %v603
  %v608 = vadd.f32 %v599, %v603
  %v609 = vadd.f32 %v605, %v50
  %v610 = vadd.f32 %v606, %v51
  %v611 = vadd.f32 %v607, %v52
  %v612 = vadd.f32 %v608, %v53
  %v613 = vld [vmem:[%s7] sm:$0x1]
  %v614 = vld [vmem:[%s8] sm:$0x1]
  %v615 = vsel %vm68, %v609, 0.0
  %616 = vadd.xlane.f32.xlu0 %v615
  %v617 = vpop.xlane.xlu0 %616
  %v618 = vsel %vm68, %v610, 0.0
  %619 = vadd.xlane.f32.xlu0 %v618
  %v620 = vpop.xlane.xlu0 %619
  %v621 = vsel %vm68, %v611, 0.0
  %622 = vadd.xlane.f32.xlu0 %v621
  %v623 = vpop.xlane.xlu0 %622
  %v624 = vsel %vm68, %v612, 0.0
  %625 = vadd.xlane.f32.xlu0 %v624
  %v626 = vpop.xlane.xlu0 %625
  %v627 = vrcp.pop 32.0
  %v628 = vmul.f32 32.0, %v627
  %v629 = vsub.f32 1.0, %v628
  %v630 = vmul.f32 %v627, %v629
  %v631 = vadd.f32 %v627, %v630
  %vm632 = vweird.f32 %v627
  %v633 = vsel %vm632, %v627, %v631
  %v634 = vmul.f32 %v617, %v633
  %v635 = vmul.f32 %v620, %v633
  %v636 = vmul.f32 %v623, %v633
  %v637 = vmul.f32 %v626, %v633
  %v638 = vsub.f32 %v609, %v634
  %v639 = vsub.f32 %v610, %v635
  %v640 = vsub.f32 %v611, %v636
  %v641 = vsub.f32 %v612, %v637
  %v642 = vmul.f32 %v638, %v638
  %v643 = vmul.f32 %v639, %v639
  %v644 = vmul.f32 %v640, %v640
  %v645 = vmul.f32 %v641, %v641
  %v646 = vsel %vm68, %v642, 0.0
  %647 = vadd.xlane.f32.xlu0 %v646
  %v648 = vpop.xlane.xlu0 %647
  %v649 = vsel %vm68, %v643, 0.0
  %650 = vadd.xlane.f32.xlu0 %v649
  %v651 = vpop.xlane.xlu0 %650
  %v652 = vsel %vm68, %v644, 0.0
  %653 = vadd.xlane.f32.xlu0 %v652
  %v654 = vpop.xlane.xlu0 %653
  %v655 = vsel %vm68, %v645, 0.0
  %656 = vadd.xlane.f32.xlu0 %v655
  %v657 = vpop.xlane.xlu0 %656
  %v658 = vmul.f32 %v648, %v633
  %v659 = vmul.f32 %v651, %v633
  %v660 = vmul.f32 %v654, %v633
  %v661 = vmul.f32 %v657, %v633
  %v662 = vadd.f32 %v658, 1e-05
  %v663 = vadd.f32 %v659, 1e-05
  %v664 = vadd.f32 %v660, 1e-05
  %v665 = vadd.f32 %v661, 1e-05
  %v666 = vrsqrt.pop %v662
  %v667 = vmul.f32 %v666, %v662
  %v668 = vmul.f32 %v667, %v666
  %v669 = vmul.f32 0.5, %v668
  %v670 = vsub.f32 1.5, %v669
  %v671 = vmul.f32 %v666, %v670
  %vm672 = vweird.f32 %v662
  %vm673 = vweird.f32 %v666
  %vm674 = vmor %vm672, %vm673
  %v675 = vsel %vm674, %v666, %v671
  %v676 = vrsqrt.pop %v663
  %v677 = vmul.f32 %v676, %v663
  %v678 = vmul.f32 %v677, %v676
  %v679 = vmul.f32 0.5, %v678
  %v680 = vsub.f32 1.5, %v679
  %v681 = vmul.f32 %v676, %v680
  %vm682 = vweird.f32 %v663
  %vm683 = vweird.f32 %v676
  %vm684 = vmor %vm682, %vm683
  %v685 = vsel %vm684, %v676, %v681
  %v686 = vrsqrt.pop %v664
  %v687 = vmul.f32 %v686, %v664
  %v688 = vmul.f32 %v687, %v686
  %v689 = vmul.f32 0.5, %v688
  %v690 = vsub.f32 1.5, %v689
  %v691 = vmul.f32 %v686, %v690
  %vm692 = vweird.f32 %v664
  %vm693 = vweird.f32 %v686
  %vm694 = vmor %vm692, %vm693
  %v695 = vsel %vm694, %v686, %v691
  %v696 = vrsqrt.pop %v665
  %v697 = vmul.f32 %v696, %v665
  %v698 = vmul.f32 %v697, %v696
  %v699 = vmul.f32 0.5, %v698
  %v700 = vsub.f32 1.5, %v699
  %v701 = vmul.f32 %v696, %v700
  %vm702 = vweird.f32 %v665
  %vm703 = vweird.f32 %v696
  %vm704 = vmor %vm702, %vm703
  %v705 = vsel %vm704, %v696, %v701
  %v706 = vmul.f32 %v638, %v675
  %v707 = vmul.f32 %v639, %v685
  %v708 = vmul.f32 %v640, %v695
  %v709 = vmul.f32 %v641, %v705
  %v711 = vperm.slane %v613, 0
  %v713 = vmul.f32 %v706, %v711
  %v714 = vmul.f32 %v707, %v711
  %v715 = vmul.f32 %v708, %v711
  %v716 = vmul.f32 %v709, %v711
  %v718 = vperm.slane %v614, 0
  %v720 = vadd.f32 %v713, %v718
  %v721 = vadd.f32 %v714, %v718
  %v722 = vadd.f32 %v715, %v718
  %v723 = vadd.f32 %v716, %v718
  %725 = vset.pattern.permute.xlu0 0
  %726 = vperm.xlu0 %725, %v54
  %v727 = vpop.permute.xlu0 %726
  %730 = vset.pattern.permute.xlu0 0
  %731 = vperm.xlu0 %730, %v55
  %v732 = vpop.permute.xlu0 %731
  %735 = vset.pattern.permute.xlu0 0
  %736 = vperm.xlu0 %735, %v56
  %v737 = vpop.permute.xlu0 %736
  %740 = vset.pattern.permute.xlu0 0
  %741 = vperm.xlu0 %740, %v57
  %v742 = vpop.permute.xlu0 %741
  %v744 = vmul.f32 %v720, %v727
  %v745 = vmul.f32 %v721, %v732
  %v746 = vmul.f32 %v722, %v737
  %v747 = vmul.f32 %v723, %v742
  %vm752 = vcmask 1040384
  %v753 = vrot.slane %v744, 7
  %v754 = vrot.slane %v745, 7
  %v755 = vsel %vm752, %v753, %v754
  %v756 = vrot.slane %v746, 7
  %v757 = vrot.slane %v747, 7
  %v758 = vsel %vm752, %v756, %v757
  %v763 = vsel %vm752, 0.0, %v753
  %v764 = vsel %vm752, 0.0, %v756
  %vm765 = vcmask 1046528
  %v766 = vrot.slane %v744, 1
  %v767 = vrot.slane %v745, 1
  %v768 = vsel %vm765, %v766, %v767
  %v769 = vrot.slane %v746, 1
  %v770 = vrot.slane %v747, 1
  %v771 = vsel %vm765, %v769, %v770
  %v774 = vsel %vm765, %v767, 0.0
  %v775 = vsel %vm765, %v770, 0.0
  %776 = vrot.lane.b32.xlu0 %v744, 32
  %v777 = vpop.permute.xlu0 %776
  %778 = vrot.lane.b32.xlu0 %v745, 32
  %v779 = vpop.permute.xlu0 %778
  %780 = vrot.lane.b32.xlu0 %v746, 32
  %v781 = vpop.permute.xlu0 %780
  %782 = vrot.lane.b32.xlu0 %v747, 32
  %v783 = vpop.permute.xlu0 %782
  %790 = vrot.lane.b32.xlu0 %v768, 64
  %v791 = vpop.permute.xlu0 %790
  %792 = vrot.lane.b32.xlu0 %v774, 64
  %v793 = vpop.permute.xlu0 %792
  %794 = vrot.lane.b32.xlu0 %v771, 64
  %v795 = vpop.permute.xlu0 %794
  %796 = vrot.lane.b32.xlu0 %v775, 64
  %v797 = vpop.permute.xlu0 %796
  %v802 = vsel %vm68, %v763, %v777
  %v803 = vsel %vm68, %v755, %v779
  %v804 = vsel %vm68, %v764, %v781
  %v805 = vsel %vm68, %v758, %v783
  %vm806 = vcmask 523264
  %v807 = vsel %vm806, %v802, %v791
  %v808 = vsel %vm806, %v803, %v793
  %v809 = vsel %vm806, %v804, %v795
  %v810 = vsel %vm806, %v805, %v797
  %v811 = vld [vmem:[%s9] sm:$0xff]
  %v812 = vld [vmem:[%s9 + $0x8] sm:$0xff]
  %v813 = vld [vmem:[%s9 + $0x10] sm:$0xff]
  %v814 = vld [vmem:[%s9 + $0x18] sm:$0xff]
  %v815 = vld [vmem:[%s9 + $0x20] sm:$0xff]
  %v816 = vld [vmem:[%s9 + $0x28] sm:$0xff]
  %v817 = vld [vmem:[%s9 + $0x30] sm:$0xff]
  %v818 = vld [vmem:[%s9 + $0x38] sm:$0xff]
  %v819 = vld [vmem:[%s9 + $0x40] sm:$0xff]
  %v820 = vld [vmem:[%s9 + $0x48] sm:$0xff]
  %v821 = vld [vmem:[%s9 + $0x50] sm:$0xff]
  %v822 = vld [vmem:[%s9 + $0x58] sm:$0xff]
  %v823 = vld [vmem:[%s10] sm:$0x1]
  %v825 = vperm.slane %v823, 0
  %vm827 = vcmask 785408
  %v829 = vsel %vm827, %v807, 0
  %v832 = vsel %vm827, %v808, 0
  %v835 = vsel %vm827, %v809, 0
  %v838 = vsel %vm827, %v810, 0
  %840 = vmatpush.msra.mxu0 0.0
  %841 = vmatpush.msra.mxu0 0.0
  %842 = vmatpush.msra.mxu0 0.0
  %843 = vmatpush.msra.mxu0 0.0
  %844 = vmatpush.msra.mxu0 %v822
  %845 = vmatpush.msra.mxu0 %v821
  %846 = vmatpush.msra.mxu0 %v820
  %847 = vmatpush.msra.mxu0 %v819
  %848 = vmatpush.msra.mxu0 %v818
  %849 = vmatpush.msra.mxu0 %v817
  %850 = vmatpush.msra.mxu0 %v816
  %851 = vmatpush.msra.mxu0 %v815
  %852 = vmatpush.msra.mxu0 %v814
  %853 = vmatpush.msra.mxu0 %v813
  %854 = vmatpush.msra.mxu0 %v812
  %855 = vmatpush.msra.mxu0 %v811
  %856 = vmatmul.f32.gmra.mxu0 %v829
  %v857 = vpop.f32.mrf.mxu0
  %v858 = vadd.f32 %v825, %v857
  %859 = vmatmul.f32.gmra.mxu0 %v832
  %v860 = vpop.f32.mrf.mxu0
  %v861 = vadd.f32 %v825, %v860
  %862 = vmatmul.f32.gmra.mxu0 %v835
  %v863 = vpop.f32.mrf.mxu0
  %v864 = vadd.f32 %v825, %v863
  %865 = vmatmul.f32.gmra.mxu0 %v838
  %v866 = vpop.f32.mrf.mxu0
  %v867 = vadd.f32 %v825, %v866
  %868 = vdwg.mxu0
  %v869 = vmax.f32 %v858, 0.0
  %v870 = vmax.f32 %v861, 0.0
  %v871 = vmax.f32 %v864, 0.0
  %v872 = vmax.f32 %v867, 0.0
  %v873 = vld [vmem:[%s11] sm:$0xff]
  %v874 = vld [vmem:[%s11 + $0x8] sm:$0xff]
  %v875 = vld [vmem:[%s11 + $0x10] sm:$0xff]
  %v876 = vld [vmem:[%s11 + $0x18] sm:$0xff]
  %v877 = vld [vmem:[%s11 + $0x20] sm:$0xff]
  %v878 = vld [vmem:[%s11 + $0x28] sm:$0xff]
  %v879 = vld [vmem:[%s11 + $0x30] sm:$0xff]
  %v880 = vld [vmem:[%s11 + $0x38] sm:$0xff]
  %v881 = vld [vmem:[%s12] sm:$0x1]
  %v883 = vperm.slane %v881, 0
  %v886 = vsel %vm806, %v869, 0
  %v889 = vsel %vm806, %v870, 0
  %v892 = vsel %vm806, %v871, 0
  %v895 = vsel %vm806, %v872, 0
  %897 = vmatpush.msra.mxu0 0.0
  %898 = vmatpush.msra.mxu0 0.0
  %899 = vmatpush.msra.mxu0 0.0
  %900 = vmatpush.msra.mxu0 0.0
  %901 = vmatpush.msra.mxu0 0.0
  %902 = vmatpush.msra.mxu0 0.0
  %903 = vmatpush.msra.mxu0 0.0
  %904 = vmatpush.msra.mxu0 0.0
  %905 = vmatpush.msra.mxu0 %v880
  %906 = vmatpush.msra.mxu0 %v879
  %907 = vmatpush.msra.mxu0 %v878
  %908 = vmatpush.msra.mxu0 %v877
  %909 = vmatpush.msra.mxu0 %v876
  %910 = vmatpush.msra.mxu0 %v875
  %911 = vmatpush.msra.mxu0 %v874
  %912 = vmatpush.msra.mxu0 %v873
  %913 = vmatmul.f32.gmra.mxu0 %v886
  %v914 = vpop.f32.mrf.mxu0
  %v915 = vadd.f32 %v883, %v914
  %916 = vmatmul.f32.gmra.mxu0 %v889
  %v917 = vpop.f32.mrf.mxu0
  %v918 = vadd.f32 %v883, %v917
  %919 = vmatmul.f32.gmra.mxu0 %v892
  %v920 = vpop.f32.mrf.mxu0
  %v921 = vadd.f32 %v883, %v920
  %922 = vmatmul.f32.gmra.mxu0 %v895
  %v923 = vpop.f32.mrf.mxu0
  %v924 = vadd.f32 %v883, %v923
  %925 = vdwg.mxu0
  %v926 = vadd.f32 %v915, %v744
  %v927 = vadd.f32 %v918, %v745
  %v928 = vadd.f32 %v921, %v746
  %v929 = vadd.f32 %v924, %v747
  %v930 = vld [vmem:[%s13] sm:$0x1]
  %v931 = vld [vmem:[%s14] sm:$0x1]
  %v932 = vsel %vm68, %v926, 0.0
  %933 = vadd.xlane.f32.xlu0 %v932
  %v934 = vpop.xlane.xlu0 %933
  %v935 = vsel %vm68, %v927, 0.0
  %936 = vadd.xlane.f32.xlu0 %v935
  %v937 = vpop.xlane.xlu0 %936
  %v938 = vsel %vm68, %v928, 0.0
  %939 = vadd.xlane.f32.xlu0 %v938
  %v940 = vpop.xlane.xlu0 %939
  %v941 = vsel %vm68, %v929, 0.0
  %942 = vadd.xlane.f32.xlu0 %v941
  %v943 = vpop.xlane.xlu0 %942
  %v944 = vmul.f32 %v934, %v633
  %v945 = vmul.f32 %v937, %v633
  %v946 = vmul.f32 %v940, %v633
  %v947 = vmul.f32 %v943, %v633
  %v948 = vsub.f32 %v926, %v944
  %v949 = vsub.f32 %v927, %v945
  %v950 = vsub.f32 %v928, %v946
  %v951 = vsub.f32 %v929, %v947
  %v952 = vmul.f32 %v948, %v948
  %v953 = vmul.f32 %v949, %v949
  %v954 = vmul.f32 %v950, %v950
  %v955 = vmul.f32 %v951, %v951
  %v956 = vsel %vm68, %v952, 0.0
  %957 = vadd.xlane.f32.xlu0 %v956
  %v958 = vpop.xlane.xlu0 %957
  %v959 = vsel %vm68, %v953, 0.0
  %960 = vadd.xlane.f32.xlu0 %v959
  %v961 = vpop.xlane.xlu0 %960
  %v962 = vsel %vm68, %v954, 0.0
  %963 = vadd.xlane.f32.xlu0 %v962
  %v964 = vpop.xlane.xlu0 %963
  %v965 = vsel %vm68, %v955, 0.0
  %966 = vadd.xlane.f32.xlu0 %v965
  %v967 = vpop.xlane.xlu0 %966
  %v968 = vmul.f32 %v958, %v633
  %v969 = vmul.f32 %v961, %v633
  %v970 = vmul.f32 %v964, %v633
  %v971 = vmul.f32 %v967, %v633
  %v972 = vadd.f32 %v968, 1e-05
  %v973 = vadd.f32 %v969, 1e-05
  %v974 = vadd.f32 %v970, 1e-05
  %v975 = vadd.f32 %v971, 1e-05
  %v976 = vrsqrt.pop %v972
  %v977 = vmul.f32 %v976, %v972
  %v978 = vmul.f32 %v977, %v976
  %v979 = vmul.f32 0.5, %v978
  %v980 = vsub.f32 1.5, %v979
  %v981 = vmul.f32 %v976, %v980
  %vm982 = vweird.f32 %v972
  %vm983 = vweird.f32 %v976
  %vm984 = vmor %vm982, %vm983
  %v985 = vsel %vm984, %v976, %v981
  %v986 = vrsqrt.pop %v973
  %v987 = vmul.f32 %v986, %v973
  %v988 = vmul.f32 %v987, %v986
  %v989 = vmul.f32 0.5, %v988
  %v990 = vsub.f32 1.5, %v989
  %v991 = vmul.f32 %v986, %v990
  %vm992 = vweird.f32 %v973
  %vm993 = vweird.f32 %v986
  %vm994 = vmor %vm992, %vm993
  %v995 = vsel %vm994, %v986, %v991
  %v996 = vrsqrt.pop %v974
  %v997 = vmul.f32 %v996, %v974
  %v998 = vmul.f32 %v997, %v996
  %v999 = vmul.f32 0.5, %v998
  %v1000 = vsub.f32 1.5, %v999
  %v1001 = vmul.f32 %v996, %v1000
  %vm1002 = vweird.f32 %v974
  %vm1003 = vweird.f32 %v996
  %vm1004 = vmor %vm1002, %vm1003
  %v1005 = vsel %vm1004, %v996, %v1001
  %v1006 = vrsqrt.pop %v975
  %v1007 = vmul.f32 %v1006, %v975
  %v1008 = vmul.f32 %v1007, %v1006
  %v1009 = vmul.f32 0.5, %v1008
  %v1010 = vsub.f32 1.5, %v1009
  %v1011 = vmul.f32 %v1006, %v1010
  %vm1012 = vweird.f32 %v975
  %vm1013 = vweird.f32 %v1006
  %vm1014 = vmor %vm1012, %vm1013
  %v1015 = vsel %vm1014, %v1006, %v1011
  %v1016 = vmul.f32 %v948, %v985
  %v1017 = vmul.f32 %v949, %v995
  %v1018 = vmul.f32 %v950, %v1005
  %v1019 = vmul.f32 %v951, %v1015
  %v1021 = vperm.slane %v930, 0
  %v1023 = vmul.f32 %v1016, %v1021
  %v1024 = vmul.f32 %v1017, %v1021
  %v1025 = vmul.f32 %v1018, %v1021
  %v1026 = vmul.f32 %v1019, %v1021
  %v1028 = vperm.slane %v931, 0
  %v1030 = vadd.f32 %v1023, %v1028
  %v1031 = vadd.f32 %v1024, %v1028
  %v1032 = vadd.f32 %v1025, %v1028
  %v1033 = vadd.f32 %v1026, %v1028
  %v1034 = vmul.f32 %v1030, %v727
  %v1035 = vmul.f32 %v1031, %v732
  %v1036 = vmul.f32 %v1032, %v737
  %v1037 = vmul.f32 %v1033, %v742
  %1038 = vst.msk [vmem:[%s15] sm:$0xff] %vm68, %v1034
  %1039 = vst.msk [vmem:[%s15 + $0x8] sm:$0xff] %vm68, %v1035
  %1040 = vst.msk [vmem:[%s15 + $0x10] sm:$0xff] %vm68, %v1036
  %1041 = vst.msk [vmem:[%s15 + $0x18] sm:$0xff] %vm68, %v1037
  // Predicated region
  $region62: #{fastspeech_forward.10} parent=0 // pred_check
    _
  $region63: #{fastspeech_forward.10} parent=0 // pred_check_branch
    %1043 = sbr.rel (0) target = $region65
  $region64: #{fastspeech_forward.10} parent=0 // pred_region
    _
  $region65: #{fastspeech_forward.10} parent=0 // pred_fallthru
    _
  // Predicated region
  $region66: #{fastspeech_forward.10} parent=0 // pred_check
    _
  $region67: #{fastspeech_forward.10} parent=0 // pred_check_branch
    %1045 = sbr.rel (0) target = $region69
  $region68: #{fastspeech_forward.10} parent=0 // pred_region
    _
  $region69: #{fastspeech_forward.10} parent=0 // pred_fallthru
    _

// kernel: fastspeech_forward.12
$region0: #{fastspeech_forward.12}
  #allocation0 [shape = 'u32[]', space=smem, size = 0x4, offset = 0x4, fixed_abs, tag = 'smem constant byte address 0x4 - core index']
  #allocation1 [shape = 'u32[72,128]{1,0:T(1,128)}', space=vmem, size = 0x9000, scoped, tag = 'internal scratch']
  %s0 = inlined_call_operand.vmem [shape: f32[2,16,32], index: 0, kind: input, shape index: {}]
  %s1 = inlined_call_operand.vmem [shape: f32[32,16], index: 1, kind: input, shape index: {}]
  %s2 = inlined_call_operand.vmem [shape: f32[1,16], index: 2, kind: input, shape index: {}]
  %s3 = inlined_call_operand.vmem [shape: f32[2,16,1], index: 3, kind: input, shape index: {}]
  %s4 = inlined_call_operand.vmem [shape: f32[128,128], index: 4, kind: input, shape index: {}]
  %s5 = inlined_call_operand.vmem [shape: f32[1,128], index: 5, kind: input, shape index: {}]
  %s6 = inlined_call_operand.vmem [shape: f32[1,128], index: 6, kind: input, shape index: {}]
  %s7 = inlined_call_operand.vmem [shape: f32[384,256], index: 7, kind: input, shape index: {}]
  %s8 = inlined_call_operand.vmem [shape: f32[1,256], index: 8, kind: input, shape index: {}]
  %s9 = inlined_call_operand.vmem [shape: f32[1,256], index: 9, kind: input, shape index: {}]
  %s10 = inlined_call_operand.vmem [shape: f32[3,256,16], index: 10, kind: input, shape index: {}]
  %s11 = inlined_call_operand.vmem [shape: f32[1,16], index: 11, kind: input, shape index: {}]
  %s12 = inlined_call_operand.vmem [shape: f32[1,16], index: 12, kind: input, shape index: {}]
  %s13 = inlined_call_operand.vmem [shape: f32[2,16,16], index: 13, kind: output, shape index: {0}]
  %s14 = inlined_call_operand.vmem [shape: f32[2,16,16], index: 14, kind: output, shape index: {1}]
  %15 = xla_tuple %s13, %s14
  %s16 = sld [smem:[#allocation0]]
  $region70: #{fastspeech_forward.12} parent=0
    _
  %s18 = ssub.s32 1, %s16
  %s19 = scalar_select 0, %s18, %s16
  // Predicated region
  $region2: #{fastspeech_forward.12} parent=0 // pred_check
    _
  $region3: #{fastspeech_forward.12} parent=0 // pred_check_branch
    %21 = sbr.rel (0) target = $region5
  $region4: #{fastspeech_forward.12} parent=0 // pred_region
    _
  $region5: #{fastspeech_forward.12} parent=0 // pred_fallthru
    _
  // Predicated region
  $region6: #{fastspeech_forward.12} parent=0 // pred_check
    _
  $region7: #{fastspeech_forward.12} parent=0 // pred_check_branch
    %23 = sbr.rel (0) target = $region9
  $region8: #{fastspeech_forward.12} parent=0 // pred_region
    _
  $region9: #{fastspeech_forward.12} parent=0 // pred_fallthru
    _
  // Predicated region
  $region10: #{fastspeech_forward.12} parent=0 // pred_check
    _
  $region11: #{fastspeech_forward.12} parent=0 // pred_check_branch
    %25 = sbr.rel (0) target = $region13
  $region12: #{fastspeech_forward.12} parent=0 // pred_region
    _
  $region13: #{fastspeech_forward.12} parent=0 // pred_fallthru
    _
  // Predicated region
  $region14: #{fastspeech_forward.12} parent=0 // pred_check
    _
  $region15: #{fastspeech_forward.12} parent=0 // pred_check_branch
    %27 = sbr.rel (0) target = $region17
  $region16: #{fastspeech_forward.12} parent=0 // pred_region
    _
  $region17: #{fastspeech_forward.12} parent=0 // pred_fallthru
    _
  // Predicated region
  $region18: #{fastspeech_forward.12} parent=0 // pred_check
    _
  $region19: #{fastspeech_forward.12} parent=0 // pred_check_branch
    %29 = sbr.rel (0) target = $region21
  $region20: #{fastspeech_forward.12} parent=0 // pred_region
    _
  $region21: #{fastspeech_forward.12} parent=0 // pred_fallthru
    _
  // Predicated region
  $region22: #{fastspeech_forward.12} parent=0 // pred_check
    _
  $region23: #{fastspeech_forward.12} parent=0 // pred_check_branch
    %31 = sbr.rel (0) target = $region25
  $region24: #{fastspeech_forward.12} parent=0 // pred_region
    _
  $region25: #{fastspeech_forward.12} parent=0 // pred_fallthru
    _
  // Predicated region
  $region26: #{fastspeech_forward.12} parent=0 // pred_check
    _
  $region27: #{fastspeech_forward.12} parent=0 // pred_check_branch
    %33 = sbr.rel (0) target = $region29
  $region28: #{fastspeech_forward.12} parent=0 // pred_region
    _
  $region29: #{fastspeech_forward.12} parent=0 // pred_fallthru
    _
  // Predicated region
  $region30: #{fastspeech_forward.12} parent=0 // pred_check
    _
  $region31: #{fastspeech_forward.12} parent=0 // pred_check_branch
    %35 = sbr.rel (0) target = $region33
  $region32: #{fastspeech_forward.12} parent=0 // pred_region
    _
  $region33: #{fastspeech_forward.12} parent=0 // pred_fallthru
    _
  // Predicated region
  $region34: #{fastspeech_forward.12} parent=0 // pred_check
    _
  $region35: #{fastspeech_forward.12} parent=0 // pred_check_branch
    %37 = sbr.rel (0) target = $region37
  $region36: #{fastspeech_forward.12} parent=0 // pred_region
    _
  $region37: #{fastspeech_forward.12} parent=0 // pred_fallthru
    _
  // Predicated region
  $region38: #{fastspeech_forward.12} parent=0 // pred_check
    _
  $region39: #{fastspeech_forward.12} parent=0 // pred_check_branch
    %39 = sbr.rel (0) target = $region41
  $region40: #{fastspeech_forward.12} parent=0 // pred_region
    _
  $region41: #{fastspeech_forward.12} parent=0 // pred_fallthru
    _
  // Predicated region
  $region42: #{fastspeech_forward.12} parent=0 // pred_check
    _
  $region43: #{fastspeech_forward.12} parent=0 // pred_check_branch
    %41 = sbr.rel (0) target = $region45
  $region44: #{fastspeech_forward.12} parent=0 // pred_region
    _
  $region45: #{fastspeech_forward.12} parent=0 // pred_fallthru
    _
  // Predicated region
  $region46: #{fastspeech_forward.12} parent=0 // pred_check
    _
  $region47: #{fastspeech_forward.12} parent=0 // pred_check_branch
    %43 = sbr.rel (0) target = $region49
  $region48: #{fastspeech_forward.12} parent=0 // pred_region
    _
  $region49: #{fastspeech_forward.12} parent=0 // pred_fallthru
    _
  // Predicated region
  $region50: #{fastspeech_forward.12} parent=0 // pred_check
    _
  $region51: #{fastspeech_forward.12} parent=0 // pred_check_branch
    %45 = sbr.rel (0) target = $region53
  $region52: #{fastspeech_forward.12} parent=0 // pred_region
    _
  $region53: #{fastspeech_forward.12} parent=0 // pred_fallthru
    _
  %v46 = vld [vmem:[%s0] sm:$0xff]
  %v47 = vld [vmem:[%s0 + $0x8] sm:$0xff]
  %v48 = vld [vmem:[%s0 + $0x10] sm:$0xff]
  %v49 = vld [vmem:[%s0 + $0x18] sm:$0xff]
  %v50 = vld [vmem:[%s1] sm:$0xff]
  %v51 = vld [vmem:[%s1 + $0x8] sm:$0xff]
  %v52 = vld [vmem:[%s1 + $0x10] sm:$0xff]
  %v53 = vld [vmem:[%s1 + $0x18] sm:$0xff]
  %v54 = vld [vmem:[%s2] sm:$0x1]
  %v56 = vperm.slane %v54, 0
  %vm58 = vcmask 261120
  %v60 = vsel %vm58, %v46, 0
  %v63 = vsel %vm58, %v47, 0
  %v66 = vsel %vm58, %v48, 0
  %v69 = vsel %vm58, %v49, 0
  %71 = vmatpush.msra.mxu0 0.0
  %72 = vmatpush.msra.mxu0 0.0
  %73 = vmatpush.msra.mxu0 0.0
  %74 = vmatpush.msra.mxu0 0.0
  %75 = vmatpush.msra.mxu0 0.0
  %76 = vmatpush.msra.mxu0 0.0
  %77 = vmatpush.msra.mxu0 0.0
  %78 = vmatpush.msra.mxu0 0.0
  %79 = vmatpush.msra.mxu0 0.0
  %80 = vmatpush.msra.mxu0 0.0
  %81 = vmatpush.msra.mxu0 0.0
  %82 = vmatpush.msra.mxu0 0.0
  %83 = vmatpush.msra.mxu0 %v53
  %84 = vmatpush.msra.mxu0 %v52
  %85 = vmatpush.msra.mxu0 %v51
  %86 = vmatpush.msra.mxu0 %v50
  %87 = vmatmul.f32.gmra.mxu0 %v60
  %v88 = vpop.f32.mrf.mxu0
  %v89 = vadd.f32 %v56, %v88
  %90 = vmatmul.f32.gmra.mxu0 %v63
  %v91 = vpop.f32.mrf.mxu0
  %v92 = vadd.f32 %v56, %v91
  %93 = vmatmul.f32.gmra.mxu0 %v66
  %v94 = vpop.f32.mrf.mxu0
  %v95 = vadd.f32 %v56, %v94
  %96 = vmatmul.f32.gmra.mxu0 %v69
  %v97 = vpop.f32.mrf.mxu0
  %v98 = vadd.f32 %v56, %v97
  %99 = vdwg.mxu0
  %v100 = vld [vmem:[%s3] sm:$0xff]
  %v101 = vld [vmem:[%s3 + $0x8] sm:$0xff]
  %v102 = vld [vmem:[%s3 + $0x10] sm:$0xff]
  %v103 = vld [vmem:[%s3 + $0x18] sm:$0xff]
  %105 = vset.pattern.permute.xlu0 0
  %106 = vperm.xlu0 %105, %v100
  %v107 = vpop.permute.xlu0 %106
  %110 = vset.pattern.permute.xlu0 0
  %111 = vperm.xlu0 %110, %v101
  %v112 = vpop.permute.xlu0 %111
  %115 = vset.pattern.permute.xlu0 0
  %116 = vperm.xlu0 %115, %v102
  %v117 = vpop.permute.xlu0 %116
  %120 = vset.pattern.permute.xlu0 0
  %121 = vperm.xlu0 %120, %v103
  %v122 = vpop.permute.xlu0 %121
  %v124 = vmul.f32 %v89, %v107
  %v125 = vmul.f32 %v92, %v112
  %v126 = vmul.f32 %v95, %v117
  %v127 = vmul.f32 %v98, %v122
  %vm128 = vcmask 130048
  %129 = vst.msk [vmem:[%s13] sm:$0xff] %vm128, %v124
  %130 = vst.msk [vmem:[%s13 + $0x8] sm:$0xff] %vm128, %v125
  %131 = vst.msk [vmem:[%s13 + $0x10] sm:$0xff] %vm128, %v126
  %132 = vst.msk [vmem:[%s13 + $0x18] sm:$0xff] %vm128, %v127
  %vm137 = vcmask 1043456
  %v138 = vrot.slane %v124, 4
  %v139 = vrot.slane %v125, 4
  %v140 = vsel %vm137, %v138, %v139
  %v141 = vrot.slane %v126, 4
  %v142 = vrot.slane %v127, 4
  %v143 = vsel %vm137, %v141, %v142
  %v148 = vsel %vm137, 0.0, %v138
  %v149 = vsel %vm137, 0.0, %v141
  %vm150 = vcmask 1042432
  %v151 = vrot.slane %v124, 5
  %v152 = vrot.slane %v125, 5
  %v153 = vsel %vm150, %v151, %v152
  %v154 = vrot.slane %v126, 5
  %v155 = vrot.slane %v127, 5
  %v156 = vsel %vm150, %v154, %v155
  %v159 = vsel %vm150, 0.0, %v151
  %v160 = vsel %vm150, 0.0, %v154
  %vm161 = vcmask 1041408
  %v162 = vrot.slane %v124, 6
  %v163 = vrot.slane %v125, 6
  %v164 = vsel %vm161, %v162, %v163
  %v165 = vrot.slane %v126, 6
  %v166 = vrot.slane %v127, 6
  %v167 = vsel %vm161, %v165, %v166
  %v170 = vsel %vm161, 0.0, %v162
  %v171 = vsel %vm161, 0.0, %v165
  %vm172 = vcmask 1040384
  %v173 = vrot.slane %v124, 7
  %v174 = vrot.slane %v125, 7
  %v175 = vsel %vm172, %v173, %v174
  %v176 = vrot.slane %v126, 7
  %v177 = vrot.slane %v127, 7
  %v178 = vsel %vm172, %v176, %v177
  %v181 = vsel %vm172, 0.0, %v173
  %v182 = vsel %vm172, 0.0, %v176
  %vm183 = vcmask 1046528
  %v184 = vrot.slane %v124, 1
  %v185 = vrot.slane %v125, 1
  %v186 = vsel %vm183, %v184, %v185
  %v187 = vrot.slane %v126, 1
  %v188 = vrot.slane %v127, 1
  %v189 = vsel %vm183, %v187, %v188
  %v192 = vsel %vm183, %v185, 0.0
  %v193 = vsel %vm183, %v188, 0.0
  %vm194 = vcmask 1045504
  %v195 = vrot.slane %v124, 2
  %v196 = vrot.slane %v125, 2
  %v197 = vsel %vm194, %v195, %v196
  %v198 = vrot.slane %v126, 2
  %v199 = vrot.slane %v127, 2
  %v200 = vsel %vm194, %v198, %v199
  %v203 = vsel %vm194, %v196, 0.0
  %v204 = vsel %vm194, %v199, 0.0
  %vm205 = vcmask 1044480
  %v206 = vrot.slane %v124, 3
  %v207 = vrot.slane %v125, 3
  %v208 = vsel %vm205, %v206, %v207
  %v209 = vrot.slane %v126, 3
  %v210 = vrot.slane %v127, 3
  %v211 = vsel %vm205, %v209, %v210
  %v214 = vsel %vm205, %v207, 0.0
  %v215 = vsel %vm205, %v210, 0.0
  %218 = vrot.lane.b32.xlu0 %v159, 16
  %v219 = vpop.permute.xlu0 %218
  %220 = vrot.lane.b32.xlu0 %v153, 16
  %v221 = vpop.permute.xlu0 %220
  %222 = vrot.lane.b32.xlu0 %v160, 16
  %v223 = vpop.permute.xlu0 %222
  %224 = vrot.lane.b32.xlu0 %v156, 16
  %v225 = vpop.permute.xlu0 %224
  %232 = vrot.lane.b32.xlu0 %v170, 32
  %v233 = vpop.permute.xlu0 %232
  %234 = vrot.lane.b32.xlu0 %v164, 32
  %v235 = vpop.permute.xlu0 %234
  %236 = vrot.lane.b32.xlu0 %v171, 32
  %v237 = vpop.permute.xlu0 %236
  %238 = vrot.lane.b32.xlu0 %v167, 32
  %v239 = vpop.permute.xlu0 %238
  %246 = vrot.lane.b32.xlu0 %v181, 48
  %v247 = vpop.permute.xlu0 %246
  %248 = vrot.lane.b32.xlu0 %v175, 48
  %v249 = vpop.permute.xlu0 %248
  %250 = vrot.lane.b32.xlu0 %v182, 48
  %v251 = vpop.permute.xlu0 %250
  %252 = vrot.lane.b32.xlu0 %v178, 48
  %v253 = vpop.permute.xlu0 %252
  %258 = vrot.lane.b32.xlu0 %v124, 64
  %v259 = vpop.permute.xlu0 %258
  %260 = vrot.lane.b32.xlu0 %v125, 64
  %v261 = vpop.permute.xlu0 %260
  %262 = vrot.lane.b32.xlu0 %v126, 64
  %v263 = vpop.permute.xlu0 %262
  %264 = vrot.lane.b32.xlu0 %v127, 64
  %v265 = vpop.permute.xlu0 %264
  %272 = vrot.lane.b32.xlu0 %v186, 80
  %v273 = vpop.permute.xlu0 %272
  %274 = vrot.lane.b32.xlu0 %v192, 80
  %v275 = vpop.permute.xlu0 %274
  %276 = vrot.lane.b32.xlu0 %v189, 80
  %v277 = vpop.permute.xlu0 %276
  %278 = vrot.lane.b32.xlu0 %v193, 80
  %v279 = vpop.permute.xlu0 %278
  %286 = vrot.lane.b32.xlu0 %v197, 96
  %v287 = vpop.permute.xlu0 %286
  %288 = vrot.lane.b32.xlu0 %v203, 96
  %v289 = vpop.permute.xlu0 %288
  %290 = vrot.lane.b32.xlu0 %v200, 96
  %v291 = vpop.permute.xlu0 %290
  %292 = vrot.lane.b32.xlu0 %v204, 96
  %v293 = vpop.permute.xlu0 %292
  %300 = vrot.lane.b32.xlu0 %v208, 112
  %v301 = vpop.permute.xlu0 %300
  %302 = vrot.lane.b32.xlu0 %v214, 112
  %v303 = vpop.permute.xlu0 %302
  %304 = vrot.lane.b32.xlu0 %v211, 112
  %v305 = vpop.permute.xlu0 %304
  %306 = vrot.lane.b32.xlu0 %v215, 112
  %v307 = vpop.permute.xlu0 %306
  %v312 = vsel %vm128, %v148, %v219
  %v313 = vsel %vm128, %v140, %v221
  %v314 = vsel %vm128, %v149, %v223
  %v315 = vsel %vm128, %v143, %v225
  %v316 = vsel %vm58, %v312, %v233
  %v317 = vsel %vm58, %v313, %v235
  %v318 = vsel %vm58, %v314, %v237
  %v319 = vsel %vm58, %v315, %v239
  %vm320 = vcmask 392192
  %v321 = vsel %vm320, %v316, %v247
  %v322 = vsel %vm320, %v317, %v249
  %v323 = vsel %vm320, %v318, %v251
  %v324 = vsel %vm320, %v319, %v253
  %vm325 = vcmask 523264
  %v326 = vsel %vm325, %v321, %v259
  %v327 = vsel %vm325, %v322, %v261
  %v328 = vsel %vm325, %v323, %v263
  %v329 = vsel %vm325, %v324, %v265
  %vm330 = vcmask 654336
  %v331 = vsel %vm330, %v326, %v273
  %v332 = vsel %vm330, %v327, %v275
  %v333 = vsel %vm330, %v328, %v277
  %v334 = vsel %vm330, %v329, %v279
  %vm335 = vcmask 785408
  %v336 = vsel %vm335, %v331, %v287
  %v337 = vsel %vm335, %v332, %v289
  %v338 = vsel %vm335, %v333, %v291
  %v339 = vsel %vm335, %v334, %v293
  %vm340 = vcmask 916480
  %v341 = vsel %vm340, %v336, %v301
  %v342 = vsel %vm340, %v337, %v303
  %v343 = vsel %vm340, %v338, %v305
  %v344 = vsel %vm340, %v339, %v307
  %v345 = vld [vmem:[%s4] sm:$0xff]
  %v346 = vld [vmem:[%s4 + $0x8] sm:$0xff]
  %v347 = vld [vmem:[%s4 + $0x10] sm:$0xff]
  %v348 = vld [vmem:[%s4 + $0x18] sm:$0xff]
  %v349 = vld [vmem:[%s4 + $0x20] sm:$0xff]
  %v350 = vld [vmem:[%s4 + $0x28] sm:$0xff]
  %v351 = vld [vmem:[%s4 + $0x30] sm:$0xff]
  %v352 = vld [vmem:[%s4 + $0x38] sm:$0xff]
  %v353 = vld [vmem:[%s4 + $0x40] sm:$0xff]
  %v354 = vld [vmem:[%s4 + $0x48] sm:$0xff]
  %v355 = vld [vmem:[%s4 + $0x50] sm:$0xff]
  %v356 = vld [vmem:[%s4 + $0x58] sm:$0xff]
  %v357 = vld [vmem:[%s4 + $0x60] sm:$0xff]
  %v358 = vld [vmem:[%s4 + $0x68] sm:$0xff]
  %v359 = vld [vmem:[%s4 + $0x70] sm:$0xff]
  %v360 = vld [vmem:[%s4 + $0x78] sm:$0xff]
  %361 = vmatpush.msra.mxu0 %v360
  %362 = vmatpush.msra.mxu0 %v359
  %363 = vmatpush.msra.mxu0 %v358
  %364 = vmatpush.msra.mxu0 %v357
  %365 = vmatpush.msra.mxu0 %v356
  %366 = vmatpush.msra.mxu0 %v355
  %367 = vmatpush.msra.mxu0 %v354
  %368 = vmatpush.msra.mxu0 %v353
  %369 = vmatpush.msra.mxu0 %v352
  %370 = vmatpush.msra.mxu0 %v351
  %371 = vmatpush.msra.mxu0 %v350
  %372 = vmatpush.msra.mxu0 %v349
  %373 = vmatpush.msra.mxu0 %v348
  %374 = vmatpush.msra.mxu0 %v347
  %375 = vmatpush.msra.mxu0 %v346
  %376 = vmatpush.msra.mxu0 %v345
  %377 = vmatmul.f32.gmra.mxu0 %v341
  %v378 = vpop.f32.mrf.mxu0
  %v379 = vadd.f32 0.0, %v378
  %380 = vmatmul.f32.gmra.mxu0 %v342
  %v381 = vpop.f32.mrf.mxu0
  %v382 = vadd.f32 0.0, %v381
  %383 = vmatmul.f32.gmra.mxu0 %v343
  %v384 = vpop.f32.mrf.mxu0
  %v385 = vadd.f32 0.0, %v384
  %386 = vmatmul.f32.gmra.mxu0 %v344
  %v387 = vpop.f32.mrf.mxu0
  %v388 = vadd.f32 0.0, %v387
  %389 = vdwg.mxu0
  %v390 = vld [vmem:[%s5] sm:$0x1]
  %v391 = vld [vmem:[%s6] sm:$0x1]
  %v392 = vadd.f32 %v379, %v382
  %v393 = vadd.f32 %v392, %v385
  %v394 = vadd.f32 %v393, %v388
  %v395 = vrot.slane %v394, 4
  %v396 = vadd.f32 %v394, %v395
  %v397 = vrot.slane %v396, 2
  %v398 = vadd.f32 %v396, %v397
  %v399 = vrot.slane %v398, 1
  %v400 = vadd.f32 %v398, %v399
  %v401 = vrcp.pop 32.0
  %v402 = vmul.f32 32.0, %v401
  %v403 = vsub.f32 1.0, %v402
  %v404 = vmul.f32 %v401, %v403
  %v405 = vadd.f32 %v401, %v404
  %vm406 = vweird.f32 %v401
  %v407 = vsel %vm406, %v401, %v405
  %v408 = vmul.f32 %v400, %v407
  %v409 = vsub.f32 %v379, %v408
  %v410 = vsub.f32 %v382, %v408
  %v411 = vsub.f32 %v385, %v408
  %v412 = vsub.f32 %v388, %v408
  %v413 = vmul.f32 %v409, %v409
  %v414 = vmul.f32 %v410, %v410
  %v415 = vmul.f32 %v411, %v411
  %v416 = vmul.f32 %v412, %v412
  %v417 = vadd.f32 %v413, %v414
  %v418 = vadd.f32 %v417, %v415
  %v419 = vadd.f32 %v418, %v416
  %v420 = vrot.slane %v419, 4
  %v421 = vadd.f32 %v419, %v420
  %v422 = vrot.slane %v421, 2
  %v423 = vadd.f32 %v421, %v422
  %v424 = vrot.slane %v423, 1
  %v425 = vadd.f32 %v423, %v424
  %v426 = vmul.f32 %v425, %v407
  %v427 = vadd.f32 %v426, 1e-05
  %v428 = vrsqrt.pop %v427
  %v429 = vmul.f32 %v428, %v427
  %v430 = vmul.f32 %v429, %v428
  %v431 = vmul.f32 0.5, %v430
  %v432 = vsub.f32 1.5, %v431
  %v433 = vmul.f32 %v428, %v432
  %vm434 = vweird.f32 %v427
  %vm435 = vweird.f32 %v428
  %vm436 = vmor %vm434, %vm435
  %v437 = vsel %vm436, %v428, %v433
  %v438 = vmul.f32 %v409, %v437
  %v439 = vmul.f32 %v410, %v437
  %v440 = vmul.f32 %v411, %v437
  %v441 = vmul.f32 %v412, %v437
  %v443 = vperm.slane %v390, 0
  %v445 = vmul.f32 %v438, %v443
  %v446 = vmul.f32 %v439, %v443
  %v447 = vmul.f32 %v440, %v443
  %v448 = vmul.f32 %v441, %v443
  %v450 = vperm.slane %v391, 0
  %v452 = vadd.f32 %v445, %v450
  %v453 = vadd.f32 %v446, %v450
  %v454 = vadd.f32 %v447, %v450
  %v455 = vadd.f32 %v448, %v450
  %v456 = vmax.f32 %v452, 0.0
  %v457 = vmax.f32 %v453, 0.0
  %v458 = vmax.f32 %v454, 0.0
  %v459 = vmax.f32 %v455, 0.0
  %v464 = vrot.slane %v456, 7
  %v465 = vrot.slane %v457, 7
  %v466 = vsel %vm172, %v464, %v465
  %v467 = vrot.slane %v458, 7
  %v468 = vrot.slane %v459, 7
  %v469 = vsel %vm172, %v467, %v468
  %v474 = vsel %vm172, 0.0, %v464
  %v475 = vsel %vm172, 0.0, %v467
  %v476 = vmax.f32 %v456, %v474
  %v477 = vmax.f32 %v457, %v466
  %v478 = vmax.f32 %v458, %v475
  %v479 = vmax.f32 %v459, %v469
  %v484 = vrot.slane %v476, 7
  %v485 = vrot.slane %v477, 7
  %v486 = vsel %vm172, %v484, %v485
  %v487 = vrot.slane %v478, 7
  %v488 = vrot.slane %v479, 7
  %v489 = vsel %vm172, %v487, %v488
  %v494 = vsel %vm172, 0.0, %v484
  %v495 = vsel %vm172, 0.0, %v487
  %v496 = vrot.slane %v476, 1
  %v497 = vrot.slane %v477, 1
  %v498 = vsel %vm183, %v496, %v497
  %v499 = vrot.slane %v478, 1
  %v500 = vrot.slane %v479, 1
  %v501 = vsel %vm183, %v499, %v500
  %v506 = vsel %vm183, %v497, 0.0
  %v507 = vsel %vm183, %v500, 0.0
  %v508 = vld [vmem:[%s7] sm:$0xff]
  %v509 = vld [vmem:[%s7 + $0x8] sm:$0xff]
  %v510 = vld [vmem:[%s7 + $0x10] sm:$0xff]
  %v511 = vld [vmem:[%s7 + $0x18] sm:$0xff]
  %v512 = vld [vmem:[%s7 + $0x20] sm:$0xff]
  %v513 = vld [vmem:[%s7 + $0x28] sm:$0xff]
  %v514 = vld [vmem:[%s7 + $0x30] sm:$0xff]
  %v515 = vld [vmem:[%s7 + $0x38] sm:$0xff]
  %v516 = vld [vmem:[%s7 + $0x40] sm:$0xff]
  %v517 = vld [vmem:[%s7 + $0x48] sm:$0xff]
  %v518 = vld [vmem:[%s7 + $0x50] sm:$0xff]
  %v519 = vld [vmem:[%s7 + $0x58] sm:$0xff]
  %v520 = vld [vmem:[%s7 + $0x60] sm:$0xff]
  %v521 = vld [vmem:[%s7 + $0x68] sm:$0xff]
  %v522 = vld [vmem:[%s7 + $0x70] sm:$0xff]
  %v523 = vld [vmem:[%s7 + $0x78] sm:$0xff]
  %v524 = vld [vmem:[%s7 + $0x80] sm:$0xff]
  %v525 = vld [vmem:[%s7 + $0x88] sm:$0xff]
  %v526 = vld [vmem:[%s7 + $0x90] sm:$0xff]
  %v527 = vld [vmem:[%s7 + $0x98] sm:$0xff]
  %v528 = vld [vmem:[%s7 + $0xa0] sm:$0xff]
  %v529 = vld [vmem:[%s7 + $0xa8] sm:$0xff]
  %v530 = vld [vmem:[%s7 + $0xb0] sm:$0xff]
  %v531 = vld [vmem:[%s7 + $0xb8] sm:$0xff]
  %v532 = vld [vmem:[%s7 + $0xc0] sm:$0xff]
  %v533 = vld [vmem:[%s7 + $0xc8] sm:$0xff]
  %v534 = vld [vmem:[%s7 + $0xd0] sm:$0xff]
  %v535 = vld [vmem:[%s7 + $0xd8] sm:$0xff]
  %v536 = vld [vmem:[%s7 + $0xe0] sm:$0xff]
  %v537 = vld [vmem:[%s7 + $0xe8] sm:$0xff]
  %v538 = vld [vmem:[%s7 + $0xf0] sm:$0xff]
  %v539 = vld [vmem:[%s7 + $0xf8] sm:$0xff]
  %v540 = vld [vmem:[%s7 + $0x100] sm:$0xff]
  %v541 = vld [vmem:[%s7 + $0x108] sm:$0xff]
  %v542 = vld [vmem:[%s7 + $0x110] sm:$0xff]
  %v543 = vld [vmem:[%s7 + $0x118] sm:$0xff]
  %v544 = vld [vmem:[%s7 + $0x120] sm:$0xff]
  %v545 = vld [vmem:[%s7 + $0x128] sm:$0xff]
  %v546 = vld [vmem:[%s7 + $0x130] sm:$0xff]
  %v547 = vld [vmem:[%s7 + $0x138] sm:$0xff]
  %v548 = vld [vmem:[%s7 + $0x140] sm:$0xff]
  %v549 = vld [vmem:[%s7 + $0x148] sm:$0xff]
  %v550 = vld [vmem:[%s7 + $0x150] sm:$0xff]
  %v551 = vld [vmem:[%s7 + $0x158] sm:$0xff]
  %v552 = vld [vmem:[%s7 + $0x160] sm:$0xff]
  %v553 = vld [vmem:[%s7 + $0x168] sm:$0xff]
  %v554 = vld [vmem:[%s7 + $0x170] sm:$0xff]
  %v555 = vld [vmem:[%s7 + $0x178] sm:$0xff]
  %v556 = vld [vmem:[%s7 + $0x180] sm:$0xff]
  %v557 = vld [vmem:[%s7 + $0x188] sm:$0xff]
  %v558 = vld [vmem:[%s7 + $0x190] sm:$0xff]
  %v559 = vld [vmem:[%s7 + $0x198] sm:$0xff]
  %v560 = vld [vmem:[%s7 + $0x1a0] sm:$0xff]
  %v561 = vld [vmem:[%s7 + $0x1a8] sm:$0xff]
  %v562 = vld [vmem:[%s7 + $0x1b0] sm:$0xff]
  %v563 = vld [vmem:[%s7 + $0x1b8] sm:$0xff]
  %v564 = vld [vmem:[%s7 + $0x1c0] sm:$0xff]
  %v565 = vld [vmem:[%s7 + $0x1c8] sm:$0xff]
  %v566 = vld [vmem:[%s7 + $0x1d0] sm:$0xff]
  %v567 = vld [vmem:[%s7 + $0x1d8] sm:$0xff]
  %v568 = vld [vmem:[%s7 + $0x1e0] sm:$0xff]
  %v569 = vld [vmem:[%s7 + $0x1e8] sm:$0xff]
  %v570 = vld [vmem:[%s7 + $0x1f0] sm:$0xff]
  %v571 = vld [vmem:[%s7 + $0x1f8] sm:$0xff]
  %v572 = vld [vmem:[%s7 + $0x200] sm:$0xff]
  %v573 = vld [vmem:[%s7 + $0x208] sm:$0xff]
  %v574 = vld [vmem:[%s7 + $0x210] sm:$0xff]
  %v575 = vld [vmem:[%s7 + $0x218] sm:$0xff]
  %v576 = vld [vmem:[%s7 + $0x220] sm:$0xff]
  %v577 = vld [vmem:[%s7 + $0x228] sm:$0xff]
  %v578 = vld [vmem:[%s7 + $0x230] sm:$0xff]
  %v579 = vld [vmem:[%s7 + $0x238] sm:$0xff]
  %v580 = vld [vmem:[%s7 + $0x240] sm:$0xff]
  %v581 = vld [vmem:[%s7 + $0x248] sm:$0xff]
  %v582 = vld [vmem:[%s7 + $0x250] sm:$0xff]
  %v583 = vld [vmem:[%s7 + $0x258] sm:$0xff]
  %v584 = vld [vmem:[%s7 + $0x260] sm:$0xff]
  %v585 = vld [vmem:[%s7 + $0x268] sm:$0xff]
  %v586 = vld [vmem:[%s7 + $0x270] sm:$0xff]
  %v587 = vld [vmem:[%s7 + $0x278] sm:$0xff]
  %v588 = vld [vmem:[%s7 + $0x280] sm:$0xff]
  %v589 = vld [vmem:[%s7 + $0x288] sm:$0xff]
  %v590 = vld [vmem:[%s7 + $0x290] sm:$0xff]
  %v591 = vld [vmem:[%s7 + $0x298] sm:$0xff]
  %v592 = vld [vmem:[%s7 + $0x2a0] sm:$0xff]
  %v593 = vld [vmem:[%s7 + $0x2a8] sm:$0xff]
  %v594 = vld [vmem:[%s7 + $0x2b0] sm:$0xff]
  %v595 = vld [vmem:[%s7 + $0x2b8] sm:$0xff]
  %v596 = vld [vmem:[%s7 + $0x2c0] sm:$0xff]
  %v597 = vld [vmem:[%s7 + $0x2c8] sm:$0xff]
  %v598 = vld [vmem:[%s7 + $0x2d0] sm:$0xff]
  %v599 = vld [vmem:[%s7 + $0x2d8] sm:$0xff]
  %v600 = vld [vmem:[%s7 + $0x2e0] sm:$0xff]
  %v601 = vld [vmem:[%s7 + $0x2e8] sm:$0xff]
  %v602 = vld [vmem:[%s7 + $0x2f0] sm:$0xff]
  %v603 = vld [vmem:[%s7 + $0x2f8] sm:$0xff]
  %604 = vmatpush.msra.mxu0 %v538
  %605 = vmatpush.msra.mxu0 %v536
  %606 = vmatpush.msra.mxu0 %v534
  %607 = vmatpush.msra.mxu0 %v532
  %608 = vmatpush.msra.mxu0 %v530
  %609 = vmatpush.msra.mxu0 %v528
  %610 = vmatpush.msra.mxu0 %v526
  %611 = vmatpush.msra.mxu0 %v524
  %612 = vmatpush.msra.mxu0 %v522
  %613 = vmatpush.msra.mxu0 %v520
  %614 = vmatpush.msra.mxu0 %v518
  %615 = vmatpush.msra.mxu0 %v516
  %616 = vmatpush.msra.mxu0 %v514
  %617 = vmatpush.msra.mxu0 %v512
  %618 = vmatpush.msra.mxu0 %v510
  %619 = vmatpush.msra.mxu0 %v508
  %620 = vmatmul.f32.gmra.mxu0 %v494
  %v621 = vpop.f32.mrf.mxu0
  %v622 = vadd.f32 0.0, %v621
  %623 = vmatmul.f32.gmra.mxu0 %v486
  %v624 = vpop.f32.mrf.mxu0
  %v625 = vadd.f32 0.0, %v624
  %626 = vmatmul.f32.gmra.mxu0 %v495
  %v627 = vpop.f32.mrf.mxu0
  %v628 = vadd.f32 0.0, %v627
  %629 = vmatmul.f32.gmra.mxu0 %v489
  %v630 = vpop.f32.mrf.mxu0
  %v631 = vadd.f32 0.0, %v630
  %632 = vdwg.mxu0
  %633 = vmatpush.msra.mxu0 %v570
  %634 = vmatpush.msra.mxu0 %v568
  %635 = vmatpush.msra.mxu0 %v566
  %636 = vmatpush.msra.mxu0 %v564
  %637 = vmatpush.msra.mxu0 %v562
  %638 = vmatpush.msra.mxu0 %v560
  %639 = vmatpush.msra.mxu0 %v558
  %640 = vmatpush.msra.mxu0 %v556
  %641 = vmatpush.msra.mxu0 %v554
  %642 = vmatpush.msra.mxu0 %v552
  %643 = vmatpush.msra.mxu0 %v550
  %644 = vmatpush.msra.mxu0 %v548
  %645 = vmatpush.msra.mxu0 %v546
  %646 = vmatpush.msra.mxu0 %v544
  %647 = vmatpush.msra.mxu0 %v542
  %648 = vmatpush.msra.mxu0 %v540
  %649 = vmatmul.f32.gmra.mxu0 %v476
  %v650 = vpop.f32.mrf.mxu0
  %v651 = vadd.f32 %v622, %v650
  %652 = vmatmul.f32.gmra.mxu0 %v477
  %v653 = vpop.f32.mrf.mxu0
  %v654 = vadd.f32 %v625, %v653
  %655 = vmatmul.f32.gmra.mxu0 %v478
  %v656 = vpop.f32.mrf.mxu0
  %v657 = vadd.f32 %v628, %v656
  %658 = vmatmul.f32.gmra.mxu0 %v479
  %v659 = vpop.f32.mrf.mxu0
  %v660 = vadd.f32 %v631, %v659
  %661 = vdwg.mxu0
  %662 = vmatpush.msra.mxu0 %v602
  %663 = vmatpush.msra.mxu0 %v600
  %664 = vmatpush.msra.mxu0 %v598
  %665 = vmatpush.msra.mxu0 %v596
  %666 = vmatpush.msra.mxu0 %v594
  %667 = vmatpush.msra.mxu0 %v592
  %668 = vmatpush.msra.mxu0 %v590
  %669 = vmatpush.msra.mxu0 %v588
  %670 = vmatpush.msra.mxu0 %v586
  %671 = vmatpush.msra.mxu0 %v584
  %672 = vmatpush.msra.mxu0 %v582
  %673 = vmatpush.msra.mxu0 %v580
  %674 = vmatpush.msra.mxu0 %v578
  %675 = vmatpush.msra.mxu0 %v576
  %676 = vmatpush.msra.mxu0 %v574
  %677 = vmatpush.msra.mxu0 %v572
  %678 = vmatmul.f32.gmra.mxu0 %v498
  %v679 = vpop.f32.mrf.mxu0
  %v680 = vadd.f32 %v651, %v679
  %681 = vmatmul.f32.gmra.mxu0 %v506
  %v682 = vpop.f32.mrf.mxu0
  %v683 = vadd.f32 %v654, %v682
  %684 = vmatmul.f32.gmra.mxu0 %v501
  %v685 = vpop.f32.mrf.mxu0
  %v686 = vadd.f32 %v657, %v685
  %687 = vmatmul.f32.gmra.mxu0 %v507
  %v688 = vpop.f32.mrf.mxu0
  %v689 = vadd.f32 %v660, %v688
  %690 = vdwg.mxu0
  %691 = vmatpush.msra.mxu0 %v539
  %692 = vmatpush.msra.mxu0 %v537
  %693 = vmatpush.msra.mxu0 %v535
  %694 = vmatpush.msra.mxu0 %v533
  %695 = vmatpush.msra.mxu0 %v531
  %696 = vmatpush.msra.mxu0 %v529
  %697 = vmatpush.msra.mxu0 %v527
  %698 = vmatpush.msra.mxu0 %v525
  %699 = vmatpush.msra.mxu0 %v523
  %700 = vmatpush.msra.mxu0 %v521
  %701 = vmatpush.msra.mxu0 %v519
  %702 = vmatpush.msra.mxu0 %v517
  %703 = vmatpush.msra.mxu0 %v515
  %704 = vmatpush.msra.mxu0 %v513
  %705 = vmatpush.msra.mxu0 %v511
  %706 = vmatpush.msra.mxu0 %v509
  %707 = vmatmul.f32.gmra.mxu0 %v494
  %v708 = vpop.f32.mrf.mxu0
  %v709 = vadd.f32 0.0, %v708
  %710 = vmatmul.f32.gmra.mxu0 %v486
  %v711 = vpop.f32.mrf.mxu0
  %v712 = vadd.f32 0.0, %v711
  %713 = vmatmul.f32.gmra.mxu0 %v495
  %v714 = vpop.f32.mrf.mxu0
  %v715 = vadd.f32 0.0, %v714
  %716 = vmatmul.f32.gmra.mxu0 %v489
  %v717 = vpop.f32.mrf.mxu0
  %v718 = vadd.f32 0.0, %v717
  %719 = vdwg.mxu0
  %720 = vmatpush.msra.mxu0 %v571
  %721 = vmatpush.msra.mxu0 %v569
  %722 = vmatpush.msra.mxu0 %v567
  %723 = vmatpush.msra.mxu0 %v565
  %724 = vmatpush.msra.mxu0 %v563
  %725 = vmatpush.msra.mxu0 %v561
  %726 = vmatpush.msra.mxu0 %v559
  %727 = vmatpush.msra.mxu0 %v557
  %728 = vmatpush.msra.mxu0 %v555
  %729 = vmatpush.msra.mxu0 %v553
  %730 = vmatpush.msra.mxu0 %v551
  %731 = vmatpush.msra.mxu0 %v549
  %732 = vmatpush.msra.mxu0 %v547
  %733 = vmatpush.msra.mxu0 %v545
  %734 = vmatpush.msra.mxu0 %v543
  %735 = vmatpush.msra.mxu0 %v541
  %736 = vmatmul.f32.gmra.mxu0 %v476
  %v737 = vpop.f32.mrf.mxu0
  %v738 = vadd.f32 %v709, %v737
  %739 = vmatmul.f32.gmra.mxu0 %v477
  %v740 = vpop.f32.mrf.mxu0
  %v741 = vadd.f32 %v712, %v740
  %742 = vmatmul.f32.gmra.mxu0 %v478
  %v743 = vpop.f32.mrf.mxu0
  %v744 = vadd.f32 %v715, %v743
  %745 = vmatmul.f32.gmra.mxu0 %v479
  %v746 = vpop.f32.mrf.mxu0
  %v747 = vadd.f32 %v718, %v746
  %748 = vdwg.mxu0
  %749 = vmatpush.msra.mxu0 %v603
  %750 = vmatpush.msra.mxu0 %v601
  %751 = vmatpush.msra.mxu0 %v599
  %752 = vmatpush.msra.mxu0 %v597
  %753 = vmatpush.msra.mxu0 %v595
  %754 = vmatpush.msra.mxu0 %v593
  %755 = vmatpush.msra.mxu0 %v591
  %756 = vmatpush.msra.mxu0 %v589
  %757 = vmatpush.msra.mxu0 %v587
  %758 = vmatpush.msra.mxu0 %v585
  %759 = vmatpush.msra.mxu0 %v583
  %760 = vmatpush.msra.mxu0 %v581
  %761 = vmatpush.msra.mxu0 %v579
  %762 = vmatpush.msra.mxu0 %v577
  %763 = vmatpush.msra.mxu0 %v575
  %764 = vmatpush.msra.mxu0 %v573
  %765 = vmatmul.f32.gmra.mxu0 %v498
  %v766 = vpop.f32.mrf.mxu0
  %v767 = vadd.f32 %v738, %v766
  %768 = vmatmul.f32.gmra.mxu0 %v506
  %v769 = vpop.f32.mrf.mxu0
  %v770 = vadd.f32 %v741, %v769
  %771 = vmatmul.f32.gmra.mxu0 %v501
  %v772 = vpop.f32.mrf.mxu0
  %v773 = vadd.f32 %v744, %v772
  %774 = vmatmul.f32.gmra.mxu0 %v507
  %v775 = vpop.f32.mrf.mxu0
  %v776 = vadd.f32 %v747, %v775
  %777 = vdwg.mxu0
  %v778 = vld [vmem:[%s8] sm:$0x3]
  %v779 = vld [vmem:[%s9] sm:$0x3]
  %v780 = vadd.f32 %v680, %v683
  %v781 = vadd.f32 %v780, %v686
  %v782 = vadd.f32 %v781, %v689
  %v783 = vrot.slane %v782, 4
  %v784 = vadd.f32 %v782, %v783
  %v785 = vrot.slane %v784, 2
  %v786 = vadd.f32 %v784, %v785
  %v787 = vrot.slane %v786, 1
  %v788 = vadd.f32 %v786, %v787
  %v789 = vadd.f32 %v767, %v770
  %v790 = vadd.f32 %v789, %v773
  %v791 = vadd.f32 %v790, %v776
  %v792 = vrot.slane %v791, 4
  %v793 = vadd.f32 %v791, %v792
  %v794 = vrot.slane %v793, 2
  %v795 = vadd.f32 %v793, %v794
  %v796 = vrot.slane %v795, 1
  %v797 = vadd.f32 %v795, %v796
  %v798 = vmul.f32 %v788, %v407
  %v799 = vmul.f32 %v797, %v407
  %v800 = vsub.f32 %v680, %v798
  %v801 = vsub.f32 %v767, %v799
  %v802 = vsub.f32 %v683, %v798
  %v803 = vsub.f32 %v770, %v799
  %v804 = vsub.f32 %v686, %v798
  %v805 = vsub.f32 %v773, %v799
  %v806 = vsub.f32 %v689, %v798
  %v807 = vsub.f32 %v776, %v799
  %v808 = vmul.f32 %v800, %v800
  %v809 = vmul.f32 %v801, %v801
  %v810 = vmul.f32 %v802, %v802
  %v811 = vmul.f32 %v803, %v803
  %v812 = vmul.f32 %v804, %v804
  %v813 = vmul.f32 %v805, %v805
  %v814 = vmul.f32 %v806, %v806
  %v815 = vmul.f32 %v807, %v807
  %v816 = vadd.f32 %v808, %v810
  %v817 = vadd.f32 %v816, %v812
  %v818 = vadd.f32 %v817, %v814
  %v819 = vrot.slane %v818, 4
  %v820 = vadd.f32 %v818, %v819
  %v821 = vrot.slane %v820, 2
  %v822 = vadd.f32 %v820, %v821
  %v823 = vrot.slane %v822, 1
  %v824 = vadd.f32 %v822, %v823
  %v825 = vadd.f32 %v809, %v811
  %v826 = vadd.f32 %v825, %v813
  %v827 = vadd.f32 %v826, %v815
  %v828 = vrot.slane %v827, 4
  %v829 = vadd.f32 %v827, %v828
  %v830 = vrot.slane %v829, 2
  %v831 = vadd.f32 %v829, %v830
  %v832 = vrot.slane %v831, 1
  %v833 = vadd.f32 %v831, %v832
  %v834 = vmul.f32 %v824, %v407
  %v835 = vmul.f32 %v833, %v407
  %v836 = vadd.f32 %v834, 1e-05
  %v837 = vadd.f32 %v835, 1e-05
  %v838 = vrsqrt.pop %v836
  %v839 = vmul.f32 %v838, %v836
  %v840 = vmul.f32 %v839, %v838
  %v841 = vmul.f32 0.5, %v840
  %v842 = vsub.f32 1.5, %v841
  %v843 = vmul.f32 %v838, %v842
  %vm844 = vweird.f32 %v836
  %vm845 = vweird.f32 %v838
  %vm846 = vmor %vm844, %vm845
  %v847 = vsel %vm846, %v838, %v843
  %v848 = vrsqrt.pop %v837
  %v849 = vmul.f32 %v848, %v837
  %v850 = vmul.f32 %v849, %v848
  %v851 = vmul.f32 0.5, %v850
  %v852 = vsub.f32 1.5, %v851
  %v853 = vmul.f32 %v848, %v852
  %vm854 = vweird.f32 %v837
  %vm855 = vweird.f32 %v848
  %vm856 = vmor %vm854, %vm855
  %v857 = vsel %vm856, %v848, %v853
  %v858 = vmul.f32 %v800, %v847
  %v859 = vmul.f32 %v801, %v857
  %v860 = vmul.f32 %v802, %v847
  %v861 = vmul.f32 %v803, %v857
  %v862 = vmul.f32 %v804, %v847
  %v863 = vmul.f32 %v805, %v857
  %v864 = vmul.f32 %v806, %v847
  %v865 = vmul.f32 %v807, %v857
  %v867 = vperm.slane %v778, 0
  %v868 = vperm.slane %v778, 1
  %v871 = vmul.f32 %v858, %v867
  %v872 = vmul.f32 %v859, %v868
  %v873 = vmul.f32 %v860, %v867
  %v874 = vmul.f32 %v861, %v868
  %v875 = vmul.f32 %v862, %v867
  %v876 = vmul.f32 %v863, %v868
  %v877 = vmul.f32 %v864, %v867
  %v878 = vmul.f32 %v865, %v868
  %v880 = vperm.slane %v779, 0
  %v881 = vperm.slane %v779, 1
  %v884 = vadd.f32 %v871, %v880
  %v885 = vadd.f32 %v872, %v881
  %v886 = vadd.f32 %v873, %v880
  %v887 = vadd.f32 %v874, %v881
  %v888 = vadd.f32 %v875, %v880
  %v889 = vadd.f32 %v876, %v881
  %v890 = vadd.f32 %v877, %v880
  %v891 = vadd.f32 %v878, %v881
  %v892 = vmax.f32 %v884, 0.0
  %v893 = vmax.f32 %v885, 0.0
  %v894 = vmax.f32 %v886, 0.0
  %v895 = vmax.f32 %v887, 0.0
  %v896 = vmax.f32 %v888, 0.0
  %v897 = vmax.f32 %v889, 0.0
  %v898 = vmax.f32 %v890, 0.0
  %v899 = vmax.f32 %v891, 0.0
  %v900 = vld [vmem:[%s10] sm:$0xff]
  %v901 = vld [vmem:[%s10 + $0x8] sm:$0xff]
  %v902 = vld [vmem:[%s10 + $0x10] sm:$0xff]
  %v903 = vld [vmem:[%s10 + $0x18] sm:$0xff]
  %v904 = vld [vmem:[%s10 + $0x20] sm:$0xff]
  %v905 = vld [vmem:[%s10 + $0x28] sm:$0xff]
  %v906 = vld [vmem:[%s10 + $0x30] sm:$0xff]
  %v907 = vld [vmem:[%s10 + $0x38] sm:$0xff]
  %v908 = vld [vmem:[%s10 + $0x40] sm:$0xff]
  %v909 = vld [vmem:[%s10 + $0x48] sm:$0xff]
  %v910 = vld [vmem:[%s10 + $0x50] sm:$0xff]
  %v911 = vld [vmem:[%s10 + $0x58] sm:$0xff]
  %v912 = vld [vmem:[%s10 + $0x60] sm:$0xff]
  %v913 = vld [vmem:[%s10 + $0x68] sm:$0xff]
  %v914 = vld [vmem:[%s10 + $0x70] sm:$0xff]
  %v915 = vld [vmem:[%s10 + $0x78] sm:$0xff]
  %v916 = vld [vmem:[%s10 + $0x80] sm:$0xff]
  %v917 = vld [vmem:[%s10 + $0x88] sm:$0xff]
  %v918 = vld [vmem:[%s10 + $0x90] sm:$0xff]
  %v919 = vld [vmem:[%s10 + $0x98] sm:$0xff]
  %v920 = vld [vmem:[%s10 + $0xa0] sm:$0xff]
  %v921 = vld [vmem:[%s10 + $0xa8] sm:$0xff]
  %v922 = vld [vmem:[%s10 + $0xb0] sm:$0xff]
  %v923 = vld [vmem:[%s10 + $0xb8] sm:$0xff]
  %v924 = vld [vmem:[%s10 + $0xc0] sm:$0xff]
  %v925 = vld [vmem:[%s10 + $0xc8] sm:$0xff]
  %v926 = vld [vmem:[%s10 + $0xd0] sm:$0xff]
  %v927 = vld [vmem:[%s10 + $0xd8] sm:$0xff]
  %v928 = vld [vmem:[%s10 + $0xe0] sm:$0xff]
  %v929 = vld [vmem:[%s10 + $0xe8] sm:$0xff]
  %v930 = vld [vmem:[%s10 + $0xf0] sm:$0xff]
  %v931 = vld [vmem:[%s10 + $0xf8] sm:$0xff]
  %932 = vmatpush.msra.mxu0 %v915
  %933 = vmatpush.msra.mxu0 %v914
  %934 = vmatpush.msra.mxu0 %v913
  %935 = vmatpush.msra.mxu0 %v912
  %936 = vmatpush.msra.mxu0 %v911
  %937 = vmatpush.msra.mxu0 %v910
  %938 = vmatpush.msra.mxu0 %v909
  %939 = vmatpush.msra.mxu0 %v908
  %940 = vmatpush.msra.mxu0 %v907
  %941 = vmatpush.msra.mxu0 %v906
  %942 = vmatpush.msra.mxu0 %v905
  %943 = vmatpush.msra.mxu0 %v904
  %944 = vmatpush.msra.mxu0 %v903
  %945 = vmatpush.msra.mxu0 %v902
  %946 = vmatpush.msra.mxu0 %v901
  %947 = vmatpush.msra.mxu0 %v900
  %948 = vmatmul.f32.gmra.mxu0 %v892
  %v949 = vpop.f32.mrf.mxu0
  %v950 = vadd.f32 0.0, %v949
  %951 = vmatmul.f32.gmra.mxu0 %v894
  %v952 = vpop.f32.mrf.mxu0
  %v953 = vadd.f32 0.0, %v952
  %954 = vmatmul.f32.gmra.mxu0 %v896
  %v955 = vpop.f32.mrf.mxu0
  %v956 = vadd.f32 0.0, %v955
  %957 = vmatmul.f32.gmra.mxu0 %v898
  %v958 = vpop.f32.mrf.mxu0
  %v959 = vadd.f32 0.0, %v958
  %960 = vdwg.mxu0
  %961 = vmatpush.msra.mxu0 %v931
  %962 = vmatpush.msra.mxu0 %v930
  %963 = vmatpush.msra.mxu0 %v929
  %964 = vmatpush.msra.mxu0 %v928
  %965 = vmatpush.msra.mxu0 %v927
  %966 = vmatpush.msra.mxu0 %v926
  %967 = vmatpush.msra.mxu0 %v925
  %968 = vmatpush.msra.mxu0 %v924
  %969 = vmatpush.msra.mxu0 %v923
  %970 = vmatpush.msra.mxu0 %v922
  %971 = vmatpush.msra.mxu0 %v921
  %972 = vmatpush.msra.mxu0 %v920
  %973 = vmatpush.msra.mxu0 %v919
  %974 = vmatpush.msra.mxu0 %v918
  %975 = vmatpush.msra.mxu0 %v917
  %976 = vmatpush.msra.mxu0 %v916
  %977 = vmatmul.f32.gmra.mxu0 %v893
  %v978 = vpop.f32.mrf.mxu0
  %v979 = vadd.f32 %v950, %v978
  %980 = vmatmul.f32.gmra.mxu0 %v895
  %v981 = vpop.f32.mrf.mxu0
  %v982 = vadd.f32 %v953, %v981
  %983 = vmatmul.f32.gmra.mxu0 %v897
  %v984 = vpop.f32.mrf.mxu0
  %v985 = vadd.f32 %v956, %v984
  %986 = vmatmul.f32.gmra.mxu0 %v899
  %v987 = vpop.f32.mrf.mxu0
  %v988 = vadd.f32 %v959, %v987
  %989 = vdwg.mxu0
  %s990 = scalar_lea.vmem %s10, 256
  %v991 = vld [vmem:[%s990] sm:$0xff]
  %v992 = vld [vmem:[%s990 + $0x8] sm:$0xff]
  %v993 = vld [vmem:[%s990 + $0x10] sm:$0xff]
  %v994 = vld [vmem:[%s990 + $0x18] sm:$0xff]
  %v995 = vld [vmem:[%s990 + $0x20] sm:$0xff]
  %v996 = vld [vmem:[%s990 + $0x28] sm:$0xff]
  %v997 = vld [vmem:[%s990 + $0x30] sm:$0xff]
  %v998 = vld [vmem:[%s990 + $0x38] sm:$0xff]
  %v999 = vld [vmem:[%s990 + $0x40] sm:$0xff]
  %v1000 = vld [vmem:[%s990 + $0x48] sm:$0xff]
  %v1001 = vld [vmem:[%s990 + $0x50] sm:$0xff]
  %v1002 = vld [vmem:[%s990 + $0x58] sm:$0xff]
  %v1003 = vld [vmem:[%s990 + $0x60] sm:$0xff]
  %v1004 = vld [vmem:[%s990 + $0x68] sm:$0xff]
  %v1005 = vld [vmem:[%s990 + $0x70] sm:$0xff]
  %v1006 = vld [vmem:[%s990 + $0x78] sm:$0xff]
  %v1007 = vld [vmem:[%s990 + $0x80] sm:$0xff]
  %v1008 = vld [vmem:[%s990 + $0x88] sm:$0xff]
  %v1009 = vld [vmem:[%s990 + $0x90] sm:$0xff]
  %v1010 = vld [vmem:[%s990 + $0x98] sm:$0xff]
  %v1011 = vld [vmem:[%s990 + $0xa0] sm:$0xff]
  %v1012 = vld [vmem:[%s990 + $0xa8] sm:$0xff]
  %v1013 = vld [vmem:[%s990 + $0xb0] sm:$0xff]
  %v1014 = vld [vmem:[%s990 + $0xb8] sm:$0xff]
  %v1015 = vld [vmem:[%s990 + $0xc0] sm:$0xff]
  %v1016 = vld [vmem:[%s990 + $0xc8] sm:$0xff]
  %v1017 = vld [vmem:[%s990 + $0xd0] sm:$0xff]
  %v1018 = vld [vmem:[%s990 + $0xd8] sm:$0xff]
  %v1019 = vld [vmem:[%s990 + $0xe0] sm:$0xff]
  %v1020 = vld [vmem:[%s990 + $0xe8] sm:$0xff]
  %v1021 = vld [vmem:[%s990 + $0xf0] sm:$0xff]
  %v1022 = vld [vmem:[%s990 + $0xf8] sm:$0xff]
  %1023 = vmatpush.msra.mxu0 %v1006
  %1024 = vmatpush.msra.mxu0 %v1005
  %1025 = vmatpush.msra.mxu0 %v1004
  %1026 = vmatpush.msra.mxu0 %v1003
  %1027 = vmatpush.msra.mxu0 %v1002
  %1028 = vmatpush.msra.mxu0 %v1001
  %1029 = vmatpush.msra.mxu0 %v1000
  %1030 = vmatpush.msra.mxu0 %v999
  %1031 = vmatpush.msra.mxu0 %v998
  %1032 = vmatpush.msra.mxu0 %v997
  %1033 = vmatpush.msra.mxu0 %v996
  %1034 = vmatpush.msra.mxu0 %v995
  %1035 = vmatpush.msra.mxu0 %v994
  %1036 = vmatpush.msra.mxu0 %v993
  %1037 = vmatpush.msra.mxu0 %v992
  %1038 = vmatpush.msra.mxu0 %v991
  %1039 = vmatmul.f32.gmra.mxu0 %v892
  %v1040 = vpop.f32.mrf.mxu0
  %v1041 = vadd.f32 0.0, %v1040
  %1042 = vmatmul.f32.gmra.mxu0 %v894
  %v1043 = vpop.f32.mrf.mxu0
  %v1044 = vadd.f32 0.0, %v1043
  %1045 = vmatmul.f32.gmra.mxu0 %v896
  %v1046 = vpop.f32.mrf.mxu0
  %v1047 = vadd.f32 0.0, %v1046
  %1048 = vmatmul.f32.gmra.mxu0 %v898
  %v1049 = vpop.f32.mrf.mxu0
  %v1050 = vadd.f32 0.0, %v1049
  %1051 = vdwg.mxu0
  %1052 = vmatpush.msra.mxu0 %v1022
  %1053 = vmatpush.msra.mxu0 %v1021
  %1054 = vmatpush.msra.mxu0 %v1020
  %1055 = vmatpush.msra.mxu0 %v1019
  %1056 = vmatpush.msra.mxu0 %v1018
  %1057 = vmatpush.msra.mxu0 %v1017
  %1058 = vmatpush.msra.mxu0 %v1016
  %1059 = vmatpush.msra.mxu0 %v1015
  %1060 = vmatpush.msra.mxu0 %v1014
  %1061 = vmatpush.msra.mxu0 %v1013
  %1062 = vmatpush.msra.mxu0 %v1012
  %1063 = vmatpush.msra.mxu0 %v1011
  %1064 = vmatpush.msra.mxu0 %v1010
  %1065 = vmatpush.msra.mxu0 %v1009
  %1066 = vmatpush.msra.mxu0 %v1008
  %1067 = vmatpush.msra.mxu0 %v1007
  %1068 = vmatmul.f32.gmra.mxu0 %v893
  %v1069 = vpop.f32.mrf.mxu0
  %v1070 = vadd.f32 %v1041, %v1069
  %1071 = vmatmul.f32.gmra.mxu0 %v895
  %v1072 = vpop.f32.mrf.mxu0
  %v1073 = vadd.f32 %v1044, %v1072
  %1074 = vmatmul.f32.gmra.mxu0 %v897
  %v1075 = vpop.f32.mrf.mxu0
  %v1076 = vadd.f32 %v1047, %v1075
  %1077 = vmatmul.f32.gmra.mxu0 %v899
  %v1078 = vpop.f32.mrf.mxu0
  %v1079 = vadd.f32 %v1050, %v1078
  %1080 = vdwg.mxu0
  %s1081 = scalar_lea.vmem %s10, 512
  %v1082 = vld [vmem:[%s1081] sm:$0xff]
  %v1083 = vld [vmem:[%s1081 + $0x8] sm:$0xff]
  %v1084 = vld [vmem:[%s1081 + $0x10] sm:$0xff]
  %v1085 = vld [vmem:[%s1081 + $0x18] sm:$0xff]
  %v1086 = vld [vmem:[%s1081 + $0x20] sm:$0xff]
  %v1087 = vld [vmem:[%s1081 + $0x28] sm:$0xff]
  %v1088 = vld [vmem:[%s1081 + $0x30] sm:$0xff]
  %v1089 = vld [vmem:[%s1081 + $0x38] sm:$0xff]
  %v1090 = vld [vmem:[%s1081 + $0x40] sm:$0xff]
  %v1091 = vld [vmem:[%s1081 + $0x48] sm:$0xff]
  %v1092 = vld [vmem:[%s1081 + $0x50] sm:$0xff]
  %v1093 = vld [vmem:[%s1081 + $0x58] sm:$0xff]
  %v1094 = vld [vmem:[%s1081 + $0x60] sm:$0xff]
  %v1095 = vld [vmem:[%s1081 + $0x68] sm:$0xff]
  %v1096 = vld [vmem:[%s1081 + $0x70] sm:$0xff]
  %v1097 = vld [vmem:[%s1081 + $0x78] sm:$0xff]
  %v1098 = vld [vmem:[%s1081 + $0x80] sm:$0xff]
  %v1099 = vld [vmem:[%s1081 + $0x88] sm:$0xff]
  %v1100 = vld [vmem:[%s1081 + $0x90] sm:$0xff]
  %v1101 = vld [vmem:[%s1081 + $0x98] sm:$0xff]
  %v1102 = vld [vmem:[%s1081 + $0xa0] sm:$0xff]
  %v1103 = vld [vmem:[%s1081 + $0xa8] sm:$0xff]
  %v1104 = vld [vmem:[%s1081 + $0xb0] sm:$0xff]
  %v1105 = vld [vmem:[%s1081 + $0xb8] sm:$0xff]
  %v1106 = vld [vmem:[%s1081 + $0xc0] sm:$0xff]
  %v1107 = vld [vmem:[%s1081 + $0xc8] sm:$0xff]
  %v1108 = vld [vmem:[%s1081 + $0xd0] sm:$0xff]
  %v1109 = vld [vmem:[%s1081 + $0xd8] sm:$0xff]
  %v1110 = vld [vmem:[%s1081 + $0xe0] sm:$0xff]
  %v1111 = vld [vmem:[%s1081 + $0xe8] sm:$0xff]
  %v1112 = vld [vmem:[%s1081 + $0xf0] sm:$0xff]
  %v1113 = vld [vmem:[%s1081 + $0xf8] sm:$0xff]
  %1114 = vmatpush.msra.mxu0 %v1097
  %1115 = vmatpush.msra.mxu0 %v1096
  %1116 = vmatpush.msra.mxu0 %v1095
  %1117 = vmatpush.msra.mxu0 %v1094
  %1118 = vmatpush.msra.mxu0 %v1093
  %1119 = vmatpush.msra.mxu0 %v1092
  %1120 = vmatpush.msra.mxu0 %v1091
  %1121 = vmatpush.msra.mxu0 %v1090
  %1122 = vmatpush.msra.mxu0 %v1089
  %1123 = vmatpush.msra.mxu0 %v1088
  %1124 = vmatpush.msra.mxu0 %v1087
  %1125 = vmatpush.msra.mxu0 %v1086
  %1126 = vmatpush.msra.mxu0 %v1085
  %1127 = vmatpush.msra.mxu0 %v1084
  %1128 = vmatpush.msra.mxu0 %v1083
  %1129 = vmatpush.msra.mxu0 %v1082
  %1130 = vmatmul.f32.gmra.mxu0 %v892
  %v1131 = vpop.f32.mrf.mxu0
  %v1132 = vadd.f32 0.0, %v1131
  %1133 = vmatmul.f32.gmra.mxu0 %v894
  %v1134 = vpop.f32.mrf.mxu0
  %v1135 = vadd.f32 0.0, %v1134
  %1136 = vmatmul.f32.gmra.mxu0 %v896
  %v1137 = vpop.f32.mrf.mxu0
  %v1138 = vadd.f32 0.0, %v1137
  %1139 = vmatmul.f32.gmra.mxu0 %v898
  %v1140 = vpop.f32.mrf.mxu0
  %v1141 = vadd.f32 0.0, %v1140
  %1142 = vdwg.mxu0
  %1143 = vmatpush.msra.mxu0 %v1113
  %1144 = vmatpush.msra.mxu0 %v1112
  %1145 = vmatpush.msra.mxu0 %v1111
  %1146 = vmatpush.msra.mxu0 %v1110
  %1147 = vmatpush.msra.mxu0 %v1109
  %1148 = vmatpush.msra.mxu0 %v1108
  %1149 = vmatpush.msra.mxu0 %v1107
  %1150 = vmatpush.msra.mxu0 %v1106
  %1151 = vmatpush.msra.mxu0 %v1105
  %1152 = vmatpush.msra.mxu0 %v1104
  %1153 = vmatpush.msra.mxu0 %v1103
  %1154 = vmatpush.msra.mxu0 %v1102
  %1155 = vmatpush.msra.mxu0 %v1101
  %1156 = vmatpush.msra.mxu0 %v1100
  %1157 = vmatpush.msra.mxu0 %v1099
  %1158 = vmatpush.msra.mxu0 %v1098
  %1159 = vmatmul.f32.gmra.mxu0 %v893
  %v1160 = vpop.f32.mrf.mxu0
  %v1161 = vadd.f32 %v1132, %v1160
  %1162 = vmatmul.f32.gmra.mxu0 %v895
  %v1163 = vpop.f32.mrf.mxu0
  %v1164 = vadd.f32 %v1135, %v1163
  %1165 = vmatmul.f32.gmra.mxu0 %v897
  %v1166 = vpop.f32.mrf.mxu0
  %v1167 = vadd.f32 %v1138, %v1166
  %1168 = vmatmul.f32.gmra.mxu0 %v899
  %v1169 = vpop.f32.mrf.mxu0
  %v1170 = vadd.f32 %v1141, %v1169
  %1171 = vdwg.mxu0
  %v1176 = vrot.slane %v979, 7
  %v1177 = vrot.slane %v982, 7
  %v1178 = vsel %vm172, %v1176, %v1177
  %v1179 = vrot.slane %v985, 7
  %v1180 = vrot.slane %v988, 7
  %v1181 = vsel %vm172, %v1179, %v1180
  %v1186 = vsel %vm172, 0.0, %v1176
  %v1187 = vsel %vm172, 0.0, %v1179
  %v1188 = vadd.f32 %v1070, %v1186
  %v1189 = vadd.f32 %v1073, %v1178
  %v1190 = vadd.f32 %v1076, %v1187
  %v1191 = vadd.f32 %v1079, %v1181
  %v1196 = vrot.slane %v1161, 1
  %v1197 = vrot.slane %v1164, 1
  %v1198 = vsel %vm183, %v1196, %v1197
  %v1199 = vrot.slane %v1167, 1
  %v1200 = vrot.slane %v1170, 1
  %v1201 = vsel %vm183, %v1199, %v1200
  %v1206 = vsel %vm183, %v1197, 0.0
  %v1207 = vsel %vm183, %v1200, 0.0
  %v1208 = vadd.f32 %v1188, %v1198
  %v1209 = vadd.f32 %v1189, %v1206
  %v1210 = vadd.f32 %v1190, %v1201
  %v1211 = vadd.f32 %v1191, %v1207
  %v1212 = vld [vmem:[%s11] sm:$0x1]
  %v1213 = vld [vmem:[%s12] sm:$0x1]
  %v1214 = vsel %vm128, %v1208, 0.0
  %v1215 = vsel %vm128, %v1209, 0.0
  %v1216 = vadd.f32 %v1214, %v1215
  %v1217 = vsel %vm128, %v1210, 0.0
  %v1218 = vadd.f32 %v1216, %v1217
  %v1219 = vsel %vm128, %v1211, 0.0
  %v1220 = vadd.f32 %v1218, %v1219
  %v1221 = vrot.slane %v1220, 4
  %v1222 = vadd.f32 %v1220, %v1221
  %v1223 = vrot.slane %v1222, 2
  %v1224 = vadd.f32 %v1222, %v1223
  %v1225 = vrot.slane %v1224, 1
  %v1226 = vadd.f32 %v1224, %v1225
  %v1227 = vmul.f32 %v1226, %v407
  %v1228 = vsub.f32 %v1208, %v1227
  %v1229 = vsub.f32 %v1209, %v1227
  %v1230 = vsub.f32 %v1210, %v1227
  %v1231 = vsub.f32 %v1211, %v1227
  %v1232 = vmul.f32 %v1228, %v1228
  %v1233 = vmul.f32 %v1229, %v1229
  %v1234 = vmul.f32 %v1230, %v1230
  %v1235 = vmul.f32 %v1231, %v1231
  %v1236 = vsel %vm128, %v1232, 0.0
  %v1237 = vsel %vm128, %v1233, 0.0
  %v1238 = vadd.f32 %v1236, %v1237
  %v1239 = vsel %vm128, %v1234, 0.0
  %v1240 = vadd.f32 %v1238, %v1239
  %v1241 = vsel %vm128, %v1235, 0.0
  %v1242 = vadd.f32 %v1240, %v1241
  %v1243 = vrot.slane %v1242, 4
  %v1244 = vadd.f32 %v1242, %v1243
  %v1245 = vrot.slane %v1244, 2
  %v1246 = vadd.f32 %v1244, %v1245
  %v1247 = vrot.slane %v1246, 1
  %v1248 = vadd.f32 %v1246, %v1247
  %v1249 = vmul.f32 %v1248, %v407
  %v1250 = vadd.f32 %v1249, 1e-05
  %v1251 = vrsqrt.pop %v1250
  %v1252 = vmul.f32 %v1251, %v1250
  %v1253 = vmul.f32 %v1252, %v1251
  %v1254 = vmul.f32 0.5, %v1253
  %v1255 = vsub.f32 1.5, %v1254
  %v1256 = vmul.f32 %v1251, %v1255
  %vm1257 = vweird.f32 %v1250
  %vm1258 = vweird.f32 %v1251
  %vm1259 = vmor %vm1257, %vm1258
  %v1260 = vsel %vm1259, %v1251, %v1256
  %v1261 = vmul.f32 %v1228, %v1260
  %v1262 = vmul.f32 %v1229, %v1260
  %v1263 = vmul.f32 %v1230, %v1260
  %v1264 = vmul.f32 %v1231, %v1260
  %v1266 = vperm.slane %v1212, 0
  %v1268 = vmul.f32 %v1261, %v1266
  %v1269 = vmul.f32 %v1262, %v1266
  %v1270 = vmul.f32 %v1263, %v1266
  %v1271 = vmul.f32 %v1264, %v1266
  %v1273 = vperm.slane %v1213, 0
  %v1275 = vadd.f32 %v1268, %v1273
  %v1276 = vadd.f32 %v1269, %v1273
  %v1277 = vadd.f32 %v1270, %v1273
  %v1278 = vadd.f32 %v1271, %v1273
  %v1279 = vadd.f32 %v1275, %v124
  %v1280 = vadd.f32 %v1276, %v125
  %v1281 = vadd.f32 %v1277, %v126
  %v1282 = vadd.f32 %v1278, %v127
  %1283 = vst.msk [vmem:[%s14] sm:$0xff] %vm128, %v1279
  %1284 = vst.msk [vmem:[%s14 + $0x8] sm:$0xff] %vm128, %v1280
  %1285 = vst.msk [vmem:[%s14 + $0x10] sm:$0xff] %vm128, %v1281
  %1286 = vst.msk [vmem:[%s14 + $0x18] sm:$0xff] %vm128, %v1282
  // Predicated region
  $region54: #{fastspeech_forward.12} parent=0 // pred_check
    _
  $region55: #{fastspeech_forward.12} parent=0 // pred_check_branch
    %1288 = sbr.rel (0) target = $region57
  $region56: #{fastspeech_forward.12} parent=0 // pred_region
    _
  $region57: #{fastspeech_forward.12} parent=0 // pred_fallthru
    _
  // Predicated region
  $region58: #{fastspeech_forward.12} parent=0 // pred_check
    _
  $region59: #{fastspeech_forward.12} parent=0 // pred_check_branch
    %1290 = sbr.rel (0) target = $region61
  $region60: #{fastspeech_forward.12} parent=0 // pred_region
    _
  $region61: #{fastspeech_forward.12} parent=0 // pred_fallthru
    _
  // Predicated region
  $region62: #{fastspeech_forward.12} parent=0 // pred_check
    _
  $region63: #{fastspeech_forward.12} parent=0 // pred_check_branch
    %1292 = sbr.rel (0) target = $region65
  $region64: #{fastspeech_forward.12} parent=0 // pred_region
    _
  $region65: #{fastspeech_forward.12} parent=0 // pred_fallthru
    _
  // Predicated region
  $region66: #{fastspeech_forward.12} parent=0 // pred_check
    _
  $region67: #{fastspeech_forward.12} parent=0 // pred_check_branch
    %1294 = sbr.rel (0) target = $region69
  $region68: #{fastspeech_forward.12} parent=0 // pred_region
    _
  $region69: #{fastspeech_forward.12} parent=0 // pred_fallthru
    _

// kernel: fastspeech_forward.13
$region0: #{fastspeech_forward.13}
  #allocation0 [shape = 'u32[]', space=smem, size = 0x4, offset = 0x4, fixed_abs, tag = 'smem constant byte address 0x4 - core index']
  #allocation1 [shape = 'u32[72,128]{1,0:T(1,128)}', space=vmem, size = 0x9000, scoped, tag = 'internal scratch']
  #allocation2 [shape = 'f32[2,16,16]{2,1,0:T(8,128)}', space=vmem, size = 0x4000, scoped, tag = 'scratch operand']
  #allocation3 [shape = 'f32[2,16,16]{2,1,0:T(8,128)}', space=vmem, size = 0x4000, scoped, tag = 'scratch operand']
  %s0 = inlined_call_operand.vmem [shape: f32[2,16,16], index: 0, kind: input, shape index: {}]
  %s1 = inlined_call_operand.vmem [shape: f32[4,16,32], index: 1, kind: input, shape index: {}]
  %s2 = inlined_call_operand.vmem [shape: f32[4,1,32], index: 2, kind: input, shape index: {}]
  %s3 = inlined_call_operand.vmem [shape: f32[16,48], index: 3, kind: input, shape index: {}]
  %s4 = inlined_call_operand.vmem [shape: f32[16,48], index: 4, kind: input, shape index: {}]
  %s5 = inlined_call_operand.vmem [shape: f32[1,48], index: 5, kind: input, shape index: {}]
  %s6 = inlined_call_operand.vmem [shape: f32[1,48], index: 6, kind: input, shape index: {}]
  %s7 = inlined_call_operand.vmem [shape: f32[16,48], index: 7, kind: input, shape index: {}]
  %s8 = inlined_call_operand.vmem [shape: f32[16,48], index: 8, kind: input, shape index: {}]
  %s9 = inlined_call_operand.vmem [shape: f32[1,48], index: 9, kind: input, shape index: {}]
  %s10 = inlined_call_operand.vmem [shape: f32[1,48], index: 10, kind: input, shape index: {}]
  %s11 = inlined_call_operand.vmem [shape: f32[32,16], index: 11, kind: input, shape index: {}]
  %s12 = inlined_call_operand.vmem [shape: f32[1,1,16], index: 12, kind: input, shape index: {}]
  %s13 = inlined_call_operand.vmem [shape: f32[2,16,16], index: 13, kind: input, shape index: {}]
  %s14 = inlined_call_operand.vmem [shape: f32[2,16,1], index: 14, kind: input, shape index: {}]
  %s15 = inlined_call_operand.hbm [shape: f32[2,16,16], index: 15, kind: output, shape index: {}]
  %s16 = sld [smem:[#allocation0]]
  $region70: #{fastspeech_forward.13} parent=0
    _
  %s18 = ssub.s32 1, %s16
  %s19 = scalar_select 0, %s18, %s16
  $region1: #{fastspeech_forward.13} parent=0
    #allocation4 [shape = 'u8[16384]{0}', space=vmem, size = 0x4000, scoped, tag = 'output window, operand 0, single buffered']
    #allocation5 [shape = 's32[1]{0}', space=sflag, size = 0x4, scoped, tag = 'scoped memory for fastspeech_forward.13']
    %20 = vsyncpa [#allocation5], 0
    // Predicated region
    $region2: #{fastspeech_forward.13} parent=1 // pred_check
      _
    $region3: #{fastspeech_forward.13} parent=1 // pred_check_branch
      %22 = sbr.rel (0) target = $region5
    $region4: #{fastspeech_forward.13} parent=1 // pred_region
      _
    $region5: #{fastspeech_forward.13} parent=1 // pred_fallthru
      _
    // Predicated region
    $region6: #{fastspeech_forward.13} parent=1 // pred_check
      _
    $region7: #{fastspeech_forward.13} parent=1 // pred_check_branch
      %24 = sbr.rel (0) target = $region9
    $region8: #{fastspeech_forward.13} parent=1 // pred_region
      _
    $region9: #{fastspeech_forward.13} parent=1 // pred_fallthru
      _
    // Predicated region
    $region10: #{fastspeech_forward.13} parent=1 // pred_check
      _
    $region11: #{fastspeech_forward.13} parent=1 // pred_check_branch
      %26 = sbr.rel (0) target = $region13
    $region12: #{fastspeech_forward.13} parent=1 // pred_region
      _
    $region13: #{fastspeech_forward.13} parent=1 // pred_fallthru
      _
    // Predicated region
    $region14: #{fastspeech_forward.13} parent=1 // pred_check
      _
    $region15: #{fastspeech_forward.13} parent=1 // pred_check_branch
      %28 = sbr.rel (0) target = $region17
    $region16: #{fastspeech_forward.13} parent=1 // pred_region
      _
    $region17: #{fastspeech_forward.13} parent=1 // pred_fallthru
      _
    // Predicated region
    $region18: #{fastspeech_forward.13} parent=1 // pred_check
      _
    $region19: #{fastspeech_forward.13} parent=1 // pred_check_branch
      %30 = sbr.rel (0) target = $region21
    $region20: #{fastspeech_forward.13} parent=1 // pred_region
      _
    $region21: #{fastspeech_forward.13} parent=1 // pred_fallthru
      _
    // Predicated region
    $region22: #{fastspeech_forward.13} parent=1 // pred_check
      _
    $region23: #{fastspeech_forward.13} parent=1 // pred_check_branch
      %32 = sbr.rel (0) target = $region25
    $region24: #{fastspeech_forward.13} parent=1 // pred_region
      _
    $region25: #{fastspeech_forward.13} parent=1 // pred_fallthru
      _
    // Predicated region
    $region26: #{fastspeech_forward.13} parent=1 // pred_check
      _
    $region27: #{fastspeech_forward.13} parent=1 // pred_check_branch
      %34 = sbr.rel (0) target = $region29
    $region28: #{fastspeech_forward.13} parent=1 // pred_region
      _
    $region29: #{fastspeech_forward.13} parent=1 // pred_fallthru
      _
    // Predicated region
    $region30: #{fastspeech_forward.13} parent=1 // pred_check
      _
    $region31: #{fastspeech_forward.13} parent=1 // pred_check_branch
      %36 = sbr.rel (0) target = $region33
    $region32: #{fastspeech_forward.13} parent=1 // pred_region
      _
    $region33: #{fastspeech_forward.13} parent=1 // pred_fallthru
      _
    // Predicated region
    $region34: #{fastspeech_forward.13} parent=1 // pred_check
      _
    $region35: #{fastspeech_forward.13} parent=1 // pred_check_branch
      %38 = sbr.rel (0) target = $region37
    $region36: #{fastspeech_forward.13} parent=1 // pred_region
      _
    $region37: #{fastspeech_forward.13} parent=1 // pred_fallthru
      _
    // Predicated region
    $region38: #{fastspeech_forward.13} parent=1 // pred_check
      _
    $region39: #{fastspeech_forward.13} parent=1 // pred_check_branch
      %40 = sbr.rel (0) target = $region41
    $region40: #{fastspeech_forward.13} parent=1 // pred_region
      _
    $region41: #{fastspeech_forward.13} parent=1 // pred_fallthru
      _
    // Predicated region
    $region42: #{fastspeech_forward.13} parent=1 // pred_check
      _
    $region43: #{fastspeech_forward.13} parent=1 // pred_check_branch
      %42 = sbr.rel (0) target = $region45
    $region44: #{fastspeech_forward.13} parent=1 // pred_region
      _
    $region45: #{fastspeech_forward.13} parent=1 // pred_fallthru
      _
    // Predicated region
    $region46: #{fastspeech_forward.13} parent=1 // pred_check
      _
    $region47: #{fastspeech_forward.13} parent=1 // pred_check_branch
      %44 = sbr.rel (0) target = $region49
    $region48: #{fastspeech_forward.13} parent=1 // pred_region
      _
    $region49: #{fastspeech_forward.13} parent=1 // pred_fallthru
      _
    // Predicated region
    $region50: #{fastspeech_forward.13} parent=1 // pred_check
      _
    $region51: #{fastspeech_forward.13} parent=1 // pred_check_branch
      %46 = sbr.rel (0) target = $region53
    $region52: #{fastspeech_forward.13} parent=1 // pred_region
      _
    $region53: #{fastspeech_forward.13} parent=1 // pred_fallthru
      _
    // Predicated region
    $region54: #{fastspeech_forward.13} parent=1 // pred_check
      _
    $region55: #{fastspeech_forward.13} parent=1 // pred_check_branch
      %48 = sbr.rel (0) target = $region57
    $region56: #{fastspeech_forward.13} parent=1 // pred_region
      _
    $region57: #{fastspeech_forward.13} parent=1 // pred_fallthru
      _
    // Predicated region
    $region58: #{fastspeech_forward.13} parent=1 // pred_check
      _
    $region59: #{fastspeech_forward.13} parent=1 // pred_check_branch
      %50 = sbr.rel (0) target = $region61
    $region60: #{fastspeech_forward.13} parent=1 // pred_region
      _
    $region61: #{fastspeech_forward.13} parent=1 // pred_fallthru
      _
    %v51 = vld [vmem:[%s0] sm:$0xff]
    %v52 = vld [vmem:[%s0 + $0x8] sm:$0xff]
    %v53 = vld [vmem:[%s0 + $0x10] sm:$0xff]
    %v54 = vld [vmem:[%s0 + $0x18] sm:$0xff]
    %v55 = vld [vmem:[%s1] sm:$0xff]
    %v56 = vld [vmem:[%s1 + $0x8] sm:$0xff]
    %v57 = vld [vmem:[%s2] sm:$0x1]
    %v59 = vperm.slane %v57, 0
    %vm61 = vcmask 130048
    %v63 = vsel %vm61, %v51, 0
    %v66 = vsel %vm61, %v52, 0
    %v69 = vsel %vm61, %v53, 0
    %v72 = vsel %vm61, %v54, 0
    %74 = vmatpush.msra.mxu0 0.0
    %75 = vmatpush.msra.mxu0 0.0
    %76 = vmatpush.msra.mxu0 0.0
    %77 = vmatpush.msra.mxu0 0.0
    %78 = vmatpush.msra.mxu0 0.0
    %79 = vmatpush.msra.mxu0 0.0
    %80 = vmatpush.msra.mxu0 0.0
    %81 = vmatpush.msra.mxu0 0.0
    %82 = vmatpush.msra.mxu0 0.0
    %83 = vmatpush.msra.mxu0 0.0
    %84 = vmatpush.msra.mxu0 0.0
    %85 = vmatpush.msra.mxu0 0.0
    %86 = vmatpush.msra.mxu0 0.0
    %87 = vmatpush.msra.mxu0 0.0
    %88 = vmatpush.msra.mxu0 %v56
    %89 = vmatpush.msra.mxu0 %v55
    %90 = vmatmul.f32.gmra.mxu0 %v63
    %v91 = vpop.f32.mrf.mxu0
    %v92 = vadd.f32 %v59, %v91
    %93 = vmatmul.f32.gmra.mxu0 %v66
    %v94 = vpop.f32.mrf.mxu0
    %v95 = vadd.f32 %v59, %v94
    %96 = vmatmul.f32.gmra.mxu0 %v69
    %v97 = vpop.f32.mrf.mxu0
    %v98 = vadd.f32 %v59, %v97
    %99 = vmatmul.f32.gmra.mxu0 %v72
    %v100 = vpop.f32.mrf.mxu0
    %v101 = vadd.f32 %v59, %v100
    %102 = vdwg.mxu0
    %v103 = vmax.f32 %v92, 0.0
    %v104 = vmax.f32 %v95, 0.0
    %v105 = vmax.f32 %v98, 0.0
    %v106 = vmax.f32 %v101, 0.0
    %v107 = vxor.u32 %v92, 2147483648
    %v108 = vxor.u32 %v95, 2147483648
    %v109 = vxor.u32 %v98, 2147483648
    %v110 = vxor.u32 %v101, 2147483648
    %v111 = vmul.f32 %v107, 1.442695
    %v112 = vpow.pop %v111
    %v113 = vmul.f32 %v108, 1.442695
    %v114 = vpow.pop %v113
    %v115 = vmul.f32 %v109, 1.442695
    %v116 = vpow.pop %v115
    %v117 = vmul.f32 %v110, 1.442695
    %v118 = vpow.pop %v117
    %v119 = vadd.f32 %v112, 1.0
    %v120 = vadd.f32 %v114, 1.0
    %v121 = vadd.f32 %v116, 1.0
    %v122 = vadd.f32 %v118, 1.0
    %v123 = vrcp.pop %v119
    %v124 = vmul.f32 %v119, %v123
    %v125 = vsub.f32 1.0, %v124
    %v126 = vmul.f32 %v123, %v125
    %v127 = vadd.f32 %v123, %v126
    %vm128 = vweird.f32 %v119
    %vm129 = vweird.f32 %v123
    %vm130 = vmor %vm128, %vm129
    %v131 = vsel %vm130, %v123, %v127
    %v132 = vand.u32 2147483647, %v119
    %vm133 = vcmp.eq.f32.partialorder %v132, 8.507059e+37
    %v134 = vand.u32 %v119, 2147483648
    %v135 = vor.u32 1.1754944e-38, %v134
    %v136 = vsel %vm133, %v135, %v131
    %v137 = vmul.f32 1.0, %v136
    %v138 = vrcp.pop %v120
    %v139 = vmul.f32 %v120, %v138
    %v140 = vsub.f32 1.0, %v139
    %v141 = vmul.f32 %v138, %v140
    %v142 = vadd.f32 %v138, %v141
    %vm143 = vweird.f32 %v120
    %vm144 = vweird.f32 %v138
    %vm145 = vmor %vm143, %vm144
    %v146 = vsel %vm145, %v138, %v142
    %v147 = vand.u32 2147483647, %v120
    %vm148 = vcmp.eq.f32.partialorder %v147, 8.507059e+37
    %v149 = vand.u32 %v120, 2147483648
    %v150 = vor.u32 1.1754944e-38, %v149
    %v151 = vsel %vm148, %v150, %v146
    %v152 = vmul.f32 1.0, %v151
    %v153 = vrcp.pop %v121
    %v154 = vmul.f32 %v121, %v153
    %v155 = vsub.f32 1.0, %v154
    %v156 = vmul.f32 %v153, %v155
    %v157 = vadd.f32 %v153, %v156
    %vm158 = vweird.f32 %v121
    %vm159 = vweird.f32 %v153
    %vm160 = vmor %vm158, %vm159
    %v161 = vsel %vm160, %v153, %v157
    %v162 = vand.u32 2147483647, %v121
    %vm163 = vcmp.eq.f32.partialorder %v162, 8.507059e+37
    %v164 = vand.u32 %v121, 2147483648
    %v165 = vor.u32 1.1754944e-38, %v164
    %v166 = vsel %vm163, %v165, %v161
    %v167 = vmul.f32 1.0, %v166
    %v168 = vrcp.pop %v122
    %v169 = vmul.f32 %v122, %v168
    %v170 = vsub.f32 1.0, %v169
    %v171 = vmul.f32 %v168, %v170
    %v172 = vadd.f32 %v168, %v171
    %vm173 = vweird.f32 %v122
    %vm174 = vweird.f32 %v168
    %vm175 = vmor %vm173, %vm174
    %v176 = vsel %vm175, %v168, %v172
    %v177 = vand.u32 2147483647, %v122
    %vm178 = vcmp.eq.f32.partialorder %v177, 8.507059e+37
    %v179 = vand.u32 %v122, 2147483648
    %v180 = vor.u32 1.1754944e-38, %v179
    %v181 = vsel %vm178, %v180, %v176
    %v182 = vmul.f32 1.0, %v181
    %187 = vrot.lane.b32.xlu0 %v137, 112
    %v188 = vpop.permute.xlu0 %187
    %189 = vrot.lane.b32.xlu0 %v152, 112
    %v190 = vpop.permute.xlu0 %189
    %191 = vrot.lane.b32.xlu0 %v167, 112
    %v192 = vpop.permute.xlu0 %191
    %193 = vrot.lane.b32.xlu0 %v182, 112
    %v194 = vpop.permute.xlu0 %193
    %v199 = vmul.f32 %v103, %v188
    %v200 = vmul.f32 %v104, %v190
    %v201 = vmul.f32 %v105, %v192
    %v202 = vmul.f32 %v106, %v194
    %v203 = vsub.f32 1.0, %v137
    %v204 = vsub.f32 1.0, %v152
    %v205 = vsub.f32 1.0, %v167
    %v206 = vsub.f32 1.0, %v182
    %211 = vrot.lane.b32.xlu0 %v203, 112
    %v212 = vpop.permute.xlu0 %211
    %213 = vrot.lane.b32.xlu0 %v204, 112
    %v214 = vpop.permute.xlu0 %213
    %215 = vrot.lane.b32.xlu0 %v205, 112
    %v216 = vpop.permute.xlu0 %215
    %217 = vrot.lane.b32.xlu0 %v206, 112
    %v218 = vpop.permute.xlu0 %217
    %v223 = vmul.f32 %v51, %v212
    %v224 = vmul.f32 %v52, %v214
    %v225 = vmul.f32 %v53, %v216
    %v226 = vmul.f32 %v54, %v218
    %v227 = vadd.f32 %v199, %v223
    %v228 = vadd.f32 %v200, %v224
    %v229 = vadd.f32 %v201, %v225
    %v230 = vadd.f32 %v202, %v226
    %s231 = scalar_lea.vmem %s1, 16
    %v232 = vld [vmem:[%s231] sm:$0xff]
    %v233 = vld [vmem:[%s231 + $0x8] sm:$0xff]
    %s234 = scalar_lea.vmem %s2, 1
    %v235 = vld [vmem:[%s234] sm:$0x1]
    %v237 = vperm.slane %v235, 0
    %v240 = vsel %vm61, %v227, 0
    %v243 = vsel %vm61, %v228, 0
    %v246 = vsel %vm61, %v229, 0
    %v249 = vsel %vm61, %v230, 0
    %251 = vmatpush.msra.mxu0 0.0
    %252 = vmatpush.msra.mxu0 0.0
    %253 = vmatpush.msra.mxu0 0.0
    %254 = vmatpush.msra.mxu0 0.0
    %255 = vmatpush.msra.mxu0 0.0
    %256 = vmatpush.msra.mxu0 0.0
    %257 = vmatpush.msra.mxu0 0.0
    %258 = vmatpush.msra.mxu0 0.0
    %259 = vmatpush.msra.mxu0 0.0
    %260 = vmatpush.msra.mxu0 0.0
    %261 = vmatpush.msra.mxu0 0.0
    %262 = vmatpush.msra.mxu0 0.0
    %263 = vmatpush.msra.mxu0 0.0
    %264 = vmatpush.msra.mxu0 0.0
    %265 = vmatpush.msra.mxu0 %v233
    %266 = vmatpush.msra.mxu0 %v232
    %267 = vmatmul.f32.gmra.mxu0 %v240
    %v268 = vpop.f32.mrf.mxu0
    %v269 = vadd.f32 %v237, %v268
    %270 = vmatmul.f32.gmra.mxu0 %v243
    %v271 = vpop.f32.mrf.mxu0
    %v272 = vadd.f32 %v237, %v271
    %273 = vmatmul.f32.gmra.mxu0 %v246
    %v274 = vpop.f32.mrf.mxu0
    %v275 = vadd.f32 %v237, %v274
    %276 = vmatmul.f32.gmra.mxu0 %v249
    %v277 = vpop.f32.mrf.mxu0
    %v278 = vadd.f32 %v237, %v277
    %279 = vdwg.mxu0
    %v280 = vmax.f32 %v269, 0.0
    %v281 = vmax.f32 %v272, 0.0
    %v282 = vmax.f32 %v275, 0.0
    %v283 = vmax.f32 %v278, 0.0
    %v284 = vxor.u32 %v269, 2147483648
    %v285 = vxor.u32 %v272, 2147483648
    %v286 = vxor.u32 %v275, 2147483648
    %v287 = vxor.u32 %v278, 2147483648
    %v288 = vmul.f32 %v284, 1.442695
    %v289 = vpow.pop %v288
    %v290 = vmul.f32 %v285, 1.442695
    %v291 = vpow.pop %v290
    %v292 = vmul.f32 %v286, 1.442695
    %v293 = vpow.pop %v292
    %v294 = vmul.f32 %v287, 1.442695
    %v295 = vpow.pop %v294
    %v296 = vadd.f32 %v289, 1.0
    %v297 = vadd.f32 %v291, 1.0
    %v298 = vadd.f32 %v293, 1.0
    %v299 = vadd.f32 %v295, 1.0
    %v300 = vrcp.pop %v296
    %v301 = vmul.f32 %v296, %v300
    %v302 = vsub.f32 1.0, %v301
    %v303 = vmul.f32 %v300, %v302
    %v304 = vadd.f32 %v300, %v303
    %vm305 = vweird.f32 %v296
    %vm306 = vweird.f32 %v300
    %vm307 = vmor %vm305, %vm306
    %v308 = vsel %vm307, %v300, %v304
    %v309 = vand.u32 2147483647, %v296
    %vm310 = vcmp.eq.f32.partialorder %v309, 8.507059e+37
    %v311 = vand.u32 %v296, 2147483648
    %v312 = vor.u32 1.1754944e-38, %v311
    %v313 = vsel %vm310, %v312, %v308
    %v314 = vmul.f32 1.0, %v313
    %v315 = vrcp.pop %v297
    %v316 = vmul.f32 %v297, %v315
    %v317 = vsub.f32 1.0, %v316
    %v318 = vmul.f32 %v315, %v317
    %v319 = vadd.f32 %v315, %v318
    %vm320 = vweird.f32 %v297
    %vm321 = vweird.f32 %v315
    %vm322 = vmor %vm320, %vm321
    %v323 = vsel %vm322, %v315, %v319
    %v324 = vand.u32 2147483647, %v297
    %vm325 = vcmp.eq.f32.partialorder %v324, 8.507059e+37
    %v326 = vand.u32 %v297, 2147483648
    %v327 = vor.u32 1.1754944e-38, %v326
    %v328 = vsel %vm325, %v327, %v323
    %v329 = vmul.f32 1.0, %v328
    %v330 = vrcp.pop %v298
    %v331 = vmul.f32 %v298, %v330
    %v332 = vsub.f32 1.0, %v331
    %v333 = vmul.f32 %v330, %v332
    %v334 = vadd.f32 %v330, %v333
    %vm335 = vweird.f32 %v298
    %vm336 = vweird.f32 %v330
    %vm337 = vmor %vm335, %vm336
    %v338 = vsel %vm337, %v330, %v334
    %v339 = vand.u32 2147483647, %v298
    %vm340 = vcmp.eq.f32.partialorder %v339, 8.507059e+37
    %v341 = vand.u32 %v298, 2147483648
    %v342 = vor.u32 1.1754944e-38, %v341
    %v343 = vsel %vm340, %v342, %v338
    %v344 = vmul.f32 1.0, %v343
    %v345 = vrcp.pop %v299
    %v346 = vmul.f32 %v299, %v345
    %v347 = vsub.f32 1.0, %v346
    %v348 = vmul.f32 %v345, %v347
    %v349 = vadd.f32 %v345, %v348
    %vm350 = vweird.f32 %v299
    %vm351 = vweird.f32 %v345
    %vm352 = vmor %vm350, %vm351
    %v353 = vsel %vm352, %v345, %v349
    %v354 = vand.u32 2147483647, %v299
    %vm355 = vcmp.eq.f32.partialorder %v354, 8.507059e+37
    %v356 = vand.u32 %v299, 2147483648
    %v357 = vor.u32 1.1754944e-38, %v356
    %v358 = vsel %vm355, %v357, %v353
    %v359 = vmul.f32 1.0, %v358
    %364 = vrot.lane.b32.xlu0 %v314, 112
    %v365 = vpop.permute.xlu0 %364
    %366 = vrot.lane.b32.xlu0 %v329, 112
    %v367 = vpop.permute.xlu0 %366
    %368 = vrot.lane.b32.xlu0 %v344, 112
    %v369 = vpop.permute.xlu0 %368
    %370 = vrot.lane.b32.xlu0 %v359, 112
    %v371 = vpop.permute.xlu0 %370
    %v376 = vmul.f32 %v280, %v365
    %v377 = vmul.f32 %v281, %v367
    %v378 = vmul.f32 %v282, %v369
    %v379 = vmul.f32 %v283, %v371
    %v380 = vsub.f32 1.0, %v314
    %v381 = vsub.f32 1.0, %v329
    %v382 = vsub.f32 1.0, %v344
    %v383 = vsub.f32 1.0, %v359
    %388 = vrot.lane.b32.xlu0 %v380, 112
    %v389 = vpop.permute.xlu0 %388
    %390 = vrot.lane.b32.xlu0 %v381, 112
    %v391 = vpop.permute.xlu0 %390
    %392 = vrot.lane.b32.xlu0 %v382, 112
    %v393 = vpop.permute.xlu0 %392
    %394 = vrot.lane.b32.xlu0 %v383, 112
    %v395 = vpop.permute.xlu0 %394
    %v400 = vmul.f32 %v227, %v389
    %v401 = vmul.f32 %v228, %v391
    %v402 = vmul.f32 %v229, %v393
    %v403 = vmul.f32 %v230, %v395
    %v404 = vadd.f32 %v376, %v400
    %v405 = vadd.f32 %v377, %v401
    %v406 = vadd.f32 %v378, %v402
    %v407 = vadd.f32 %v379, %v403
    %s408 = scalar_lea.vmem %s1, 32
    %v409 = vld [vmem:[%s408] sm:$0xff]
    %v410 = vld [vmem:[%s408 + $0x8] sm:$0xff]
    %s411 = scalar_lea.vmem %s2, 2
    %v412 = vld [vmem:[%s411] sm:$0x1]
    %v414 = vperm.slane %v412, 0
    %v417 = vsel %vm61, %v404, 0
    %v420 = vsel %vm61, %v405, 0
    %v423 = vsel %vm61, %v406, 0
    %v426 = vsel %vm61, %v407, 0
    %428 = vmatpush.msra.mxu0 0.0
    %429 = vmatpush.msra.mxu0 0.0
    %430 = vmatpush.msra.mxu0 0.0
    %431 = vmatpush.msra.mxu0 0.0
    %432 = vmatpush.msra.mxu0 0.0
    %433 = vmatpush.msra.mxu0 0.0
    %434 = vmatpush.msra.mxu0 0.0
    %435 = vmatpush.msra.mxu0 0.0
    %436 = vmatpush.msra.mxu0 0.0
    %437 = vmatpush.msra.mxu0 0.0
    %438 = vmatpush.msra.mxu0 0.0
    %439 = vmatpush.msra.mxu0 0.0
    %440 = vmatpush.msra.mxu0 0.0
    %441 = vmatpush.msra.mxu0 0.0
    %442 = vmatpush.msra.mxu0 %v410
    %443 = vmatpush.msra.mxu0 %v409
    %444 = vmatmul.f32.gmra.mxu0 %v417
    %v445 = vpop.f32.mrf.mxu0
    %v446 = vadd.f32 %v414, %v445
    %447 = vmatmul.f32.gmra.mxu0 %v420
    %v448 = vpop.f32.mrf.mxu0
    %v449 = vadd.f32 %v414, %v448
    %450 = vmatmul.f32.gmra.mxu0 %v423
    %v451 = vpop.f32.mrf.mxu0
    %v452 = vadd.f32 %v414, %v451
    %453 = vmatmul.f32.gmra.mxu0 %v426
    %v454 = vpop.f32.mrf.mxu0
    %v455 = vadd.f32 %v414, %v454
    %456 = vdwg.mxu0
    %v457 = vmax.f32 %v446, 0.0
    %v458 = vmax.f32 %v449, 0.0
    %v459 = vmax.f32 %v452, 0.0
    %v460 = vmax.f32 %v455, 0.0
    %v461 = vxor.u32 %v446, 2147483648
    %v462 = vxor.u32 %v449, 2147483648
    %v463 = vxor.u32 %v452, 2147483648
    %v464 = vxor.u32 %v455, 2147483648
    %v465 = vmul.f32 %v461, 1.442695
    %v466 = vpow.pop %v465
    %v467 = vmul.f32 %v462, 1.442695
    %v468 = vpow.pop %v467
    %v469 = vmul.f32 %v463, 1.442695
    %v470 = vpow.pop %v469
    %v471 = vmul.f32 %v464, 1.442695
    %v472 = vpow.pop %v471
    %v473 = vadd.f32 %v466, 1.0
    %v474 = vadd.f32 %v468, 1.0
    %v475 = vadd.f32 %v470, 1.0
    %v476 = vadd.f32 %v472, 1.0
    %v477 = vrcp.pop %v473
    %v478 = vmul.f32 %v473, %v477
    %v479 = vsub.f32 1.0, %v478
    %v480 = vmul.f32 %v477, %v479
    %v481 = vadd.f32 %v477, %v480
    %vm482 = vweird.f32 %v473
    %vm483 = vweird.f32 %v477
    %vm484 = vmor %vm482, %vm483
    %v485 = vsel %vm484, %v477, %v481
    %v486 = vand.u32 2147483647, %v473
    %vm487 = vcmp.eq.f32.partialorder %v486, 8.507059e+37
    %v488 = vand.u32 %v473, 2147483648
    %v489 = vor.u32 1.1754944e-38, %v488
    %v490 = vsel %vm487, %v489, %v485
    %v491 = vmul.f32 1.0, %v490
    %v492 = vrcp.pop %v474
    %v493 = vmul.f32 %v474, %v492
    %v494 = vsub.f32 1.0, %v493
    %v495 = vmul.f32 %v492, %v494
    %v496 = vadd.f32 %v492, %v495
    %vm497 = vweird.f32 %v474
    %vm498 = vweird.f32 %v492
    %vm499 = vmor %vm497, %vm498
    %v500 = vsel %vm499, %v492, %v496
    %v501 = vand.u32 2147483647, %v474
    %vm502 = vcmp.eq.f32.partialorder %v501, 8.507059e+37
    %v503 = vand.u32 %v474, 2147483648
    %v504 = vor.u32 1.1754944e-38, %v503
    %v505 = vsel %vm502, %v504, %v500
    %v506 = vmul.f32 1.0, %v505
    %v507 = vrcp.pop %v475
    %v508 = vmul.f32 %v475, %v507
    %v509 = vsub.f32 1.0, %v508
    %v510 = vmul.f32 %v507, %v509
    %v511 = vadd.f32 %v507, %v510
    %vm512 = vweird.f32 %v475
    %vm513 = vweird.f32 %v507
    %vm514 = vmor %vm512, %vm513
    %v515 = vsel %vm514, %v507, %v511
    %v516 = vand.u32 2147483647, %v475
    %vm517 = vcmp.eq.f32.partialorder %v516, 8.507059e+37
    %v518 = vand.u32 %v475, 2147483648
    %v519 = vor.u32 1.1754944e-38, %v518
    %v520 = vsel %vm517, %v519, %v515
    %v521 = vmul.f32 1.0, %v520
    %v522 = vrcp.pop %v476
    %v523 = vmul.f32 %v476, %v522
    %v524 = vsub.f32 1.0, %v523
    %v525 = vmul.f32 %v522, %v524
    %v526 = vadd.f32 %v522, %v525
    %vm527 = vweird.f32 %v476
    %vm528 = vweird.f32 %v522
    %vm529 = vmor %vm527, %vm528
    %v530 = vsel %vm529, %v522, %v526
    %v531 = vand.u32 2147483647, %v476
    %vm532 = vcmp.eq.f32.partialorder %v531, 8.507059e+37
    %v533 = vand.u32 %v476, 2147483648
    %v534 = vor.u32 1.1754944e-38, %v533
    %v535 = vsel %vm532, %v534, %v530
    %v536 = vmul.f32 1.0, %v535
    %541 = vrot.lane.b32.xlu0 %v491, 112
    %v542 = vpop.permute.xlu0 %541
    %543 = vrot.lane.b32.xlu0 %v506, 112
    %v544 = vpop.permute.xlu0 %543
    %545 = vrot.lane.b32.xlu0 %v521, 112
    %v546 = vpop.permute.xlu0 %545
    %547 = vrot.lane.b32.xlu0 %v536, 112
    %v548 = vpop.permute.xlu0 %547
    %v553 = vmul.f32 %v457, %v542
    %v554 = vmul.f32 %v458, %v544
    %v555 = vmul.f32 %v459, %v546
    %v556 = vmul.f32 %v460, %v548
    %v557 = vsub.f32 1.0, %v491
    %v558 = vsub.f32 1.0, %v506
    %v559 = vsub.f32 1.0, %v521
    %v560 = vsub.f32 1.0, %v536
    %565 = vrot.lane.b32.xlu0 %v557, 112
    %v566 = vpop.permute.xlu0 %565
    %567 = vrot.lane.b32.xlu0 %v558, 112
    %v568 = vpop.permute.xlu0 %567
    %569 = vrot.lane.b32.xlu0 %v559, 112
    %v570 = vpop.permute.xlu0 %569
    %571 = vrot.lane.b32.xlu0 %v560, 112
    %v572 = vpop.permute.xlu0 %571
    %v577 = vmul.f32 %v404, %v566
    %v578 = vmul.f32 %v405, %v568
    %v579 = vmul.f32 %v406, %v570
    %v580 = vmul.f32 %v407, %v572
    %v581 = vadd.f32 %v553, %v577
    %v582 = vadd.f32 %v554, %v578
    %v583 = vadd.f32 %v555, %v579
    %v584 = vadd.f32 %v556, %v580
    %s585 = scalar_lea.vmem %s1, 48
    %v586 = vld [vmem:[%s585] sm:$0xff]
    %v587 = vld [vmem:[%s585 + $0x8] sm:$0xff]
    %s588 = scalar_lea.vmem %s2, 3
    %v589 = vld [vmem:[%s588] sm:$0x1]
    %v591 = vperm.slane %v589, 0
    %v594 = vsel %vm61, %v581, 0
    %v597 = vsel %vm61, %v582, 0
    %v600 = vsel %vm61, %v583, 0
    %v603 = vsel %vm61, %v584, 0
    %605 = vmatpush.msra.mxu0 0.0
    %606 = vmatpush.msra.mxu0 0.0
    %607 = vmatpush.msra.mxu0 0.0
    %608 = vmatpush.msra.mxu0 0.0
    %609 = vmatpush.msra.mxu0 0.0
    %610 = vmatpush.msra.mxu0 0.0
    %611 = vmatpush.msra.mxu0 0.0
    %612 = vmatpush.msra.mxu0 0.0
    %613 = vmatpush.msra.mxu0 0.0
    %614 = vmatpush.msra.mxu0 0.0
    %615 = vmatpush.msra.mxu0 0.0
    %616 = vmatpush.msra.mxu0 0.0
    %617 = vmatpush.msra.mxu0 0.0
    %618 = vmatpush.msra.mxu0 0.0
    %619 = vmatpush.msra.mxu0 %v587
    %620 = vmatpush.msra.mxu0 %v586
    %621 = vmatmul.f32.gmra.mxu0 %v594
    %v622 = vpop.f32.mrf.mxu0
    %v623 = vadd.f32 %v591, %v622
    %624 = vmatmul.f32.gmra.mxu0 %v597
    %v625 = vpop.f32.mrf.mxu0
    %v626 = vadd.f32 %v591, %v625
    %627 = vmatmul.f32.gmra.mxu0 %v600
    %v628 = vpop.f32.mrf.mxu0
    %v629 = vadd.f32 %v591, %v628
    %630 = vmatmul.f32.gmra.mxu0 %v603
    %v631 = vpop.f32.mrf.mxu0
    %v632 = vadd.f32 %v591, %v631
    %633 = vdwg.mxu0
    %v634 = vmax.f32 %v623, 0.0
    %v635 = vmax.f32 %v626, 0.0
    %v636 = vmax.f32 %v629, 0.0
    %v637 = vmax.f32 %v632, 0.0
    %v638 = vxor.u32 %v623, 2147483648
    %v639 = vxor.u32 %v626, 2147483648
    %v640 = vxor.u32 %v629, 2147483648
    %v641 = vxor.u32 %v632, 2147483648
    %v642 = vmul.f32 %v638, 1.442695
    %v643 = vpow.pop %v642
    %v644 = vmul.f32 %v639, 1.442695
    %v645 = vpow.pop %v644
    %v646 = vmul.f32 %v640, 1.442695
    %v647 = vpow.pop %v646
    %v648 = vmul.f32 %v641, 1.442695
    %v649 = vpow.pop %v648
    %v650 = vadd.f32 %v643, 1.0
    %v651 = vadd.f32 %v645, 1.0
    %v652 = vadd.f32 %v647, 1.0
    %v653 = vadd.f32 %v649, 1.0
    %v654 = vrcp.pop %v650
    %v655 = vmul.f32 %v650, %v654
    %v656 = vsub.f32 1.0, %v655
    %v657 = vmul.f32 %v654, %v656
    %v658 = vadd.f32 %v654, %v657
    %vm659 = vweird.f32 %v650
    %vm660 = vweird.f32 %v654
    %vm661 = vmor %vm659, %vm660
    %v662 = vsel %vm661, %v654, %v658
    %v663 = vand.u32 2147483647, %v650
    %vm664 = vcmp.eq.f32.partialorder %v663, 8.507059e+37
    %v665 = vand.u32 %v650, 2147483648
    %v666 = vor.u32 1.1754944e-38, %v665
    %v667 = vsel %vm664, %v666, %v662
    %v668 = vmul.f32 1.0, %v667
    %v669 = vrcp.pop %v651
    %v670 = vmul.f32 %v651, %v669
    %v671 = vsub.f32 1.0, %v670
    %v672 = vmul.f32 %v669, %v671
    %v673 = vadd.f32 %v669, %v672
    %vm674 = vweird.f32 %v651
    %vm675 = vweird.f32 %v669
    %vm676 = vmor %vm674, %vm675
    %v677 = vsel %vm676, %v669, %v673
    %v678 = vand.u32 2147483647, %v651
    %vm679 = vcmp.eq.f32.partialorder %v678, 8.507059e+37
    %v680 = vand.u32 %v651, 2147483648
    %v681 = vor.u32 1.1754944e-38, %v680
    %v682 = vsel %vm679, %v681, %v677
    %v683 = vmul.f32 1.0, %v682
    %v684 = vrcp.pop %v652
    %v685 = vmul.f32 %v652, %v684
    %v686 = vsub.f32 1.0, %v685
    %v687 = vmul.f32 %v684, %v686
    %v688 = vadd.f32 %v684, %v687
    %vm689 = vweird.f32 %v652
    %vm690 = vweird.f32 %v684
    %vm691 = vmor %vm689, %vm690
    %v692 = vsel %vm691, %v684, %v688
    %v693 = vand.u32 2147483647, %v652
    %vm694 = vcmp.eq.f32.partialorder %v693, 8.507059e+37
    %v695 = vand.u32 %v652, 2147483648
    %v696 = vor.u32 1.1754944e-38, %v695
    %v697 = vsel %vm694, %v696, %v692
    %v698 = vmul.f32 1.0, %v697
    %v699 = vrcp.pop %v653
    %v700 = vmul.f32 %v653, %v699
    %v701 = vsub.f32 1.0, %v700
    %v702 = vmul.f32 %v699, %v701
    %v703 = vadd.f32 %v699, %v702
    %vm704 = vweird.f32 %v653
    %vm705 = vweird.f32 %v699
    %vm706 = vmor %vm704, %vm705
    %v707 = vsel %vm706, %v699, %v703
    %v708 = vand.u32 2147483647, %v653
    %vm709 = vcmp.eq.f32.partialorder %v708, 8.507059e+37
    %v710 = vand.u32 %v653, 2147483648
    %v711 = vor.u32 1.1754944e-38, %v710
    %v712 = vsel %vm709, %v711, %v707
    %v713 = vmul.f32 1.0, %v712
    %718 = vrot.lane.b32.xlu0 %v668, 112
    %v719 = vpop.permute.xlu0 %718
    %720 = vrot.lane.b32.xlu0 %v683, 112
    %v721 = vpop.permute.xlu0 %720
    %722 = vrot.lane.b32.xlu0 %v698, 112
    %v723 = vpop.permute.xlu0 %722
    %724 = vrot.lane.b32.xlu0 %v713, 112
    %v725 = vpop.permute.xlu0 %724
    %v730 = vmul.f32 %v634, %v719
    %v731 = vmul.f32 %v635, %v721
    %v732 = vmul.f32 %v636, %v723
    %v733 = vmul.f32 %v637, %v725
    %v734 = vsub.f32 1.0, %v668
    %v735 = vsub.f32 1.0, %v683
    %v736 = vsub.f32 1.0, %v698
    %v737 = vsub.f32 1.0, %v713
    %742 = vrot.lane.b32.xlu0 %v734, 112
    %v743 = vpop.permute.xlu0 %742
    %744 = vrot.lane.b32.xlu0 %v735, 112
    %v745 = vpop.permute.xlu0 %744
    %746 = vrot.lane.b32.xlu0 %v736, 112
    %v747 = vpop.permute.xlu0 %746
    %748 = vrot.lane.b32.xlu0 %v737, 112
    %v749 = vpop.permute.xlu0 %748
    %v754 = vmul.f32 %v581, %v743
    %v755 = vmul.f32 %v582, %v745
    %v756 = vmul.f32 %v583, %v747
    %v757 = vmul.f32 %v584, %v749
    %v758 = vadd.f32 %v730, %v754
    %v759 = vadd.f32 %v731, %v755
    %v760 = vadd.f32 %v732, %v756
    %v761 = vadd.f32 %v733, %v757
    %v762 = vld [vmem:[%s3] sm:$0xff]
    %v763 = vld [vmem:[%s3 + $0x8] sm:$0xff]
    %v764 = vld [vmem:[%s5] sm:$0x1]
    %v766 = vperm.slane %v764, 0
    %v769 = vsel %vm61, %v758, 0
    %v772 = vsel %vm61, %v759, 0
    %v775 = vsel %vm61, %v760, 0
    %v778 = vsel %vm61, %v761, 0
    %780 = vmatpush.msra.mxu0 0.0
    %781 = vmatpush.msra.mxu0 0.0
    %782 = vmatpush.msra.mxu0 0.0
    %783 = vmatpush.msra.mxu0 0.0
    %784 = vmatpush.msra.mxu0 0.0
    %785 = vmatpush.msra.mxu0 0.0
    %786 = vmatpush.msra.mxu0 0.0
    %787 = vmatpush.msra.mxu0 0.0
    %788 = vmatpush.msra.mxu0 0.0
    %789 = vmatpush.msra.mxu0 0.0
    %790 = vmatpush.msra.mxu0 0.0
    %791 = vmatpush.msra.mxu0 0.0
    %792 = vmatpush.msra.mxu0 0.0
    %793 = vmatpush.msra.mxu0 0.0
    %794 = vmatpush.msra.mxu0 %v763
    %795 = vmatpush.msra.mxu0 %v762
    %796 = vmatmul.f32.gmra.mxu0 %v769
    %v797 = vpop.f32.mrf.mxu0
    %v798 = vadd.f32 %v766, %v797
    %799 = vmatmul.f32.gmra.mxu0 %v772
    %v800 = vpop.f32.mrf.mxu0
    %v801 = vadd.f32 %v766, %v800
    %802 = vmatmul.f32.gmra.mxu0 %v775
    %v803 = vpop.f32.mrf.mxu0
    %v804 = vadd.f32 %v766, %v803
    %805 = vmatmul.f32.gmra.mxu0 %v778
    %v806 = vpop.f32.mrf.mxu0
    %v807 = vadd.f32 %v766, %v806
    %808 = vdwg.mxu0
    %v809 = vld [vmem:[%s7] sm:$0xff]
    %v810 = vld [vmem:[%s7 + $0x8] sm:$0xff]
    %v811 = vld [vmem:[%s9] sm:$0x1]
    %v813 = vperm.slane %v811, 0
    %815 = vmatpush.msra.mxu0 0.0
    %816 = vmatpush.msra.mxu0 0.0
    %817 = vmatpush.msra.mxu0 0.0
    %818 = vmatpush.msra.mxu0 0.0
    %819 = vmatpush.msra.mxu0 0.0
    %820 = vmatpush.msra.mxu0 0.0
    %821 = vmatpush.msra.mxu0 0.0
    %822 = vmatpush.msra.mxu0 0.0
    %823 = vmatpush.msra.mxu0 0.0
    %824 = vmatpush.msra.mxu0 0.0
    %825 = vmatpush.msra.mxu0 0.0
    %826 = vmatpush.msra.mxu0 0.0
    %827 = vmatpush.msra.mxu0 0.0
    %828 = vmatpush.msra.mxu0 0.0
    %829 = vmatpush.msra.mxu0 %v810
    %830 = vmatpush.msra.mxu0 %v809
    %831 = vmatmul.f32.gmra.mxu0 %v769
    %v832 = vpop.f32.mrf.mxu0
    %v833 = vadd.f32 %v813, %v832
    %834 = vmatmul.f32.gmra.mxu0 %v772
    %v835 = vpop.f32.mrf.mxu0
    %v836 = vadd.f32 %v813, %v835
    %837 = vmatmul.f32.gmra.mxu0 %v775
    %v838 = vpop.f32.mrf.mxu0
    %v839 = vadd.f32 %v813, %v838
    %840 = vmatmul.f32.gmra.mxu0 %v778
    %v841 = vpop.f32.mrf.mxu0
    %v842 = vadd.f32 %v813, %v841
    %843 = vdwg.mxu0
    %v844 = vld [vmem:[%s4] sm:$0xff]
    %v845 = vld [vmem:[%s4 + $0x8] sm:$0xff]
    %v846 = vld [vmem:[%s6] sm:$0x1]
    %v847 = vld [vmem:[%s8] sm:$0xff]
    %v848 = vld [vmem:[%s8 + $0x8] sm:$0xff]
    %v849 = vld [vmem:[%s10] sm:$0x1]
    %v851 = vperm.slane %v846, 0
    %v854 = vsel %vm61, 0.0, 0
    %856 = vmatpush.msra.mxu0 0.0
    %857 = vmatpush.msra.mxu0 0.0
    %858 = vmatpush.msra.mxu0 0.0
    %859 = vmatpush.msra.mxu0 0.0
    %860 = vmatpush.msra.mxu0 0.0
    %861 = vmatpush.msra.mxu0 0.0
    %862 = vmatpush.msra.mxu0 0.0
    %863 = vmatpush.msra.mxu0 0.0
    %864 = vmatpush.msra.mxu0 0.0
    %865 = vmatpush.msra.mxu0 0.0
    %866 = vmatpush.msra.mxu0 0.0
    %867 = vmatpush.msra.mxu0 0.0
    %868 = vmatpush.msra.mxu0 0.0
    %869 = vmatpush.msra.mxu0 0.0
    %870 = vmatpush.msra.mxu0 %v845
    %871 = vmatpush.msra.mxu0 %v844
    %872 = vmatmul.f32.gmra.mxu0 %v854
    %v873 = vpop.f32.mrf.mxu0
    %v874 = vadd.f32 %v851, %v873
    %875 = vdwg.mxu0
    %v877 = vrot.slane %v874, 1
    %v880 = vadd.f32 %v798, %v874
    %v881 = vadd.f32 %v804, %v877
    %v882 = vxor.u32 %v880, 2147483648
    %v883 = vxor.u32 %v881, 2147483648
    %v884 = vmul.f32 %v882, 1.442695
    %v885 = vpow.pop %v884
    %v886 = vmul.f32 %v883, 1.442695
    %v887 = vpow.pop %v886
    %v888 = vadd.f32 %v885, 1.0
    %v889 = vadd.f32 %v887, 1.0
    %v890 = vrcp.pop %v888
    %v891 = vmul.f32 %v888, %v890
    %v892 = vsub.f32 1.0, %v891
    %v893 = vmul.f32 %v890, %v892
    %v894 = vadd.f32 %v890, %v893
    %vm895 = vweird.f32 %v888
    %vm896 = vweird.f32 %v890
    %vm897 = vmor %vm895, %vm896
    %v898 = vsel %vm897, %v890, %v894
    %v899 = vand.u32 2147483647, %v888
    %vm900 = vcmp.eq.f32.partialorder %v899, 8.507059e+37
    %v901 = vand.u32 %v888, 2147483648
    %v902 = vor.u32 1.1754944e-38, %v901
    %v903 = vsel %vm900, %v902, %v898
    %v904 = vmul.f32 1.0, %v903
    %v905 = vrcp.pop %v889
    %v906 = vmul.f32 %v889, %v905
    %v907 = vsub.f32 1.0, %v906
    %v908 = vmul.f32 %v905, %v907
    %v909 = vadd.f32 %v905, %v908
    %vm910 = vweird.f32 %v889
    %vm911 = vweird.f32 %v905
    %vm912 = vmor %vm910, %vm911
    %v913 = vsel %vm912, %v905, %v909
    %v914 = vand.u32 2147483647, %v889
    %vm915 = vcmp.eq.f32.partialorder %v914, 8.507059e+37
    %v916 = vand.u32 %v889, 2147483648
    %v917 = vor.u32 1.1754944e-38, %v916
    %v918 = vsel %vm915, %v917, %v913
    %v919 = vmul.f32 1.0, %v918
    %920 = vrot.lane.b32.xlu0 %v874, 96
    %v921 = vpop.permute.xlu0 %920
    %922 = vrot.lane.b32.xlu0 %v877, 96
    %v923 = vpop.permute.xlu0 %922
    %v926 = vmul.f32 %v904, %v921
    %v927 = vmul.f32 %v919, %v923
    %930 = vrot.lane.b32.xlu0 %v926, 32
    %v931 = vpop.permute.xlu0 %930
    %932 = vrot.lane.b32.xlu0 %v927, 32
    %v933 = vpop.permute.xlu0 %932
    %v936 = vadd.f32 %v798, %v931
    %v937 = vadd.f32 %v804, %v933
    %v938 = vtanh.pop %v936
    %v939 = vtanh.pop %v937
    %v940 = vsub.f32 1.0, %v904
    %v941 = vsub.f32 1.0, %v919
    %944 = vrot.lane.b32.xlu0 %v938, 112
    %v945 = vpop.permute.xlu0 %944
    %946 = vrot.lane.b32.xlu0 %v939, 112
    %v947 = vpop.permute.xlu0 %946
    %v950 = vmul.f32 %v940, %v945
    %v951 = vmul.f32 %v941, %v947
    %v952 = vmul.f32 %v904, 0.0
    %v953 = vmul.f32 %v919, 0.0
    %v954 = vadd.f32 %v950, %v952
    %v955 = vadd.f32 %v951, %v953
    %958 = vrot.lane.b32.xlu0 %v954, 112
    %v959 = vpop.permute.xlu0 %958
    %960 = vrot.lane.b32.xlu0 %v955, 112
    %v961 = vpop.permute.xlu0 %960
    %vm964 = vcmask 122880
    %965 = vst.msk [vmem:[#allocation2] sm:$0x1] %vm964, %v959
    %966 = vst.msk [vmem:[#allocation2 + $0x10] sm:$0x1] %vm964, %v961
    %v968 = vperm.slane %v849, 0
    %970 = vmatpush.msra.mxu0 0.0
    %971 = vmatpush.msra.mxu0 0.0
    %972 = vmatpush.msra.mxu0 0.0
    %973 = vmatpush.msra.mxu0 0.0
    %974 = vmatpush.msra.mxu0 0.0
    %975 = vmatpush.msra.mxu0 0.0
    %976 = vmatpush.msra.mxu0 0.0
    %977 = vmatpush.msra.mxu0 0.0
    %978 = vmatpush.msra.mxu0 0.0
    %979 = vmatpush.msra.mxu0 0.0
    %980 = vmatpush.msra.mxu0 0.0
    %981 = vmatpush.msra.mxu0 0.0
    %982 = vmatpush.msra.mxu0 0.0
    %983 = vmatpush.msra.mxu0 0.0
    %984 = vmatpush.msra.mxu0 %v848
    %985 = vmatpush.msra.mxu0 %v847
    %986 = vmatmul.f32.gmra.mxu0 %v854
    %v987 = vpop.f32.mrf.mxu0
    %v988 = vadd.f32 %v968, %v987
    %989 = vdwg.mxu0
    %v991 = vrot.slane %v988, 1
    %v992 = vrot.slane %v988, 2
    %v995 = vadd.f32 %v836, %v991
    %v996 = vadd.f32 %v842, %v992
    %v997 = vxor.u32 %v995, 2147483648
    %v998 = vxor.u32 %v996, 2147483648
    %v999 = vmul.f32 %v997, 1.442695
    %v1000 = vpow.pop %v999
    %v1001 = vmul.f32 %v998, 1.442695
    %v1002 = vpow.pop %v1001
    %v1003 = vadd.f32 %v1000, 1.0
    %v1004 = vadd.f32 %v1002, 1.0
    %v1005 = vrcp.pop %v1003
    %v1006 = vmul.f32 %v1003, %v1005
    %v1007 = vsub.f32 1.0, %v1006
    %v1008 = vmul.f32 %v1005, %v1007
    %v1009 = vadd.f32 %v1005, %v1008
    %vm1010 = vweird.f32 %v1003
    %vm1011 = vweird.f32 %v1005
    %vm1012 = vmor %vm1010, %vm1011
    %v1013 = vsel %vm1012, %v1005, %v1009
    %v1014 = vand.u32 2147483647, %v1003
    %vm1015 = vcmp.eq.f32.partialorder %v1014, 8.507059e+37
    %v1016 = vand.u32 %v1003, 2147483648
    %v1017 = vor.u32 1.1754944e-38, %v1016
    %v1018 = vsel %vm1015, %v1017, %v1013
    %v1019 = vmul.f32 1.0, %v1018
    %v1020 = vrcp.pop %v1004
    %v1021 = vmul.f32 %v1004, %v1020
    %v1022 = vsub.f32 1.0, %v1021
    %v1023 = vmul.f32 %v1020, %v1022
    %v1024 = vadd.f32 %v1020, %v1023
    %vm1025 = vweird.f32 %v1004
    %vm1026 = vweird.f32 %v1020
    %vm1027 = vmor %vm1025, %vm1026
    %v1028 = vsel %vm1027, %v1020, %v1024
    %v1029 = vand.u32 2147483647, %v1004
    %vm1030 = vcmp.eq.f32.partialorder %v1029, 8.507059e+37
    %v1031 = vand.u32 %v1004, 2147483648
    %v1032 = vor.u32 1.1754944e-38, %v1031
    %v1033 = vsel %vm1030, %v1032, %v1028
    %v1034 = vmul.f32 1.0, %v1033
    %1035 = vrot.lane.b32.xlu0 %v991, 96
    %v1036 = vpop.permute.xlu0 %1035
    %1037 = vrot.lane.b32.xlu0 %v992, 96
    %v1038 = vpop.permute.xlu0 %1037
    %v1041 = vmul.f32 %v1019, %v1036
    %v1042 = vmul.f32 %v1034, %v1038
    %1045 = vrot.lane.b32.xlu0 %v1041, 32
    %v1046 = vpop.permute.xlu0 %1045
    %1047 = vrot.lane.b32.xlu0 %v1042, 32
    %v1048 = vpop.permute.xlu0 %1047
    %v1051 = vadd.f32 %v836, %v1046
    %v1052 = vadd.f32 %v842, %v1048
    %v1053 = vtanh.pop %v1051
    %v1054 = vtanh.pop %v1052
    %v1055 = vsub.f32 1.0, %v1019
    %v1056 = vsub.f32 1.0, %v1034
    %1059 = vrot.lane.b32.xlu0 %v1053, 112
    %v1060 = vpop.permute.xlu0 %1059
    %1061 = vrot.lane.b32.xlu0 %v1054, 112
    %v1062 = vpop.permute.xlu0 %1061
    %v1065 = vmul.f32 %v1055, %v1060
    %v1066 = vmul.f32 %v1056, %v1062
    %v1067 = vmul.f32 %v1019, 0.0
    %v1068 = vmul.f32 %v1034, 0.0
    %v1069 = vadd.f32 %v1065, %v1067
    %v1070 = vadd.f32 %v1066, %v1068
    %1073 = vrot.lane.b32.xlu0 %v1069, 112
    %v1074 = vpop.permute.xlu0 %1073
    %1075 = vrot.lane.b32.xlu0 %v1070, 112
    %v1076 = vpop.permute.xlu0 %1075
    %vm1079 = vcmask 130055
    %1080 = vst.msk [vmem:[#allocation3 + $0x8] sm:$0x80] %vm1079, %v1074
    %1081 = vst.msk [vmem:[#allocation3 + $0x18] sm:$0x80] %vm1079, %v1076
    %v1082 = vrot.slane %v955, 7
    %vm1083 = vcmask 1041409
    %v1084 = vsel %vm1083, %v1082, %v954
    %1085 = vrot.lane.b32.xlu0 %v1084, 112
    %v1086 = vpop.permute.xlu0 %1085
    %v1087 = vsel %vm61, %v1086, 0
    %1089 = vmatpush.msra.mxu0 0.0
    %1090 = vmatpush.msra.mxu0 0.0
    %1091 = vmatpush.msra.mxu0 0.0
    %1092 = vmatpush.msra.mxu0 0.0
    %1093 = vmatpush.msra.mxu0 0.0
    %1094 = vmatpush.msra.mxu0 0.0
    %1095 = vmatpush.msra.mxu0 0.0
    %1096 = vmatpush.msra.mxu0 0.0
    %1097 = vmatpush.msra.mxu0 0.0
    %1098 = vmatpush.msra.mxu0 0.0
    %1099 = vmatpush.msra.mxu0 0.0
    %1100 = vmatpush.msra.mxu0 0.0
    %1101 = vmatpush.msra.mxu0 0.0
    %1102 = vmatpush.msra.mxu0 0.0
    %1103 = vmatpush.msra.mxu0 %v845
    %1104 = vmatpush.msra.mxu0 %v844
    %1105 = vmatmul.f32.gmra.mxu0 %v1087
    %v1106 = vpop.f32.mrf.mxu0
    %v1107 = vadd.f32 %v851, %v1106
    %1108 = vdwg.mxu0
    %v1110 = vrot.slane %v1107, 7
    %v1113 = vadd.f32 %v798, %v1110
    %v1114 = vadd.f32 %v804, %v1107
    %v1115 = vxor.u32 %v1113, 2147483648
    %v1116 = vxor.u32 %v1114, 2147483648
    %v1117 = vmul.f32 %v1115, 1.442695
    %v1118 = vpow.pop %v1117
    %v1119 = vmul.f32 %v1116, 1.442695
    %v1120 = vpow.pop %v1119
    %v1121 = vadd.f32 %v1118, 1.0
    %v1122 = vadd.f32 %v1120, 1.0
    %v1123 = vrcp.pop %v1121
    %v1124 = vmul.f32 %v1121, %v1123
    %v1125 = vsub.f32 1.0, %v1124
    %v1126 = vmul.f32 %v1123, %v1125
    %v1127 = vadd.f32 %v1123, %v1126
    %vm1128 = vweird.f32 %v1121
    %vm1129 = vweird.f32 %v1123
    %vm1130 = vmor %vm1128, %vm1129
    %v1131 = vsel %vm1130, %v1123, %v1127
    %v1132 = vand.u32 2147483647, %v1121
    %vm1133 = vcmp.eq.f32.partialorder %v1132, 8.507059e+37
    %v1134 = vand.u32 %v1121, 2147483648
    %v1135 = vor.u32 1.1754944e-38, %v1134
    %v1136 = vsel %vm1133, %v1135, %v1131
    %v1137 = vmul.f32 1.0, %v1136
    %v1138 = vrcp.pop %v1122
    %v1139 = vmul.f32 %v1122, %v1138
    %v1140 = vsub.f32 1.0, %v1139
    %v1141 = vmul.f32 %v1138, %v1140
    %v1142 = vadd.f32 %v1138, %v1141
    %vm1143 = vweird.f32 %v1122
    %vm1144 = vweird.f32 %v1138
    %vm1145 = vmor %vm1143, %vm1144
    %v1146 = vsel %vm1145, %v1138, %v1142
    %v1147 = vand.u32 2147483647, %v1122
    %vm1148 = vcmp.eq.f32.partialorder %v1147, 8.507059e+37
    %v1149 = vand.u32 %v1122, 2147483648
    %v1150 = vor.u32 1.1754944e-38, %v1149
    %v1151 = vsel %vm1148, %v1150, %v1146
    %v1152 = vmul.f32 1.0, %v1151
    %1153 = vrot.lane.b32.xlu0 %v1110, 96
    %v1154 = vpop.permute.xlu0 %1153
    %1155 = vrot.lane.b32.xlu0 %v1107, 96
    %v1156 = vpop.permute.xlu0 %1155
    %v1159 = vmul.f32 %v1137, %v1154
    %v1160 = vmul.f32 %v1152, %v1156
    %1163 = vrot.lane.b32.xlu0 %v1159, 32
    %v1164 = vpop.permute.xlu0 %1163
    %1165 = vrot.lane.b32.xlu0 %v1160, 32
    %v1166 = vpop.permute.xlu0 %1165
    %v1169 = vadd.f32 %v798, %v1164
    %v1170 = vadd.f32 %v804, %v1166
    %v1171 = vtanh.pop %v1169
    %v1172 = vtanh.pop %v1170
    %v1173 = vsub.f32 1.0, %v1137
    %v1174 = vsub.f32 1.0, %v1152
    %1177 = vrot.lane.b32.xlu0 %v1171, 112
    %v1178 = vpop.permute.xlu0 %1177
    %1179 = vrot.lane.b32.xlu0 %v1172, 112
    %v1180 = vpop.permute.xlu0 %1179
    %v1183 = vmul.f32 %v1173, %v1178
    %v1184 = vmul.f32 %v1174, %v1180
    %v1185 = vrot.slane %v954, 7
    %v1188 = vmul.f32 %v1137, %v1185
    %v1189 = vmul.f32 %v1152, %v1082
    %v1190 = vadd.f32 %v1183, %v1188
    %v1191 = vadd.f32 %v1184, %v1189
    %1194 = vrot.lane.b32.xlu0 %v1190, 112
    %v1195 = vpop.permute.xlu0 %1194
    %1196 = vrot.lane.b32.xlu0 %v1191, 112
    %v1197 = vpop.permute.xlu0 %1196
    %vm1200 = vcmask 123905
    %1201 = vst.msk [vmem:[#allocation2] sm:$0x2] %vm1200, %v1195
    %1202 = vst.msk [vmem:[#allocation2 + $0x10] sm:$0x2] %vm1200, %v1197
    %v1203 = vrot.slane %v1069, 7
    %v1204 = vrot.slane %v1070, 6
    %v1205 = vsel %vm1083, %v1204, %v1203
    %1206 = vrot.lane.b32.xlu0 %v1205, 112
    %v1207 = vpop.permute.xlu0 %1206
    %v1208 = vsel %vm61, %v1207, 0
    %1210 = vmatpush.msra.mxu0 0.0
    %1211 = vmatpush.msra.mxu0 0.0
    %1212 = vmatpush.msra.mxu0 0.0
    %1213 = vmatpush.msra.mxu0 0.0
    %1214 = vmatpush.msra.mxu0 0.0
    %1215 = vmatpush.msra.mxu0 0.0
    %1216 = vmatpush.msra.mxu0 0.0
    %1217 = vmatpush.msra.mxu0 0.0
    %1218 = vmatpush.msra.mxu0 0.0
    %1219 = vmatpush.msra.mxu0 0.0
    %1220 = vmatpush.msra.mxu0 0.0
    %1221 = vmatpush.msra.mxu0 0.0
    %1222 = vmatpush.msra.mxu0 0.0
    %1223 = vmatpush.msra.mxu0 0.0
    %1224 = vmatpush.msra.mxu0 %v848
    %1225 = vmatpush.msra.mxu0 %v847
    %1226 = vmatmul.f32.gmra.mxu0 %v1208
    %v1227 = vpop.f32.mrf.mxu0
    %v1228 = vadd.f32 %v968, %v1227
    %1229 = vdwg.mxu0
    %v1231 = vrot.slane %v1228, 2
    %v1232 = vrot.slane %v1228, 3
    %v1235 = vadd.f32 %v836, %v1231
    %v1236 = vadd.f32 %v842, %v1232
    %v1237 = vxor.u32 %v1235, 2147483648
    %v1238 = vxor.u32 %v1236, 2147483648
    %v1239 = vmul.f32 %v1237, 1.442695
    %v1240 = vpow.pop %v1239
    %v1241 = vmul.f32 %v1238, 1.442695
    %v1242 = vpow.pop %v1241
    %v1243 = vadd.f32 %v1240, 1.0
    %v1244 = vadd.f32 %v1242, 1.0
    %v1245 = vrcp.pop %v1243
    %v1246 = vmul.f32 %v1243, %v1245
    %v1247 = vsub.f32 1.0, %v1246
    %v1248 = vmul.f32 %v1245, %v1247
    %v1249 = vadd.f32 %v1245, %v1248
    %vm1250 = vweird.f32 %v1243
    %vm1251 = vweird.f32 %v1245
    %vm1252 = vmor %vm1250, %vm1251
    %v1253 = vsel %vm1252, %v1245, %v1249
    %v1254 = vand.u32 2147483647, %v1243
    %vm1255 = vcmp.eq.f32.partialorder %v1254, 8.507059e+37
    %v1256 = vand.u32 %v1243, 2147483648
    %v1257 = vor.u32 1.1754944e-38, %v1256
    %v1258 = vsel %vm1255, %v1257, %v1253
    %v1259 = vmul.f32 1.0, %v1258
    %v1260 = vrcp.pop %v1244
    %v1261 = vmul.f32 %v1244, %v1260
    %v1262 = vsub.f32 1.0, %v1261
    %v1263 = vmul.f32 %v1260, %v1262
    %v1264 = vadd.f32 %v1260, %v1263
    %vm1265 = vweird.f32 %v1244
    %vm1266 = vweird.f32 %v1260
    %vm1267 = vmor %vm1265, %vm1266
    %v1268 = vsel %vm1267, %v1260, %v1264
    %v1269 = vand.u32 2147483647, %v1244
    %vm1270 = vcmp.eq.f32.partialorder %v1269, 8.507059e+37
    %v1271 = vand.u32 %v1244, 2147483648
    %v1272 = vor.u32 1.1754944e-38, %v1271
    %v1273 = vsel %vm1270, %v1272, %v1268
    %v1274 = vmul.f32 1.0, %v1273
    %1275 = vrot.lane.b32.xlu0 %v1231, 96
    %v1276 = vpop.permute.xlu0 %1275
    %1277 = vrot.lane.b32.xlu0 %v1232, 96
    %v1278 = vpop.permute.xlu0 %1277
    %v1281 = vmul.f32 %v1259, %v1276
    %v1282 = vmul.f32 %v1274, %v1278
    %1285 = vrot.lane.b32.xlu0 %v1281, 32
    %v1286 = vpop.permute.xlu0 %1285
    %1287 = vrot.lane.b32.xlu0 %v1282, 32
    %v1288 = vpop.permute.xlu0 %1287
    %v1291 = vadd.f32 %v836, %v1286
    %v1292 = vadd.f32 %v842, %v1288
    %v1293 = vtanh.pop %v1291
    %v1294 = vtanh.pop %v1292
    %v1295 = vsub.f32 1.0, %v1259
    %v1296 = vsub.f32 1.0, %v1274
    %1299 = vrot.lane.b32.xlu0 %v1293, 112
    %v1300 = vpop.permute.xlu0 %1299
    %1301 = vrot.lane.b32.xlu0 %v1294, 112
    %v1302 = vpop.permute.xlu0 %1301
    %v1305 = vmul.f32 %v1295, %v1300
    %v1306 = vmul.f32 %v1296, %v1302
    %v1307 = vrot.slane %v1069, 1
    %v1308 = vrot.slane %v1070, 1
    %v1311 = vmul.f32 %v1259, %v1307
    %v1312 = vmul.f32 %v1274, %v1308
    %v1313 = vadd.f32 %v1305, %v1311
    %v1314 = vadd.f32 %v1306, %v1312
    %1317 = vrot.lane.b32.xlu0 %v1313, 112
    %v1318 = vpop.permute.xlu0 %1317
    %1319 = vrot.lane.b32.xlu0 %v1314, 112
    %v1320 = vpop.permute.xlu0 %1319
    %vm1323 = vcmask 129030
    %1324 = vst.msk [vmem:[#allocation3 + $0x8] sm:$0x40] %vm1323, %v1318
    %1325 = vst.msk [vmem:[#allocation3 + $0x18] sm:$0x40] %vm1323, %v1320
    %v1326 = vrot.slane %v1190, 1
    %v1327 = vsel %vm1083, %v1191, %v1326
    %1328 = vrot.lane.b32.xlu0 %v1327, 112
    %v1329 = vpop.permute.xlu0 %1328
    %v1330 = vsel %vm61, %v1329, 0
    %1332 = vmatpush.msra.mxu0 0.0
    %1333 = vmatpush.msra.mxu0 0.0
    %1334 = vmatpush.msra.mxu0 0.0
    %1335 = vmatpush.msra.mxu0 0.0
    %1336 = vmatpush.msra.mxu0 0.0
    %1337 = vmatpush.msra.mxu0 0.0
    %1338 = vmatpush.msra.mxu0 0.0
    %1339 = vmatpush.msra.mxu0 0.0
    %1340 = vmatpush.msra.mxu0 0.0
    %1341 = vmatpush.msra.mxu0 0.0
    %1342 = vmatpush.msra.mxu0 0.0
    %1343 = vmatpush.msra.mxu0 0.0
    %1344 = vmatpush.msra.mxu0 0.0
    %1345 = vmatpush.msra.mxu0 0.0
    %1346 = vmatpush.msra.mxu0 %v845
    %1347 = vmatpush.msra.mxu0 %v844
    %1348 = vmatmul.f32.gmra.mxu0 %v1330
    %v1349 = vpop.f32.mrf.mxu0
    %v1350 = vadd.f32 %v851, %v1349
    %1351 = vdwg.mxu0
    %v1353 = vrot.slane %v1350, 6
    %v1354 = vrot.slane %v1350, 7
    %v1357 = vadd.f32 %v798, %v1353
    %v1358 = vadd.f32 %v804, %v1354
    %v1359 = vxor.u32 %v1357, 2147483648
    %v1360 = vxor.u32 %v1358, 2147483648
    %v1361 = vmul.f32 %v1359, 1.442695
    %v1362 = vpow.pop %v1361
    %v1363 = vmul.f32 %v1360, 1.442695
    %v1364 = vpow.pop %v1363
    %v1365 = vadd.f32 %v1362, 1.0
    %v1366 = vadd.f32 %v1364, 1.0
    %v1367 = vrcp.pop %v1365
    %v1368 = vmul.f32 %v1365, %v1367
    %v1369 = vsub.f32 1.0, %v1368
    %v1370 = vmul.f32 %v1367, %v1369
    %v1371 = vadd.f32 %v1367, %v1370
    %vm1372 = vweird.f32 %v1365
    %vm1373 = vweird.f32 %v1367
    %vm1374 = vmor %vm1372, %vm1373
    %v1375 = vsel %vm1374, %v1367, %v1371
    %v1376 = vand.u32 2147483647, %v1365
    %vm1377 = vcmp.eq.f32.partialorder %v1376, 8.507059e+37
    %v1378 = vand.u32 %v1365, 2147483648
    %v1379 = vor.u32 1.1754944e-38, %v1378
    %v1380 = vsel %vm1377, %v1379, %v1375
    %v1381 = vmul.f32 1.0, %v1380
    %v1382 = vrcp.pop %v1366
    %v1383 = vmul.f32 %v1366, %v1382
    %v1384 = vsub.f32 1.0, %v1383
    %v1385 = vmul.f32 %v1382, %v1384
    %v1386 = vadd.f32 %v1382, %v1385
    %vm1387 = vweird.f32 %v1366
    %vm1388 = vweird.f32 %v1382
    %vm1389 = vmor %vm1387, %vm1388
    %v1390 = vsel %vm1389, %v1382, %v1386
    %v1391 = vand.u32 2147483647, %v1366
    %vm1392 = vcmp.eq.f32.partialorder %v1391, 8.507059e+37
    %v1393 = vand.u32 %v1366, 2147483648
    %v1394 = vor.u32 1.1754944e-38, %v1393
    %v1395 = vsel %vm1392, %v1394, %v1390
    %v1396 = vmul.f32 1.0, %v1395
    %1397 = vrot.lane.b32.xlu0 %v1353, 96
    %v1398 = vpop.permute.xlu0 %1397
    %1399 = vrot.lane.b32.xlu0 %v1354, 96
    %v1400 = vpop.permute.xlu0 %1399
    %v1403 = vmul.f32 %v1381, %v1398
    %v1404 = vmul.f32 %v1396, %v1400
    %1407 = vrot.lane.b32.xlu0 %v1403, 32
    %v1408 = vpop.permute.xlu0 %1407
    %1409 = vrot.lane.b32.xlu0 %v1404, 32
    %v1410 = vpop.permute.xlu0 %1409
    %v1413 = vadd.f32 %v798, %v1408
    %v1414 = vadd.f32 %v804, %v1410
    %v1415 = vtanh.pop %v1413
    %v1416 = vtanh.pop %v1414
    %v1417 = vsub.f32 1.0, %v1381
    %v1418 = vsub.f32 1.0, %v1396
    %1421 = vrot.lane.b32.xlu0 %v1415, 112
    %v1422 = vpop.permute.xlu0 %1421
    %1423 = vrot.lane.b32.xlu0 %v1416, 112
    %v1424 = vpop.permute.xlu0 %1423
    %v1427 = vmul.f32 %v1417, %v1422
    %v1428 = vmul.f32 %v1418, %v1424
    %v1429 = vrot.slane %v1190, 7
    %v1430 = vrot.slane %v1191, 7
    %v1433 = vmul.f32 %v1381, %v1429
    %v1434 = vmul.f32 %v1396, %v1430
    %v1435 = vadd.f32 %v1427, %v1433
    %v1436 = vadd.f32 %v1428, %v1434
    %1439 = vrot.lane.b32.xlu0 %v1435, 112
    %v1440 = vpop.permute.xlu0 %1439
    %1441 = vrot.lane.b32.xlu0 %v1436, 112
    %v1442 = vpop.permute.xlu0 %1441
    %vm1445 = vcmask 124930
    %1446 = vst.msk [vmem:[#allocation2] sm:$0x4] %vm1445, %v1440
    %1447 = vst.msk [vmem:[#allocation2 + $0x10] sm:$0x4] %vm1445, %v1442
    %v1448 = vrot.slane %v1313, 6
    %v1449 = vrot.slane %v1314, 5
    %v1450 = vsel %vm1083, %v1449, %v1448
    %1451 = vrot.lane.b32.xlu0 %v1450, 112
    %v1452 = vpop.permute.xlu0 %1451
    %v1453 = vsel %vm61, %v1452, 0
    %1455 = vmatpush.msra.mxu0 0.0
    %1456 = vmatpush.msra.mxu0 0.0
    %1457 = vmatpush.msra.mxu0 0.0
    %1458 = vmatpush.msra.mxu0 0.0
    %1459 = vmatpush.msra.mxu0 0.0
    %1460 = vmatpush.msra.mxu0 0.0
    %1461 = vmatpush.msra.mxu0 0.0
    %1462 = vmatpush.msra.mxu0 0.0
    %1463 = vmatpush.msra.mxu0 0.0
    %1464 = vmatpush.msra.mxu0 0.0
    %1465 = vmatpush.msra.mxu0 0.0
    %1466 = vmatpush.msra.mxu0 0.0
    %1467 = vmatpush.msra.mxu0 0.0
    %1468 = vmatpush.msra.mxu0 0.0
    %1469 = vmatpush.msra.mxu0 %v848
    %1470 = vmatpush.msra.mxu0 %v847
    %1471 = vmatmul.f32.gmra.mxu0 %v1453
    %v1472 = vpop.f32.mrf.mxu0
    %v1473 = vadd.f32 %v968, %v1472
    %1474 = vdwg.mxu0
    %v1476 = vrot.slane %v1473, 3
    %v1477 = vrot.slane %v1473, 4
    %v1480 = vadd.f32 %v836, %v1476
    %v1481 = vadd.f32 %v842, %v1477
    %v1482 = vxor.u32 %v1480, 2147483648
    %v1483 = vxor.u32 %v1481, 2147483648
    %v1484 = vmul.f32 %v1482, 1.442695
    %v1485 = vpow.pop %v1484
    %v1486 = vmul.f32 %v1483, 1.442695
    %v1487 = vpow.pop %v1486
    %v1488 = vadd.f32 %v1485, 1.0
    %v1489 = vadd.f32 %v1487, 1.0
    %v1490 = vrcp.pop %v1488
    %v1491 = vmul.f32 %v1488, %v1490
    %v1492 = vsub.f32 1.0, %v1491
    %v1493 = vmul.f32 %v1490, %v1492
    %v1494 = vadd.f32 %v1490, %v1493
    %vm1495 = vweird.f32 %v1488
    %vm1496 = vweird.f32 %v1490
    %vm1497 = vmor %vm1495, %vm1496
    %v1498 = vsel %vm1497, %v1490, %v1494
    %v1499 = vand.u32 2147483647, %v1488
    %vm1500 = vcmp.eq.f32.partialorder %v1499, 8.507059e+37
    %v1501 = vand.u32 %v1488, 2147483648
    %v1502 = vor.u32 1.1754944e-38, %v1501
    %v1503 = vsel %vm1500, %v1502, %v1498
    %v1504 = vmul.f32 1.0, %v1503
    %v1505 = vrcp.pop %v1489
    %v1506 = vmul.f32 %v1489, %v1505
    %v1507 = vsub.f32 1.0, %v1506
    %v1508 = vmul.f32 %v1505, %v1507
    %v1509 = vadd.f32 %v1505, %v1508
    %vm1510 = vweird.f32 %v1489
    %vm1511 = vweird.f32 %v1505
    %vm1512 = vmor %vm1510, %vm1511
    %v1513 = vsel %vm1512, %v1505, %v1509
    %v1514 = vand.u32 2147483647, %v1489
    %vm1515 = vcmp.eq.f32.partialorder %v1514, 8.507059e+37
    %v1516 = vand.u32 %v1489, 2147483648
    %v1517 = vor.u32 1.1754944e-38, %v1516
    %v1518 = vsel %vm1515, %v1517, %v1513
    %v1519 = vmul.f32 1.0, %v1518
    %1520 = vrot.lane.b32.xlu0 %v1476, 96
    %v1521 = vpop.permute.xlu0 %1520
    %1522 = vrot.lane.b32.xlu0 %v1477, 96
    %v1523 = vpop.permute.xlu0 %1522
    %v1526 = vmul.f32 %v1504, %v1521
    %v1527 = vmul.f32 %v1519, %v1523
    %1530 = vrot.lane.b32.xlu0 %v1526, 32
    %v1531 = vpop.permute.xlu0 %1530
    %1532 = vrot.lane.b32.xlu0 %v1527, 32
    %v1533 = vpop.permute.xlu0 %1532
    %v1536 = vadd.f32 %v836, %v1531
    %v1537 = vadd.f32 %v842, %v1533
    %v1538 = vtanh.pop %v1536
    %v1539 = vtanh.pop %v1537
    %v1540 = vsub.f32 1.0, %v1504
    %v1541 = vsub.f32 1.0, %v1519
    %1544 = vrot.lane.b32.xlu0 %v1538, 112
    %v1545 = vpop.permute.xlu0 %1544
    %1546 = vrot.lane.b32.xlu0 %v1539, 112
    %v1547 = vpop.permute.xlu0 %1546
    %v1550 = vmul.f32 %v1540, %v1545
    %v1551 = vmul.f32 %v1541, %v1547
    %v1552 = vrot.slane %v1313, 1
    %v1553 = vrot.slane %v1314, 1
    %v1556 = vmul.f32 %v1504, %v1552
    %v1557 = vmul.f32 %v1519, %v1553
    %v1558 = vadd.f32 %v1550, %v1556
    %v1559 = vadd.f32 %v1551, %v1557
    %1562 = vrot.lane.b32.xlu0 %v1558, 112
    %v1563 = vpop.permute.xlu0 %1562
    %1564 = vrot.lane.b32.xlu0 %v1559, 112
    %v1565 = vpop.permute.xlu0 %1564
    %vm1568 = vcmask 128005
    %1569 = vst.msk [vmem:[#allocation3 + $0x8] sm:$0x20] %vm1568, %v1563
    %1570 = vst.msk [vmem:[#allocation3 + $0x18] sm:$0x20] %vm1568, %v1565
    %v1571 = vrot.slane %v1435, 2
    %v1572 = vrot.slane %v1436, 1
    %v1573 = vsel %vm1083, %v1572, %v1571
    %1574 = vrot.lane.b32.xlu0 %v1573, 112
    %v1575 = vpop.permute.xlu0 %1574
    %v1576 = vsel %vm61, %v1575, 0
    %1578 = vmatpush.msra.mxu0 0.0
    %1579 = vmatpush.msra.mxu0 0.0
    %1580 = vmatpush.msra.mxu0 0.0
    %1581 = vmatpush.msra.mxu0 0.0
    %1582 = vmatpush.msra.mxu0 0.0
    %1583 = vmatpush.msra.mxu0 0.0
    %1584 = vmatpush.msra.mxu0 0.0
    %1585 = vmatpush.msra.mxu0 0.0
    %1586 = vmatpush.msra.mxu0 0.0
    %1587 = vmatpush.msra.mxu0 0.0
    %1588 = vmatpush.msra.mxu0 0.0
    %1589 = vmatpush.msra.mxu0 0.0
    %1590 = vmatpush.msra.mxu0 0.0
    %1591 = vmatpush.msra.mxu0 0.0
    %1592 = vmatpush.msra.mxu0 %v845
    %1593 = vmatpush.msra.mxu0 %v844
    %1594 = vmatmul.f32.gmra.mxu0 %v1576
    %v1595 = vpop.f32.mrf.mxu0
    %v1596 = vadd.f32 %v851, %v1595
    %1597 = vdwg.mxu0
    %v1599 = vrot.slane %v1596, 5
    %v1600 = vrot.slane %v1596, 6
    %v1603 = vadd.f32 %v798, %v1599
    %v1604 = vadd.f32 %v804, %v1600
    %v1605 = vxor.u32 %v1603, 2147483648
    %v1606 = vxor.u32 %v1604, 2147483648
    %v1607 = vmul.f32 %v1605, 1.442695
    %v1608 = vpow.pop %v1607
    %v1609 = vmul.f32 %v1606, 1.442695
    %v1610 = vpow.pop %v1609
    %v1611 = vadd.f32 %v1608, 1.0
    %v1612 = vadd.f32 %v1610, 1.0
    %v1613 = vrcp.pop %v1611
    %v1614 = vmul.f32 %v1611, %v1613
    %v1615 = vsub.f32 1.0, %v1614
    %v1616 = vmul.f32 %v1613, %v1615
    %v1617 = vadd.f32 %v1613, %v1616
    %vm1618 = vweird.f32 %v1611
    %vm1619 = vweird.f32 %v1613
    %vm1620 = vmor %vm1618, %vm1619
    %v1621 = vsel %vm1620, %v1613, %v1617
    %v1622 = vand.u32 2147483647, %v1611
    %vm1623 = vcmp.eq.f32.partialorder %v1622, 8.507059e+37
    %v1624 = vand.u32 %v1611, 2147483648
    %v1625 = vor.u32 1.1754944e-38, %v1624
    %v1626 = vsel %vm1623, %v1625, %v1621
    %v1627 = vmul.f32 1.0, %v1626
    %v1628 = vrcp.pop %v1612
    %v1629 = vmul.f32 %v1612, %v1628
    %v1630 = vsub.f32 1.0, %v1629
    %v1631 = vmul.f32 %v1628, %v1630
    %v1632 = vadd.f32 %v1628, %v1631
    %vm1633 = vweird.f32 %v1612
    %vm1634 = vweird.f32 %v1628
    %vm1635 = vmor %vm1633, %vm1634
    %v1636 = vsel %vm1635, %v1628, %v1632
    %v1637 = vand.u32 2147483647, %v1612
    %vm1638 = vcmp.eq.f32.partialorder %v1637, 8.507059e+37
    %v1639 = vand.u32 %v1612, 2147483648
    %v1640 = vor.u32 1.1754944e-38, %v1639
    %v1641 = vsel %vm1638, %v1640, %v1636
    %v1642 = vmul.f32 1.0, %v1641
    %1643 = vrot.lane.b32.xlu0 %v1599, 96
    %v1644 = vpop.permute.xlu0 %1643
    %1645 = vrot.lane.b32.xlu0 %v1600, 96
    %v1646 = vpop.permute.xlu0 %1645
    %v1649 = vmul.f32 %v1627, %v1644
    %v1650 = vmul.f32 %v1642, %v1646
    %1653 = vrot.lane.b32.xlu0 %v1649, 32
    %v1654 = vpop.permute.xlu0 %1653
    %1655 = vrot.lane.b32.xlu0 %v1650, 32
    %v1656 = vpop.permute.xlu0 %1655
    %v1659 = vadd.f32 %v798, %v1654
    %v1660 = vadd.f32 %v804, %v1656
    %v1661 = vtanh.pop %v1659
    %v1662 = vtanh.pop %v1660
    %v1663 = vsub.f32 1.0, %v1627
    %v1664 = vsub.f32 1.0, %v1642
    %1667 = vrot.lane.b32.xlu0 %v1661, 112
    %v1668 = vpop.permute.xlu0 %1667
    %1669 = vrot.lane.b32.xlu0 %v1662, 112
    %v1670 = vpop.permute.xlu0 %1669
    %v1673 = vmul.f32 %v1663, %v1668
    %v1674 = vmul.f32 %v1664, %v1670
    %v1675 = vrot.slane %v1435, 7
    %v1676 = vrot.slane %v1436, 7
    %v1679 = vmul.f32 %v1627, %v1675
    %v1680 = vmul.f32 %v1642, %v1676
    %v1681 = vadd.f32 %v1673, %v1679
    %v1682 = vadd.f32 %v1674, %v1680
    %1685 = vrot.lane.b32.xlu0 %v1681, 112
    %v1686 = vpop.permute.xlu0 %1685
    %1687 = vrot.lane.b32.xlu0 %v1682, 112
    %v1688 = vpop.permute.xlu0 %1687
    %vm1691 = vcmask 125955
    %1692 = vst.msk [vmem:[#allocation2] sm:$0x8] %vm1691, %v1686
    %1693 = vst.msk [vmem:[#allocation2 + $0x10] sm:$0x8] %vm1691, %v1688
    %v1694 = vrot.slane %v1558, 5
    %v1695 = vrot.slane %v1559, 4
    %v1696 = vsel %vm1083, %v1695, %v1694
    %1697 = vrot.lane.b32.xlu0 %v1696, 112
    %v1698 = vpop.permute.xlu0 %1697
    %v1699 = vsel %vm61, %v1698, 0
    %1701 = vmatpush.msra.mxu0 0.0
    %1702 = vmatpush.msra.mxu0 0.0
    %1703 = vmatpush.msra.mxu0 0.0
    %1704 = vmatpush.msra.mxu0 0.0
    %1705 = vmatpush.msra.mxu0 0.0
    %1706 = vmatpush.msra.mxu0 0.0
    %1707 = vmatpush.msra.mxu0 0.0
    %1708 = vmatpush.msra.mxu0 0.0
    %1709 = vmatpush.msra.mxu0 0.0
    %1710 = vmatpush.msra.mxu0 0.0
    %1711 = vmatpush.msra.mxu0 0.0
    %1712 = vmatpush.msra.mxu0 0.0
    %1713 = vmatpush.msra.mxu0 0.0
    %1714 = vmatpush.msra.mxu0 0.0
    %1715 = vmatpush.msra.mxu0 %v848
    %1716 = vmatpush.msra.mxu0 %v847
    %1717 = vmatmul.f32.gmra.mxu0 %v1699
    %v1718 = vpop.f32.mrf.mxu0
    %v1719 = vadd.f32 %v968, %v1718
    %1720 = vdwg.mxu0
    %v1722 = vrot.slane %v1719, 4
    %v1723 = vrot.slane %v1719, 5
    %v1726 = vadd.f32 %v836, %v1722
    %v1727 = vadd.f32 %v842, %v1723
    %v1728 = vxor.u32 %v1726, 2147483648
    %v1729 = vxor.u32 %v1727, 2147483648
    %v1730 = vmul.f32 %v1728, 1.442695
    %v1731 = vpow.pop %v1730
    %v1732 = vmul.f32 %v1729, 1.442695
    %v1733 = vpow.pop %v1732
    %v1734 = vadd.f32 %v1731, 1.0
    %v1735 = vadd.f32 %v1733, 1.0
    %v1736 = vrcp.pop %v1734
    %v1737 = vmul.f32 %v1734, %v1736
    %v1738 = vsub.f32 1.0, %v1737
    %v1739 = vmul.f32 %v1736, %v1738
    %v1740 = vadd.f32 %v1736, %v1739
    %vm1741 = vweird.f32 %v1734
    %vm1742 = vweird.f32 %v1736
    %vm1743 = vmor %vm1741, %vm1742
    %v1744 = vsel %vm1743, %v1736, %v1740
    %v1745 = vand.u32 2147483647, %v1734
    %vm1746 = vcmp.eq.f32.partialorder %v1745, 8.507059e+37
    %v1747 = vand.u32 %v1734, 2147483648
    %v1748 = vor.u32 1.1754944e-38, %v1747
    %v1749 = vsel %vm1746, %v1748, %v1744
    %v1750 = vmul.f32 1.0, %v1749
    %v1751 = vrcp.pop %v1735
    %v1752 = vmul.f32 %v1735, %v1751
    %v1753 = vsub.f32 1.0, %v1752
    %v1754 = vmul.f32 %v1751, %v1753
    %v1755 = vadd.f32 %v1751, %v1754
    %vm1756 = vweird.f32 %v1735
    %vm1757 = vweird.f32 %v1751
    %vm1758 = vmor %vm1756, %vm1757
    %v1759 = vsel %vm1758, %v1751, %v1755
    %v1760 = vand.u32 2147483647, %v1735
    %vm1761 = vcmp.eq.f32.partialorder %v1760, 8.507059e+37
    %v1762 = vand.u32 %v1735, 2147483648
    %v1763 = vor.u32 1.1754944e-38, %v1762
    %v1764 = vsel %vm1761, %v1763, %v1759
    %v1765 = vmul.f32 1.0, %v1764
    %1766 = vrot.lane.b32.xlu0 %v1722, 96
    %v1767 = vpop.permute.xlu0 %1766
    %1768 = vrot.lane.b32.xlu0 %v1723, 96
    %v1769 = vpop.permute.xlu0 %1768
    %v1772 = vmul.f32 %v1750, %v1767
    %v1773 = vmul.f32 %v1765, %v1769
    %1776 = vrot.lane.b32.xlu0 %v1772, 32
    %v1777 = vpop.permute.xlu0 %1776
    %1778 = vrot.lane.b32.xlu0 %v1773, 32
    %v1779 = vpop.permute.xlu0 %1778
    %v1782 = vadd.f32 %v836, %v1777
    %v1783 = vadd.f32 %v842, %v1779
    %v1784 = vtanh.pop %v1782
    %v1785 = vtanh.pop %v1783
    %v1786 = vsub.f32 1.0, %v1750
    %v1787 = vsub.f32 1.0, %v1765
    %1790 = vrot.lane.b32.xlu0 %v1784, 112
    %v1791 = vpop.permute.xlu0 %1790
    %1792 = vrot.lane.b32.xlu0 %v1785, 112
    %v1793 = vpop.permute.xlu0 %1792
    %v1796 = vmul.f32 %v1786, %v1791
    %v1797 = vmul.f32 %v1787, %v1793
    %v1798 = vrot.slane %v1558, 1
    %v1799 = vrot.slane %v1559, 1
    %v1802 = vmul.f32 %v1750, %v1798
    %v1803 = vmul.f32 %v1765, %v1799
    %v1804 = vadd.f32 %v1796, %v1802
    %v1805 = vadd.f32 %v1797, %v1803
    %1808 = vrot.lane.b32.xlu0 %v1804, 112
    %v1809 = vpop.permute.xlu0 %1808
    %1810 = vrot.lane.b32.xlu0 %v1805, 112
    %v1811 = vpop.permute.xlu0 %1810
    %vm1814 = vcmask 126980
    %1815 = vst.msk [vmem:[#allocation3 + $0x8] sm:$0x10] %vm1814, %v1809
    %1816 = vst.msk [vmem:[#allocation3 + $0x18] sm:$0x10] %vm1814, %v1811
    %v1817 = vrot.slane %v1681, 3
    %v1818 = vrot.slane %v1682, 2
    %v1819 = vsel %vm1083, %v1818, %v1817
    %1820 = vrot.lane.b32.xlu0 %v1819, 112
    %v1821 = vpop.permute.xlu0 %1820
    %v1822 = vsel %vm61, %v1821, 0
    %1824 = vmatpush.msra.mxu0 0.0
    %1825 = vmatpush.msra.mxu0 0.0
    %1826 = vmatpush.msra.mxu0 0.0
    %1827 = vmatpush.msra.mxu0 0.0
    %1828 = vmatpush.msra.mxu0 0.0
    %1829 = vmatpush.msra.mxu0 0.0
    %1830 = vmatpush.msra.mxu0 0.0
    %1831 = vmatpush.msra.mxu0 0.0
    %1832 = vmatpush.msra.mxu0 0.0
    %1833 = vmatpush.msra.mxu0 0.0
    %1834 = vmatpush.msra.mxu0 0.0
    %1835 = vmatpush.msra.mxu0 0.0
    %1836 = vmatpush.msra.mxu0 0.0
    %1837 = vmatpush.msra.mxu0 0.0
    %1838 = vmatpush.msra.mxu0 %v845
    %1839 = vmatpush.msra.mxu0 %v844
    %1840 = vmatmul.f32.gmra.mxu0 %v1822
    %v1841 = vpop.f32.mrf.mxu0
    %v1842 = vadd.f32 %v851, %v1841
    %1843 = vdwg.mxu0
    %v1845 = vrot.slane %v1842, 4
    %v1846 = vrot.slane %v1842, 5
    %v1849 = vadd.f32 %v798, %v1845
    %v1850 = vadd.f32 %v804, %v1846
    %v1851 = vxor.u32 %v1849, 2147483648
    %v1852 = vxor.u32 %v1850, 2147483648
    %v1853 = vmul.f32 %v1851, 1.442695
    %v1854 = vpow.pop %v1853
    %v1855 = vmul.f32 %v1852, 1.442695
    %v1856 = vpow.pop %v1855
    %v1857 = vadd.f32 %v1854, 1.0
    %v1858 = vadd.f32 %v1856, 1.0
    %v1859 = vrcp.pop %v1857
    %v1860 = vmul.f32 %v1857, %v1859
    %v1861 = vsub.f32 1.0, %v1860
    %v1862 = vmul.f32 %v1859, %v1861
    %v1863 = vadd.f32 %v1859, %v1862
    %vm1864 = vweird.f32 %v1857
    %vm1865 = vweird.f32 %v1859
    %vm1866 = vmor %vm1864, %vm1865
    %v1867 = vsel %vm1866, %v1859, %v1863
    %v1868 = vand.u32 2147483647, %v1857
    %vm1869 = vcmp.eq.f32.partialorder %v1868, 8.507059e+37
    %v1870 = vand.u32 %v1857, 2147483648
    %v1871 = vor.u32 1.1754944e-38, %v1870
    %v1872 = vsel %vm1869, %v1871, %v1867
    %v1873 = vmul.f32 1.0, %v1872
    %v1874 = vrcp.pop %v1858
    %v1875 = vmul.f32 %v1858, %v1874
    %v1876 = vsub.f32 1.0, %v1875
    %v1877 = vmul.f32 %v1874, %v1876
    %v1878 = vadd.f32 %v1874, %v1877
    %vm1879 = vweird.f32 %v1858
    %vm1880 = vweird.f32 %v1874
    %vm1881 = vmor %vm1879, %vm1880
    %v1882 = vsel %vm1881, %v1874, %v1878
    %v1883 = vand.u32 2147483647, %v1858
    %vm1884 = vcmp.eq.f32.partialorder %v1883, 8.507059e+37
    %v1885 = vand.u32 %v1858, 2147483648
    %v1886 = vor.u32 1.1754944e-38, %v1885
    %v1887 = vsel %vm1884, %v1886, %v1882
    %v1888 = vmul.f32 1.0, %v1887
    %1889 = vrot.lane.b32.xlu0 %v1845, 96
    %v1890 = vpop.permute.xlu0 %1889
    %1891 = vrot.lane.b32.xlu0 %v1846, 96
    %v1892 = vpop.permute.xlu0 %1891
    %v1895 = vmul.f32 %v1873, %v1890
    %v1896 = vmul.f32 %v1888, %v1892
    %1899 = vrot.lane.b32.xlu0 %v1895, 32
    %v1900 = vpop.permute.xlu0 %1899
    %1901 = vrot.lane.b32.xlu0 %v1896, 32
    %v1902 = vpop.permute.xlu0 %1901
    %v1905 = vadd.f32 %v798, %v1900
    %v1906 = vadd.f32 %v804, %v1902
    %v1907 = vtanh.pop %v1905
    %v1908 = vtanh.pop %v1906
    %v1909 = vsub.f32 1.0, %v1873
    %v1910 = vsub.f32 1.0, %v1888
    %1913 = vrot.lane.b32.xlu0 %v1907, 112
    %v1914 = vpop.permute.xlu0 %1913
    %1915 = vrot.lane.b32.xlu0 %v1908, 112
    %v1916 = vpop.permute.xlu0 %1915
    %v1919 = vmul.f32 %v1909, %v1914
    %v1920 = vmul.f32 %v1910, %v1916
    %v1921 = vrot.slane %v1681, 7
    %v1922 = vrot.slane %v1682, 7
    %v1925 = vmul.f32 %v1873, %v1921
    %v1926 = vmul.f32 %v1888, %v1922
    %v1927 = vadd.f32 %v1919, %v1925
    %v1928 = vadd.f32 %v1920, %v1926
    %1931 = vrot.lane.b32.xlu0 %v1927, 112
    %v1932 = vpop.permute.xlu0 %1931
    %1933 = vrot.lane.b32.xlu0 %v1928, 112
    %v1934 = vpop.permute.xlu0 %1933
    %1937 = vst.msk [vmem:[#allocation2] sm:$0x10] %vm1814, %v1932
    %1938 = vst.msk [vmem:[#allocation2 + $0x10] sm:$0x10] %vm1814, %v1934
    %v1939 = vrot.slane %v1804, 4
    %v1940 = vrot.slane %v1805, 3
    %v1941 = vsel %vm1083, %v1940, %v1939
    %1942 = vrot.lane.b32.xlu0 %v1941, 112
    %v1943 = vpop.permute.xlu0 %1942
    %v1944 = vsel %vm61, %v1943, 0
    %1946 = vmatpush.msra.mxu0 0.0
    %1947 = vmatpush.msra.mxu0 0.0
    %1948 = vmatpush.msra.mxu0 0.0
    %1949 = vmatpush.msra.mxu0 0.0
    %1950 = vmatpush.msra.mxu0 0.0
    %1951 = vmatpush.msra.mxu0 0.0
    %1952 = vmatpush.msra.mxu0 0.0
    %1953 = vmatpush.msra.mxu0 0.0
    %1954 = vmatpush.msra.mxu0 0.0
    %1955 = vmatpush.msra.mxu0 0.0
    %1956 = vmatpush.msra.mxu0 0.0
    %1957 = vmatpush.msra.mxu0 0.0
    %1958 = vmatpush.msra.mxu0 0.0
    %1959 = vmatpush.msra.mxu0 0.0
    %1960 = vmatpush.msra.mxu0 %v848
    %1961 = vmatpush.msra.mxu0 %v847
    %1962 = vmatmul.f32.gmra.mxu0 %v1944
    %v1963 = vpop.f32.mrf.mxu0
    %v1964 = vadd.f32 %v968, %v1963
    %1965 = vdwg.mxu0
    %v1967 = vrot.slane %v1964, 5
    %v1968 = vrot.slane %v1964, 6
    %v1971 = vadd.f32 %v836, %v1967
    %v1972 = vadd.f32 %v842, %v1968
    %v1973 = vxor.u32 %v1971, 2147483648
    %v1974 = vxor.u32 %v1972, 2147483648
    %v1975 = vmul.f32 %v1973, 1.442695
    %v1976 = vpow.pop %v1975
    %v1977 = vmul.f32 %v1974, 1.442695
    %v1978 = vpow.pop %v1977
    %v1979 = vadd.f32 %v1976, 1.0
    %v1980 = vadd.f32 %v1978, 1.0
    %v1981 = vrcp.pop %v1979
    %v1982 = vmul.f32 %v1979, %v1981
    %v1983 = vsub.f32 1.0, %v1982
    %v1984 = vmul.f32 %v1981, %v1983
    %v1985 = vadd.f32 %v1981, %v1984
    %vm1986 = vweird.f32 %v1979
    %vm1987 = vweird.f32 %v1981
    %vm1988 = vmor %vm1986, %vm1987
    %v1989 = vsel %vm1988, %v1981, %v1985
    %v1990 = vand.u32 2147483647, %v1979
    %vm1991 = vcmp.eq.f32.partialorder %v1990, 8.507059e+37
    %v1992 = vand.u32 %v1979, 2147483648
    %v1993 = vor.u32 1.1754944e-38, %v1992
    %v1994 = vsel %vm1991, %v1993, %v1989
    %v1995 = vmul.f32 1.0, %v1994
    %v1996 = vrcp.pop %v1980
    %v1997 = vmul.f32 %v1980, %v1996
    %v1998 = vsub.f32 1.0, %v1997
    %v1999 = vmul.f32 %v1996, %v1998
    %v2000 = vadd.f32 %v1996, %v1999
    %vm2001 = vweird.f32 %v1980
    %vm2002 = vweird.f32 %v1996
    %vm2003 = vmor %vm2001, %vm2002
    %v2004 = vsel %vm2003, %v1996, %v2000
    %v2005 = vand.u32 2147483647, %v1980
    %vm2006 = vcmp.eq.f32.partialorder %v2005, 8.507059e+37
    %v2007 = vand.u32 %v1980, 2147483648
    %v2008 = vor.u32 1.1754944e-38, %v2007
    %v2009 = vsel %vm2006, %v2008, %v2004
    %v2010 = vmul.f32 1.0, %v2009
    %2011 = vrot.lane.b32.xlu0 %v1967, 96
    %v2012 = vpop.permute.xlu0 %2011
    %2013 = vrot.lane.b32.xlu0 %v1968, 96
    %v2014 = vpop.permute.xlu0 %2013
    %v2017 = vmul.f32 %v1995, %v2012
    %v2018 = vmul.f32 %v2010, %v2014
    %2021 = vrot.lane.b32.xlu0 %v2017, 32
    %v2022 = vpop.permute.xlu0 %2021
    %2023 = vrot.lane.b32.xlu0 %v2018, 32
    %v2024 = vpop.permute.xlu0 %2023
    %v2027 = vadd.f32 %v836, %v2022
    %v2028 = vadd.f32 %v842, %v2024
    %v2029 = vtanh.pop %v2027
    %v2030 = vtanh.pop %v2028
    %v2031 = vsub.f32 1.0, %v1995
    %v2032 = vsub.f32 1.0, %v2010
    %2035 = vrot.lane.b32.xlu0 %v2029, 112
    %v2036 = vpop.permute.xlu0 %2035
    %2037 = vrot.lane.b32.xlu0 %v2030, 112
    %v2038 = vpop.permute.xlu0 %2037
    %v2041 = vmul.f32 %v2031, %v2036
    %v2042 = vmul.f32 %v2032, %v2038
    %v2043 = vrot.slane %v1804, 1
    %v2044 = vrot.slane %v1805, 1
    %v2047 = vmul.f32 %v1995, %v2043
    %v2048 = vmul.f32 %v2010, %v2044
    %v2049 = vadd.f32 %v2041, %v2047
    %v2050 = vadd.f32 %v2042, %v2048
    %2053 = vrot.lane.b32.xlu0 %v2049, 112
    %v2054 = vpop.permute.xlu0 %2053
    %2055 = vrot.lane.b32.xlu0 %v2050, 112
    %v2056 = vpop.permute.xlu0 %2055
    %2059 = vst.msk [vmem:[#allocation3 + $0x8] sm:$0x8] %vm1691, %v2054
    %2060 = vst.msk [vmem:[#allocation3 + $0x18] sm:$0x8] %vm1691, %v2056
    %v2061 = vrot.slane %v1927, 4
    %v2062 = vrot.slane %v1928, 3
    %v2063 = vsel %vm1083, %v2062, %v2061
    %2064 = vrot.lane.b32.xlu0 %v2063, 112
    %v2065 = vpop.permute.xlu0 %2064
    %v2066 = vsel %vm61, %v2065, 0
    %2068 = vmatpush.msra.mxu0 0.0
    %2069 = vmatpush.msra.mxu0 0.0
    %2070 = vmatpush.msra.mxu0 0.0
    %2071 = vmatpush.msra.mxu0 0.0
    %2072 = vmatpush.msra.mxu0 0.0
    %2073 = vmatpush.msra.mxu0 0.0
    %2074 = vmatpush.msra.mxu0 0.0
    %2075 = vmatpush.msra.mxu0 0.0
    %2076 = vmatpush.msra.mxu0 0.0
    %2077 = vmatpush.msra.mxu0 0.0
    %2078 = vmatpush.msra.mxu0 0.0
    %2079 = vmatpush.msra.mxu0 0.0
    %2080 = vmatpush.msra.mxu0 0.0
    %2081 = vmatpush.msra.mxu0 0.0
    %2082 = vmatpush.msra.mxu0 %v845
    %2083 = vmatpush.msra.mxu0 %v844
    %2084 = vmatmul.f32.gmra.mxu0 %v2066
    %v2085 = vpop.f32.mrf.mxu0
    %v2086 = vadd.f32 %v851, %v2085
    %2087 = vdwg.mxu0
    %v2089 = vrot.slane %v2086, 3
    %v2090 = vrot.slane %v2086, 4
    %v2093 = vadd.f32 %v798, %v2089
    %v2094 = vadd.f32 %v804, %v2090
    %v2095 = vxor.u32 %v2093, 2147483648
    %v2096 = vxor.u32 %v2094, 2147483648
    %v2097 = vmul.f32 %v2095, 1.442695
    %v2098 = vpow.pop %v2097
    %v2099 = vmul.f32 %v2096, 1.442695
    %v2100 = vpow.pop %v2099
    %v2101 = vadd.f32 %v2098, 1.0
    %v2102 = vadd.f32 %v2100, 1.0
    %v2103 = vrcp.pop %v2101
    %v2104 = vmul.f32 %v2101, %v2103
    %v2105 = vsub.f32 1.0, %v2104
    %v2106 = vmul.f32 %v2103, %v2105
    %v2107 = vadd.f32 %v2103, %v2106
    %vm2108 = vweird.f32 %v2101
    %vm2109 = vweird.f32 %v2103
    %vm2110 = vmor %vm2108, %vm2109
    %v2111 = vsel %vm2110, %v2103, %v2107
    %v2112 = vand.u32 2147483647, %v2101
    %vm2113 = vcmp.eq.f32.partialorder %v2112, 8.507059e+37
    %v2114 = vand.u32 %v2101, 2147483648
    %v2115 = vor.u32 1.1754944e-38, %v2114
    %v2116 = vsel %vm2113, %v2115, %v2111
    %v2117 = vmul.f32 1.0, %v2116
    %v2118 = vrcp.pop %v2102
    %v2119 = vmul.f32 %v2102, %v2118
    %v2120 = vsub.f32 1.0, %v2119
    %v2121 = vmul.f32 %v2118, %v2120
    %v2122 = vadd.f32 %v2118, %v2121
    %vm2123 = vweird.f32 %v2102
    %vm2124 = vweird.f32 %v2118
    %vm2125 = vmor %vm2123, %vm2124
    %v2126 = vsel %vm2125, %v2118, %v2122
    %v2127 = vand.u32 2147483647, %v2102
    %vm2128 = vcmp.eq.f32.partialorder %v2127, 8.507059e+37
    %v2129 = vand.u32 %v2102, 2147483648
    %v2130 = vor.u32 1.1754944e-38, %v2129
    %v2131 = vsel %vm2128, %v2130, %v2126
    %v2132 = vmul.f32 1.0, %v2131
    %2133 = vrot.lane.b32.xlu0 %v2089, 96
    %v2134 = vpop.permute.xlu0 %2133
    %2135 = vrot.lane.b32.xlu0 %v2090, 96
    %v2136 = vpop.permute.xlu0 %2135
    %v2139 = vmul.f32 %v2117, %v2134
    %v2140 = vmul.f32 %v2132, %v2136
    %2143 = vrot.lane.b32.xlu0 %v2139, 32
    %v2144 = vpop.permute.xlu0 %2143
    %2145 = vrot.lane.b32.xlu0 %v2140, 32
    %v2146 = vpop.permute.xlu0 %2145
    %v2149 = vadd.f32 %v798, %v2144
    %v2150 = vadd.f32 %v804, %v2146
    %v2151 = vtanh.pop %v2149
    %v2152 = vtanh.pop %v2150
    %v2153 = vsub.f32 1.0, %v2117
    %v2154 = vsub.f32 1.0, %v2132
    %2157 = vrot.lane.b32.xlu0 %v2151, 112
    %v2158 = vpop.permute.xlu0 %2157
    %2159 = vrot.lane.b32.xlu0 %v2152, 112
    %v2160 = vpop.permute.xlu0 %2159
    %v2163 = vmul.f32 %v2153, %v2158
    %v2164 = vmul.f32 %v2154, %v2160
    %v2165 = vrot.slane %v1927, 7
    %v2166 = vrot.slane %v1928, 7
    %v2169 = vmul.f32 %v2117, %v2165
    %v2170 = vmul.f32 %v2132, %v2166
    %v2171 = vadd.f32 %v2163, %v2169
    %v2172 = vadd.f32 %v2164, %v2170
    %2175 = vrot.lane.b32.xlu0 %v2171, 112
    %v2176 = vpop.permute.xlu0 %2175
    %2177 = vrot.lane.b32.xlu0 %v2172, 112
    %v2178 = vpop.permute.xlu0 %2177
    %2181 = vst.msk [vmem:[#allocation2] sm:$0x20] %vm1568, %v2176
    %2182 = vst.msk [vmem:[#allocation2 + $0x10] sm:$0x20] %vm1568, %v2178
    %v2183 = vrot.slane %v2049, 3
    %v2184 = vrot.slane %v2050, 2
    %v2185 = vsel %vm1083, %v2184, %v2183
    %2186 = vrot.lane.b32.xlu0 %v2185, 112
    %v2187 = vpop.permute.xlu0 %2186
    %v2188 = vsel %vm61, %v2187, 0
    %2190 = vmatpush.msra.mxu0 0.0
    %2191 = vmatpush.msra.mxu0 0.0
    %2192 = vmatpush.msra.mxu0 0.0
    %2193 = vmatpush.msra.mxu0 0.0
    %2194 = vmatpush.msra.mxu0 0.0
    %2195 = vmatpush.msra.mxu0 0.0
    %2196 = vmatpush.msra.mxu0 0.0
    %2197 = vmatpush.msra.mxu0 0.0
    %2198 = vmatpush.msra.mxu0 0.0
    %2199 = vmatpush.msra.mxu0 0.0
    %2200 = vmatpush.msra.mxu0 0.0
    %2201 = vmatpush.msra.mxu0 0.0
    %2202 = vmatpush.msra.mxu0 0.0
    %2203 = vmatpush.msra.mxu0 0.0
    %2204 = vmatpush.msra.mxu0 %v848
    %2205 = vmatpush.msra.mxu0 %v847
    %2206 = vmatmul.f32.gmra.mxu0 %v2188
    %v2207 = vpop.f32.mrf.mxu0
    %v2208 = vadd.f32 %v968, %v2207
    %2209 = vdwg.mxu0
    %v2211 = vrot.slane %v2208, 6
    %v2212 = vrot.slane %v2208, 7
    %v2215 = vadd.f32 %v836, %v2211
    %v2216 = vadd.f32 %v842, %v2212
    %v2217 = vxor.u32 %v2215, 2147483648
    %v2218 = vxor.u32 %v2216, 2147483648
    %v2219 = vmul.f32 %v2217, 1.442695
    %v2220 = vpow.pop %v2219
    %v2221 = vmul.f32 %v2218, 1.442695
    %v2222 = vpow.pop %v2221
    %v2223 = vadd.f32 %v2220, 1.0
    %v2224 = vadd.f32 %v2222, 1.0
    %v2225 = vrcp.pop %v2223
    %v2226 = vmul.f32 %v2223, %v2225
    %v2227 = vsub.f32 1.0, %v2226
    %v2228 = vmul.f32 %v2225, %v2227
    %v2229 = vadd.f32 %v2225, %v2228
    %vm2230 = vweird.f32 %v2223
    %vm2231 = vweird.f32 %v2225
    %vm2232 = vmor %vm2230, %vm2231
    %v2233 = vsel %vm2232, %v2225, %v2229
    %v2234 = vand.u32 2147483647, %v2223
    %vm2235 = vcmp.eq.f32.partialorder %v2234, 8.507059e+37
    %v2236 = vand.u32 %v2223, 2147483648
    %v2237 = vor.u32 1.1754944e-38, %v2236
    %v2238 = vsel %vm2235, %v2237, %v2233
    %v2239 = vmul.f32 1.0, %v2238
    %v2240 = vrcp.pop %v2224
    %v2241 = vmul.f32 %v2224, %v2240
    %v2242 = vsub.f32 1.0, %v2241
    %v2243 = vmul.f32 %v2240, %v2242
    %v2244 = vadd.f32 %v2240, %v2243
    %vm2245 = vweird.f32 %v2224
    %vm2246 = vweird.f32 %v2240
    %vm2247 = vmor %vm2245, %vm2246
    %v2248 = vsel %vm2247, %v2240, %v2244
    %v2249 = vand.u32 2147483647, %v2224
    %vm2250 = vcmp.eq.f32.partialorder %v2249, 8.507059e+37
    %v2251 = vand.u32 %v2224, 2147483648
    %v2252 = vor.u32 1.1754944e-38, %v2251
    %v2253 = vsel %vm2250, %v2252, %v2248
    %v2254 = vmul.f32 1.0, %v2253
    %2255 = vrot.lane.b32.xlu0 %v2211, 96
    %v2256 = vpop.permute.xlu0 %2255
    %2257 = vrot.lane.b32.xlu0 %v2212, 96
    %v2258 = vpop.permute.xlu0 %2257
    %v2261 = vmul.f32 %v2239, %v2256
    %v2262 = vmul.f32 %v2254, %v2258
    %2265 = vrot.lane.b32.xlu0 %v2261, 32
    %v2266 = vpop.permute.xlu0 %2265
    %2267 = vrot.lane.b32.xlu0 %v2262, 32
    %v2268 = vpop.permute.xlu0 %2267
    %v2271 = vadd.f32 %v836, %v2266
    %v2272 = vadd.f32 %v842, %v2268
    %v2273 = vtanh.pop %v2271
    %v2274 = vtanh.pop %v2272
    %v2275 = vsub.f32 1.0, %v2239
    %v2276 = vsub.f32 1.0, %v2254
    %2279 = vrot.lane.b32.xlu0 %v2273, 112
    %v2280 = vpop.permute.xlu0 %2279
    %2281 = vrot.lane.b32.xlu0 %v2274, 112
    %v2282 = vpop.permute.xlu0 %2281
    %v2285 = vmul.f32 %v2275, %v2280
    %v2286 = vmul.f32 %v2276, %v2282
    %v2287 = vrot.slane %v2049, 1
    %v2288 = vrot.slane %v2050, 1
    %v2291 = vmul.f32 %v2239, %v2287
    %v2292 = vmul.f32 %v2254, %v2288
    %v2293 = vadd.f32 %v2285, %v2291
    %v2294 = vadd.f32 %v2286, %v2292
    %2297 = vrot.lane.b32.xlu0 %v2293, 112
    %v2298 = vpop.permute.xlu0 %2297
    %2299 = vrot.lane.b32.xlu0 %v2294, 112
    %v2300 = vpop.permute.xlu0 %2299
    %2303 = vst.msk [vmem:[#allocation3 + $0x8] sm:$0x4] %vm1445, %v2298
    %2304 = vst.msk [vmem:[#allocation3 + $0x18] sm:$0x4] %vm1445, %v2300
    %v2305 = vrot.slane %v2171, 5
    %v2306 = vrot.slane %v2172, 4
    %v2307 = vsel %vm1083, %v2306, %v2305
    %2308 = vrot.lane.b32.xlu0 %v2307, 112
    %v2309 = vpop.permute.xlu0 %2308
    %v2310 = vsel %vm61, %v2309, 0
    %2312 = vmatpush.msra.mxu0 0.0
    %2313 = vmatpush.msra.mxu0 0.0
    %2314 = vmatpush.msra.mxu0 0.0
    %2315 = vmatpush.msra.mxu0 0.0
    %2316 = vmatpush.msra.mxu0 0.0
    %2317 = vmatpush.msra.mxu0 0.0
    %2318 = vmatpush.msra.mxu0 0.0
    %2319 = vmatpush.msra.mxu0 0.0
    %2320 = vmatpush.msra.mxu0 0.0
    %2321 = vmatpush.msra.mxu0 0.0
    %2322 = vmatpush.msra.mxu0 0.0
    %2323 = vmatpush.msra.mxu0 0.0
    %2324 = vmatpush.msra.mxu0 0.0
    %2325 = vmatpush.msra.mxu0 0.0
    %2326 = vmatpush.msra.mxu0 %v845
    %2327 = vmatpush.msra.mxu0 %v844
    %2328 = vmatmul.f32.gmra.mxu0 %v2310
    %v2329 = vpop.f32.mrf.mxu0
    %v2330 = vadd.f32 %v851, %v2329
    %2331 = vdwg.mxu0
    %v2333 = vrot.slane %v2330, 2
    %v2334 = vrot.slane %v2330, 3
    %v2337 = vadd.f32 %v798, %v2333
    %v2338 = vadd.f32 %v804, %v2334
    %v2339 = vxor.u32 %v2337, 2147483648
    %v2340 = vxor.u32 %v2338, 2147483648
    %v2341 = vmul.f32 %v2339, 1.442695
    %v2342 = vpow.pop %v2341
    %v2343 = vmul.f32 %v2340, 1.442695
    %v2344 = vpow.pop %v2343
    %v2345 = vadd.f32 %v2342, 1.0
    %v2346 = vadd.f32 %v2344, 1.0
    %v2347 = vrcp.pop %v2345
    %v2348 = vmul.f32 %v2345, %v2347
    %v2349 = vsub.f32 1.0, %v2348
    %v2350 = vmul.f32 %v2347, %v2349
    %v2351 = vadd.f32 %v2347, %v2350
    %vm2352 = vweird.f32 %v2345
    %vm2353 = vweird.f32 %v2347
    %vm2354 = vmor %vm2352, %vm2353
    %v2355 = vsel %vm2354, %v2347, %v2351
    %v2356 = vand.u32 2147483647, %v2345
    %vm2357 = vcmp.eq.f32.partialorder %v2356, 8.507059e+37
    %v2358 = vand.u32 %v2345, 2147483648
    %v2359 = vor.u32 1.1754944e-38, %v2358
    %v2360 = vsel %vm2357, %v2359, %v2355
    %v2361 = vmul.f32 1.0, %v2360
    %v2362 = vrcp.pop %v2346
    %v2363 = vmul.f32 %v2346, %v2362
    %v2364 = vsub.f32 1.0, %v2363
    %v2365 = vmul.f32 %v2362, %v2364
    %v2366 = vadd.f32 %v2362, %v2365
    %vm2367 = vweird.f32 %v2346
    %vm2368 = vweird.f32 %v2362
    %vm2369 = vmor %vm2367, %vm2368
    %v2370 = vsel %vm2369, %v2362, %v2366
    %v2371 = vand.u32 2147483647, %v2346
    %vm2372 = vcmp.eq.f32.partialorder %v2371, 8.507059e+37
    %v2373 = vand.u32 %v2346, 2147483648
    %v2374 = vor.u32 1.1754944e-38, %v2373
    %v2375 = vsel %vm2372, %v2374, %v2370
    %v2376 = vmul.f32 1.0, %v2375
    %2377 = vrot.lane.b32.xlu0 %v2333, 96
    %v2378 = vpop.permute.xlu0 %2377
    %2379 = vrot.lane.b32.xlu0 %v2334, 96
    %v2380 = vpop.permute.xlu0 %2379
    %v2383 = vmul.f32 %v2361, %v2378
    %v2384 = vmul.f32 %v2376, %v2380
    %2387 = vrot.lane.b32.xlu0 %v2383, 32
    %v2388 = vpop.permute.xlu0 %2387
    %2389 = vrot.lane.b32.xlu0 %v2384, 32
    %v2390 = vpop.permute.xlu0 %2389
    %v2393 = vadd.f32 %v798, %v2388
    %v2394 = vadd.f32 %v804, %v2390
    %v2395 = vtanh.pop %v2393
    %v2396 = vtanh.pop %v2394
    %v2397 = vsub.f32 1.0, %v2361
    %v2398 = vsub.f32 1.0, %v2376
    %2401 = vrot.lane.b32.xlu0 %v2395, 112
    %v2402 = vpop.permute.xlu0 %2401
    %2403 = vrot.lane.b32.xlu0 %v2396, 112
    %v2404 = vpop.permute.xlu0 %2403
    %v2407 = vmul.f32 %v2397, %v2402
    %v2408 = vmul.f32 %v2398, %v2404
    %v2409 = vrot.slane %v2171, 7
    %v2410 = vrot.slane %v2172, 7
    %v2413 = vmul.f32 %v2361, %v2409
    %v2414 = vmul.f32 %v2376, %v2410
    %v2415 = vadd.f32 %v2407, %v2413
    %v2416 = vadd.f32 %v2408, %v2414
    %2419 = vrot.lane.b32.xlu0 %v2415, 112
    %v2420 = vpop.permute.xlu0 %2419
    %2421 = vrot.lane.b32.xlu0 %v2416, 112
    %v2422 = vpop.permute.xlu0 %2421
    %2425 = vst.msk [vmem:[#allocation2] sm:$0x40] %vm1323, %v2420
    %2426 = vst.msk [vmem:[#allocation2 + $0x10] sm:$0x40] %vm1323, %v2422
    %v2427 = vrot.slane %v2293, 2
    %v2428 = vrot.slane %v2294, 1
    %v2429 = vsel %vm1083, %v2428, %v2427
    %2430 = vrot.lane.b32.xlu0 %v2429, 112
    %v2431 = vpop.permute.xlu0 %2430
    %v2432 = vsel %vm61, %v2431, 0
    %2434 = vmatpush.msra.mxu0 0.0
    %2435 = vmatpush.msra.mxu0 0.0
    %2436 = vmatpush.msra.mxu0 0.0
    %2437 = vmatpush.msra.mxu0 0.0
    %2438 = vmatpush.msra.mxu0 0.0
    %2439 = vmatpush.msra.mxu0 0.0
    %2440 = vmatpush.msra.mxu0 0.0
    %2441 = vmatpush.msra.mxu0 0.0
    %2442 = vmatpush.msra.mxu0 0.0
    %2443 = vmatpush.msra.mxu0 0.0
    %2444 = vmatpush.msra.mxu0 0.0
    %2445 = vmatpush.msra.mxu0 0.0
    %2446 = vmatpush.msra.mxu0 0.0
    %2447 = vmatpush.msra.mxu0 0.0
    %2448 = vmatpush.msra.mxu0 %v848
    %2449 = vmatpush.msra.mxu0 %v847
    %2450 = vmatmul.f32.gmra.mxu0 %v2432
    %v2451 = vpop.f32.mrf.mxu0
    %v2452 = vadd.f32 %v968, %v2451
    %2453 = vdwg.mxu0
    %v2455 = vrot.slane %v2452, 7
    %v2458 = vadd.f32 %v836, %v2455
    %v2459 = vadd.f32 %v842, %v2452
    %v2460 = vxor.u32 %v2458, 2147483648
    %v2461 = vxor.u32 %v2459, 2147483648
    %v2462 = vmul.f32 %v2460, 1.442695
    %v2463 = vpow.pop %v2462
    %v2464 = vmul.f32 %v2461, 1.442695
    %v2465 = vpow.pop %v2464
    %v2466 = vadd.f32 %v2463, 1.0
    %v2467 = vadd.f32 %v2465, 1.0
    %v2468 = vrcp.pop %v2466
    %v2469 = vmul.f32 %v2466, %v2468
    %v2470 = vsub.f32 1.0, %v2469
    %v2471 = vmul.f32 %v2468, %v2470
    %v2472 = vadd.f32 %v2468, %v2471
    %vm2473 = vweird.f32 %v2466
    %vm2474 = vweird.f32 %v2468
    %vm2475 = vmor %vm2473, %vm2474
    %v2476 = vsel %vm2475, %v2468, %v2472
    %v2477 = vand.u32 2147483647, %v2466
    %vm2478 = vcmp.eq.f32.partialorder %v2477, 8.507059e+37
    %v2479 = vand.u32 %v2466, 2147483648
    %v2480 = vor.u32 1.1754944e-38, %v2479
    %v2481 = vsel %vm2478, %v2480, %v2476
    %v2482 = vmul.f32 1.0, %v2481
    %v2483 = vrcp.pop %v2467
    %v2484 = vmul.f32 %v2467, %v2483
    %v2485 = vsub.f32 1.0, %v2484
    %v2486 = vmul.f32 %v2483, %v2485
    %v2487 = vadd.f32 %v2483, %v2486
    %vm2488 = vweird.f32 %v2467
    %vm2489 = vweird.f32 %v2483
    %vm2490 = vmor %vm2488, %vm2489
    %v2491 = vsel %vm2490, %v2483, %v2487
    %v2492 = vand.u32 2147483647, %v2467
    %vm2493 = vcmp.eq.f32.partialorder %v2492, 8.507059e+37
    %v2494 = vand.u32 %v2467, 2147483648
    %v2495 = vor.u32 1.1754944e-38, %v2494
    %v2496 = vsel %vm2493, %v2495, %v2491
    %v2497 = vmul.f32 1.0, %v2496
    %2498 = vrot.lane.b32.xlu0 %v2455, 96
    %v2499 = vpop.permute.xlu0 %2498
    %2500 = vrot.lane.b32.xlu0 %v2452, 96
    %v2501 = vpop.permute.xlu0 %2500
    %v2504 = vmul.f32 %v2482, %v2499
    %v2505 = vmul.f32 %v2497, %v2501
    %2508 = vrot.lane.b32.xlu0 %v2504, 32
    %v2509 = vpop.permute.xlu0 %2508
    %2510 = vrot.lane.b32.xlu0 %v2505, 32
    %v2511 = vpop.permute.xlu0 %2510
    %v2514 = vadd.f32 %v836, %v2509
    %v2515 = vadd.f32 %v842, %v2511
    %v2516 = vtanh.pop %v2514
    %v2517 = vtanh.pop %v2515
    %v2518 = vsub.f32 1.0, %v2482
    %v2519 = vsub.f32 1.0, %v2497
    %2522 = vrot.lane.b32.xlu0 %v2516, 112
    %v2523 = vpop.permute.xlu0 %2522
    %2524 = vrot.lane.b32.xlu0 %v2517, 112
    %v2525 = vpop.permute.xlu0 %2524
    %v2528 = vmul.f32 %v2518, %v2523
    %v2529 = vmul.f32 %v2519, %v2525
    %v2530 = vrot.slane %v2293, 1
    %v2533 = vmul.f32 %v2482, %v2530
    %v2534 = vmul.f32 %v2497, %v2428
    %v2535 = vadd.f32 %v2528, %v2533
    %v2536 = vadd.f32 %v2529, %v2534
    %2539 = vrot.lane.b32.xlu0 %v2535, 112
    %v2540 = vpop.permute.xlu0 %2539
    %2541 = vrot.lane.b32.xlu0 %v2536, 112
    %v2542 = vpop.permute.xlu0 %2541
    %2545 = vst.msk [vmem:[#allocation3 + $0x8] sm:$0x2] %vm1200, %v2540
    %2546 = vst.msk [vmem:[#allocation3 + $0x18] sm:$0x2] %vm1200, %v2542
    %v2547 = vrot.slane %v2415, 6
    %v2548 = vrot.slane %v2416, 5
    %v2549 = vsel %vm1083, %v2548, %v2547
    %2550 = vrot.lane.b32.xlu0 %v2549, 112
    %v2551 = vpop.permute.xlu0 %2550
    %v2552 = vsel %vm61, %v2551, 0
    %2554 = vmatpush.msra.mxu0 0.0
    %2555 = vmatpush.msra.mxu0 0.0
    %2556 = vmatpush.msra.mxu0 0.0
    %2557 = vmatpush.msra.mxu0 0.0
    %2558 = vmatpush.msra.mxu0 0.0
    %2559 = vmatpush.msra.mxu0 0.0
    %2560 = vmatpush.msra.mxu0 0.0
    %2561 = vmatpush.msra.mxu0 0.0
    %2562 = vmatpush.msra.mxu0 0.0
    %2563 = vmatpush.msra.mxu0 0.0
    %2564 = vmatpush.msra.mxu0 0.0
    %2565 = vmatpush.msra.mxu0 0.0
    %2566 = vmatpush.msra.mxu0 0.0
    %2567 = vmatpush.msra.mxu0 0.0
    %2568 = vmatpush.msra.mxu0 %v845
    %2569 = vmatpush.msra.mxu0 %v844
    %2570 = vmatmul.f32.gmra.mxu0 %v2552
    %v2571 = vpop.f32.mrf.mxu0
    %v2572 = vadd.f32 %v851, %v2571
    %2573 = vdwg.mxu0
    %v2575 = vrot.slane %v2572, 1
    %v2576 = vrot.slane %v2572, 2
    %v2579 = vadd.f32 %v798, %v2575
    %v2580 = vadd.f32 %v804, %v2576
    %v2581 = vxor.u32 %v2579, 2147483648
    %v2582 = vxor.u32 %v2580, 2147483648
    %v2583 = vmul.f32 %v2581, 1.442695
    %v2584 = vpow.pop %v2583
    %v2585 = vmul.f32 %v2582, 1.442695
    %v2586 = vpow.pop %v2585
    %v2587 = vadd.f32 %v2584, 1.0
    %v2588 = vadd.f32 %v2586, 1.0
    %v2589 = vrcp.pop %v2587
    %v2590 = vmul.f32 %v2587, %v2589
    %v2591 = vsub.f32 1.0, %v2590
    %v2592 = vmul.f32 %v2589, %v2591
    %v2593 = vadd.f32 %v2589, %v2592
    %vm2594 = vweird.f32 %v2587
    %vm2595 = vweird.f32 %v2589
    %vm2596 = vmor %vm2594, %vm2595
    %v2597 = vsel %vm2596, %v2589, %v2593
    %v2598 = vand.u32 2147483647, %v2587
    %vm2599 = vcmp.eq.f32.partialorder %v2598, 8.507059e+37
    %v2600 = vand.u32 %v2587, 2147483648
    %v2601 = vor.u32 1.1754944e-38, %v2600
    %v2602 = vsel %vm2599, %v2601, %v2597
    %v2603 = vmul.f32 1.0, %v2602
    %v2604 = vrcp.pop %v2588
    %v2605 = vmul.f32 %v2588, %v2604
    %v2606 = vsub.f32 1.0, %v2605
    %v2607 = vmul.f32 %v2604, %v2606
    %v2608 = vadd.f32 %v2604, %v2607
    %vm2609 = vweird.f32 %v2588
    %vm2610 = vweird.f32 %v2604
    %vm2611 = vmor %vm2609, %vm2610
    %v2612 = vsel %vm2611, %v2604, %v2608
    %v2613 = vand.u32 2147483647, %v2588
    %vm2614 = vcmp.eq.f32.partialorder %v2613, 8.507059e+37
    %v2615 = vand.u32 %v2588, 2147483648
    %v2616 = vor.u32 1.1754944e-38, %v2615
    %v2617 = vsel %vm2614, %v2616, %v2612
    %v2618 = vmul.f32 1.0, %v2617
    %2619 = vrot.lane.b32.xlu0 %v2575, 96
    %v2620 = vpop.permute.xlu0 %2619
    %2621 = vrot.lane.b32.xlu0 %v2576, 96
    %v2622 = vpop.permute.xlu0 %2621
    %v2625 = vmul.f32 %v2603, %v2620
    %v2626 = vmul.f32 %v2618, %v2622
    %2629 = vrot.lane.b32.xlu0 %v2625, 32
    %v2630 = vpop.permute.xlu0 %2629
    %2631 = vrot.lane.b32.xlu0 %v2626, 32
    %v2632 = vpop.permute.xlu0 %2631
    %v2635 = vadd.f32 %v798, %v2630
    %v2636 = vadd.f32 %v804, %v2632
    %v2637 = vtanh.pop %v2635
    %v2638 = vtanh.pop %v2636
    %v2639 = vsub.f32 1.0, %v2603
    %v2640 = vsub.f32 1.0, %v2618
    %2643 = vrot.lane.b32.xlu0 %v2637, 112
    %v2644 = vpop.permute.xlu0 %2643
    %2645 = vrot.lane.b32.xlu0 %v2638, 112
    %v2646 = vpop.permute.xlu0 %2645
    %v2649 = vmul.f32 %v2639, %v2644
    %v2650 = vmul.f32 %v2640, %v2646
    %v2651 = vrot.slane %v2415, 7
    %v2652 = vrot.slane %v2416, 7
    %v2655 = vmul.f32 %v2603, %v2651
    %v2656 = vmul.f32 %v2618, %v2652
    %v2657 = vadd.f32 %v2649, %v2655
    %v2658 = vadd.f32 %v2650, %v2656
    %2661 = vrot.lane.b32.xlu0 %v2657, 112
    %v2662 = vpop.permute.xlu0 %2661
    %2663 = vrot.lane.b32.xlu0 %v2658, 112
    %v2664 = vpop.permute.xlu0 %2663
    %2667 = vst.msk [vmem:[#allocation2] sm:$0x80] %vm1079, %v2662
    %2668 = vst.msk [vmem:[#allocation2 + $0x10] sm:$0x80] %vm1079, %v2664
    %v2669 = vrot.slane %v2535, 1
    %v2670 = vsel %vm1083, %v2536, %v2669
    %2671 = vrot.lane.b32.xlu0 %v2670, 112
    %v2672 = vpop.permute.xlu0 %2671
    %v2673 = vsel %vm61, %v2672, 0
    %2675 = vmatpush.msra.mxu0 0.0
    %2676 = vmatpush.msra.mxu0 0.0
    %2677 = vmatpush.msra.mxu0 0.0
    %2678 = vmatpush.msra.mxu0 0.0
    %2679 = vmatpush.msra.mxu0 0.0
    %2680 = vmatpush.msra.mxu0 0.0
    %2681 = vmatpush.msra.mxu0 0.0
    %2682 = vmatpush.msra.mxu0 0.0
    %2683 = vmatpush.msra.mxu0 0.0
    %2684 = vmatpush.msra.mxu0 0.0
    %2685 = vmatpush.msra.mxu0 0.0
    %2686 = vmatpush.msra.mxu0 0.0
    %2687 = vmatpush.msra.mxu0 0.0
    %2688 = vmatpush.msra.mxu0 0.0
    %2689 = vmatpush.msra.mxu0 %v848
    %2690 = vmatpush.msra.mxu0 %v847
    %2691 = vmatmul.f32.gmra.mxu0 %v2673
    %v2692 = vpop.f32.mrf.mxu0
    %v2693 = vadd.f32 %v968, %v2692
    %2694 = vdwg.mxu0
    %v2696 = vrot.slane %v2693, 1
    %v2699 = vadd.f32 %v836, %v2693
    %v2700 = vadd.f32 %v842, %v2696
    %v2701 = vxor.u32 %v2699, 2147483648
    %v2702 = vxor.u32 %v2700, 2147483648
    %v2703 = vmul.f32 %v2701, 1.442695
    %v2704 = vpow.pop %v2703
    %v2705 = vmul.f32 %v2702, 1.442695
    %v2706 = vpow.pop %v2705
    %v2707 = vadd.f32 %v2704, 1.0
    %v2708 = vadd.f32 %v2706, 1.0
    %v2709 = vrcp.pop %v2707
    %v2710 = vmul.f32 %v2707, %v2709
    %v2711 = vsub.f32 1.0, %v2710
    %v2712 = vmul.f32 %v2709, %v2711
    %v2713 = vadd.f32 %v2709, %v2712
    %vm2714 = vweird.f32 %v2707
    %vm2715 = vweird.f32 %v2709
    %vm2716 = vmor %vm2714, %vm2715
    %v2717 = vsel %vm2716, %v2709, %v2713
    %v2718 = vand.u32 2147483647, %v2707
    %vm2719 = vcmp.eq.f32.partialorder %v2718, 8.507059e+37
    %v2720 = vand.u32 %v2707, 2147483648
    %v2721 = vor.u32 1.1754944e-38, %v2720
    %v2722 = vsel %vm2719, %v2721, %v2717
    %v2723 = vmul.f32 1.0, %v2722
    %v2724 = vrcp.pop %v2708
    %v2725 = vmul.f32 %v2708, %v2724
    %v2726 = vsub.f32 1.0, %v2725
    %v2727 = vmul.f32 %v2724, %v2726
    %v2728 = vadd.f32 %v2724, %v2727
    %vm2729 = vweird.f32 %v2708
    %vm2730 = vweird.f32 %v2724
    %vm2731 = vmor %vm2729, %vm2730
    %v2732 = vsel %vm2731, %v2724, %v2728
    %v2733 = vand.u32 2147483647, %v2708
    %vm2734 = vcmp.eq.f32.partialorder %v2733, 8.507059e+37
    %v2735 = vand.u32 %v2708, 2147483648
    %v2736 = vor.u32 1.1754944e-38, %v2735
    %v2737 = vsel %vm2734, %v2736, %v2732
    %v2738 = vmul.f32 1.0, %v2737
    %2739 = vrot.lane.b32.xlu0 %v2693, 96
    %v2740 = vpop.permute.xlu0 %2739
    %2741 = vrot.lane.b32.xlu0 %v2696, 96
    %v2742 = vpop.permute.xlu0 %2741
    %v2745 = vmul.f32 %v2723, %v2740
    %v2746 = vmul.f32 %v2738, %v2742
    %2749 = vrot.lane.b32.xlu0 %v2745, 32
    %v2750 = vpop.permute.xlu0 %2749
    %2751 = vrot.lane.b32.xlu0 %v2746, 32
    %v2752 = vpop.permute.xlu0 %2751
    %v2755 = vadd.f32 %v836, %v2750
    %v2756 = vadd.f32 %v842, %v2752
    %v2757 = vtanh.pop %v2755
    %v2758 = vtanh.pop %v2756
    %v2759 = vsub.f32 1.0, %v2723
    %v2760 = vsub.f32 1.0, %v2738
    %2763 = vrot.lane.b32.xlu0 %v2757, 112
    %v2764 = vpop.permute.xlu0 %2763
    %2765 = vrot.lane.b32.xlu0 %v2758, 112
    %v2766 = vpop.permute.xlu0 %2765
    %v2769 = vmul.f32 %v2759, %v2764
    %v2770 = vmul.f32 %v2760, %v2766
    %v2771 = vrot.slane %v2536, 1
    %v2774 = vmul.f32 %v2723, %v2669
    %v2775 = vmul.f32 %v2738, %v2771
    %v2776 = vadd.f32 %v2769, %v2774
    %v2777 = vadd.f32 %v2770, %v2775
    %2780 = vrot.lane.b32.xlu0 %v2776, 112
    %v2781 = vpop.permute.xlu0 %2780
    %2782 = vrot.lane.b32.xlu0 %v2777, 112
    %v2783 = vpop.permute.xlu0 %2782
    %2786 = vst.msk [vmem:[#allocation3 + $0x8] sm:$0x1] %vm964, %v2781
    %2787 = vst.msk [vmem:[#allocation3 + $0x18] sm:$0x1] %vm964, %v2783
    %v2788 = vrot.slane %v2657, 7
    %v2789 = vrot.slane %v2658, 6
    %v2790 = vsel %vm1083, %v2789, %v2788
    %2791 = vrot.lane.b32.xlu0 %v2790, 112
    %v2792 = vpop.permute.xlu0 %2791
    %v2793 = vsel %vm61, %v2792, 0
    %2795 = vmatpush.msra.mxu0 0.0
    %2796 = vmatpush.msra.mxu0 0.0
    %2797 = vmatpush.msra.mxu0 0.0
    %2798 = vmatpush.msra.mxu0 0.0
    %2799 = vmatpush.msra.mxu0 0.0
    %2800 = vmatpush.msra.mxu0 0.0
    %2801 = vmatpush.msra.mxu0 0.0
    %2802 = vmatpush.msra.mxu0 0.0
    %2803 = vmatpush.msra.mxu0 0.0
    %2804 = vmatpush.msra.mxu0 0.0
    %2805 = vmatpush.msra.mxu0 0.0
    %2806 = vmatpush.msra.mxu0 0.0
    %2807 = vmatpush.msra.mxu0 0.0
    %2808 = vmatpush.msra.mxu0 0.0
    %2809 = vmatpush.msra.mxu0 %v845
    %2810 = vmatpush.msra.mxu0 %v844
    %2811 = vmatmul.f32.gmra.mxu0 %v2793
    %v2812 = vpop.f32.mrf.mxu0
    %v2813 = vadd.f32 %v851, %v2812
    %2814 = vdwg.mxu0
    %v2816 = vrot.slane %v2813, 1
    %v2819 = vadd.f32 %v801, %v2813
    %v2820 = vadd.f32 %v807, %v2816
    %v2821 = vxor.u32 %v2819, 2147483648
    %v2822 = vxor.u32 %v2820, 2147483648
    %v2823 = vmul.f32 %v2821, 1.442695
    %v2824 = vpow.pop %v2823
    %v2825 = vmul.f32 %v2822, 1.442695
    %v2826 = vpow.pop %v2825
    %v2827 = vadd.f32 %v2824, 1.0
    %v2828 = vadd.f32 %v2826, 1.0
    %v2829 = vrcp.pop %v2827
    %v2830 = vmul.f32 %v2827, %v2829
    %v2831 = vsub.f32 1.0, %v2830
    %v2832 = vmul.f32 %v2829, %v2831
    %v2833 = vadd.f32 %v2829, %v2832
    %vm2834 = vweird.f32 %v2827
    %vm2835 = vweird.f32 %v2829
    %vm2836 = vmor %vm2834, %vm2835
    %v2837 = vsel %vm2836, %v2829, %v2833
    %v2838 = vand.u32 2147483647, %v2827
    %vm2839 = vcmp.eq.f32.partialorder %v2838, 8.507059e+37
    %v2840 = vand.u32 %v2827, 2147483648
    %v2841 = vor.u32 1.1754944e-38, %v2840
    %v2842 = vsel %vm2839, %v2841, %v2837
    %v2843 = vmul.f32 1.0, %v2842
    %v2844 = vrcp.pop %v2828
    %v2845 = vmul.f32 %v2828, %v2844
    %v2846 = vsub.f32 1.0, %v2845
    %v2847 = vmul.f32 %v2844, %v2846
    %v2848 = vadd.f32 %v2844, %v2847
    %vm2849 = vweird.f32 %v2828
    %vm2850 = vweird.f32 %v2844
    %vm2851 = vmor %vm2849, %vm2850
    %v2852 = vsel %vm2851, %v2844, %v2848
    %v2853 = vand.u32 2147483647, %v2828
    %vm2854 = vcmp.eq.f32.partialorder %v2853, 8.507059e+37
    %v2855 = vand.u32 %v2828, 2147483648
    %v2856 = vor.u32 1.1754944e-38, %v2855
    %v2857 = vsel %vm2854, %v2856, %v2852
    %v2858 = vmul.f32 1.0, %v2857
    %2859 = vrot.lane.b32.xlu0 %v2813, 96
    %v2860 = vpop.permute.xlu0 %2859
    %2861 = vrot.lane.b32.xlu0 %v2816, 96
    %v2862 = vpop.permute.xlu0 %2861
    %v2865 = vmul.f32 %v2843, %v2860
    %v2866 = vmul.f32 %v2858, %v2862
    %2869 = vrot.lane.b32.xlu0 %v2865, 32
    %v2870 = vpop.permute.xlu0 %2869
    %2871 = vrot.lane.b32.xlu0 %v2866, 32
    %v2872 = vpop.permute.xlu0 %2871
    %v2875 = vadd.f32 %v801, %v2870
    %v2876 = vadd.f32 %v807, %v2872
    %v2877 = vtanh.pop %v2875
    %v2878 = vtanh.pop %v2876
    %v2879 = vsub.f32 1.0, %v2843
    %v2880 = vsub.f32 1.0, %v2858
    %2883 = vrot.lane.b32.xlu0 %v2877, 112
    %v2884 = vpop.permute.xlu0 %2883
    %2885 = vrot.lane.b32.xlu0 %v2878, 112
    %v2886 = vpop.permute.xlu0 %2885
    %v2889 = vmul.f32 %v2879, %v2884
    %v2890 = vmul.f32 %v2880, %v2886
    %v2891 = vrot.slane %v2658, 7
    %v2894 = vmul.f32 %v2843, %v2788
    %v2895 = vmul.f32 %v2858, %v2891
    %v2896 = vadd.f32 %v2889, %v2894
    %v2897 = vadd.f32 %v2890, %v2895
    %2900 = vrot.lane.b32.xlu0 %v2896, 112
    %v2901 = vpop.permute.xlu0 %2900
    %2902 = vrot.lane.b32.xlu0 %v2897, 112
    %v2903 = vpop.permute.xlu0 %2902
    %2906 = vst.msk [vmem:[#allocation2 + $0x8] sm:$0x1] %vm964, %v2901
    %2907 = vst.msk [vmem:[#allocation2 + $0x18] sm:$0x1] %vm964, %v2903
    %v2908 = vrot.slane %v2777, 7
    %v2909 = vsel %vm1083, %v2908, %v2776
    %2910 = vrot.lane.b32.xlu0 %v2909, 112
    %v2911 = vpop.permute.xlu0 %2910
    %v2912 = vsel %vm61, %v2911, 0
    %2914 = vmatpush.msra.mxu0 0.0
    %2915 = vmatpush.msra.mxu0 0.0
    %2916 = vmatpush.msra.mxu0 0.0
    %2917 = vmatpush.msra.mxu0 0.0
    %2918 = vmatpush.msra.mxu0 0.0
    %2919 = vmatpush.msra.mxu0 0.0
    %2920 = vmatpush.msra.mxu0 0.0
    %2921 = vmatpush.msra.mxu0 0.0
    %2922 = vmatpush.msra.mxu0 0.0
    %2923 = vmatpush.msra.mxu0 0.0
    %2924 = vmatpush.msra.mxu0 0.0
    %2925 = vmatpush.msra.mxu0 0.0
    %2926 = vmatpush.msra.mxu0 0.0
    %2927 = vmatpush.msra.mxu0 0.0
    %2928 = vmatpush.msra.mxu0 %v848
    %2929 = vmatpush.msra.mxu0 %v847
    %2930 = vmatmul.f32.gmra.mxu0 %v2912
    %v2931 = vpop.f32.mrf.mxu0
    %v2932 = vadd.f32 %v968, %v2931
    %2933 = vdwg.mxu0
    %v2935 = vrot.slane %v2932, 1
    %v2936 = vrot.slane %v2932, 2
    %v2939 = vadd.f32 %v833, %v2935
    %v2940 = vadd.f32 %v839, %v2936
    %v2941 = vxor.u32 %v2939, 2147483648
    %v2942 = vxor.u32 %v2940, 2147483648
    %v2943 = vmul.f32 %v2941, 1.442695
    %v2944 = vpow.pop %v2943
    %v2945 = vmul.f32 %v2942, 1.442695
    %v2946 = vpow.pop %v2945
    %v2947 = vadd.f32 %v2944, 1.0
    %v2948 = vadd.f32 %v2946, 1.0
    %v2949 = vrcp.pop %v2947
    %v2950 = vmul.f32 %v2947, %v2949
    %v2951 = vsub.f32 1.0, %v2950
    %v2952 = vmul.f32 %v2949, %v2951
    %v2953 = vadd.f32 %v2949, %v2952
    %vm2954 = vweird.f32 %v2947
    %vm2955 = vweird.f32 %v2949
    %vm2956 = vmor %vm2954, %vm2955
    %v2957 = vsel %vm2956, %v2949, %v2953
    %v2958 = vand.u32 2147483647, %v2947
    %vm2959 = vcmp.eq.f32.partialorder %v2958, 8.507059e+37
    %v2960 = vand.u32 %v2947, 2147483648
    %v2961 = vor.u32 1.1754944e-38, %v2960
    %v2962 = vsel %vm2959, %v2961, %v2957
    %v2963 = vmul.f32 1.0, %v2962
    %v2964 = vrcp.pop %v2948
    %v2965 = vmul.f32 %v2948, %v2964
    %v2966 = vsub.f32 1.0, %v2965
    %v2967 = vmul.f32 %v2964, %v2966
    %v2968 = vadd.f32 %v2964, %v2967
    %vm2969 = vweird.f32 %v2948
    %vm2970 = vweird.f32 %v2964
    %vm2971 = vmor %vm2969, %vm2970
    %v2972 = vsel %vm2971, %v2964, %v2968
    %v2973 = vand.u32 2147483647, %v2948
    %vm2974 = vcmp.eq.f32.partialorder %v2973, 8.507059e+37
    %v2975 = vand.u32 %v2948, 2147483648
    %v2976 = vor.u32 1.1754944e-38, %v2975
    %v2977 = vsel %vm2974, %v2976, %v2972
    %v2978 = vmul.f32 1.0, %v2977
    %2979 = vrot.lane.b32.xlu0 %v2935, 96
    %v2980 = vpop.permute.xlu0 %2979
    %2981 = vrot.lane.b32.xlu0 %v2936, 96
    %v2982 = vpop.permute.xlu0 %2981
    %v2985 = vmul.f32 %v2963, %v2980
    %v2986 = vmul.f32 %v2978, %v2982
    %2989 = vrot.lane.b32.xlu0 %v2985, 32
    %v2990 = vpop.permute.xlu0 %2989
    %2991 = vrot.lane.b32.xlu0 %v2986, 32
    %v2992 = vpop.permute.xlu0 %2991
    %v2995 = vadd.f32 %v833, %v2990
    %v2996 = vadd.f32 %v839, %v2992
    %v2997 = vtanh.pop %v2995
    %v2998 = vtanh.pop %v2996
    %v2999 = vsub.f32 1.0, %v2963
    %v3000 = vsub.f32 1.0, %v2978
    %3003 = vrot.lane.b32.xlu0 %v2997, 112
    %v3004 = vpop.permute.xlu0 %3003
    %3005 = vrot.lane.b32.xlu0 %v2998, 112
    %v3006 = vpop.permute.xlu0 %3005
    %v3009 = vmul.f32 %v2999, %v3004
    %v3010 = vmul.f32 %v3000, %v3006
    %v3011 = vrot.slane %v2776, 1
    %v3012 = vrot.slane %v2777, 1
    %v3015 = vmul.f32 %v2963, %v3011
    %v3016 = vmul.f32 %v2978, %v3012
    %v3017 = vadd.f32 %v3009, %v3015
    %v3018 = vadd.f32 %v3010, %v3016
    %3021 = vrot.lane.b32.xlu0 %v3017, 112
    %v3022 = vpop.permute.xlu0 %3021
    %3023 = vrot.lane.b32.xlu0 %v3018, 112
    %v3024 = vpop.permute.xlu0 %3023
    %3027 = vst.msk [vmem:[#allocation3] sm:$0x80] %vm1079, %v3022
    %3028 = vst.msk [vmem:[#allocation3 + $0x10] sm:$0x80] %vm1079, %v3024
    %v3029 = vrot.slane %v2897, 7
    %v3030 = vsel %vm1083, %v3029, %v2896
    %3031 = vrot.lane.b32.xlu0 %v3030, 112
    %v3032 = vpop.permute.xlu0 %3031
    %v3033 = vsel %vm61, %v3032, 0
    %3035 = vmatpush.msra.mxu0 0.0
    %3036 = vmatpush.msra.mxu0 0.0
    %3037 = vmatpush.msra.mxu0 0.0
    %3038 = vmatpush.msra.mxu0 0.0
    %3039 = vmatpush.msra.mxu0 0.0
    %3040 = vmatpush.msra.mxu0 0.0
    %3041 = vmatpush.msra.mxu0 0.0
    %3042 = vmatpush.msra.mxu0 0.0
    %3043 = vmatpush.msra.mxu0 0.0
    %3044 = vmatpush.msra.mxu0 0.0
    %3045 = vmatpush.msra.mxu0 0.0
    %3046 = vmatpush.msra.mxu0 0.0
    %3047 = vmatpush.msra.mxu0 0.0
    %3048 = vmatpush.msra.mxu0 0.0
    %3049 = vmatpush.msra.mxu0 %v845
    %3050 = vmatpush.msra.mxu0 %v844
    %3051 = vmatmul.f32.gmra.mxu0 %v3033
    %v3052 = vpop.f32.mrf.mxu0
    %v3053 = vadd.f32 %v851, %v3052
    %3054 = vdwg.mxu0
    %v3056 = vrot.slane %v3053, 7
    %v3059 = vadd.f32 %v801, %v3056
    %v3060 = vadd.f32 %v807, %v3053
    %v3061 = vxor.u32 %v3059, 2147483648
    %v3062 = vxor.u32 %v3060, 2147483648
    %v3063 = vmul.f32 %v3061, 1.442695
    %v3064 = vpow.pop %v3063
    %v3065 = vmul.f32 %v3062, 1.442695
    %v3066 = vpow.pop %v3065
    %v3067 = vadd.f32 %v3064, 1.0
    %v3068 = vadd.f32 %v3066, 1.0
    %v3069 = vrcp.pop %v3067
    %v3070 = vmul.f32 %v3067, %v3069
    %v3071 = vsub.f32 1.0, %v3070
    %v3072 = vmul.f32 %v3069, %v3071
    %v3073 = vadd.f32 %v3069, %v3072
    %vm3074 = vweird.f32 %v3067
    %vm3075 = vweird.f32 %v3069
    %vm3076 = vmor %vm3074, %vm3075
    %v3077 = vsel %vm3076, %v3069, %v3073
    %v3078 = vand.u32 2147483647, %v3067
    %vm3079 = vcmp.eq.f32.partialorder %v3078, 8.507059e+37
    %v3080 = vand.u32 %v3067, 2147483648
    %v3081 = vor.u32 1.1754944e-38, %v3080
    %v3082 = vsel %vm3079, %v3081, %v3077
    %v3083 = vmul.f32 1.0, %v3082
    %v3084 = vrcp.pop %v3068
    %v3085 = vmul.f32 %v3068, %v3084
    %v3086 = vsub.f32 1.0, %v3085
    %v3087 = vmul.f32 %v3084, %v3086
    %v3088 = vadd.f32 %v3084, %v3087
    %vm3089 = vweird.f32 %v3068
    %vm3090 = vweird.f32 %v3084
    %vm3091 = vmor %vm3089, %vm3090
    %v3092 = vsel %vm3091, %v3084, %v3088
    %v3093 = vand.u32 2147483647, %v3068
    %vm3094 = vcmp.eq.f32.partialorder %v3093, 8.507059e+37
    %v3095 = vand.u32 %v3068, 2147483648
    %v3096 = vor.u32 1.1754944e-38, %v3095
    %v3097 = vsel %vm3094, %v3096, %v3092
    %v3098 = vmul.f32 1.0, %v3097
    %3099 = vrot.lane.b32.xlu0 %v3056, 96
    %v3100 = vpop.permute.xlu0 %3099
    %3101 = vrot.lane.b32.xlu0 %v3053, 96
    %v3102 = vpop.permute.xlu0 %3101
    %v3105 = vmul.f32 %v3083, %v3100
    %v3106 = vmul.f32 %v3098, %v3102
    %3109 = vrot.lane.b32.xlu0 %v3105, 32
    %v3110 = vpop.permute.xlu0 %3109
    %3111 = vrot.lane.b32.xlu0 %v3106, 32
    %v3112 = vpop.permute.xlu0 %3111
    %v3115 = vadd.f32 %v801, %v3110
    %v3116 = vadd.f32 %v807, %v3112
    %v3117 = vtanh.pop %v3115
    %v3118 = vtanh.pop %v3116
    %v3119 = vsub.f32 1.0, %v3083
    %v3120 = vsub.f32 1.0, %v3098
    %3123 = vrot.lane.b32.xlu0 %v3117, 112
    %v3124 = vpop.permute.xlu0 %3123
    %3125 = vrot.lane.b32.xlu0 %v3118, 112
    %v3126 = vpop.permute.xlu0 %3125
    %v3129 = vmul.f32 %v3119, %v3124
    %v3130 = vmul.f32 %v3120, %v3126
    %v3131 = vrot.slane %v2896, 7
    %v3134 = vmul.f32 %v3083, %v3131
    %v3135 = vmul.f32 %v3098, %v3029
    %v3136 = vadd.f32 %v3129, %v3134
    %v3137 = vadd.f32 %v3130, %v3135
    %3140 = vrot.lane.b32.xlu0 %v3136, 112
    %v3141 = vpop.permute.xlu0 %3140
    %3142 = vrot.lane.b32.xlu0 %v3137, 112
    %v3143 = vpop.permute.xlu0 %3142
    %3146 = vst.msk [vmem:[#allocation2 + $0x8] sm:$0x2] %vm1200, %v3141
    %3147 = vst.msk [vmem:[#allocation2 + $0x18] sm:$0x2] %vm1200, %v3143
    %v3148 = vrot.slane %v3017, 7
    %v3149 = vrot.slane %v3018, 6
    %v3150 = vsel %vm1083, %v3149, %v3148
    %3151 = vrot.lane.b32.xlu0 %v3150, 112
    %v3152 = vpop.permute.xlu0 %3151
    %v3153 = vsel %vm61, %v3152, 0
    %3155 = vmatpush.msra.mxu0 0.0
    %3156 = vmatpush.msra.mxu0 0.0
    %3157 = vmatpush.msra.mxu0 0.0
    %3158 = vmatpush.msra.mxu0 0.0
    %3159 = vmatpush.msra.mxu0 0.0
    %3160 = vmatpush.msra.mxu0 0.0
    %3161 = vmatpush.msra.mxu0 0.0
    %3162 = vmatpush.msra.mxu0 0.0
    %3163 = vmatpush.msra.mxu0 0.0
    %3164 = vmatpush.msra.mxu0 0.0
    %3165 = vmatpush.msra.mxu0 0.0
    %3166 = vmatpush.msra.mxu0 0.0
    %3167 = vmatpush.msra.mxu0 0.0
    %3168 = vmatpush.msra.mxu0 0.0
    %3169 = vmatpush.msra.mxu0 %v848
    %3170 = vmatpush.msra.mxu0 %v847
    %3171 = vmatmul.f32.gmra.mxu0 %v3153
    %v3172 = vpop.f32.mrf.mxu0
    %v3173 = vadd.f32 %v968, %v3172
    %3174 = vdwg.mxu0
    %v3176 = vrot.slane %v3173, 2
    %v3177 = vrot.slane %v3173, 3
    %v3180 = vadd.f32 %v833, %v3176
    %v3181 = vadd.f32 %v839, %v3177
    %v3182 = vxor.u32 %v3180, 2147483648
    %v3183 = vxor.u32 %v3181, 2147483648
    %v3184 = vmul.f32 %v3182, 1.442695
    %v3185 = vpow.pop %v3184
    %v3186 = vmul.f32 %v3183, 1.442695
    %v3187 = vpow.pop %v3186
    %v3188 = vadd.f32 %v3185, 1.0
    %v3189 = vadd.f32 %v3187, 1.0
    %v3190 = vrcp.pop %v3188
    %v3191 = vmul.f32 %v3188, %v3190
    %v3192 = vsub.f32 1.0, %v3191
    %v3193 = vmul.f32 %v3190, %v3192
    %v3194 = vadd.f32 %v3190, %v3193
    %vm3195 = vweird.f32 %v3188
    %vm3196 = vweird.f32 %v3190
    %vm3197 = vmor %vm3195, %vm3196
    %v3198 = vsel %vm3197, %v3190, %v3194
    %v3199 = vand.u32 2147483647, %v3188
    %vm3200 = vcmp.eq.f32.partialorder %v3199, 8.507059e+37
    %v3201 = vand.u32 %v3188, 2147483648
    %v3202 = vor.u32 1.1754944e-38, %v3201
    %v3203 = vsel %vm3200, %v3202, %v3198
    %v3204 = vmul.f32 1.0, %v3203
    %v3205 = vrcp.pop %v3189
    %v3206 = vmul.f32 %v3189, %v3205
    %v3207 = vsub.f32 1.0, %v3206
    %v3208 = vmul.f32 %v3205, %v3207
    %v3209 = vadd.f32 %v3205, %v3208
    %vm3210 = vweird.f32 %v3189
    %vm3211 = vweird.f32 %v3205
    %vm3212 = vmor %vm3210, %vm3211
    %v3213 = vsel %vm3212, %v3205, %v3209
    %v3214 = vand.u32 2147483647, %v3189
    %vm3215 = vcmp.eq.f32.partialorder %v3214, 8.507059e+37
    %v3216 = vand.u32 %v3189, 2147483648
    %v3217 = vor.u32 1.1754944e-38, %v3216
    %v3218 = vsel %vm3215, %v3217, %v3213
    %v3219 = vmul.f32 1.0, %v3218
    %3220 = vrot.lane.b32.xlu0 %v3176, 96
    %v3221 = vpop.permute.xlu0 %3220
    %3222 = vrot.lane.b32.xlu0 %v3177, 96
    %v3223 = vpop.permute.xlu0 %3222
    %v3226 = vmul.f32 %v3204, %v3221
    %v3227 = vmul.f32 %v3219, %v3223
    %3230 = vrot.lane.b32.xlu0 %v3226, 32
    %v3231 = vpop.permute.xlu0 %3230
    %3232 = vrot.lane.b32.xlu0 %v3227, 32
    %v3233 = vpop.permute.xlu0 %3232
    %v3236 = vadd.f32 %v833, %v3231
    %v3237 = vadd.f32 %v839, %v3233
    %v3238 = vtanh.pop %v3236
    %v3239 = vtanh.pop %v3237
    %v3240 = vsub.f32 1.0, %v3204
    %v3241 = vsub.f32 1.0, %v3219
    %3244 = vrot.lane.b32.xlu0 %v3238, 112
    %v3245 = vpop.permute.xlu0 %3244
    %3246 = vrot.lane.b32.xlu0 %v3239, 112
    %v3247 = vpop.permute.xlu0 %3246
    %v3250 = vmul.f32 %v3240, %v3245
    %v3251 = vmul.f32 %v3241, %v3247
    %v3252 = vrot.slane %v3017, 1
    %v3253 = vrot.slane %v3018, 1
    %v3256 = vmul.f32 %v3204, %v3252
    %v3257 = vmul.f32 %v3219, %v3253
    %v3258 = vadd.f32 %v3250, %v3256
    %v3259 = vadd.f32 %v3251, %v3257
    %3262 = vrot.lane.b32.xlu0 %v3258, 112
    %v3263 = vpop.permute.xlu0 %3262
    %3264 = vrot.lane.b32.xlu0 %v3259, 112
    %v3265 = vpop.permute.xlu0 %3264
    %3268 = vst.msk [vmem:[#allocation3] sm:$0x40] %vm1323, %v3263
    %3269 = vst.msk [vmem:[#allocation3 + $0x10] sm:$0x40] %vm1323, %v3265
    %v3270 = vrot.slane %v3136, 1
    %v3271 = vsel %vm1083, %v3137, %v3270
    %3272 = vrot.lane.b32.xlu0 %v3271, 112
    %v3273 = vpop.permute.xlu0 %3272
    %v3274 = vsel %vm61, %v3273, 0
    %3276 = vmatpush.msra.mxu0 0.0
    %3277 = vmatpush.msra.mxu0 0.0
    %3278 = vmatpush.msra.mxu0 0.0
    %3279 = vmatpush.msra.mxu0 0.0
    %3280 = vmatpush.msra.mxu0 0.0
    %3281 = vmatpush.msra.mxu0 0.0
    %3282 = vmatpush.msra.mxu0 0.0
    %3283 = vmatpush.msra.mxu0 0.0
    %3284 = vmatpush.msra.mxu0 0.0
    %3285 = vmatpush.msra.mxu0 0.0
    %3286 = vmatpush.msra.mxu0 0.0
    %3287 = vmatpush.msra.mxu0 0.0
    %3288 = vmatpush.msra.mxu0 0.0
    %3289 = vmatpush.msra.mxu0 0.0
    %3290 = vmatpush.msra.mxu0 %v845
    %3291 = vmatpush.msra.mxu0 %v844
    %3292 = vmatmul.f32.gmra.mxu0 %v3274
    %v3293 = vpop.f32.mrf.mxu0
    %v3294 = vadd.f32 %v851, %v3293
    %3295 = vdwg.mxu0
    %v3297 = vrot.slane %v3294, 6
    %v3298 = vrot.slane %v3294, 7
    %v3301 = vadd.f32 %v801, %v3297
    %v3302 = vadd.f32 %v807, %v3298
    %v3303 = vxor.u32 %v3301, 2147483648
    %v3304 = vxor.u32 %v3302, 2147483648
    %v3305 = vmul.f32 %v3303, 1.442695
    %v3306 = vpow.pop %v3305
    %v3307 = vmul.f32 %v3304, 1.442695
    %v3308 = vpow.pop %v3307
    %v3309 = vadd.f32 %v3306, 1.0
    %v3310 = vadd.f32 %v3308, 1.0
    %v3311 = vrcp.pop %v3309
    %v3312 = vmul.f32 %v3309, %v3311
    %v3313 = vsub.f32 1.0, %v3312
    %v3314 = vmul.f32 %v3311, %v3313
    %v3315 = vadd.f32 %v3311, %v3314
    %vm3316 = vweird.f32 %v3309
    %vm3317 = vweird.f32 %v3311
    %vm3318 = vmor %vm3316, %vm3317
    %v3319 = vsel %vm3318, %v3311, %v3315
    %v3320 = vand.u32 2147483647, %v3309
    %vm3321 = vcmp.eq.f32.partialorder %v3320, 8.507059e+37
    %v3322 = vand.u32 %v3309, 2147483648
    %v3323 = vor.u32 1.1754944e-38, %v3322
    %v3324 = vsel %vm3321, %v3323, %v3319
    %v3325 = vmul.f32 1.0, %v3324
    %v3326 = vrcp.pop %v3310
    %v3327 = vmul.f32 %v3310, %v3326
    %v3328 = vsub.f32 1.0, %v3327
    %v3329 = vmul.f32 %v3326, %v3328
    %v3330 = vadd.f32 %v3326, %v3329
    %vm3331 = vweird.f32 %v3310
    %vm3332 = vweird.f32 %v3326
    %vm3333 = vmor %vm3331, %vm3332
    %v3334 = vsel %vm3333, %v3326, %v3330
    %v3335 = vand.u32 2147483647, %v3310
    %vm3336 = vcmp.eq.f32.partialorder %v3335, 8.507059e+37
    %v3337 = vand.u32 %v3310, 2147483648
    %v3338 = vor.u32 1.1754944e-38, %v3337
    %v3339 = vsel %vm3336, %v3338, %v3334
    %v3340 = vmul.f32 1.0, %v3339
    %3341 = vrot.lane.b32.xlu0 %v3297, 96
    %v3342 = vpop.permute.xlu0 %3341
    %3343 = vrot.lane.b32.xlu0 %v3298, 96
    %v3344 = vpop.permute.xlu0 %3343
    %v3347 = vmul.f32 %v3325, %v3342
    %v3348 = vmul.f32 %v3340, %v3344
    %3351 = vrot.lane.b32.xlu0 %v3347, 32
    %v3352 = vpop.permute.xlu0 %3351
    %3353 = vrot.lane.b32.xlu0 %v3348, 32
    %v3354 = vpop.permute.xlu0 %3353
    %v3357 = vadd.f32 %v801, %v3352
    %v3358 = vadd.f32 %v807, %v3354
    %v3359 = vtanh.pop %v3357
    %v3360 = vtanh.pop %v3358
    %v3361 = vsub.f32 1.0, %v3325
    %v3362 = vsub.f32 1.0, %v3340
    %3365 = vrot.lane.b32.xlu0 %v3359, 112
    %v3366 = vpop.permute.xlu0 %3365
    %3367 = vrot.lane.b32.xlu0 %v3360, 112
    %v3368 = vpop.permute.xlu0 %3367
    %v3371 = vmul.f32 %v3361, %v3366
    %v3372 = vmul.f32 %v3362, %v3368
    %v3373 = vrot.slane %v3136, 7
    %v3374 = vrot.slane %v3137, 7
    %v3377 = vmul.f32 %v3325, %v3373
    %v3378 = vmul.f32 %v3340, %v3374
    %v3379 = vadd.f32 %v3371, %v3377
    %v3380 = vadd.f32 %v3372, %v3378
    %3383 = vrot.lane.b32.xlu0 %v3379, 112
    %v3384 = vpop.permute.xlu0 %3383
    %3385 = vrot.lane.b32.xlu0 %v3380, 112
    %v3386 = vpop.permute.xlu0 %3385
    %3389 = vst.msk [vmem:[#allocation2 + $0x8] sm:$0x4] %vm1445, %v3384
    %3390 = vst.msk [vmem:[#allocation2 + $0x18] sm:$0x4] %vm1445, %v3386
    %v3391 = vrot.slane %v3258, 6
    %v3392 = vrot.slane %v3259, 5
    %v3393 = vsel %vm1083, %v3392, %v3391
    %3394 = vrot.lane.b32.xlu0 %v3393, 112
    %v3395 = vpop.permute.xlu0 %3394
    %v3396 = vsel %vm61, %v3395, 0
    %3398 = vmatpush.msra.mxu0 0.0
    %3399 = vmatpush.msra.mxu0 0.0
    %3400 = vmatpush.msra.mxu0 0.0
    %3401 = vmatpush.msra.mxu0 0.0
    %3402 = vmatpush.msra.mxu0 0.0
    %3403 = vmatpush.msra.mxu0 0.0
    %3404 = vmatpush.msra.mxu0 0.0
    %3405 = vmatpush.msra.mxu0 0.0
    %3406 = vmatpush.msra.mxu0 0.0
    %3407 = vmatpush.msra.mxu0 0.0
    %3408 = vmatpush.msra.mxu0 0.0
    %3409 = vmatpush.msra.mxu0 0.0
    %3410 = vmatpush.msra.mxu0 0.0
    %3411 = vmatpush.msra.mxu0 0.0
    %3412 = vmatpush.msra.mxu0 %v848
    %3413 = vmatpush.msra.mxu0 %v847
    %3414 = vmatmul.f32.gmra.mxu0 %v3396
    %v3415 = vpop.f32.mrf.mxu0
    %v3416 = vadd.f32 %v968, %v3415
    %3417 = vdwg.mxu0
    %v3419 = vrot.slane %v3416, 3
    %v3420 = vrot.slane %v3416, 4
    %v3423 = vadd.f32 %v833, %v3419
    %v3424 = vadd.f32 %v839, %v3420
    %v3425 = vxor.u32 %v3423, 2147483648
    %v3426 = vxor.u32 %v3424, 2147483648
    %v3427 = vmul.f32 %v3425, 1.442695
    %v3428 = vpow.pop %v3427
    %v3429 = vmul.f32 %v3426, 1.442695
    %v3430 = vpow.pop %v3429
    %v3431 = vadd.f32 %v3428, 1.0
    %v3432 = vadd.f32 %v3430, 1.0
    %v3433 = vrcp.pop %v3431
    %v3434 = vmul.f32 %v3431, %v3433
    %v3435 = vsub.f32 1.0, %v3434
    %v3436 = vmul.f32 %v3433, %v3435
    %v3437 = vadd.f32 %v3433, %v3436
    %vm3438 = vweird.f32 %v3431
    %vm3439 = vweird.f32 %v3433
    %vm3440 = vmor %vm3438, %vm3439
    %v3441 = vsel %vm3440, %v3433, %v3437
    %v3442 = vand.u32 2147483647, %v3431
    %vm3443 = vcmp.eq.f32.partialorder %v3442, 8.507059e+37
    %v3444 = vand.u32 %v3431, 2147483648
    %v3445 = vor.u32 1.1754944e-38, %v3444
    %v3446 = vsel %vm3443, %v3445, %v3441
    %v3447 = vmul.f32 1.0, %v3446
    %v3448 = vrcp.pop %v3432
    %v3449 = vmul.f32 %v3432, %v3448
    %v3450 = vsub.f32 1.0, %v3449
    %v3451 = vmul.f32 %v3448, %v3450
    %v3452 = vadd.f32 %v3448, %v3451
    %vm3453 = vweird.f32 %v3432
    %vm3454 = vweird.f32 %v3448
    %vm3455 = vmor %vm3453, %vm3454
    %v3456 = vsel %vm3455, %v3448, %v3452
    %v3457 = vand.u32 2147483647, %v3432
    %vm3458 = vcmp.eq.f32.partialorder %v3457, 8.507059e+37
    %v3459 = vand.u32 %v3432, 2147483648
    %v3460 = vor.u32 1.1754944e-38, %v3459
    %v3461 = vsel %vm3458, %v3460, %v3456
    %v3462 = vmul.f32 1.0, %v3461
    %3463 = vrot.lane.b32.xlu0 %v3419, 96
    %v3464 = vpop.permute.xlu0 %3463
    %3465 = vrot.lane.b32.xlu0 %v3420, 96
    %v3466 = vpop.permute.xlu0 %3465
    %v3469 = vmul.f32 %v3447, %v3464
    %v3470 = vmul.f32 %v3462, %v3466
    %3473 = vrot.lane.b32.xlu0 %v3469, 32
    %v3474 = vpop.permute.xlu0 %3473
    %3475 = vrot.lane.b32.xlu0 %v3470, 32
    %v3476 = vpop.permute.xlu0 %3475
    %v3479 = vadd.f32 %v833, %v3474
    %v3480 = vadd.f32 %v839, %v3476
    %v3481 = vtanh.pop %v3479
    %v3482 = vtanh.pop %v3480
    %v3483 = vsub.f32 1.0, %v3447
    %v3484 = vsub.f32 1.0, %v3462
    %3487 = vrot.lane.b32.xlu0 %v3481, 112
    %v3488 = vpop.permute.xlu0 %3487
    %3489 = vrot.lane.b32.xlu0 %v3482, 112
    %v3490 = vpop.permute.xlu0 %3489
    %v3493 = vmul.f32 %v3483, %v3488
    %v3494 = vmul.f32 %v3484, %v3490
    %v3495 = vrot.slane %v3258, 1
    %v3496 = vrot.slane %v3259, 1
    %v3499 = vmul.f32 %v3447, %v3495
    %v3500 = vmul.f32 %v3462, %v3496
    %v3501 = vadd.f32 %v3493, %v3499
    %v3502 = vadd.f32 %v3494, %v3500
    %3505 = vrot.lane.b32.xlu0 %v3501, 112
    %v3506 = vpop.permute.xlu0 %3505
    %3507 = vrot.lane.b32.xlu0 %v3502, 112
    %v3508 = vpop.permute.xlu0 %3507
    %3511 = vst.msk [vmem:[#allocation3] sm:$0x20] %vm1568, %v3506
    %3512 = vst.msk [vmem:[#allocation3 + $0x10] sm:$0x20] %vm1568, %v3508
    %v3513 = vrot.slane %v3379, 2
    %v3514 = vrot.slane %v3380, 1
    %v3515 = vsel %vm1083, %v3514, %v3513
    %3516 = vrot.lane.b32.xlu0 %v3515, 112
    %v3517 = vpop.permute.xlu0 %3516
    %v3518 = vsel %vm61, %v3517, 0
    %3520 = vmatpush.msra.mxu0 0.0
    %3521 = vmatpush.msra.mxu0 0.0
    %3522 = vmatpush.msra.mxu0 0.0
    %3523 = vmatpush.msra.mxu0 0.0
    %3524 = vmatpush.msra.mxu0 0.0
    %3525 = vmatpush.msra.mxu0 0.0
    %3526 = vmatpush.msra.mxu0 0.0
    %3527 = vmatpush.msra.mxu0 0.0
    %3528 = vmatpush.msra.mxu0 0.0
    %3529 = vmatpush.msra.mxu0 0.0
    %3530 = vmatpush.msra.mxu0 0.0
    %3531 = vmatpush.msra.mxu0 0.0
    %3532 = vmatpush.msra.mxu0 0.0
    %3533 = vmatpush.msra.mxu0 0.0
    %3534 = vmatpush.msra.mxu0 %v845
    %3535 = vmatpush.msra.mxu0 %v844
    %3536 = vmatmul.f32.gmra.mxu0 %v3518
    %v3537 = vpop.f32.mrf.mxu0
    %v3538 = vadd.f32 %v851, %v3537
    %3539 = vdwg.mxu0
    %v3541 = vrot.slane %v3538, 5
    %v3542 = vrot.slane %v3538, 6
    %v3545 = vadd.f32 %v801, %v3541
    %v3546 = vadd.f32 %v807, %v3542
    %v3547 = vxor.u32 %v3545, 2147483648
    %v3548 = vxor.u32 %v3546, 2147483648
    %v3549 = vmul.f32 %v3547, 1.442695
    %v3550 = vpow.pop %v3549
    %v3551 = vmul.f32 %v3548, 1.442695
    %v3552 = vpow.pop %v3551
    %v3553 = vadd.f32 %v3550, 1.0
    %v3554 = vadd.f32 %v3552, 1.0
    %v3555 = vrcp.pop %v3553
    %v3556 = vmul.f32 %v3553, %v3555
    %v3557 = vsub.f32 1.0, %v3556
    %v3558 = vmul.f32 %v3555, %v3557
    %v3559 = vadd.f32 %v3555, %v3558
    %vm3560 = vweird.f32 %v3553
    %vm3561 = vweird.f32 %v3555
    %vm3562 = vmor %vm3560, %vm3561
    %v3563 = vsel %vm3562, %v3555, %v3559
    %v3564 = vand.u32 2147483647, %v3553
    %vm3565 = vcmp.eq.f32.partialorder %v3564, 8.507059e+37
    %v3566 = vand.u32 %v3553, 2147483648
    %v3567 = vor.u32 1.1754944e-38, %v3566
    %v3568 = vsel %vm3565, %v3567, %v3563
    %v3569 = vmul.f32 1.0, %v3568
    %v3570 = vrcp.pop %v3554
    %v3571 = vmul.f32 %v3554, %v3570
    %v3572 = vsub.f32 1.0, %v3571
    %v3573 = vmul.f32 %v3570, %v3572
    %v3574 = vadd.f32 %v3570, %v3573
    %vm3575 = vweird.f32 %v3554
    %vm3576 = vweird.f32 %v3570
    %vm3577 = vmor %vm3575, %vm3576
    %v3578 = vsel %vm3577, %v3570, %v3574
    %v3579 = vand.u32 2147483647, %v3554
    %vm3580 = vcmp.eq.f32.partialorder %v3579, 8.507059e+37
    %v3581 = vand.u32 %v3554, 2147483648
    %v3582 = vor.u32 1.1754944e-38, %v3581
    %v3583 = vsel %vm3580, %v3582, %v3578
    %v3584 = vmul.f32 1.0, %v3583
    %3585 = vrot.lane.b32.xlu0 %v3541, 96
    %v3586 = vpop.permute.xlu0 %3585
    %3587 = vrot.lane.b32.xlu0 %v3542, 96
    %v3588 = vpop.permute.xlu0 %3587
    %v3591 = vmul.f32 %v3569, %v3586
    %v3592 = vmul.f32 %v3584, %v3588
    %3595 = vrot.lane.b32.xlu0 %v3591, 32
    %v3596 = vpop.permute.xlu0 %3595
    %3597 = vrot.lane.b32.xlu0 %v3592, 32
    %v3598 = vpop.permute.xlu0 %3597
    %v3601 = vadd.f32 %v801, %v3596
    %v3602 = vadd.f32 %v807, %v3598
    %v3603 = vtanh.pop %v3601
    %v3604 = vtanh.pop %v3602
    %v3605 = vsub.f32 1.0, %v3569
    %v3606 = vsub.f32 1.0, %v3584
    %3609 = vrot.lane.b32.xlu0 %v3603, 112
    %v3610 = vpop.permute.xlu0 %3609
    %3611 = vrot.lane.b32.xlu0 %v3604, 112
    %v3612 = vpop.permute.xlu0 %3611
    %v3615 = vmul.f32 %v3605, %v3610
    %v3616 = vmul.f32 %v3606, %v3612
    %v3617 = vrot.slane %v3379, 7
    %v3618 = vrot.slane %v3380, 7
    %v3621 = vmul.f32 %v3569, %v3617
    %v3622 = vmul.f32 %v3584, %v3618
    %v3623 = vadd.f32 %v3615, %v3621
    %v3624 = vadd.f32 %v3616, %v3622
    %3627 = vrot.lane.b32.xlu0 %v3623, 112
    %v3628 = vpop.permute.xlu0 %3627
    %3629 = vrot.lane.b32.xlu0 %v3624, 112
    %v3630 = vpop.permute.xlu0 %3629
    %3633 = vst.msk [vmem:[#allocation2 + $0x8] sm:$0x8] %vm1691, %v3628
    %3634 = vst.msk [vmem:[#allocation2 + $0x18] sm:$0x8] %vm1691, %v3630
    %v3635 = vrot.slane %v3501, 5
    %v3636 = vrot.slane %v3502, 4
    %v3637 = vsel %vm1083, %v3636, %v3635
    %3638 = vrot.lane.b32.xlu0 %v3637, 112
    %v3639 = vpop.permute.xlu0 %3638
    %v3640 = vsel %vm61, %v3639, 0
    %3642 = vmatpush.msra.mxu0 0.0
    %3643 = vmatpush.msra.mxu0 0.0
    %3644 = vmatpush.msra.mxu0 0.0
    %3645 = vmatpush.msra.mxu0 0.0
    %3646 = vmatpush.msra.mxu0 0.0
    %3647 = vmatpush.msra.mxu0 0.0
    %3648 = vmatpush.msra.mxu0 0.0
    %3649 = vmatpush.msra.mxu0 0.0
    %3650 = vmatpush.msra.mxu0 0.0
    %3651 = vmatpush.msra.mxu0 0.0
    %3652 = vmatpush.msra.mxu0 0.0
    %3653 = vmatpush.msra.mxu0 0.0
    %3654 = vmatpush.msra.mxu0 0.0
    %3655 = vmatpush.msra.mxu0 0.0
    %3656 = vmatpush.msra.mxu0 %v848
    %3657 = vmatpush.msra.mxu0 %v847
    %3658 = vmatmul.f32.gmra.mxu0 %v3640
    %v3659 = vpop.f32.mrf.mxu0
    %v3660 = vadd.f32 %v968, %v3659
    %3661 = vdwg.mxu0
    %v3663 = vrot.slane %v3660, 4
    %v3664 = vrot.slane %v3660, 5
    %v3667 = vadd.f32 %v833, %v3663
    %v3668 = vadd.f32 %v839, %v3664
    %v3669 = vxor.u32 %v3667, 2147483648
    %v3670 = vxor.u32 %v3668, 2147483648
    %v3671 = vmul.f32 %v3669, 1.442695
    %v3672 = vpow.pop %v3671
    %v3673 = vmul.f32 %v3670, 1.442695
    %v3674 = vpow.pop %v3673
    %v3675 = vadd.f32 %v3672, 1.0
    %v3676 = vadd.f32 %v3674, 1.0
    %v3677 = vrcp.pop %v3675
    %v3678 = vmul.f32 %v3675, %v3677
    %v3679 = vsub.f32 1.0, %v3678
    %v3680 = vmul.f32 %v3677, %v3679
    %v3681 = vadd.f32 %v3677, %v3680
    %vm3682 = vweird.f32 %v3675
    %vm3683 = vweird.f32 %v3677
    %vm3684 = vmor %vm3682, %vm3683
    %v3685 = vsel %vm3684, %v3677, %v3681
    %v3686 = vand.u32 2147483647, %v3675
    %vm3687 = vcmp.eq.f32.partialorder %v3686, 8.507059e+37
    %v3688 = vand.u32 %v3675, 2147483648
    %v3689 = vor.u32 1.1754944e-38, %v3688
    %v3690 = vsel %vm3687, %v3689, %v3685
    %v3691 = vmul.f32 1.0, %v3690
    %v3692 = vrcp.pop %v3676
    %v3693 = vmul.f32 %v3676, %v3692
    %v3694 = vsub.f32 1.0, %v3693
    %v3695 = vmul.f32 %v3692, %v3694
    %v3696 = vadd.f32 %v3692, %v3695
    %vm3697 = vweird.f32 %v3676
    %vm3698 = vweird.f32 %v3692
    %vm3699 = vmor %vm3697, %vm3698
    %v3700 = vsel %vm3699, %v3692, %v3696
    %v3701 = vand.u32 2147483647, %v3676
    %vm3702 = vcmp.eq.f32.partialorder %v3701, 8.507059e+37
    %v3703 = vand.u32 %v3676, 2147483648
    %v3704 = vor.u32 1.1754944e-38, %v3703
    %v3705 = vsel %vm3702, %v3704, %v3700
    %v3706 = vmul.f32 1.0, %v3705
    %3707 = vrot.lane.b32.xlu0 %v3663, 96
    %v3708 = vpop.permute.xlu0 %3707
    %3709 = vrot.lane.b32.xlu0 %v3664, 96
    %v3710 = vpop.permute.xlu0 %3709
    %v3713 = vmul.f32 %v3691, %v3708
    %v3714 = vmul.f32 %v3706, %v3710
    %3717 = vrot.lane.b32.xlu0 %v3713, 32
    %v3718 = vpop.permute.xlu0 %3717
    %3719 = vrot.lane.b32.xlu0 %v3714, 32
    %v3720 = vpop.permute.xlu0 %3719
    %v3723 = vadd.f32 %v833, %v3718
    %v3724 = vadd.f32 %v839, %v3720
    %v3725 = vtanh.pop %v3723
    %v3726 = vtanh.pop %v3724
    %v3727 = vsub.f32 1.0, %v3691
    %v3728 = vsub.f32 1.0, %v3706
    %3731 = vrot.lane.b32.xlu0 %v3725, 112
    %v3732 = vpop.permute.xlu0 %3731
    %3733 = vrot.lane.b32.xlu0 %v3726, 112
    %v3734 = vpop.permute.xlu0 %3733
    %v3737 = vmul.f32 %v3727, %v3732
    %v3738 = vmul.f32 %v3728, %v3734
    %v3739 = vrot.slane %v3501, 1
    %v3740 = vrot.slane %v3502, 1
    %v3743 = vmul.f32 %v3691, %v3739
    %v3744 = vmul.f32 %v3706, %v3740
    %v3745 = vadd.f32 %v3737, %v3743
    %v3746 = vadd.f32 %v3738, %v3744
    %3749 = vrot.lane.b32.xlu0 %v3745, 112
    %v3750 = vpop.permute.xlu0 %3749
    %3751 = vrot.lane.b32.xlu0 %v3746, 112
    %v3752 = vpop.permute.xlu0 %3751
    %3755 = vst.msk [vmem:[#allocation3] sm:$0x10] %vm1814, %v3750
    %3756 = vst.msk [vmem:[#allocation3 + $0x10] sm:$0x10] %vm1814, %v3752
    %v3757 = vrot.slane %v3623, 3
    %v3758 = vrot.slane %v3624, 2
    %v3759 = vsel %vm1083, %v3758, %v3757
    %3760 = vrot.lane.b32.xlu0 %v3759, 112
    %v3761 = vpop.permute.xlu0 %3760
    %v3762 = vsel %vm61, %v3761, 0
    %3764 = vmatpush.msra.mxu0 0.0
    %3765 = vmatpush.msra.mxu0 0.0
    %3766 = vmatpush.msra.mxu0 0.0
    %3767 = vmatpush.msra.mxu0 0.0
    %3768 = vmatpush.msra.mxu0 0.0
    %3769 = vmatpush.msra.mxu0 0.0
    %3770 = vmatpush.msra.mxu0 0.0
    %3771 = vmatpush.msra.mxu0 0.0
    %3772 = vmatpush.msra.mxu0 0.0
    %3773 = vmatpush.msra.mxu0 0.0
    %3774 = vmatpush.msra.mxu0 0.0
    %3775 = vmatpush.msra.mxu0 0.0
    %3776 = vmatpush.msra.mxu0 0.0
    %3777 = vmatpush.msra.mxu0 0.0
    %3778 = vmatpush.msra.mxu0 %v845
    %3779 = vmatpush.msra.mxu0 %v844
    %3780 = vmatmul.f32.gmra.mxu0 %v3762
    %v3781 = vpop.f32.mrf.mxu0
    %v3782 = vadd.f32 %v851, %v3781
    %3783 = vdwg.mxu0
    %v3785 = vrot.slane %v3782, 4
    %v3786 = vrot.slane %v3782, 5
    %v3789 = vadd.f32 %v801, %v3785
    %v3790 = vadd.f32 %v807, %v3786
    %v3791 = vxor.u32 %v3789, 2147483648
    %v3792 = vxor.u32 %v3790, 2147483648
    %v3793 = vmul.f32 %v3791, 1.442695
    %v3794 = vpow.pop %v3793
    %v3795 = vmul.f32 %v3792, 1.442695
    %v3796 = vpow.pop %v3795
    %v3797 = vadd.f32 %v3794, 1.0
    %v3798 = vadd.f32 %v3796, 1.0
    %v3799 = vrcp.pop %v3797
    %v3800 = vmul.f32 %v3797, %v3799
    %v3801 = vsub.f32 1.0, %v3800
    %v3802 = vmul.f32 %v3799, %v3801
    %v3803 = vadd.f32 %v3799, %v3802
    %vm3804 = vweird.f32 %v3797
    %vm3805 = vweird.f32 %v3799
    %vm3806 = vmor %vm3804, %vm3805
    %v3807 = vsel %vm3806, %v3799, %v3803
    %v3808 = vand.u32 2147483647, %v3797
    %vm3809 = vcmp.eq.f32.partialorder %v3808, 8.507059e+37
    %v3810 = vand.u32 %v3797, 2147483648
    %v3811 = vor.u32 1.1754944e-38, %v3810
    %v3812 = vsel %vm3809, %v3811, %v3807
    %v3813 = vmul.f32 1.0, %v3812
    %v3814 = vrcp.pop %v3798
    %v3815 = vmul.f32 %v3798, %v3814
    %v3816 = vsub.f32 1.0, %v3815
    %v3817 = vmul.f32 %v3814, %v3816
    %v3818 = vadd.f32 %v3814, %v3817
    %vm3819 = vweird.f32 %v3798
    %vm3820 = vweird.f32 %v3814
    %vm3821 = vmor %vm3819, %vm3820
    %v3822 = vsel %vm3821, %v3814, %v3818
    %v3823 = vand.u32 2147483647, %v3798
    %vm3824 = vcmp.eq.f32.partialorder %v3823, 8.507059e+37
    %v3825 = vand.u32 %v3798, 2147483648
    %v3826 = vor.u32 1.1754944e-38, %v3825
    %v3827 = vsel %vm3824, %v3826, %v3822
    %v3828 = vmul.f32 1.0, %v3827
    %3829 = vrot.lane.b32.xlu0 %v3785, 96
    %v3830 = vpop.permute.xlu0 %3829
    %3831 = vrot.lane.b32.xlu0 %v3786, 96
    %v3832 = vpop.permute.xlu0 %3831
    %v3835 = vmul.f32 %v3813, %v3830
    %v3836 = vmul.f32 %v3828, %v3832
    %3839 = vrot.lane.b32.xlu0 %v3835, 32
    %v3840 = vpop.permute.xlu0 %3839
    %3841 = vrot.lane.b32.xlu0 %v3836, 32
    %v3842 = vpop.permute.xlu0 %3841
    %v3845 = vadd.f32 %v801, %v3840
    %v3846 = vadd.f32 %v807, %v3842
    %v3847 = vtanh.pop %v3845
    %v3848 = vtanh.pop %v3846
    %v3849 = vsub.f32 1.0, %v3813
    %v3850 = vsub.f32 1.0, %v3828
    %3853 = vrot.lane.b32.xlu0 %v3847, 112
    %v3854 = vpop.permute.xlu0 %3853
    %3855 = vrot.lane.b32.xlu0 %v3848, 112
    %v3856 = vpop.permute.xlu0 %3855
    %v3859 = vmul.f32 %v3849, %v3854
    %v3860 = vmul.f32 %v3850, %v3856
    %v3861 = vrot.slane %v3623, 7
    %v3862 = vrot.slane %v3624, 7
    %v3865 = vmul.f32 %v3813, %v3861
    %v3866 = vmul.f32 %v3828, %v3862
    %v3867 = vadd.f32 %v3859, %v3865
    %v3868 = vadd.f32 %v3860, %v3866
    %3871 = vrot.lane.b32.xlu0 %v3867, 112
    %v3872 = vpop.permute.xlu0 %3871
    %3873 = vrot.lane.b32.xlu0 %v3868, 112
    %v3874 = vpop.permute.xlu0 %3873
    %3877 = vst.msk [vmem:[#allocation2 + $0x8] sm:$0x10] %vm1814, %v3872
    %3878 = vst.msk [vmem:[#allocation2 + $0x18] sm:$0x10] %vm1814, %v3874
    %v3879 = vrot.slane %v3745, 4
    %v3880 = vrot.slane %v3746, 3
    %v3881 = vsel %vm1083, %v3880, %v3879
    %3882 = vrot.lane.b32.xlu0 %v3881, 112
    %v3883 = vpop.permute.xlu0 %3882
    %v3884 = vsel %vm61, %v3883, 0
    %3886 = vmatpush.msra.mxu0 0.0
    %3887 = vmatpush.msra.mxu0 0.0
    %3888 = vmatpush.msra.mxu0 0.0
    %3889 = vmatpush.msra.mxu0 0.0
    %3890 = vmatpush.msra.mxu0 0.0
    %3891 = vmatpush.msra.mxu0 0.0
    %3892 = vmatpush.msra.mxu0 0.0
    %3893 = vmatpush.msra.mxu0 0.0
    %3894 = vmatpush.msra.mxu0 0.0
    %3895 = vmatpush.msra.mxu0 0.0
    %3896 = vmatpush.msra.mxu0 0.0
    %3897 = vmatpush.msra.mxu0 0.0
    %3898 = vmatpush.msra.mxu0 0.0
    %3899 = vmatpush.msra.mxu0 0.0
    %3900 = vmatpush.msra.mxu0 %v848
    %3901 = vmatpush.msra.mxu0 %v847
    %3902 = vmatmul.f32.gmra.mxu0 %v3884
    %v3903 = vpop.f32.mrf.mxu0
    %v3904 = vadd.f32 %v968, %v3903
    %3905 = vdwg.mxu0
    %v3907 = vrot.slane %v3904, 5
    %v3908 = vrot.slane %v3904, 6
    %v3911 = vadd.f32 %v833, %v3907
    %v3912 = vadd.f32 %v839, %v3908
    %v3913 = vxor.u32 %v3911, 2147483648
    %v3914 = vxor.u32 %v3912, 2147483648
    %v3915 = vmul.f32 %v3913, 1.442695
    %v3916 = vpow.pop %v3915
    %v3917 = vmul.f32 %v3914, 1.442695
    %v3918 = vpow.pop %v3917
    %v3919 = vadd.f32 %v3916, 1.0
    %v3920 = vadd.f32 %v3918, 1.0
    %v3921 = vrcp.pop %v3919
    %v3922 = vmul.f32 %v3919, %v3921
    %v3923 = vsub.f32 1.0, %v3922
    %v3924 = vmul.f32 %v3921, %v3923
    %v3925 = vadd.f32 %v3921, %v3924
    %vm3926 = vweird.f32 %v3919
    %vm3927 = vweird.f32 %v3921
    %vm3928 = vmor %vm3926, %vm3927
    %v3929 = vsel %vm3928, %v3921, %v3925
    %v3930 = vand.u32 2147483647, %v3919
    %vm3931 = vcmp.eq.f32.partialorder %v3930, 8.507059e+37
    %v3932 = vand.u32 %v3919, 2147483648
    %v3933 = vor.u32 1.1754944e-38, %v3932
    %v3934 = vsel %vm3931, %v3933, %v3929
    %v3935 = vmul.f32 1.0, %v3934
    %v3936 = vrcp.pop %v3920
    %v3937 = vmul.f32 %v3920, %v3936
    %v3938 = vsub.f32 1.0, %v3937
    %v3939 = vmul.f32 %v3936, %v3938
    %v3940 = vadd.f32 %v3936, %v3939
    %vm3941 = vweird.f32 %v3920
    %vm3942 = vweird.f32 %v3936
    %vm3943 = vmor %vm3941, %vm3942
    %v3944 = vsel %vm3943, %v3936, %v3940
    %v3945 = vand.u32 2147483647, %v3920
    %vm3946 = vcmp.eq.f32.partialorder %v3945, 8.507059e+37
    %v3947 = vand.u32 %v3920, 2147483648
    %v3948 = vor.u32 1.1754944e-38, %v3947
    %v3949 = vsel %vm3946, %v3948, %v3944
    %v3950 = vmul.f32 1.0, %v3949
    %3951 = vrot.lane.b32.xlu0 %v3907, 96
    %v3952 = vpop.permute.xlu0 %3951
    %3953 = vrot.lane.b32.xlu0 %v3908, 96
    %v3954 = vpop.permute.xlu0 %3953
    %v3957 = vmul.f32 %v3935, %v3952
    %v3958 = vmul.f32 %v3950, %v3954
    %3961 = vrot.lane.b32.xlu0 %v3957, 32
    %v3962 = vpop.permute.xlu0 %3961
    %3963 = vrot.lane.b32.xlu0 %v3958, 32
    %v3964 = vpop.permute.xlu0 %3963
    %v3967 = vadd.f32 %v833, %v3962
    %v3968 = vadd.f32 %v839, %v3964
    %v3969 = vtanh.pop %v3967
    %v3970 = vtanh.pop %v3968
    %v3971 = vsub.f32 1.0, %v3935
    %v3972 = vsub.f32 1.0, %v3950
    %3975 = vrot.lane.b32.xlu0 %v3969, 112
    %v3976 = vpop.permute.xlu0 %3975
    %3977 = vrot.lane.b32.xlu0 %v3970, 112
    %v3978 = vpop.permute.xlu0 %3977
    %v3981 = vmul.f32 %v3971, %v3976
    %v3982 = vmul.f32 %v3972, %v3978
    %v3983 = vrot.slane %v3745, 1
    %v3984 = vrot.slane %v3746, 1
    %v3987 = vmul.f32 %v3935, %v3983
    %v3988 = vmul.f32 %v3950, %v3984
    %v3989 = vadd.f32 %v3981, %v3987
    %v3990 = vadd.f32 %v3982, %v3988
    %3993 = vrot.lane.b32.xlu0 %v3989, 112
    %v3994 = vpop.permute.xlu0 %3993
    %3995 = vrot.lane.b32.xlu0 %v3990, 112
    %v3996 = vpop.permute.xlu0 %3995
    %3999 = vst.msk [vmem:[#allocation3] sm:$0x8] %vm1691, %v3994
    %4000 = vst.msk [vmem:[#allocation3 + $0x10] sm:$0x8] %vm1691, %v3996
    %v4001 = vrot.slane %v3867, 4
    %v4002 = vrot.slane %v3868, 3
    %v4003 = vsel %vm1083, %v4002, %v4001
    %4004 = vrot.lane.b32.xlu0 %v4003, 112
    %v4005 = vpop.permute.xlu0 %4004
    %v4006 = vsel %vm61, %v4005, 0
    %4008 = vmatpush.msra.mxu0 0.0
    %4009 = vmatpush.msra.mxu0 0.0
    %4010 = vmatpush.msra.mxu0 0.0
    %4011 = vmatpush.msra.mxu0 0.0
    %4012 = vmatpush.msra.mxu0 0.0
    %4013 = vmatpush.msra.mxu0 0.0
    %4014 = vmatpush.msra.mxu0 0.0
    %4015 = vmatpush.msra.mxu0 0.0
    %4016 = vmatpush.msra.mxu0 0.0
    %4017 = vmatpush.msra.mxu0 0.0
    %4018 = vmatpush.msra.mxu0 0.0
    %4019 = vmatpush.msra.mxu0 0.0
    %4020 = vmatpush.msra.mxu0 0.0
    %4021 = vmatpush.msra.mxu0 0.0
    %4022 = vmatpush.msra.mxu0 %v845
    %4023 = vmatpush.msra.mxu0 %v844
    %4024 = vmatmul.f32.gmra.mxu0 %v4006
    %v4025 = vpop.f32.mrf.mxu0
    %v4026 = vadd.f32 %v851, %v4025
    %4027 = vdwg.mxu0
    %v4029 = vrot.slane %v4026, 3
    %v4030 = vrot.slane %v4026, 4
    %v4033 = vadd.f32 %v801, %v4029
    %v4034 = vadd.f32 %v807, %v4030
    %v4035 = vxor.u32 %v4033, 2147483648
    %v4036 = vxor.u32 %v4034, 2147483648
    %v4037 = vmul.f32 %v4035, 1.442695
    %v4038 = vpow.pop %v4037
    %v4039 = vmul.f32 %v4036, 1.442695
    %v4040 = vpow.pop %v4039
    %v4041 = vadd.f32 %v4038, 1.0
    %v4042 = vadd.f32 %v4040, 1.0
    %v4043 = vrcp.pop %v4041
    %v4044 = vmul.f32 %v4041, %v4043
    %v4045 = vsub.f32 1.0, %v4044
    %v4046 = vmul.f32 %v4043, %v4045
    %v4047 = vadd.f32 %v4043, %v4046
    %vm4048 = vweird.f32 %v4041
    %vm4049 = vweird.f32 %v4043
    %vm4050 = vmor %vm4048, %vm4049
    %v4051 = vsel %vm4050, %v4043, %v4047
    %v4052 = vand.u32 2147483647, %v4041
    %vm4053 = vcmp.eq.f32.partialorder %v4052, 8.507059e+37
    %v4054 = vand.u32 %v4041, 2147483648
    %v4055 = vor.u32 1.1754944e-38, %v4054
    %v4056 = vsel %vm4053, %v4055, %v4051
    %v4057 = vmul.f32 1.0, %v4056
    %v4058 = vrcp.pop %v4042
    %v4059 = vmul.f32 %v4042, %v4058
    %v4060 = vsub.f32 1.0, %v4059
    %v4061 = vmul.f32 %v4058, %v4060
    %v4062 = vadd.f32 %v4058, %v4061
    %vm4063 = vweird.f32 %v4042
    %vm4064 = vweird.f32 %v4058
    %vm4065 = vmor %vm4063, %vm4064
    %v4066 = vsel %vm4065, %v4058, %v4062
    %v4067 = vand.u32 2147483647, %v4042
    %vm4068 = vcmp.eq.f32.partialorder %v4067, 8.507059e+37
    %v4069 = vand.u32 %v4042, 2147483648
    %v4070 = vor.u32 1.1754944e-38, %v4069
    %v4071 = vsel %vm4068, %v4070, %v4066
    %v4072 = vmul.f32 1.0, %v4071
    %4073 = vrot.lane.b32.xlu0 %v4029, 96
    %v4074 = vpop.permute.xlu0 %4073
    %4075 = vrot.lane.b32.xlu0 %v4030, 96
    %v4076 = vpop.permute.xlu0 %4075
    %v4079 = vmul.f32 %v4057, %v4074
    %v4080 = vmul.f32 %v4072, %v4076
    %4083 = vrot.lane.b32.xlu0 %v4079, 32
    %v4084 = vpop.permute.xlu0 %4083
    %4085 = vrot.lane.b32.xlu0 %v4080, 32
    %v4086 = vpop.permute.xlu0 %4085
    %v4089 = vadd.f32 %v801, %v4084
    %v4090 = vadd.f32 %v807, %v4086
    %v4091 = vtanh.pop %v4089
    %v4092 = vtanh.pop %v4090
    %v4093 = vsub.f32 1.0, %v4057
    %v4094 = vsub.f32 1.0, %v4072
    %4097 = vrot.lane.b32.xlu0 %v4091, 112
    %v4098 = vpop.permute.xlu0 %4097
    %4099 = vrot.lane.b32.xlu0 %v4092, 112
    %v4100 = vpop.permute.xlu0 %4099
    %v4103 = vmul.f32 %v4093, %v4098
    %v4104 = vmul.f32 %v4094, %v4100
    %v4105 = vrot.slane %v3867, 7
    %v4106 = vrot.slane %v3868, 7
    %v4109 = vmul.f32 %v4057, %v4105
    %v4110 = vmul.f32 %v4072, %v4106
    %v4111 = vadd.f32 %v4103, %v4109
    %v4112 = vadd.f32 %v4104, %v4110
    %4115 = vrot.lane.b32.xlu0 %v4111, 112
    %v4116 = vpop.permute.xlu0 %4115
    %4117 = vrot.lane.b32.xlu0 %v4112, 112
    %v4118 = vpop.permute.xlu0 %4117
    %4121 = vst.msk [vmem:[#allocation2 + $0x8] sm:$0x20] %vm1568, %v4116
    %4122 = vst.msk [vmem:[#allocation2 + $0x18] sm:$0x20] %vm1568, %v4118
    %v4123 = vrot.slane %v3989, 3
    %v4124 = vrot.slane %v3990, 2
    %v4125 = vsel %vm1083, %v4124, %v4123
    %4126 = vrot.lane.b32.xlu0 %v4125, 112
    %v4127 = vpop.permute.xlu0 %4126
    %v4128 = vsel %vm61, %v4127, 0
    %4130 = vmatpush.msra.mxu0 0.0
    %4131 = vmatpush.msra.mxu0 0.0
    %4132 = vmatpush.msra.mxu0 0.0
    %4133 = vmatpush.msra.mxu0 0.0
    %4134 = vmatpush.msra.mxu0 0.0
    %4135 = vmatpush.msra.mxu0 0.0
    %4136 = vmatpush.msra.mxu0 0.0
    %4137 = vmatpush.msra.mxu0 0.0
    %4138 = vmatpush.msra.mxu0 0.0
    %4139 = vmatpush.msra.mxu0 0.0
    %4140 = vmatpush.msra.mxu0 0.0
    %4141 = vmatpush.msra.mxu0 0.0
    %4142 = vmatpush.msra.mxu0 0.0
    %4143 = vmatpush.msra.mxu0 0.0
    %4144 = vmatpush.msra.mxu0 %v848
    %4145 = vmatpush.msra.mxu0 %v847
    %4146 = vmatmul.f32.gmra.mxu0 %v4128
    %v4147 = vpop.f32.mrf.mxu0
    %v4148 = vadd.f32 %v968, %v4147
    %4149 = vdwg.mxu0
    %v4151 = vrot.slane %v4148, 6
    %v4152 = vrot.slane %v4148, 7
    %v4155 = vadd.f32 %v833, %v4151
    %v4156 = vadd.f32 %v839, %v4152
    %v4157 = vxor.u32 %v4155, 2147483648
    %v4158 = vxor.u32 %v4156, 2147483648
    %v4159 = vmul.f32 %v4157, 1.442695
    %v4160 = vpow.pop %v4159
    %v4161 = vmul.f32 %v4158, 1.442695
    %v4162 = vpow.pop %v4161
    %v4163 = vadd.f32 %v4160, 1.0
    %v4164 = vadd.f32 %v4162, 1.0
    %v4165 = vrcp.pop %v4163
    %v4166 = vmul.f32 %v4163, %v4165
    %v4167 = vsub.f32 1.0, %v4166
    %v4168 = vmul.f32 %v4165, %v4167
    %v4169 = vadd.f32 %v4165, %v4168
    %vm4170 = vweird.f32 %v4163
    %vm4171 = vweird.f32 %v4165
    %vm4172 = vmor %vm4170, %vm4171
    %v4173 = vsel %vm4172, %v4165, %v4169
    %v4174 = vand.u32 2147483647, %v4163
    %vm4175 = vcmp.eq.f32.partialorder %v4174, 8.507059e+37
    %v4176 = vand.u32 %v4163, 2147483648
    %v4177 = vor.u32 1.1754944e-38, %v4176
    %v4178 = vsel %vm4175, %v4177, %v4173
    %v4179 = vmul.f32 1.0, %v4178
    %v4180 = vrcp.pop %v4164
    %v4181 = vmul.f32 %v4164, %v4180
    %v4182 = vsub.f32 1.0, %v4181
    %v4183 = vmul.f32 %v4180, %v4182
    %v4184 = vadd.f32 %v4180, %v4183
    %vm4185 = vweird.f32 %v4164
    %vm4186 = vweird.f32 %v4180
    %vm4187 = vmor %vm4185, %vm4186
    %v4188 = vsel %vm4187, %v4180, %v4184
    %v4189 = vand.u32 2147483647, %v4164
    %vm4190 = vcmp.eq.f32.partialorder %v4189, 8.507059e+37
    %v4191 = vand.u32 %v4164, 2147483648
    %v4192 = vor.u32 1.1754944e-38, %v4191
    %v4193 = vsel %vm4190, %v4192, %v4188
    %v4194 = vmul.f32 1.0, %v4193
    %4195 = vrot.lane.b32.xlu0 %v4151, 96
    %v4196 = vpop.permute.xlu0 %4195
    %4197 = vrot.lane.b32.xlu0 %v4152, 96
    %v4198 = vpop.permute.xlu0 %4197
    %v4201 = vmul.f32 %v4179, %v4196
    %v4202 = vmul.f32 %v4194, %v4198
    %4205 = vrot.lane.b32.xlu0 %v4201, 32
    %v4206 = vpop.permute.xlu0 %4205
    %4207 = vrot.lane.b32.xlu0 %v4202, 32
    %v4208 = vpop.permute.xlu0 %4207
    %v4211 = vadd.f32 %v833, %v4206
    %v4212 = vadd.f32 %v839, %v4208
    %v4213 = vtanh.pop %v4211
    %v4214 = vtanh.pop %v4212
    %v4215 = vsub.f32 1.0, %v4179
    %v4216 = vsub.f32 1.0, %v4194
    %4219 = vrot.lane.b32.xlu0 %v4213, 112
    %v4220 = vpop.permute.xlu0 %4219
    %4221 = vrot.lane.b32.xlu0 %v4214, 112
    %v4222 = vpop.permute.xlu0 %4221
    %v4225 = vmul.f32 %v4215, %v4220
    %v4226 = vmul.f32 %v4216, %v4222
    %v4227 = vrot.slane %v3989, 1
    %v4228 = vrot.slane %v3990, 1
    %v4231 = vmul.f32 %v4179, %v4227
    %v4232 = vmul.f32 %v4194, %v4228
    %v4233 = vadd.f32 %v4225, %v4231
    %v4234 = vadd.f32 %v4226, %v4232
    %4237 = vrot.lane.b32.xlu0 %v4233, 112
    %v4238 = vpop.permute.xlu0 %4237
    %4239 = vrot.lane.b32.xlu0 %v4234, 112
    %v4240 = vpop.permute.xlu0 %4239
    %4243 = vst.msk [vmem:[#allocation3] sm:$0x4] %vm1445, %v4238
    %4244 = vst.msk [vmem:[#allocation3 + $0x10] sm:$0x4] %vm1445, %v4240
    %v4245 = vrot.slane %v4111, 5
    %v4246 = vrot.slane %v4112, 4
    %v4247 = vsel %vm1083, %v4246, %v4245
    %4248 = vrot.lane.b32.xlu0 %v4247, 112
    %v4249 = vpop.permute.xlu0 %4248
    %v4250 = vsel %vm61, %v4249, 0
    %4252 = vmatpush.msra.mxu0 0.0
    %4253 = vmatpush.msra.mxu0 0.0
    %4254 = vmatpush.msra.mxu0 0.0
    %4255 = vmatpush.msra.mxu0 0.0
    %4256 = vmatpush.msra.mxu0 0.0
    %4257 = vmatpush.msra.mxu0 0.0
    %4258 = vmatpush.msra.mxu0 0.0
    %4259 = vmatpush.msra.mxu0 0.0
    %4260 = vmatpush.msra.mxu0 0.0
    %4261 = vmatpush.msra.mxu0 0.0
    %4262 = vmatpush.msra.mxu0 0.0
    %4263 = vmatpush.msra.mxu0 0.0
    %4264 = vmatpush.msra.mxu0 0.0
    %4265 = vmatpush.msra.mxu0 0.0
    %4266 = vmatpush.msra.mxu0 %v845
    %4267 = vmatpush.msra.mxu0 %v844
    %4268 = vmatmul.f32.gmra.mxu0 %v4250
    %v4269 = vpop.f32.mrf.mxu0
    %v4270 = vadd.f32 %v851, %v4269
    %4271 = vdwg.mxu0
    %v4273 = vrot.slane %v4270, 2
    %v4274 = vrot.slane %v4270, 3
    %v4277 = vadd.f32 %v801, %v4273
    %v4278 = vadd.f32 %v807, %v4274
    %v4279 = vxor.u32 %v4277, 2147483648
    %v4280 = vxor.u32 %v4278, 2147483648
    %v4281 = vmul.f32 %v4279, 1.442695
    %v4282 = vpow.pop %v4281
    %v4283 = vmul.f32 %v4280, 1.442695
    %v4284 = vpow.pop %v4283
    %v4285 = vadd.f32 %v4282, 1.0
    %v4286 = vadd.f32 %v4284, 1.0
    %v4287 = vrcp.pop %v4285
    %v4288 = vmul.f32 %v4285, %v4287
    %v4289 = vsub.f32 1.0, %v4288
    %v4290 = vmul.f32 %v4287, %v4289
    %v4291 = vadd.f32 %v4287, %v4290
    %vm4292 = vweird.f32 %v4285
    %vm4293 = vweird.f32 %v4287
    %vm4294 = vmor %vm4292, %vm4293
    %v4295 = vsel %vm4294, %v4287, %v4291
    %v4296 = vand.u32 2147483647, %v4285
    %vm4297 = vcmp.eq.f32.partialorder %v4296, 8.507059e+37
    %v4298 = vand.u32 %v4285, 2147483648
    %v4299 = vor.u32 1.1754944e-38, %v4298
    %v4300 = vsel %vm4297, %v4299, %v4295
    %v4301 = vmul.f32 1.0, %v4300
    %v4302 = vrcp.pop %v4286
    %v4303 = vmul.f32 %v4286, %v4302
    %v4304 = vsub.f32 1.0, %v4303
    %v4305 = vmul.f32 %v4302, %v4304
    %v4306 = vadd.f32 %v4302, %v4305
    %vm4307 = vweird.f32 %v4286
    %vm4308 = vweird.f32 %v4302
    %vm4309 = vmor %vm4307, %vm4308
    %v4310 = vsel %vm4309, %v4302, %v4306
    %v4311 = vand.u32 2147483647, %v4286
    %vm4312 = vcmp.eq.f32.partialorder %v4311, 8.507059e+37
    %v4313 = vand.u32 %v4286, 2147483648
    %v4314 = vor.u32 1.1754944e-38, %v4313
    %v4315 = vsel %vm4312, %v4314, %v4310
    %v4316 = vmul.f32 1.0, %v4315
    %4317 = vrot.lane.b32.xlu0 %v4273, 96
    %v4318 = vpop.permute.xlu0 %4317
    %4319 = vrot.lane.b32.xlu0 %v4274, 96
    %v4320 = vpop.permute.xlu0 %4319
    %v4323 = vmul.f32 %v4301, %v4318
    %v4324 = vmul.f32 %v4316, %v4320
    %4327 = vrot.lane.b32.xlu0 %v4323, 32
    %v4328 = vpop.permute.xlu0 %4327
    %4329 = vrot.lane.b32.xlu0 %v4324, 32
    %v4330 = vpop.permute.xlu0 %4329
    %v4333 = vadd.f32 %v801, %v4328
    %v4334 = vadd.f32 %v807, %v4330
    %v4335 = vtanh.pop %v4333
    %v4336 = vtanh.pop %v4334
    %v4337 = vsub.f32 1.0, %v4301
    %v4338 = vsub.f32 1.0, %v4316
    %4341 = vrot.lane.b32.xlu0 %v4335, 112
    %v4342 = vpop.permute.xlu0 %4341
    %4343 = vrot.lane.b32.xlu0 %v4336, 112
    %v4344 = vpop.permute.xlu0 %4343
    %v4347 = vmul.f32 %v4337, %v4342
    %v4348 = vmul.f32 %v4338, %v4344
    %v4349 = vrot.slane %v4111, 7
    %v4350 = vrot.slane %v4112, 7
    %v4353 = vmul.f32 %v4301, %v4349
    %v4354 = vmul.f32 %v4316, %v4350
    %v4355 = vadd.f32 %v4347, %v4353
    %v4356 = vadd.f32 %v4348, %v4354
    %4359 = vrot.lane.b32.xlu0 %v4355, 112
    %v4360 = vpop.permute.xlu0 %4359
    %4361 = vrot.lane.b32.xlu0 %v4356, 112
    %v4362 = vpop.permute.xlu0 %4361
    %4365 = vst.msk [vmem:[#allocation2 + $0x8] sm:$0x40] %vm1323, %v4360
    %4366 = vst.msk [vmem:[#allocation2 + $0x18] sm:$0x40] %vm1323, %v4362
    %v4367 = vrot.slane %v4233, 2
    %v4368 = vrot.slane %v4234, 1
    %v4369 = vsel %vm1083, %v4368, %v4367
    %4370 = vrot.lane.b32.xlu0 %v4369, 112
    %v4371 = vpop.permute.xlu0 %4370
    %v4372 = vsel %vm61, %v4371, 0
    %4374 = vmatpush.msra.mxu0 0.0
    %4375 = vmatpush.msra.mxu0 0.0
    %4376 = vmatpush.msra.mxu0 0.0
    %4377 = vmatpush.msra.mxu0 0.0
    %4378 = vmatpush.msra.mxu0 0.0
    %4379 = vmatpush.msra.mxu0 0.0
    %4380 = vmatpush.msra.mxu0 0.0
    %4381 = vmatpush.msra.mxu0 0.0
    %4382 = vmatpush.msra.mxu0 0.0
    %4383 = vmatpush.msra.mxu0 0.0
    %4384 = vmatpush.msra.mxu0 0.0
    %4385 = vmatpush.msra.mxu0 0.0
    %4386 = vmatpush.msra.mxu0 0.0
    %4387 = vmatpush.msra.mxu0 0.0
    %4388 = vmatpush.msra.mxu0 %v848
    %4389 = vmatpush.msra.mxu0 %v847
    %4390 = vmatmul.f32.gmra.mxu0 %v4372
    %v4391 = vpop.f32.mrf.mxu0
    %v4392 = vadd.f32 %v968, %v4391
    %4393 = vdwg.mxu0
    %v4395 = vrot.slane %v4392, 7
    %v4398 = vadd.f32 %v833, %v4395
    %v4399 = vadd.f32 %v839, %v4392
    %v4400 = vxor.u32 %v4398, 2147483648
    %v4401 = vxor.u32 %v4399, 2147483648
    %v4402 = vmul.f32 %v4400, 1.442695
    %v4403 = vpow.pop %v4402
    %v4404 = vmul.f32 %v4401, 1.442695
    %v4405 = vpow.pop %v4404
    %v4406 = vadd.f32 %v4403, 1.0
    %v4407 = vadd.f32 %v4405, 1.0
    %v4408 = vrcp.pop %v4406
    %v4409 = vmul.f32 %v4406, %v4408
    %v4410 = vsub.f32 1.0, %v4409
    %v4411 = vmul.f32 %v4408, %v4410
    %v4412 = vadd.f32 %v4408, %v4411
    %vm4413 = vweird.f32 %v4406
    %vm4414 = vweird.f32 %v4408
    %vm4415 = vmor %vm4413, %vm4414
    %v4416 = vsel %vm4415, %v4408, %v4412
    %v4417 = vand.u32 2147483647, %v4406
    %vm4418 = vcmp.eq.f32.partialorder %v4417, 8.507059e+37
    %v4419 = vand.u32 %v4406, 2147483648
    %v4420 = vor.u32 1.1754944e-38, %v4419
    %v4421 = vsel %vm4418, %v4420, %v4416
    %v4422 = vmul.f32 1.0, %v4421
    %v4423 = vrcp.pop %v4407
    %v4424 = vmul.f32 %v4407, %v4423
    %v4425 = vsub.f32 1.0, %v4424
    %v4426 = vmul.f32 %v4423, %v4425
    %v4427 = vadd.f32 %v4423, %v4426
    %vm4428 = vweird.f32 %v4407
    %vm4429 = vweird.f32 %v4423
    %vm4430 = vmor %vm4428, %vm4429
    %v4431 = vsel %vm4430, %v4423, %v4427
    %v4432 = vand.u32 2147483647, %v4407
    %vm4433 = vcmp.eq.f32.partialorder %v4432, 8.507059e+37
    %v4434 = vand.u32 %v4407, 2147483648
    %v4435 = vor.u32 1.1754944e-38, %v4434
    %v4436 = vsel %vm4433, %v4435, %v4431
    %v4437 = vmul.f32 1.0, %v4436
    %4438 = vrot.lane.b32.xlu0 %v4395, 96
    %v4439 = vpop.permute.xlu0 %4438
    %4440 = vrot.lane.b32.xlu0 %v4392, 96
    %v4441 = vpop.permute.xlu0 %4440
    %v4444 = vmul.f32 %v4422, %v4439
    %v4445 = vmul.f32 %v4437, %v4441
    %4448 = vrot.lane.b32.xlu0 %v4444, 32
    %v4449 = vpop.permute.xlu0 %4448
    %4450 = vrot.lane.b32.xlu0 %v4445, 32
    %v4451 = vpop.permute.xlu0 %4450
    %v4454 = vadd.f32 %v833, %v4449
    %v4455 = vadd.f32 %v839, %v4451
    %v4456 = vtanh.pop %v4454
    %v4457 = vtanh.pop %v4455
    %v4458 = vsub.f32 1.0, %v4422
    %v4459 = vsub.f32 1.0, %v4437
    %4462 = vrot.lane.b32.xlu0 %v4456, 112
    %v4463 = vpop.permute.xlu0 %4462
    %4464 = vrot.lane.b32.xlu0 %v4457, 112
    %v4465 = vpop.permute.xlu0 %4464
    %v4468 = vmul.f32 %v4458, %v4463
    %v4469 = vmul.f32 %v4459, %v4465
    %v4470 = vrot.slane %v4233, 1
    %v4473 = vmul.f32 %v4422, %v4470
    %v4474 = vmul.f32 %v4437, %v4368
    %v4475 = vadd.f32 %v4468, %v4473
    %v4476 = vadd.f32 %v4469, %v4474
    %4479 = vrot.lane.b32.xlu0 %v4475, 112
    %v4480 = vpop.permute.xlu0 %4479
    %4481 = vrot.lane.b32.xlu0 %v4476, 112
    %v4482 = vpop.permute.xlu0 %4481
    %4485 = vst.msk [vmem:[#allocation3] sm:$0x2] %vm1200, %v4480
    %4486 = vst.msk [vmem:[#allocation3 + $0x10] sm:$0x2] %vm1200, %v4482
    %v4487 = vrot.slane %v4355, 6
    %v4488 = vrot.slane %v4356, 5
    %v4489 = vsel %vm1083, %v4488, %v4487
    %4490 = vrot.lane.b32.xlu0 %v4489, 112
    %v4491 = vpop.permute.xlu0 %4490
    %v4492 = vsel %vm61, %v4491, 0
    %4494 = vmatpush.msra.mxu0 0.0
    %4495 = vmatpush.msra.mxu0 0.0
    %4496 = vmatpush.msra.mxu0 0.0
    %4497 = vmatpush.msra.mxu0 0.0
    %4498 = vmatpush.msra.mxu0 0.0
    %4499 = vmatpush.msra.mxu0 0.0
    %4500 = vmatpush.msra.mxu0 0.0
    %4501 = vmatpush.msra.mxu0 0.0
    %4502 = vmatpush.msra.mxu0 0.0
    %4503 = vmatpush.msra.mxu0 0.0
    %4504 = vmatpush.msra.mxu0 0.0
    %4505 = vmatpush.msra.mxu0 0.0
    %4506 = vmatpush.msra.mxu0 0.0
    %4507 = vmatpush.msra.mxu0 0.0
    %4508 = vmatpush.msra.mxu0 %v845
    %4509 = vmatpush.msra.mxu0 %v844
    %4510 = vmatmul.f32.gmra.mxu0 %v4492
    %v4511 = vpop.f32.mrf.mxu0
    %v4512 = vadd.f32 %v851, %v4511
    %4513 = vdwg.mxu0
    %v4515 = vrot.slane %v4512, 1
    %v4516 = vrot.slane %v4512, 2
    %v4519 = vadd.f32 %v801, %v4515
    %v4520 = vadd.f32 %v807, %v4516
    %v4521 = vxor.u32 %v4519, 2147483648
    %v4522 = vxor.u32 %v4520, 2147483648
    %v4523 = vmul.f32 %v4521, 1.442695
    %v4524 = vpow.pop %v4523
    %v4525 = vmul.f32 %v4522, 1.442695
    %v4526 = vpow.pop %v4525
    %v4527 = vadd.f32 %v4524, 1.0
    %v4528 = vadd.f32 %v4526, 1.0
    %v4529 = vrcp.pop %v4527
    %v4530 = vmul.f32 %v4527, %v4529
    %v4531 = vsub.f32 1.0, %v4530
    %v4532 = vmul.f32 %v4529, %v4531
    %v4533 = vadd.f32 %v4529, %v4532
    %vm4534 = vweird.f32 %v4527
    %vm4535 = vweird.f32 %v4529
    %vm4536 = vmor %vm4534, %vm4535
    %v4537 = vsel %vm4536, %v4529, %v4533
    %v4538 = vand.u32 2147483647, %v4527
    %vm4539 = vcmp.eq.f32.partialorder %v4538, 8.507059e+37
    %v4540 = vand.u32 %v4527, 2147483648
    %v4541 = vor.u32 1.1754944e-38, %v4540
    %v4542 = vsel %vm4539, %v4541, %v4537
    %v4543 = vmul.f32 1.0, %v4542
    %v4544 = vrcp.pop %v4528
    %v4545 = vmul.f32 %v4528, %v4544
    %v4546 = vsub.f32 1.0, %v4545
    %v4547 = vmul.f32 %v4544, %v4546
    %v4548 = vadd.f32 %v4544, %v4547
    %vm4549 = vweird.f32 %v4528
    %vm4550 = vweird.f32 %v4544
    %vm4551 = vmor %vm4549, %vm4550
    %v4552 = vsel %vm4551, %v4544, %v4548
    %v4553 = vand.u32 2147483647, %v4528
    %vm4554 = vcmp.eq.f32.partialorder %v4553, 8.507059e+37
    %v4555 = vand.u32 %v4528, 2147483648
    %v4556 = vor.u32 1.1754944e-38, %v4555
    %v4557 = vsel %vm4554, %v4556, %v4552
    %v4558 = vmul.f32 1.0, %v4557
    %4559 = vrot.lane.b32.xlu0 %v4515, 96
    %v4560 = vpop.permute.xlu0 %4559
    %4561 = vrot.lane.b32.xlu0 %v4516, 96
    %v4562 = vpop.permute.xlu0 %4561
    %v4565 = vmul.f32 %v4543, %v4560
    %v4566 = vmul.f32 %v4558, %v4562
    %4569 = vrot.lane.b32.xlu0 %v4565, 32
    %v4570 = vpop.permute.xlu0 %4569
    %4571 = vrot.lane.b32.xlu0 %v4566, 32
    %v4572 = vpop.permute.xlu0 %4571
    %v4575 = vadd.f32 %v801, %v4570
    %v4576 = vadd.f32 %v807, %v4572
    %v4577 = vtanh.pop %v4575
    %v4578 = vtanh.pop %v4576
    %v4579 = vsub.f32 1.0, %v4543
    %v4580 = vsub.f32 1.0, %v4558
    %4583 = vrot.lane.b32.xlu0 %v4577, 112
    %v4584 = vpop.permute.xlu0 %4583
    %4585 = vrot.lane.b32.xlu0 %v4578, 112
    %v4586 = vpop.permute.xlu0 %4585
    %v4589 = vmul.f32 %v4579, %v4584
    %v4590 = vmul.f32 %v4580, %v4586
    %v4591 = vrot.slane %v4355, 7
    %v4592 = vrot.slane %v4356, 7
    %v4595 = vmul.f32 %v4543, %v4591
    %v4596 = vmul.f32 %v4558, %v4592
    %v4597 = vadd.f32 %v4589, %v4595
    %v4598 = vadd.f32 %v4590, %v4596
    %4601 = vrot.lane.b32.xlu0 %v4597, 112
    %v4602 = vpop.permute.xlu0 %4601
    %4603 = vrot.lane.b32.xlu0 %v4598, 112
    %v4604 = vpop.permute.xlu0 %4603
    %4607 = vst.msk [vmem:[#allocation2 + $0x8] sm:$0x80] %vm1079, %v4602
    %4608 = vst.msk [vmem:[#allocation2 + $0x18] sm:$0x80] %vm1079, %v4604
    %v4609 = vrot.slane %v4475, 1
    %v4610 = vsel %vm1083, %v4476, %v4609
    %4611 = vrot.lane.b32.xlu0 %v4610, 112
    %v4612 = vpop.permute.xlu0 %4611
    %v4613 = vsel %vm61, %v4612, 0
    %4615 = vmatpush.msra.mxu0 0.0
    %4616 = vmatpush.msra.mxu0 0.0
    %4617 = vmatpush.msra.mxu0 0.0
    %4618 = vmatpush.msra.mxu0 0.0
    %4619 = vmatpush.msra.mxu0 0.0
    %4620 = vmatpush.msra.mxu0 0.0
    %4621 = vmatpush.msra.mxu0 0.0
    %4622 = vmatpush.msra.mxu0 0.0
    %4623 = vmatpush.msra.mxu0 0.0
    %4624 = vmatpush.msra.mxu0 0.0
    %4625 = vmatpush.msra.mxu0 0.0
    %4626 = vmatpush.msra.mxu0 0.0
    %4627 = vmatpush.msra.mxu0 0.0
    %4628 = vmatpush.msra.mxu0 0.0
    %4629 = vmatpush.msra.mxu0 %v848
    %4630 = vmatpush.msra.mxu0 %v847
    %4631 = vmatmul.f32.gmra.mxu0 %v4613
    %v4632 = vpop.f32.mrf.mxu0
    %v4633 = vadd.f32 %v968, %v4632
    %4634 = vdwg.mxu0
    %v4636 = vrot.slane %v4633, 1
    %v4639 = vadd.f32 %v833, %v4633
    %v4640 = vadd.f32 %v839, %v4636
    %v4641 = vxor.u32 %v4639, 2147483648
    %v4642 = vxor.u32 %v4640, 2147483648
    %v4643 = vmul.f32 %v4641, 1.442695
    %v4644 = vpow.pop %v4643
    %v4645 = vmul.f32 %v4642, 1.442695
    %v4646 = vpow.pop %v4645
    %v4647 = vadd.f32 %v4644, 1.0
    %v4648 = vadd.f32 %v4646, 1.0
    %v4649 = vrcp.pop %v4647
    %v4650 = vmul.f32 %v4647, %v4649
    %v4651 = vsub.f32 1.0, %v4650
    %v4652 = vmul.f32 %v4649, %v4651
    %v4653 = vadd.f32 %v4649, %v4652
    %vm4654 = vweird.f32 %v4647
    %vm4655 = vweird.f32 %v4649
    %vm4656 = vmor %vm4654, %vm4655
    %v4657 = vsel %vm4656, %v4649, %v4653
    %v4658 = vand.u32 2147483647, %v4647
    %vm4659 = vcmp.eq.f32.partialorder %v4658, 8.507059e+37
    %v4660 = vand.u32 %v4647, 2147483648
    %v4661 = vor.u32 1.1754944e-38, %v4660
    %v4662 = vsel %vm4659, %v4661, %v4657
    %v4663 = vmul.f32 1.0, %v4662
    %v4664 = vrcp.pop %v4648
    %v4665 = vmul.f32 %v4648, %v4664
    %v4666 = vsub.f32 1.0, %v4665
    %v4667 = vmul.f32 %v4664, %v4666
    %v4668 = vadd.f32 %v4664, %v4667
    %vm4669 = vweird.f32 %v4648
    %vm4670 = vweird.f32 %v4664
    %vm4671 = vmor %vm4669, %vm4670
    %v4672 = vsel %vm4671, %v4664, %v4668
    %v4673 = vand.u32 2147483647, %v4648
    %vm4674 = vcmp.eq.f32.partialorder %v4673, 8.507059e+37
    %v4675 = vand.u32 %v4648, 2147483648
    %v4676 = vor.u32 1.1754944e-38, %v4675
    %v4677 = vsel %vm4674, %v4676, %v4672
    %v4678 = vmul.f32 1.0, %v4677
    %4679 = vrot.lane.b32.xlu0 %v4633, 96
    %v4680 = vpop.permute.xlu0 %4679
    %4681 = vrot.lane.b32.xlu0 %v4636, 96
    %v4682 = vpop.permute.xlu0 %4681
    %v4685 = vmul.f32 %v4663, %v4680
    %v4686 = vmul.f32 %v4678, %v4682
    %4689 = vrot.lane.b32.xlu0 %v4685, 32
    %v4690 = vpop.permute.xlu0 %4689
    %4691 = vrot.lane.b32.xlu0 %v4686, 32
    %v4692 = vpop.permute.xlu0 %4691
    %v4695 = vadd.f32 %v833, %v4690
    %v4696 = vadd.f32 %v839, %v4692
    %v4697 = vtanh.pop %v4695
    %v4698 = vtanh.pop %v4696
    %v4699 = vsub.f32 1.0, %v4663
    %v4700 = vsub.f32 1.0, %v4678
    %4703 = vrot.lane.b32.xlu0 %v4697, 112
    %v4704 = vpop.permute.xlu0 %4703
    %4705 = vrot.lane.b32.xlu0 %v4698, 112
    %v4706 = vpop.permute.xlu0 %4705
    %v4709 = vmul.f32 %v4699, %v4704
    %v4710 = vmul.f32 %v4700, %v4706
    %v4711 = vrot.slane %v4476, 1
    %v4714 = vmul.f32 %v4663, %v4609
    %v4715 = vmul.f32 %v4678, %v4711
    %v4716 = vadd.f32 %v4709, %v4714
    %v4717 = vadd.f32 %v4710, %v4715
    %4720 = vrot.lane.b32.xlu0 %v4716, 112
    %v4721 = vpop.permute.xlu0 %4720
    %4722 = vrot.lane.b32.xlu0 %v4717, 112
    %v4723 = vpop.permute.xlu0 %4722
    %4726 = vst.msk [vmem:[#allocation3] sm:$0x1] %vm964, %v4721
    %4727 = vst.msk [vmem:[#allocation3 + $0x10] sm:$0x1] %vm964, %v4723
    %v4728 = vld [vmem:[%s11] sm:$0xff]
    %v4729 = vld [vmem:[%s11 + $0x8] sm:$0xff]
    %v4730 = vld [vmem:[%s11 + $0x10] sm:$0xff]
    %v4731 = vld [vmem:[%s11 + $0x18] sm:$0xff]
    %v4732 = vld [vmem:[#allocation2] sm:$0xff]
    %v4733 = vld [vmem:[#allocation2 + $0x8] sm:$0xff]
    %v4734 = vld [vmem:[#allocation2 + $0x10] sm:$0xff]
    %v4735 = vld [vmem:[#allocation2 + $0x18] sm:$0xff]
    %v4736 = vld [vmem:[#allocation3] sm:$0xff]
    %v4737 = vld [vmem:[#allocation3 + $0x8] sm:$0xff]
    %v4738 = vld [vmem:[#allocation3 + $0x10] sm:$0xff]
    %v4739 = vld [vmem:[#allocation3 + $0x18] sm:$0xff]
    %v4741 = vsel %vm61, %v4736, 0
    %v4744 = vsel %vm61, %v4737, 0
    %v4747 = vsel %vm61, %v4738, 0
    %v4750 = vsel %vm61, %v4739, 0
    %4752 = vmatpush.msra.mxu0 0.0
    %4753 = vmatpush.msra.mxu0 0.0
    %4754 = vmatpush.msra.mxu0 0.0
    %4755 = vmatpush.msra.mxu0 0.0
    %4756 = vmatpush.msra.mxu0 0.0
    %4757 = vmatpush.msra.mxu0 0.0
    %4758 = vmatpush.msra.mxu0 0.0
    %4759 = vmatpush.msra.mxu0 0.0
    %4760 = vmatpush.msra.mxu0 0.0
    %4761 = vmatpush.msra.mxu0 0.0
    %4762 = vmatpush.msra.mxu0 0.0
    %4763 = vmatpush.msra.mxu0 0.0
    %4764 = vmatpush.msra.mxu0 0.0
    %4765 = vmatpush.msra.mxu0 0.0
    %4766 = vmatpush.msra.mxu0 %v4731
    %4767 = vmatpush.msra.mxu0 %v4730
    %4768 = vmatmul.f32.gmra.mxu0 %v4741
    %v4769 = vpop.f32.mrf.mxu0
    %v4770 = vadd.f32 0.0, %v4769
    %4771 = vmatmul.f32.gmra.mxu0 %v4744
    %v4772 = vpop.f32.mrf.mxu0
    %v4773 = vadd.f32 0.0, %v4772
    %4774 = vmatmul.f32.gmra.mxu0 %v4747
    %v4775 = vpop.f32.mrf.mxu0
    %v4776 = vadd.f32 0.0, %v4775
    %4777 = vmatmul.f32.gmra.mxu0 %v4750
    %v4778 = vpop.f32.mrf.mxu0
    %v4779 = vadd.f32 0.0, %v4778
    %4780 = vdwg.mxu0
    %v4782 = vsel %vm61, %v4732, 0
    %v4785 = vsel %vm61, %v4733, 0
    %v4788 = vsel %vm61, %v4734, 0
    %v4791 = vsel %vm61, %v4735, 0
    %4793 = vmatpush.msra.mxu0 0.0
    %4794 = vmatpush.msra.mxu0 0.0
    %4795 = vmatpush.msra.mxu0 0.0
    %4796 = vmatpush.msra.mxu0 0.0
    %4797 = vmatpush.msra.mxu0 0.0
    %4798 = vmatpush.msra.mxu0 0.0
    %4799 = vmatpush.msra.mxu0 0.0
    %4800 = vmatpush.msra.mxu0 0.0
    %4801 = vmatpush.msra.mxu0 0.0
    %4802 = vmatpush.msra.mxu0 0.0
    %4803 = vmatpush.msra.mxu0 0.0
    %4804 = vmatpush.msra.mxu0 0.0
    %4805 = vmatpush.msra.mxu0 0.0
    %4806 = vmatpush.msra.mxu0 0.0
    %4807 = vmatpush.msra.mxu0 %v4729
    %4808 = vmatpush.msra.mxu0 %v4728
    %4809 = vmatmul.f32.gmra.mxu0 %v4782
    %v4810 = vpop.f32.mrf.mxu0
    %v4811 = vadd.f32 %v4770, %v4810
    %4812 = vmatmul.f32.gmra.mxu0 %v4785
    %v4813 = vpop.f32.mrf.mxu0
    %v4814 = vadd.f32 %v4773, %v4813
    %4815 = vmatmul.f32.gmra.mxu0 %v4788
    %v4816 = vpop.f32.mrf.mxu0
    %v4817 = vadd.f32 %v4776, %v4816
    %4818 = vmatmul.f32.gmra.mxu0 %v4791
    %v4819 = vpop.f32.mrf.mxu0
    %v4820 = vadd.f32 %v4779, %v4819
    %4821 = vdwg.mxu0
    %v4822 = vld [vmem:[%s13] sm:$0xff]
    %v4823 = vld [vmem:[%s13 + $0x8] sm:$0xff]
    %v4824 = vld [vmem:[%s13 + $0x10] sm:$0xff]
    %v4825 = vld [vmem:[%s13 + $0x18] sm:$0xff]
    %v4826 = vadd.f32 %v4822, %v4811
    %v4827 = vadd.f32 %v4823, %v4814
    %v4828 = vadd.f32 %v4824, %v4817
    %v4829 = vadd.f32 %v4825, %v4820
    %v4830 = vld [vmem:[%s12] sm:$0x1]
    %v4832 = vperm.slane %v4830, 0
    %v4834 = vadd.f32 %v4826, %v4832
    %v4835 = vadd.f32 %v4827, %v4832
    %v4836 = vadd.f32 %v4828, %v4832
    %v4837 = vadd.f32 %v4829, %v4832
    %v4838 = vld [vmem:[%s14] sm:$0xff]
    %v4839 = vld [vmem:[%s14 + $0x8] sm:$0xff]
    %v4840 = vld [vmem:[%s14 + $0x10] sm:$0xff]
    %v4841 = vld [vmem:[%s14 + $0x18] sm:$0xff]
    %4843 = vset.pattern.permute.xlu0 0
    %4844 = vperm.xlu0 %4843, %v4838
    %v4845 = vpop.permute.xlu0 %4844
    %4848 = vset.pattern.permute.xlu0 0
    %4849 = vperm.xlu0 %4848, %v4839
    %v4850 = vpop.permute.xlu0 %4849
    %4853 = vset.pattern.permute.xlu0 0
    %4854 = vperm.xlu0 %4853, %v4840
    %v4855 = vpop.permute.xlu0 %4854
    %4858 = vset.pattern.permute.xlu0 0
    %4859 = vperm.xlu0 %4858, %v4841
    %v4860 = vpop.permute.xlu0 %4859
    %v4862 = vmul.f32 %v4834, %v4845
    %v4863 = vmul.f32 %v4835, %v4850
    %v4864 = vmul.f32 %v4836, %v4855
    %v4865 = vmul.f32 %v4837, %v4860
    %4866 = vst.msk [vmem:[#allocation4] sm:$0xff] %vm61, %v4862
    %4867 = vst.msk [vmem:[#allocation4 + $0x8] sm:$0xff] %vm61, %v4863
    %4868 = vst.msk [vmem:[#allocation4 + $0x10] sm:$0xff] %vm61, %v4864
    %4869 = vst.msk [vmem:[#allocation4 + $0x18] sm:$0xff] %vm61, %v4865
    // Predicated region
    $region62: #{fastspeech_forward.13} parent=1 // pred_check
      _
    $region63: #{fastspeech_forward.13} parent=1 // pred_check_branch
      %4871 = sbr.rel (0) target = $region65
    $region64: #{fastspeech_forward.13} parent=1 // pred_region
      %4873 = vsyncadd [#allocation5], 0
      %s4874 = sshll.u32 [#allocation4], 4
      %s4875 = int_to_ptr.vmem [resolvable:$true] %s4874
      %s4876 = sshll.u32 %s15, 4
      %s4877 = int_to_ptr.hbm [resolvable:$true] %s4876
      %4882 = dma.vmem_to_hbm [thread:$0]  %s4875, 512, %s4877, [#allocation5], 128, 128, 8
    $region65: #{fastspeech_forward.13} parent=1 // pred_fallthru
      _
    // Predicated region
    $region66: #{fastspeech_forward.13} parent=1 // pred_check
      _
    $region67: #{fastspeech_forward.13} parent=1 // pred_check_branch
      %4884 = sbr.rel (0) target = $region69
    $region68: #{fastspeech_forward.13} parent=1 // pred_region
      %4886 = dma.done [#allocation5], 512
    $region69: #{fastspeech_forward.13} parent=1 // pred_fallthru
      _
    %4887 = vsyncpa [#allocation5], 1

</llo_original>
